<compile_context>
chip_gen: v7x
topology: tpu7x:2x2x1
jax: 0.10.0
libtpu: 0.0.40
codegen_flags: <defaults>
</compile_context>

<pallas_src>
import jax
import jax.numpy as jnp
from jax.experimental import pallas as pl
from jax.experimental.pallas import tpu as pltpu


_GRID = 32                 # embedded spatial grid: 32x32 -> 1024 lanes
_FLAT = _GRID * _GRID


# ----------------------------------------------------------------------------
# In-kernel helpers (traced Python; all shapes/offsets are static)
# ----------------------------------------------------------------------------
def _shifted(a, d):
    """b[:, j] = a[:, j + d] (zeros past the end).  d is a static int."""
    if d == 0:
        return a
    pad = jnp.zeros((a.shape[0], d), a.dtype)
    return jnp.concatenate([a[:, d:], pad], axis=1)


def _conv5x5_embedded(x, w, b, cin, stride):
    """Valid 5x5 conv + bias + ReLU on a channel-major flat spatial map.

    x: (cin, 1024) bf16; logical pixel (h, w) lives at lane stride*(h*32+w).
    w: (cout, 25*cin) bf16, feature order (kh, kw, ci).
    b: (cout, 1) f32.
    Returns (cout, 1024) f32 with output pixel (oh, ow) at lane
    stride*(oh*32+ow); all other lanes hold garbage that is never read.
    """
    acc = None
    for kh in range(5):                                   # 5 MXU pushes / conv
        pieces = [_shifted(x, stride * (kh * _GRID + kw)) for kw in range(5)]
        chunk = jnp.concatenate(pieces, axis=0)           # (5*cin, 1024)
        wk = w[:, kh * 5 * cin:(kh + 1) * 5 * cin]        # (cout, 5*cin)
        part = jnp.dot(wk, chunk, preferred_element_type=jnp.float32)
        acc = part if acc is None else acc + part
    return jnp.maximum(acc + b, 0.0)


def _maxpool2x2_embedded(a, stride):
    """2x2/2 max pool of an embedded map; result stays embedded at 2*stride."""
    return jnp.maximum(
        jnp.maximum(a, _shifted(a, stride)),
        jnp.maximum(_shifted(a, stride * _GRID),
                    _shifted(a, stride * _GRID + stride)))


# ----------------------------------------------------------------------------
# Fused whole-network kernel (one image per grid step)
# ----------------------------------------------------------------------------
def _cnn32_kernel(x_ref, w1_ref, b1_ref, w2_ref, b2_ref, sel_ref,
                  fw1_ref, fb1_ref, fw2_ref, fb2_ref, fw3_ref, fb3_ref,
                  o_ref):
    bf16 = jnp.bfloat16
    f32 = jnp.float32

    x = x_ref[0].astype(bf16)                                       # (3, 1024)

    # conv1 (3->6, 5x5) + ReLU + 2x2 pool: 28x28 -> 14x14 (stride-2 embedding)
    a = _conv5x5_embedded(x, w1_ref[...], b1_ref[...], cin=3, stride=1)
    a = _maxpool2x2_embedded(a, stride=1).astype(bf16)              # (6, 1024)

    # conv2 (6->16, 5x5) + ReLU + 2x2 pool: 10x10 -> 5x5 (stride-4 embedding)
    a = _conv5x5_embedded(a, w2_ref[...], b2_ref[...], cin=6, stride=2)
    a = _maxpool2x2_embedded(a, stride=2).astype(bf16)              # (16, 1024)

    # Gather the 16 x 5 x 5 pooled map into (16, 128) fc1 order (column
    # ph*5+pw; remaining columns zero) with a constant 0/1 selection matmul.
    g = jnp.dot(a, sel_ref[...], preferred_element_type=f32).astype(bf16)

    # fc1 (400 -> 60, zero-padded to 64): contract (channel, position) against
    # the per-channel packed weight; accumulate in f32 starting from the bias.
    h = fb1_ref[...]                                                # (1, 64)
    for c in range(16):
        h = h + jnp.dot(g[c:c + 1, :], fw1_ref[c],
                        preferred_element_type=f32)
    h = jnp.maximum(h, 0.0).astype(bf16)

    # fc2 (60 -> 16) + ReLU, fc3 (16 -> 10)
    h = jnp.maximum(
        jnp.dot(h, fw2_ref[...], preferred_element_type=f32) + fb2_ref[...],
        0.0).astype(bf16)
    out = jnp.dot(h, fw3_ref[...], preferred_element_type=f32) + fb3_ref[...]
    o_ref[0] = out.astype(o_ref.dtype)                              # (1, 10)


# ----------------------------------------------------------------------------
# Wrapper
# ----------------------------------------------------------------------------
def cnn32_forward(packed, x):
    """x: (N, 3, 32, 32) float32 (PyTorch NCHW) -> logits (N, 10) float32."""
    N = x.shape[0]
    x3 = x.reshape(N, 3, _FLAT)                 # contiguous reshape, no copy

    out = pl.pallas_call(
        _cnn32_kernel,
        out_shape=jax.ShapeDtypeStruct((N, 1, 10), jnp.float32),
        grid=(N,),
        in_specs=[
            pl.BlockSpec((1, 3, _FLAT), lambda n: (n, 0, 0)),   # image
            pl.BlockSpec((6, 75), lambda n: (0, 0)),            # conv1 w
            pl.BlockSpec((6, 1), lambda n: (0, 0)),             # conv1 b
            pl.BlockSpec((16, 150), lambda n: (0, 0)),          # conv2 w
            pl.BlockSpec((16, 1), lambda n: (0, 0)),            # conv2 b
            pl.BlockSpec((_FLAT, 128), lambda n: (0, 0)),       # pool2 gather
            pl.BlockSpec((16, 128, 64), lambda n: (0, 0, 0)),   # fc1 w packed
            pl.BlockSpec((1, 64), lambda n: (0, 0)),            # fc1 b
            pl.BlockSpec((64, 16), lambda n: (0, 0)),           # fc2 w
            pl.BlockSpec((1, 16), lambda n: (0, 0)),            # fc2 b
            pl.BlockSpec((16, 10), lambda n: (0, 0)),           # fc3 w
            pl.BlockSpec((1, 10), lambda n: (0, 0)),            # fc3 b
        ],
        out_specs=pl.BlockSpec((1, 1, 10), lambda n: (n, 0, 0)),
        compiler_params=pltpu.CompilerParams(
            dimension_semantics=("parallel",)),
    )(x3, packed["w1m"], packed["b1c"], packed["w2m"], packed["b2c"],
      packed["sel"], packed["fw1"], packed["fb1"], packed["fw2"],
      packed["fb2"], packed["fw3"], packed["fb3"])

    return out.reshape(N, 10)


# ----------------------------------------------------------------------------
# Parameters: PyTorch-default-style init + one-time bf16 packing
# ----------------------------------------------------------------------------
def _uniform(key, shape, fan_in):
    bound = 1.0 / jnp.sqrt(jnp.float32(fan_in))
    return jax.random.uniform(key, shape, jnp.float32, -bound, bound)


def init_params(key):
    keys = jax.random.split(key, 10)
    p = {}
    p["conv1_w"] = _uniform(keys[0], (6, 3, 5, 5), 3 * 5 * 5)
    p["conv1_b"] = _uniform(keys[1], (6,), 3 * 5 * 5)
    p["conv2_w"] = _uniform(keys[2], (16, 6, 5, 5), 6 * 5 * 5)
    p["conv2_b"] = _uniform(keys[3], (16,), 6 * 5 * 5)
    # Linear weights stored (in, out)
    p["fc1_w"] = _uniform(keys[4], (16 * 5 * 5, 60), 16 * 5 * 5)
    p["fc1_b"] = _uniform(keys[5], (60,), 16 * 5 * 5)
    p["fc2_w"] = _uniform(keys[6], (60, 16), 60)
    p["fc2_b"] = _uniform(keys[7], (16,), 60)
    p["fc3_w"] = _uniform(keys[8], (16, 10), 16)
    p["fc3_b"] = _uniform(keys[9], (10,), 16)
    return p


def pack_params(p):
    """One-time packing / bf16 casting of all weights into kernel layout."""
    f32, bf16 = jnp.float32, jnp.bfloat16
    # conv weights: (Cout, Cin, kh, kw) -> (Cout, 25*Cin), feature=(kh, kw, ci)
    w1m = p["conv1_w"].transpose(0, 2, 3, 1).reshape(6, 75).astype(bf16)
    b1c = p["conv1_b"].reshape(6, 1).astype(f32)
    w2m = p["conv2_w"].transpose(0, 2, 3, 1).reshape(16, 150).astype(bf16)
    b2c = p["conv2_b"].reshape(16, 1).astype(f32)

    # 0/1 gather matrix: flat-grid lane 4*ph*32 + 4*pw  ->  slot ph*5 + pw
    idx = jnp.arange(25)
    rows = 4 * (idx // 5) * _GRID + 4 * (idx % 5)
    sel = jnp.zeros((_FLAT, 128), f32).at[rows, idx].set(1.0).astype(bf16)

    # fc1: (400, 60) scattered to (16 ch, 128 slots, 64 out), zero-padded
    fw1 = jnp.zeros((16, 128, 64), f32).at[:, :25, :60].set(
        p["fc1_w"].reshape(16, 25, 60)).astype(bf16)
    fb1 = jnp.zeros((1, 64), f32).at[0, :60].set(p["fc1_b"])
    # fc2: pad the 60-wide input to 64 rows (padding rows are zero)
    fw2 = jnp.zeros((64, 16), f32).at[:60, :].set(p["fc2_w"]).astype(bf16)
    fb2 = p["fc2_b"].reshape(1, 16).astype(f32)
    fw3 = p["fc3_w"].astype(bf16)
    fb3 = p["fc3_b"].reshape(1, 10).astype(f32)

    return dict(w1m=w1m, b1c=b1c, w2m=w2m, b2c=b2c, sel=sel,
                fw1=fw1, fb1=fb1, fw2=fw2, fb2=fb2, fw3=fw3, fb3=fb3)


# ----------------------------------------------------------------------------
# Pure-JAX f32 reference (for a tolerance check only)
# ----------------------------------------------------------------------------
def _reference_forward(p, x):
    def conv(a, w, b):                              # valid conv, stride 1
        n, c, hh, ww = a.shape
        co, _, k, _ = w.shape
        o = hh - k + 1
        cols = [a[:, :, kh:kh + o, kw:kw + o]
                for kh in range(k) for kw in range(k)]
        pat = jnp.stack(cols, axis=2).reshape(n, c * k * k, o, o)
        wm = w.reshape(co, c * k * k)
        return jnp.einsum("of,nfhw->nohw", wm, pat) + b[None, :, None, None]

    def pool(a):
        n, c, hh, ww = a.shape
        return a.reshape(n, c, hh // 2, 2, ww // 2, 2).max(axis=(3, 5))

    a = pool(jax.nn.relu(conv(x, p["conv1_w"], p["conv1_b"])))
    a = pool(jax.nn.relu(conv(a, p["conv2_w"], p["conv2_b"])))
    a = a.reshape(a.shape[0], -1)
    a = jax.nn.relu(a @ p["fc1_w"] + p["fc1_b"])
    a = jax.nn.relu(a @ p["fc2_w"] + p["fc2_b"])
    return a @ p["fc3_w"] + p["fc3_b"]


if __name__ == "__main__":
    key = jax.random.PRNGKey(0)
    k_params, k_x = jax.random.split(key)
    params = init_params(k_params)
    packed = pack_params(params)

    # CNN_32 implies 3x32x32 inputs (CIFAR); small batch of 2.
    x = jax.random.normal(k_x, (2, 3, 32, 32), dtype=jnp.float32)

    out = jax.jit(cnn32_forward)(packed, x)
    out = jax.block_until_ready(out)
    assert out.shape == (2, 10), out.shape
    assert out.dtype == jnp.float32

    ref = _reference_forward(params, x)
    err = float(jnp.max(jnp.abs(out - ref)))
    assert err < 5e-2, f"max abs err vs f32 reference: {err}"

    print("KERNEL_OK")
</pallas_src>

<mosaic_0001>
module attributes {stable_mosaic.version = 11 : i64} {
  func.func @_cnn32_kernel(%arg0: i32, %arg1: memref<1x3x1024xf32, #tpu.memory_space<vmem>>, %arg2: memref<6x75xbf16, #tpu.memory_space<vmem>>, %arg3: memref<6x1xf32, #tpu.memory_space<vmem>>, %arg4: memref<16x150xbf16, #tpu.memory_space<vmem>>, %arg5: memref<16x1xf32, #tpu.memory_space<vmem>>, %arg6: memref<1024x128xbf16, #tpu.memory_space<vmem>>, %arg7: memref<16x128x64xbf16, #tpu.memory_space<vmem>>, %arg8: memref<1x64xf32, #tpu.memory_space<vmem>>, %arg9: memref<64x16xbf16, #tpu.memory_space<vmem>>, %arg10: memref<1x16xf32, #tpu.memory_space<vmem>>, %arg11: memref<16x10xbf16, #tpu.memory_space<vmem>>, %arg12: memref<1x10xf32, #tpu.memory_space<vmem>>, %arg13: memref<1x1x10xf32, #tpu.memory_space<vmem>>) attributes {dimension_semantics = [#tpu.dimension_semantics<parallel>], iteration_bounds = array<i64: 2>, scalar_prefetch = 0 : i64, scratch_operands = 0 : i64, tpu.core_type = #tpu.core_type<tc>, window_params = [{transform_indices = @transform_0, window_bounds = array<i64: 1, 3, 1024>}, {pipeline_mode = #tpu.pipeline_mode<synchronous>, transform_indices = @transform_1, window_bounds = array<i64: 6, 75>}, {pipeline_mode = #tpu.pipeline_mode<synchronous>, transform_indices = @transform_2, window_bounds = array<i64: 6, 1>}, {pipeline_mode = #tpu.pipeline_mode<synchronous>, transform_indices = @transform_3, window_bounds = array<i64: 16, 150>}, {pipeline_mode = #tpu.pipeline_mode<synchronous>, transform_indices = @transform_4, window_bounds = array<i64: 16, 1>}, {pipeline_mode = #tpu.pipeline_mode<synchronous>, transform_indices = @transform_5, window_bounds = array<i64: 1024, 128>}, {pipeline_mode = #tpu.pipeline_mode<synchronous>, transform_indices = @transform_6, window_bounds = array<i64: 16, 128, 64>}, {pipeline_mode = #tpu.pipeline_mode<synchronous>, transform_indices = @transform_7, window_bounds = array<i64: 1, 64>}, {pipeline_mode = #tpu.pipeline_mode<synchronous>, transform_indices = @transform_8, window_bounds = array<i64: 64, 16>}, {pipeline_mode = #tpu.pipeline_mode<synchronous>, transform_indices = @transform_9, window_bounds = array<i64: 1, 16>}, {pipeline_mode = #tpu.pipeline_mode<synchronous>, transform_indices = @transform_10, window_bounds = array<i64: 16, 10>}, {pipeline_mode = #tpu.pipeline_mode<synchronous>, transform_indices = @transform_11, window_bounds = array<i64: 1, 10>}, {transform_indices = @transform_12, window_bounds = array<i64: 1, 1, 10>}]} {
    %c0 = arith.constant 0 : index
    %c0_0 = arith.constant 0 : index
    %c0_1 = arith.constant 0 : index
    %0 = vector.load %arg1[%c0, %c0_0, %c0_1] : memref<1x3x1024xf32, #tpu.memory_space<vmem>>, vector<1x3x1024xf32>
    %1 = vector.shape_cast %0 : vector<1x3x1024xf32> to vector<3x1024xf32>
    %2 = arith.truncf %1 : vector<3x1024xf32> to vector<3x1024xbf16>
    %c0_2 = arith.constant 0 : index
    %c0_3 = arith.constant 0 : index
    %3 = vector.load %arg2[%c0_2, %c0_3] : memref<6x75xbf16, #tpu.memory_space<vmem>>, vector<6x75xbf16>
    %c0_4 = arith.constant 0 : index
    %c0_5 = arith.constant 0 : index
    %4 = vector.load %arg3[%c0_4, %c0_5] : memref<6x1xf32, #tpu.memory_space<vmem>>, vector<6x1xf32>
    %cst = arith.constant 0.000000e+00 : bf16
    %5 = vector.broadcast %cst : bf16 to vector<3x1xbf16>
    %6 = vector.extract_strided_slice %2 {offsets = [0, 1], sizes = [3, 1023], strides = [1, 1]} : vector<3x1024xbf16> to vector<3x1023xbf16>
    %7 = tpu.concatenate %6, %5 in 1 : vector<3x1023xbf16>, vector<3x1xbf16> -> vector<3x1024xbf16>
    %cst_6 = arith.constant 0.000000e+00 : bf16
    %8 = vector.broadcast %cst_6 : bf16 to vector<3x2xbf16>
    %9 = vector.extract_strided_slice %2 {offsets = [0, 2], sizes = [3, 1022], strides = [1, 1]} : vector<3x1024xbf16> to vector<3x1022xbf16>
    %10 = tpu.concatenate %9, %8 in 1 : vector<3x1022xbf16>, vector<3x2xbf16> -> vector<3x1024xbf16>
    %cst_7 = arith.constant 0.000000e+00 : bf16
    %11 = vector.broadcast %cst_7 : bf16 to vector<3x3xbf16>
    %12 = vector.extract_strided_slice %2 {offsets = [0, 3], sizes = [3, 1021], strides = [1, 1]} : vector<3x1024xbf16> to vector<3x1021xbf16>
    %13 = tpu.concatenate %12, %11 in 1 : vector<3x1021xbf16>, vector<3x3xbf16> -> vector<3x1024xbf16>
    %cst_8 = arith.constant 0.000000e+00 : bf16
    %14 = vector.broadcast %cst_8 : bf16 to vector<3x4xbf16>
    %15 = vector.extract_strided_slice %2 {offsets = [0, 4], sizes = [3, 1020], strides = [1, 1]} : vector<3x1024xbf16> to vector<3x1020xbf16>
    %16 = tpu.concatenate %15, %14 in 1 : vector<3x1020xbf16>, vector<3x4xbf16> -> vector<3x1024xbf16>
    %17 = tpu.concatenate %2, %7, %10, %13, %16 in 0 : vector<3x1024xbf16>, vector<3x1024xbf16>, vector<3x1024xbf16>, vector<3x1024xbf16>, vector<3x1024xbf16> -> vector<15x1024xbf16>
    %18 = vector.extract_strided_slice %3 {offsets = [0, 0], sizes = [6, 15], strides = [1, 1]} : vector<6x75xbf16> to vector<6x15xbf16>
    %cst_9 = arith.constant dense<0.000000e+00> : vector<6x1024xf32>
    %19 = tpu.matmul %18, %17, %cst_9 {dimension_numbers = #tpu.dot_dimension_numbers<[1], [0], [0], [1], [0, 0, 1, 1], [], []>} : vector<6x15xbf16>, vector<15x1024xbf16>, vector<6x1024xf32> -> vector<6x1024xf32>
    %cst_10 = arith.constant 0.000000e+00 : bf16
    %20 = vector.broadcast %cst_10 : bf16 to vector<3x32xbf16>
    %21 = vector.extract_strided_slice %2 {offsets = [0, 32], sizes = [3, 992], strides = [1, 1]} : vector<3x1024xbf16> to vector<3x992xbf16>
    %22 = tpu.concatenate %21, %20 in 1 : vector<3x992xbf16>, vector<3x32xbf16> -> vector<3x1024xbf16>
    %cst_11 = arith.constant 0.000000e+00 : bf16
    %23 = vector.broadcast %cst_11 : bf16 to vector<3x33xbf16>
    %24 = vector.extract_strided_slice %2 {offsets = [0, 33], sizes = [3, 991], strides = [1, 1]} : vector<3x1024xbf16> to vector<3x991xbf16>
    %25 = tpu.concatenate %24, %23 in 1 : vector<3x991xbf16>, vector<3x33xbf16> -> vector<3x1024xbf16>
    %cst_12 = arith.constant 0.000000e+00 : bf16
    %26 = vector.broadcast %cst_12 : bf16 to vector<3x34xbf16>
    %27 = vector.extract_strided_slice %2 {offsets = [0, 34], sizes = [3, 990], strides = [1, 1]} : vector<3x1024xbf16> to vector<3x990xbf16>
    %28 = tpu.concatenate %27, %26 in 1 : vector<3x990xbf16>, vector<3x34xbf16> -> vector<3x1024xbf16>
    %cst_13 = arith.constant 0.000000e+00 : bf16
    %29 = vector.broadcast %cst_13 : bf16 to vector<3x35xbf16>
    %30 = vector.extract_strided_slice %2 {offsets = [0, 35], sizes = [3, 989], strides = [1, 1]} : vector<3x1024xbf16> to vector<3x989xbf16>
    %31 = tpu.concatenate %30, %29 in 1 : vector<3x989xbf16>, vector<3x35xbf16> -> vector<3x1024xbf16>
    %cst_14 = arith.constant 0.000000e+00 : bf16
    %32 = vector.broadcast %cst_14 : bf16 to vector<3x36xbf16>
    %33 = vector.extract_strided_slice %2 {offsets = [0, 36], sizes = [3, 988], strides = [1, 1]} : vector<3x1024xbf16> to vector<3x988xbf16>
    %34 = tpu.concatenate %33, %32 in 1 : vector<3x988xbf16>, vector<3x36xbf16> -> vector<3x1024xbf16>
    %35 = tpu.concatenate %22, %25, %28, %31, %34 in 0 : vector<3x1024xbf16>, vector<3x1024xbf16>, vector<3x1024xbf16>, vector<3x1024xbf16>, vector<3x1024xbf16> -> vector<15x1024xbf16>
    %36 = vector.extract_strided_slice %3 {offsets = [0, 15], sizes = [6, 15], strides = [1, 1]} : vector<6x75xbf16> to vector<6x15xbf16>
    %cst_15 = arith.constant dense<0.000000e+00> : vector<6x1024xf32>
    %37 = tpu.matmul %36, %35, %cst_15 {dimension_numbers = #tpu.dot_dimension_numbers<[1], [0], [0], [1], [0, 0, 1, 1], [], []>} : vector<6x15xbf16>, vector<15x1024xbf16>, vector<6x1024xf32> -> vector<6x1024xf32>
    %38 = arith.addf %19, %37 : vector<6x1024xf32>
    %cst_16 = arith.constant 0.000000e+00 : bf16
    %39 = vector.broadcast %cst_16 : bf16 to vector<3x64xbf16>
    %40 = vector.extract_strided_slice %2 {offsets = [0, 64], sizes = [3, 960], strides = [1, 1]} : vector<3x1024xbf16> to vector<3x960xbf16>
    %41 = tpu.concatenate %40, %39 in 1 : vector<3x960xbf16>, vector<3x64xbf16> -> vector<3x1024xbf16>
    %cst_17 = arith.constant 0.000000e+00 : bf16
    %42 = vector.broadcast %cst_17 : bf16 to vector<3x65xbf16>
    %43 = vector.extract_strided_slice %2 {offsets = [0, 65], sizes = [3, 959], strides = [1, 1]} : vector<3x1024xbf16> to vector<3x959xbf16>
    %44 = tpu.concatenate %43, %42 in 1 : vector<3x959xbf16>, vector<3x65xbf16> -> vector<3x1024xbf16>
    %cst_18 = arith.constant 0.000000e+00 : bf16
    %45 = vector.broadcast %cst_18 : bf16 to vector<3x66xbf16>
    %46 = vector.extract_strided_slice %2 {offsets = [0, 66], sizes = [3, 958], strides = [1, 1]} : vector<3x1024xbf16> to vector<3x958xbf16>
    %47 = tpu.concatenate %46, %45 in 1 : vector<3x958xbf16>, vector<3x66xbf16> -> vector<3x1024xbf16>
    %cst_19 = arith.constant 0.000000e+00 : bf16
    %48 = vector.broadcast %cst_19 : bf16 to vector<3x67xbf16>
    %49 = vector.extract_strided_slice %2 {offsets = [0, 67], sizes = [3, 957], strides = [1, 1]} : vector<3x1024xbf16> to vector<3x957xbf16>
    %50 = tpu.concatenate %49, %48 in 1 : vector<3x957xbf16>, vector<3x67xbf16> -> vector<3x1024xbf16>
    %cst_20 = arith.constant 0.000000e+00 : bf16
    %51 = vector.broadcast %cst_20 : bf16 to vector<3x68xbf16>
    %52 = vector.extract_strided_slice %2 {offsets = [0, 68], sizes = [3, 956], strides = [1, 1]} : vector<3x1024xbf16> to vector<3x956xbf16>
    %53 = tpu.concatenate %52, %51 in 1 : vector<3x956xbf16>, vector<3x68xbf16> -> vector<3x1024xbf16>
    %54 = tpu.concatenate %41, %44, %47, %50, %53 in 0 : vector<3x1024xbf16>, vector<3x1024xbf16>, vector<3x1024xbf16>, vector<3x1024xbf16>, vector<3x1024xbf16> -> vector<15x1024xbf16>
    %55 = vector.extract_strided_slice %3 {offsets = [0, 30], sizes = [6, 15], strides = [1, 1]} : vector<6x75xbf16> to vector<6x15xbf16>
    %cst_21 = arith.constant dense<0.000000e+00> : vector<6x1024xf32>
    %56 = tpu.matmul %55, %54, %cst_21 {dimension_numbers = #tpu.dot_dimension_numbers<[1], [0], [0], [1], [0, 0, 1, 1], [], []>} : vector<6x15xbf16>, vector<15x1024xbf16>, vector<6x1024xf32> -> vector<6x1024xf32>
    %57 = arith.addf %38, %56 : vector<6x1024xf32>
    %cst_22 = arith.constant 0.000000e+00 : bf16
    %58 = vector.broadcast %cst_22 : bf16 to vector<3x96xbf16>
    %59 = vector.extract_strided_slice %2 {offsets = [0, 96], sizes = [3, 928], strides = [1, 1]} : vector<3x1024xbf16> to vector<3x928xbf16>
    %60 = tpu.concatenate %59, %58 in 1 : vector<3x928xbf16>, vector<3x96xbf16> -> vector<3x1024xbf16>
    %cst_23 = arith.constant 0.000000e+00 : bf16
    %61 = vector.broadcast %cst_23 : bf16 to vector<3x97xbf16>
    %62 = vector.extract_strided_slice %2 {offsets = [0, 97], sizes = [3, 927], strides = [1, 1]} : vector<3x1024xbf16> to vector<3x927xbf16>
    %63 = tpu.concatenate %62, %61 in 1 : vector<3x927xbf16>, vector<3x97xbf16> -> vector<3x1024xbf16>
    %cst_24 = arith.constant 0.000000e+00 : bf16
    %64 = vector.broadcast %cst_24 : bf16 to vector<3x98xbf16>
    %65 = vector.extract_strided_slice %2 {offsets = [0, 98], sizes = [3, 926], strides = [1, 1]} : vector<3x1024xbf16> to vector<3x926xbf16>
    %66 = tpu.concatenate %65, %64 in 1 : vector<3x926xbf16>, vector<3x98xbf16> -> vector<3x1024xbf16>
    %cst_25 = arith.constant 0.000000e+00 : bf16
    %67 = vector.broadcast %cst_25 : bf16 to vector<3x99xbf16>
    %68 = vector.extract_strided_slice %2 {offsets = [0, 99], sizes = [3, 925], strides = [1, 1]} : vector<3x1024xbf16> to vector<3x925xbf16>
    %69 = tpu.concatenate %68, %67 in 1 : vector<3x925xbf16>, vector<3x99xbf16> -> vector<3x1024xbf16>
    %cst_26 = arith.constant 0.000000e+00 : bf16
    %70 = vector.broadcast %cst_26 : bf16 to vector<3x100xbf16>
    %71 = vector.extract_strided_slice %2 {offsets = [0, 100], sizes = [3, 924], strides = [1, 1]} : vector<3x1024xbf16> to vector<3x924xbf16>
    %72 = tpu.concatenate %71, %70 in 1 : vector<3x924xbf16>, vector<3x100xbf16> -> vector<3x1024xbf16>
    %73 = tpu.concatenate %60, %63, %66, %69, %72 in 0 : vector<3x1024xbf16>, vector<3x1024xbf16>, vector<3x1024xbf16>, vector<3x1024xbf16>, vector<3x1024xbf16> -> vector<15x1024xbf16>
    %74 = vector.extract_strided_slice %3 {offsets = [0, 45], sizes = [6, 15], strides = [1, 1]} : vector<6x75xbf16> to vector<6x15xbf16>
    %cst_27 = arith.constant dense<0.000000e+00> : vector<6x1024xf32>
    %75 = tpu.matmul %74, %73, %cst_27 {dimension_numbers = #tpu.dot_dimension_numbers<[1], [0], [0], [1], [0, 0, 1, 1], [], []>} : vector<6x15xbf16>, vector<15x1024xbf16>, vector<6x1024xf32> -> vector<6x1024xf32>
    %76 = arith.addf %57, %75 : vector<6x1024xf32>
    %cst_28 = arith.constant 0.000000e+00 : bf16
    %77 = vector.broadcast %cst_28 : bf16 to vector<3x128xbf16>
    %78 = vector.extract_strided_slice %2 {offsets = [0, 128], sizes = [3, 896], strides = [1, 1]} : vector<3x1024xbf16> to vector<3x896xbf16>
    %79 = tpu.concatenate %78, %77 in 1 : vector<3x896xbf16>, vector<3x128xbf16> -> vector<3x1024xbf16>
    %cst_29 = arith.constant 0.000000e+00 : bf16
    %80 = vector.broadcast %cst_29 : bf16 to vector<3x129xbf16>
    %81 = vector.extract_strided_slice %2 {offsets = [0, 129], sizes = [3, 895], strides = [1, 1]} : vector<3x1024xbf16> to vector<3x895xbf16>
    %82 = tpu.concatenate %81, %80 in 1 : vector<3x895xbf16>, vector<3x129xbf16> -> vector<3x1024xbf16>
    %cst_30 = arith.constant 0.000000e+00 : bf16
    %83 = vector.broadcast %cst_30 : bf16 to vector<3x130xbf16>
    %84 = vector.extract_strided_slice %2 {offsets = [0, 130], sizes = [3, 894], strides = [1, 1]} : vector<3x1024xbf16> to vector<3x894xbf16>
    %85 = tpu.concatenate %84, %83 in 1 : vector<3x894xbf16>, vector<3x130xbf16> -> vector<3x1024xbf16>
    %cst_31 = arith.constant 0.000000e+00 : bf16
    %86 = vector.broadcast %cst_31 : bf16 to vector<3x131xbf16>
    %87 = vector.extract_strided_slice %2 {offsets = [0, 131], sizes = [3, 893], strides = [1, 1]} : vector<3x1024xbf16> to vector<3x893xbf16>
    %88 = tpu.concatenate %87, %86 in 1 : vector<3x893xbf16>, vector<3x131xbf16> -> vector<3x1024xbf16>
    %cst_32 = arith.constant 0.000000e+00 : bf16
    %89 = vector.broadcast %cst_32 : bf16 to vector<3x132xbf16>
    %90 = vector.extract_strided_slice %2 {offsets = [0, 132], sizes = [3, 892], strides = [1, 1]} : vector<3x1024xbf16> to vector<3x892xbf16>
    %91 = tpu.concatenate %90, %89 in 1 : vector<3x892xbf16>, vector<3x132xbf16> -> vector<3x1024xbf16>
    %92 = tpu.concatenate %79, %82, %85, %88, %91 in 0 : vector<3x1024xbf16>, vector<3x1024xbf16>, vector<3x1024xbf16>, vector<3x1024xbf16>, vector<3x1024xbf16> -> vector<15x1024xbf16>
    %93 = vector.extract_strided_slice %3 {offsets = [0, 60], sizes = [6, 15], strides = [1, 1]} : vector<6x75xbf16> to vector<6x15xbf16>
    %cst_33 = arith.constant dense<0.000000e+00> : vector<6x1024xf32>
    %94 = tpu.matmul %93, %92, %cst_33 {dimension_numbers = #tpu.dot_dimension_numbers<[1], [0], [0], [1], [0, 0, 1, 1], [], []>} : vector<6x15xbf16>, vector<15x1024xbf16>, vector<6x1024xf32> -> vector<6x1024xf32>
    %95 = arith.addf %76, %94 : vector<6x1024xf32>
    %96 = vector.broadcast %4 : vector<6x1xf32> to vector<6x1024xf32>
    %97 = arith.addf %95, %96 : vector<6x1024xf32>
    %cst_34 = arith.constant 0.000000e+00 : f32
    %98 = vector.broadcast %cst_34 : f32 to vector<6x1024xf32>
    %99 = arith.maximumf %97, %98 : vector<6x1024xf32>
    %cst_35 = arith.constant 0.000000e+00 : f32
    %100 = vector.broadcast %cst_35 : f32 to vector<6x1xf32>
    %101 = vector.extract_strided_slice %99 {offsets = [0, 1], sizes = [6, 1023], strides = [1, 1]} : vector<6x1024xf32> to vector<6x1023xf32>
    %102 = tpu.concatenate %101, %100 in 1 : vector<6x1023xf32>, vector<6x1xf32> -> vector<6x1024xf32>
    %103 = arith.maximumf %99, %102 : vector<6x1024xf32>
    %cst_36 = arith.constant 0.000000e+00 : f32
    %104 = vector.broadcast %cst_36 : f32 to vector<6x32xf32>
    %105 = vector.extract_strided_slice %99 {offsets = [0, 32], sizes = [6, 992], strides = [1, 1]} : vector<6x1024xf32> to vector<6x992xf32>
    %106 = tpu.concatenate %105, %104 in 1 : vector<6x992xf32>, vector<6x32xf32> -> vector<6x1024xf32>
    %cst_37 = arith.constant 0.000000e+00 : f32
    %107 = vector.broadcast %cst_37 : f32 to vector<6x33xf32>
    %108 = vector.extract_strided_slice %99 {offsets = [0, 33], sizes = [6, 991], strides = [1, 1]} : vector<6x1024xf32> to vector<6x991xf32>
    %109 = tpu.concatenate %108, %107 in 1 : vector<6x991xf32>, vector<6x33xf32> -> vector<6x1024xf32>
    %110 = arith.maximumf %106, %109 : vector<6x1024xf32>
    %111 = arith.maximumf %103, %110 : vector<6x1024xf32>
    %112 = arith.truncf %111 : vector<6x1024xf32> to vector<6x1024xbf16>
    %c0_38 = arith.constant 0 : index
    %c0_39 = arith.constant 0 : index
    %113 = vector.load %arg4[%c0_38, %c0_39] : memref<16x150xbf16, #tpu.memory_space<vmem>>, vector<16x150xbf16>
    %c0_40 = arith.constant 0 : index
    %c0_41 = arith.constant 0 : index
    %114 = vector.load %arg5[%c0_40, %c0_41] : memref<16x1xf32, #tpu.memory_space<vmem>>, vector<16x1xf32>
    %cst_42 = arith.constant 0.000000e+00 : bf16
    %115 = vector.broadcast %cst_42 : bf16 to vector<6x2xbf16>
    %116 = vector.extract_strided_slice %112 {offsets = [0, 2], sizes = [6, 1022], strides = [1, 1]} : vector<6x1024xbf16> to vector<6x1022xbf16>
    %117 = tpu.concatenate %116, %115 in 1 : vector<6x1022xbf16>, vector<6x2xbf16> -> vector<6x1024xbf16>
    %cst_43 = arith.constant 0.000000e+00 : bf16
    %118 = vector.broadcast %cst_43 : bf16 to vector<6x4xbf16>
    %119 = vector.extract_strided_slice %112 {offsets = [0, 4], sizes = [6, 1020], strides = [1, 1]} : vector<6x1024xbf16> to vector<6x1020xbf16>
    %120 = tpu.concatenate %119, %118 in 1 : vector<6x1020xbf16>, vector<6x4xbf16> -> vector<6x1024xbf16>
    %cst_44 = arith.constant 0.000000e+00 : bf16
    %121 = vector.broadcast %cst_44 : bf16 to vector<6x6xbf16>
    %122 = vector.extract_strided_slice %112 {offsets = [0, 6], sizes = [6, 1018], strides = [1, 1]} : vector<6x1024xbf16> to vector<6x1018xbf16>
    %123 = tpu.concatenate %122, %121 in 1 : vector<6x1018xbf16>, vector<6x6xbf16> -> vector<6x1024xbf16>
    %cst_45 = arith.constant 0.000000e+00 : bf16
    %124 = vector.broadcast %cst_45 : bf16 to vector<6x8xbf16>
    %125 = vector.extract_strided_slice %112 {offsets = [0, 8], sizes = [6, 1016], strides = [1, 1]} : vector<6x1024xbf16> to vector<6x1016xbf16>
    %126 = tpu.concatenate %125, %124 in 1 : vector<6x1016xbf16>, vector<6x8xbf16> -> vector<6x1024xbf16>
    %127 = tpu.concatenate %112, %117, %120, %123, %126 in 0 : vector<6x1024xbf16>, vector<6x1024xbf16>, vector<6x1024xbf16>, vector<6x1024xbf16>, vector<6x1024xbf16> -> vector<30x1024xbf16>
    %128 = vector.extract_strided_slice %113 {offsets = [0, 0], sizes = [16, 30], strides = [1, 1]} : vector<16x150xbf16> to vector<16x30xbf16>
    %cst_46 = arith.constant dense<0.000000e+00> : vector<16x1024xf32>
    %129 = tpu.matmul %128, %127, %cst_46 {dimension_numbers = #tpu.dot_dimension_numbers<[1], [0], [0], [1], [0, 0, 1, 1], [], []>} : vector<16x30xbf16>, vector<30x1024xbf16>, vector<16x1024xf32> -> vector<16x1024xf32>
    %cst_47 = arith.constant 0.000000e+00 : bf16
    %130 = vector.broadcast %cst_47 : bf16 to vector<6x64xbf16>
    %131 = vector.extract_strided_slice %112 {offsets = [0, 64], sizes = [6, 960], strides = [1, 1]} : vector<6x1024xbf16> to vector<6x960xbf16>
    %132 = tpu.concatenate %131, %130 in 1 : vector<6x960xbf16>, vector<6x64xbf16> -> vector<6x1024xbf16>
    %cst_48 = arith.constant 0.000000e+00 : bf16
    %133 = vector.broadcast %cst_48 : bf16 to vector<6x66xbf16>
    %134 = vector.extract_strided_slice %112 {offsets = [0, 66], sizes = [6, 958], strides = [1, 1]} : vector<6x1024xbf16> to vector<6x958xbf16>
    %135 = tpu.concatenate %134, %133 in 1 : vector<6x958xbf16>, vector<6x66xbf16> -> vector<6x1024xbf16>
    %cst_49 = arith.constant 0.000000e+00 : bf16
    %136 = vector.broadcast %cst_49 : bf16 to vector<6x68xbf16>
    %137 = vector.extract_strided_slice %112 {offsets = [0, 68], sizes = [6, 956], strides = [1, 1]} : vector<6x1024xbf16> to vector<6x956xbf16>
    %138 = tpu.concatenate %137, %136 in 1 : vector<6x956xbf16>, vector<6x68xbf16> -> vector<6x1024xbf16>
    %cst_50 = arith.constant 0.000000e+00 : bf16
    %139 = vector.broadcast %cst_50 : bf16 to vector<6x70xbf16>
    %140 = vector.extract_strided_slice %112 {offsets = [0, 70], sizes = [6, 954], strides = [1, 1]} : vector<6x1024xbf16> to vector<6x954xbf16>
    %141 = tpu.concatenate %140, %139 in 1 : vector<6x954xbf16>, vector<6x70xbf16> -> vector<6x1024xbf16>
    %cst_51 = arith.constant 0.000000e+00 : bf16
    %142 = vector.broadcast %cst_51 : bf16 to vector<6x72xbf16>
    %143 = vector.extract_strided_slice %112 {offsets = [0, 72], sizes = [6, 952], strides = [1, 1]} : vector<6x1024xbf16> to vector<6x952xbf16>
    %144 = tpu.concatenate %143, %142 in 1 : vector<6x952xbf16>, vector<6x72xbf16> -> vector<6x1024xbf16>
    %145 = tpu.concatenate %132, %135, %138, %141, %144 in 0 : vector<6x1024xbf16>, vector<6x1024xbf16>, vector<6x1024xbf16>, vector<6x1024xbf16>, vector<6x1024xbf16> -> vector<30x1024xbf16>
    %146 = vector.extract_strided_slice %113 {offsets = [0, 30], sizes = [16, 30], strides = [1, 1]} : vector<16x150xbf16> to vector<16x30xbf16>
    %cst_52 = arith.constant dense<0.000000e+00> : vector<16x1024xf32>
    %147 = tpu.matmul %146, %145, %cst_52 {dimension_numbers = #tpu.dot_dimension_numbers<[1], [0], [0], [1], [0, 0, 1, 1], [], []>} : vector<16x30xbf16>, vector<30x1024xbf16>, vector<16x1024xf32> -> vector<16x1024xf32>
    %148 = arith.addf %129, %147 : vector<16x1024xf32>
    %cst_53 = arith.constant 0.000000e+00 : bf16
    %149 = vector.broadcast %cst_53 : bf16 to vector<6x128xbf16>
    %150 = vector.extract_strided_slice %112 {offsets = [0, 128], sizes = [6, 896], strides = [1, 1]} : vector<6x1024xbf16> to vector<6x896xbf16>
    %151 = tpu.concatenate %150, %149 in 1 : vector<6x896xbf16>, vector<6x128xbf16> -> vector<6x1024xbf16>
    %cst_54 = arith.constant 0.000000e+00 : bf16
    %152 = vector.broadcast %cst_54 : bf16 to vector<6x130xbf16>
    %153 = vector.extract_strided_slice %112 {offsets = [0, 130], sizes = [6, 894], strides = [1, 1]} : vector<6x1024xbf16> to vector<6x894xbf16>
    %154 = tpu.concatenate %153, %152 in 1 : vector<6x894xbf16>, vector<6x130xbf16> -> vector<6x1024xbf16>
    %cst_55 = arith.constant 0.000000e+00 : bf16
    %155 = vector.broadcast %cst_55 : bf16 to vector<6x132xbf16>
    %156 = vector.extract_strided_slice %112 {offsets = [0, 132], sizes = [6, 892], strides = [1, 1]} : vector<6x1024xbf16> to vector<6x892xbf16>
    %157 = tpu.concatenate %156, %155 in 1 : vector<6x892xbf16>, vector<6x132xbf16> -> vector<6x1024xbf16>
    %cst_56 = arith.constant 0.000000e+00 : bf16
    %158 = vector.broadcast %cst_56 : bf16 to vector<6x134xbf16>
    %159 = vector.extract_strided_slice %112 {offsets = [0, 134], sizes = [6, 890], strides = [1, 1]} : vector<6x1024xbf16> to vector<6x890xbf16>
    %160 = tpu.concatenate %159, %158 in 1 : vector<6x890xbf16>, vector<6x134xbf16> -> vector<6x1024xbf16>
    %cst_57 = arith.constant 0.000000e+00 : bf16
    %161 = vector.broadcast %cst_57 : bf16 to vector<6x136xbf16>
    %162 = vector.extract_strided_slice %112 {offsets = [0, 136], sizes = [6, 888], strides = [1, 1]} : vector<6x1024xbf16> to vector<6x888xbf16>
    %163 = tpu.concatenate %162, %161 in 1 : vector<6x888xbf16>, vector<6x136xbf16> -> vector<6x1024xbf16>
    %164 = tpu.concatenate %151, %154, %157, %160, %163 in 0 : vector<6x1024xbf16>, vector<6x1024xbf16>, vector<6x1024xbf16>, vector<6x1024xbf16>, vector<6x1024xbf16> -> vector<30x1024xbf16>
    %165 = vector.extract_strided_slice %113 {offsets = [0, 60], sizes = [16, 30], strides = [1, 1]} : vector<16x150xbf16> to vector<16x30xbf16>
    %cst_58 = arith.constant dense<0.000000e+00> : vector<16x1024xf32>
    %166 = tpu.matmul %165, %164, %cst_58 {dimension_numbers = #tpu.dot_dimension_numbers<[1], [0], [0], [1], [0, 0, 1, 1], [], []>} : vector<16x30xbf16>, vector<30x1024xbf16>, vector<16x1024xf32> -> vector<16x1024xf32>
    %167 = arith.addf %148, %166 : vector<16x1024xf32>
    %cst_59 = arith.constant 0.000000e+00 : bf16
    %168 = vector.broadcast %cst_59 : bf16 to vector<6x192xbf16>
    %169 = vector.extract_strided_slice %112 {offsets = [0, 192], sizes = [6, 832], strides = [1, 1]} : vector<6x1024xbf16> to vector<6x832xbf16>
    %170 = tpu.concatenate %169, %168 in 1 : vector<6x832xbf16>, vector<6x192xbf16> -> vector<6x1024xbf16>
    %cst_60 = arith.constant 0.000000e+00 : bf16
    %171 = vector.broadcast %cst_60 : bf16 to vector<6x194xbf16>
    %172 = vector.extract_strided_slice %112 {offsets = [0, 194], sizes = [6, 830], strides = [1, 1]} : vector<6x1024xbf16> to vector<6x830xbf16>
    %173 = tpu.concatenate %172, %171 in 1 : vector<6x830xbf16>, vector<6x194xbf16> -> vector<6x1024xbf16>
    %cst_61 = arith.constant 0.000000e+00 : bf16
    %174 = vector.broadcast %cst_61 : bf16 to vector<6x196xbf16>
    %175 = vector.extract_strided_slice %112 {offsets = [0, 196], sizes = [6, 828], strides = [1, 1]} : vector<6x1024xbf16> to vector<6x828xbf16>
    %176 = tpu.concatenate %175, %174 in 1 : vector<6x828xbf16>, vector<6x196xbf16> -> vector<6x1024xbf16>
    %cst_62 = arith.constant 0.000000e+00 : bf16
    %177 = vector.broadcast %cst_62 : bf16 to vector<6x198xbf16>
    %178 = vector.extract_strided_slice %112 {offsets = [0, 198], sizes = [6, 826], strides = [1, 1]} : vector<6x1024xbf16> to vector<6x826xbf16>
    %179 = tpu.concatenate %178, %177 in 1 : vector<6x826xbf16>, vector<6x198xbf16> -> vector<6x1024xbf16>
    %cst_63 = arith.constant 0.000000e+00 : bf16
    %180 = vector.broadcast %cst_63 : bf16 to vector<6x200xbf16>
    %181 = vector.extract_strided_slice %112 {offsets = [0, 200], sizes = [6, 824], strides = [1, 1]} : vector<6x1024xbf16> to vector<6x824xbf16>
    %182 = tpu.concatenate %181, %180 in 1 : vector<6x824xbf16>, vector<6x200xbf16> -> vector<6x1024xbf16>
    %183 = tpu.concatenate %170, %173, %176, %179, %182 in 0 : vector<6x1024xbf16>, vector<6x1024xbf16>, vector<6x1024xbf16>, vector<6x1024xbf16>, vector<6x1024xbf16> -> vector<30x1024xbf16>
    %184 = vector.extract_strided_slice %113 {offsets = [0, 90], sizes = [16, 30], strides = [1, 1]} : vector<16x150xbf16> to vector<16x30xbf16>
    %cst_64 = arith.constant dense<0.000000e+00> : vector<16x1024xf32>
    %185 = tpu.matmul %184, %183, %cst_64 {dimension_numbers = #tpu.dot_dimension_numbers<[1], [0], [0], [1], [0, 0, 1, 1], [], []>} : vector<16x30xbf16>, vector<30x1024xbf16>, vector<16x1024xf32> -> vector<16x1024xf32>
    %186 = arith.addf %167, %185 : vector<16x1024xf32>
    %cst_65 = arith.constant 0.000000e+00 : bf16
    %187 = vector.broadcast %cst_65 : bf16 to vector<6x256xbf16>
    %188 = vector.extract_strided_slice %112 {offsets = [0, 256], sizes = [6, 768], strides = [1, 1]} : vector<6x1024xbf16> to vector<6x768xbf16>
    %189 = tpu.concatenate %188, %187 in 1 : vector<6x768xbf16>, vector<6x256xbf16> -> vector<6x1024xbf16>
    %cst_66 = arith.constant 0.000000e+00 : bf16
    %190 = vector.broadcast %cst_66 : bf16 to vector<6x258xbf16>
    %191 = vector.extract_strided_slice %112 {offsets = [0, 258], sizes = [6, 766], strides = [1, 1]} : vector<6x1024xbf16> to vector<6x766xbf16>
    %192 = tpu.concatenate %191, %190 in 1 : vector<6x766xbf16>, vector<6x258xbf16> -> vector<6x1024xbf16>
    %cst_67 = arith.constant 0.000000e+00 : bf16
    %193 = vector.broadcast %cst_67 : bf16 to vector<6x260xbf16>
    %194 = vector.extract_strided_slice %112 {offsets = [0, 260], sizes = [6, 764], strides = [1, 1]} : vector<6x1024xbf16> to vector<6x764xbf16>
    %195 = tpu.concatenate %194, %193 in 1 : vector<6x764xbf16>, vector<6x260xbf16> -> vector<6x1024xbf16>
    %cst_68 = arith.constant 0.000000e+00 : bf16
    %196 = vector.broadcast %cst_68 : bf16 to vector<6x262xbf16>
    %197 = vector.extract_strided_slice %112 {offsets = [0, 262], sizes = [6, 762], strides = [1, 1]} : vector<6x1024xbf16> to vector<6x762xbf16>
    %198 = tpu.concatenate %197, %196 in 1 : vector<6x762xbf16>, vector<6x262xbf16> -> vector<6x1024xbf16>
    %cst_69 = arith.constant 0.000000e+00 : bf16
    %199 = vector.broadcast %cst_69 : bf16 to vector<6x264xbf16>
    %200 = vector.extract_strided_slice %112 {offsets = [0, 264], sizes = [6, 760], strides = [1, 1]} : vector<6x1024xbf16> to vector<6x760xbf16>
    %201 = tpu.concatenate %200, %199 in 1 : vector<6x760xbf16>, vector<6x264xbf16> -> vector<6x1024xbf16>
    %202 = tpu.concatenate %189, %192, %195, %198, %201 in 0 : vector<6x1024xbf16>, vector<6x1024xbf16>, vector<6x1024xbf16>, vector<6x1024xbf16>, vector<6x1024xbf16> -> vector<30x1024xbf16>
    %203 = vector.extract_strided_slice %113 {offsets = [0, 120], sizes = [16, 30], strides = [1, 1]} : vector<16x150xbf16> to vector<16x30xbf16>
    %cst_70 = arith.constant dense<0.000000e+00> : vector<16x1024xf32>
    %204 = tpu.matmul %203, %202, %cst_70 {dimension_numbers = #tpu.dot_dimension_numbers<[1], [0], [0], [1], [0, 0, 1, 1], [], []>} : vector<16x30xbf16>, vector<30x1024xbf16>, vector<16x1024xf32> -> vector<16x1024xf32>
    %205 = arith.addf %186, %204 : vector<16x1024xf32>
    %206 = vector.broadcast %114 : vector<16x1xf32> to vector<16x1024xf32>
    %207 = arith.addf %205, %206 : vector<16x1024xf32>
    %cst_71 = arith.constant 0.000000e+00 : f32
    %208 = vector.broadcast %cst_71 : f32 to vector<16x1024xf32>
    %209 = arith.maximumf %207, %208 : vector<16x1024xf32>
    %cst_72 = arith.constant 0.000000e+00 : f32
    %210 = vector.broadcast %cst_72 : f32 to vector<16x2xf32>
    %211 = vector.extract_strided_slice %209 {offsets = [0, 2], sizes = [16, 1022], strides = [1, 1]} : vector<16x1024xf32> to vector<16x1022xf32>
    %212 = tpu.concatenate %211, %210 in 1 : vector<16x1022xf32>, vector<16x2xf32> -> vector<16x1024xf32>
    %213 = arith.maximumf %209, %212 : vector<16x1024xf32>
    %cst_73 = arith.constant 0.000000e+00 : f32
    %214 = vector.broadcast %cst_73 : f32 to vector<16x64xf32>
    %215 = vector.extract_strided_slice %209 {offsets = [0, 64], sizes = [16, 960], strides = [1, 1]} : vector<16x1024xf32> to vector<16x960xf32>
    %216 = tpu.concatenate %215, %214 in 1 : vector<16x960xf32>, vector<16x64xf32> -> vector<16x1024xf32>
    %cst_74 = arith.constant 0.000000e+00 : f32
    %217 = vector.broadcast %cst_74 : f32 to vector<16x66xf32>
    %218 = vector.extract_strided_slice %209 {offsets = [0, 66], sizes = [16, 958], strides = [1, 1]} : vector<16x1024xf32> to vector<16x958xf32>
    %219 = tpu.concatenate %218, %217 in 1 : vector<16x958xf32>, vector<16x66xf32> -> vector<16x1024xf32>
    %220 = arith.maximumf %216, %219 : vector<16x1024xf32>
    %221 = arith.maximumf %213, %220 : vector<16x1024xf32>
    %222 = arith.truncf %221 : vector<16x1024xf32> to vector<16x1024xbf16>
    %c0_75 = arith.constant 0 : index
    %c0_76 = arith.constant 0 : index
    %223 = vector.load %arg6[%c0_75, %c0_76] : memref<1024x128xbf16, #tpu.memory_space<vmem>>, vector<1024x128xbf16>
    %cst_77 = arith.constant dense<0.000000e+00> : vector<16x128xf32>
    %224 = tpu.matmul %222, %223, %cst_77 {dimension_numbers = #tpu.dot_dimension_numbers<[1], [0], [0], [1], [0, 0, 1, 1], [], []>} : vector<16x1024xbf16>, vector<1024x128xbf16>, vector<16x128xf32> -> vector<16x128xf32>
    %225 = arith.truncf %224 : vector<16x128xf32> to vector<16x128xbf16>
    %c0_78 = arith.constant 0 : index
    %c0_79 = arith.constant 0 : index
    %226 = vector.load %arg8[%c0_78, %c0_79] : memref<1x64xf32, #tpu.memory_space<vmem>>, vector<1x64xf32>
    %227 = vector.extract_strided_slice %225 {offsets = [0, 0], sizes = [1, 128], strides = [1, 1]} : vector<16x128xbf16> to vector<1x128xbf16>
    %c0_80 = arith.constant 0 : index
    %c0_81 = arith.constant 0 : index
    %c0_82 = arith.constant 0 : index
    %228 = vector.load %arg7[%c0_80, %c0_81, %c0_82] : memref<16x128x64xbf16, #tpu.memory_space<vmem>>, vector<1x128x64xbf16>
    %229 = vector.shape_cast %228 : vector<1x128x64xbf16> to vector<128x64xbf16>
    %cst_83 = arith.constant dense<0.000000e+00> : vector<1x64xf32>
    %230 = tpu.matmul %227, %229, %cst_83 {dimension_numbers = #tpu.dot_dimension_numbers<[1], [0], [0], [1], [0, 0, 1, 1], [], []>} : vector<1x128xbf16>, vector<128x64xbf16>, vector<1x64xf32> -> vector<1x64xf32>
    %231 = arith.addf %226, %230 : vector<1x64xf32>
    %232 = vector.extract_strided_slice %225 {offsets = [1, 0], sizes = [1, 128], strides = [1, 1]} : vector<16x128xbf16> to vector<1x128xbf16>
    %c1 = arith.constant 1 : index
    %c0_84 = arith.constant 0 : index
    %c0_85 = arith.constant 0 : index
    %233 = vector.load %arg7[%c1, %c0_84, %c0_85] : memref<16x128x64xbf16, #tpu.memory_space<vmem>>, vector<1x128x64xbf16>
    %234 = vector.shape_cast %233 : vector<1x128x64xbf16> to vector<128x64xbf16>
    %cst_86 = arith.constant dense<0.000000e+00> : vector<1x64xf32>
    %235 = tpu.matmul %232, %234, %cst_86 {dimension_numbers = #tpu.dot_dimension_numbers<[1], [0], [0], [1], [0, 0, 1, 1], [], []>} : vector<1x128xbf16>, vector<128x64xbf16>, vector<1x64xf32> -> vector<1x64xf32>
    %236 = arith.addf %231, %235 : vector<1x64xf32>
    %237 = vector.extract_strided_slice %225 {offsets = [2, 0], sizes = [1, 128], strides = [1, 1]} : vector<16x128xbf16> to vector<1x128xbf16>
    %c2 = arith.constant 2 : index
    %c0_87 = arith.constant 0 : index
    %c0_88 = arith.constant 0 : index
    %238 = vector.load %arg7[%c2, %c0_87, %c0_88] : memref<16x128x64xbf16, #tpu.memory_space<vmem>>, vector<1x128x64xbf16>
    %239 = vector.shape_cast %238 : vector<1x128x64xbf16> to vector<128x64xbf16>
    %cst_89 = arith.constant dense<0.000000e+00> : vector<1x64xf32>
    %240 = tpu.matmul %237, %239, %cst_89 {dimension_numbers = #tpu.dot_dimension_numbers<[1], [0], [0], [1], [0, 0, 1, 1], [], []>} : vector<1x128xbf16>, vector<128x64xbf16>, vector<1x64xf32> -> vector<1x64xf32>
    %241 = arith.addf %236, %240 : vector<1x64xf32>
    %242 = vector.extract_strided_slice %225 {offsets = [3, 0], sizes = [1, 128], strides = [1, 1]} : vector<16x128xbf16> to vector<1x128xbf16>
    %c3 = arith.constant 3 : index
    %c0_90 = arith.constant 0 : index
    %c0_91 = arith.constant 0 : index
    %243 = vector.load %arg7[%c3, %c0_90, %c0_91] : memref<16x128x64xbf16, #tpu.memory_space<vmem>>, vector<1x128x64xbf16>
    %244 = vector.shape_cast %243 : vector<1x128x64xbf16> to vector<128x64xbf16>
    %cst_92 = arith.constant dense<0.000000e+00> : vector<1x64xf32>
    %245 = tpu.matmul %242, %244, %cst_92 {dimension_numbers = #tpu.dot_dimension_numbers<[1], [0], [0], [1], [0, 0, 1, 1], [], []>} : vector<1x128xbf16>, vector<128x64xbf16>, vector<1x64xf32> -> vector<1x64xf32>
    %246 = arith.addf %241, %245 : vector<1x64xf32>
    %247 = vector.extract_strided_slice %225 {offsets = [4, 0], sizes = [1, 128], strides = [1, 1]} : vector<16x128xbf16> to vector<1x128xbf16>
    %c4 = arith.constant 4 : index
    %c0_93 = arith.constant 0 : index
    %c0_94 = arith.constant 0 : index
    %248 = vector.load %arg7[%c4, %c0_93, %c0_94] : memref<16x128x64xbf16, #tpu.memory_space<vmem>>, vector<1x128x64xbf16>
    %249 = vector.shape_cast %248 : vector<1x128x64xbf16> to vector<128x64xbf16>
    %cst_95 = arith.constant dense<0.000000e+00> : vector<1x64xf32>
    %250 = tpu.matmul %247, %249, %cst_95 {dimension_numbers = #tpu.dot_dimension_numbers<[1], [0], [0], [1], [0, 0, 1, 1], [], []>} : vector<1x128xbf16>, vector<128x64xbf16>, vector<1x64xf32> -> vector<1x64xf32>
    %251 = arith.addf %246, %250 : vector<1x64xf32>
    %252 = vector.extract_strided_slice %225 {offsets = [5, 0], sizes = [1, 128], strides = [1, 1]} : vector<16x128xbf16> to vector<1x128xbf16>
    %c5 = arith.constant 5 : index
    %c0_96 = arith.constant 0 : index
    %c0_97 = arith.constant 0 : index
    %253 = vector.load %arg7[%c5, %c0_96, %c0_97] : memref<16x128x64xbf16, #tpu.memory_space<vmem>>, vector<1x128x64xbf16>
    %254 = vector.shape_cast %253 : vector<1x128x64xbf16> to vector<128x64xbf16>
    %cst_98 = arith.constant dense<0.000000e+00> : vector<1x64xf32>
    %255 = tpu.matmul %252, %254, %cst_98 {dimension_numbers = #tpu.dot_dimension_numbers<[1], [0], [0], [1], [0, 0, 1, 1], [], []>} : vector<1x128xbf16>, vector<128x64xbf16>, vector<1x64xf32> -> vector<1x64xf32>
    %256 = arith.addf %251, %255 : vector<1x64xf32>
    %257 = vector.extract_strided_slice %225 {offsets = [6, 0], sizes = [1, 128], strides = [1, 1]} : vector<16x128xbf16> to vector<1x128xbf16>
    %c6 = arith.constant 6 : index
    %c0_99 = arith.constant 0 : index
    %c0_100 = arith.constant 0 : index
    %258 = vector.load %arg7[%c6, %c0_99, %c0_100] : memref<16x128x64xbf16, #tpu.memory_space<vmem>>, vector<1x128x64xbf16>
    %259 = vector.shape_cast %258 : vector<1x128x64xbf16> to vector<128x64xbf16>
    %cst_101 = arith.constant dense<0.000000e+00> : vector<1x64xf32>
    %260 = tpu.matmul %257, %259, %cst_101 {dimension_numbers = #tpu.dot_dimension_numbers<[1], [0], [0], [1], [0, 0, 1, 1], [], []>} : vector<1x128xbf16>, vector<128x64xbf16>, vector<1x64xf32> -> vector<1x64xf32>
    %261 = arith.addf %256, %260 : vector<1x64xf32>
    %262 = vector.extract_strided_slice %225 {offsets = [7, 0], sizes = [1, 128], strides = [1, 1]} : vector<16x128xbf16> to vector<1x128xbf16>
    %c7 = arith.constant 7 : index
    %c0_102 = arith.constant 0 : index
    %c0_103 = arith.constant 0 : index
    %263 = vector.load %arg7[%c7, %c0_102, %c0_103] : memref<16x128x64xbf16, #tpu.memory_space<vmem>>, vector<1x128x64xbf16>
    %264 = vector.shape_cast %263 : vector<1x128x64xbf16> to vector<128x64xbf16>
    %cst_104 = arith.constant dense<0.000000e+00> : vector<1x64xf32>
    %265 = tpu.matmul %262, %264, %cst_104 {dimension_numbers = #tpu.dot_dimension_numbers<[1], [0], [0], [1], [0, 0, 1, 1], [], []>} : vector<1x128xbf16>, vector<128x64xbf16>, vector<1x64xf32> -> vector<1x64xf32>
    %266 = arith.addf %261, %265 : vector<1x64xf32>
    %267 = vector.extract_strided_slice %225 {offsets = [8, 0], sizes = [1, 128], strides = [1, 1]} : vector<16x128xbf16> to vector<1x128xbf16>
    %c8 = arith.constant 8 : index
    %c0_105 = arith.constant 0 : index
    %c0_106 = arith.constant 0 : index
    %268 = vector.load %arg7[%c8, %c0_105, %c0_106] : memref<16x128x64xbf16, #tpu.memory_space<vmem>>, vector<1x128x64xbf16>
    %269 = vector.shape_cast %268 : vector<1x128x64xbf16> to vector<128x64xbf16>
    %cst_107 = arith.constant dense<0.000000e+00> : vector<1x64xf32>
    %270 = tpu.matmul %267, %269, %cst_107 {dimension_numbers = #tpu.dot_dimension_numbers<[1], [0], [0], [1], [0, 0, 1, 1], [], []>} : vector<1x128xbf16>, vector<128x64xbf16>, vector<1x64xf32> -> vector<1x64xf32>
    %271 = arith.addf %266, %270 : vector<1x64xf32>
    %272 = vector.extract_strided_slice %225 {offsets = [9, 0], sizes = [1, 128], strides = [1, 1]} : vector<16x128xbf16> to vector<1x128xbf16>
    %c9 = arith.constant 9 : index
    %c0_108 = arith.constant 0 : index
    %c0_109 = arith.constant 0 : index
    %273 = vector.load %arg7[%c9, %c0_108, %c0_109] : memref<16x128x64xbf16, #tpu.memory_space<vmem>>, vector<1x128x64xbf16>
    %274 = vector.shape_cast %273 : vector<1x128x64xbf16> to vector<128x64xbf16>
    %cst_110 = arith.constant dense<0.000000e+00> : vector<1x64xf32>
    %275 = tpu.matmul %272, %274, %cst_110 {dimension_numbers = #tpu.dot_dimension_numbers<[1], [0], [0], [1], [0, 0, 1, 1], [], []>} : vector<1x128xbf16>, vector<128x64xbf16>, vector<1x64xf32> -> vector<1x64xf32>
    %276 = arith.addf %271, %275 : vector<1x64xf32>
    %277 = vector.extract_strided_slice %225 {offsets = [10, 0], sizes = [1, 128], strides = [1, 1]} : vector<16x128xbf16> to vector<1x128xbf16>
    %c10 = arith.constant 10 : index
    %c0_111 = arith.constant 0 : index
    %c0_112 = arith.constant 0 : index
    %278 = vector.load %arg7[%c10, %c0_111, %c0_112] : memref<16x128x64xbf16, #tpu.memory_space<vmem>>, vector<1x128x64xbf16>
    %279 = vector.shape_cast %278 : vector<1x128x64xbf16> to vector<128x64xbf16>
    %cst_113 = arith.constant dense<0.000000e+00> : vector<1x64xf32>
    %280 = tpu.matmul %277, %279, %cst_113 {dimension_numbers = #tpu.dot_dimension_numbers<[1], [0], [0], [1], [0, 0, 1, 1], [], []>} : vector<1x128xbf16>, vector<128x64xbf16>, vector<1x64xf32> -> vector<1x64xf32>
    %281 = arith.addf %276, %280 : vector<1x64xf32>
    %282 = vector.extract_strided_slice %225 {offsets = [11, 0], sizes = [1, 128], strides = [1, 1]} : vector<16x128xbf16> to vector<1x128xbf16>
    %c11 = arith.constant 11 : index
    %c0_114 = arith.constant 0 : index
    %c0_115 = arith.constant 0 : index
    %283 = vector.load %arg7[%c11, %c0_114, %c0_115] : memref<16x128x64xbf16, #tpu.memory_space<vmem>>, vector<1x128x64xbf16>
    %284 = vector.shape_cast %283 : vector<1x128x64xbf16> to vector<128x64xbf16>
    %cst_116 = arith.constant dense<0.000000e+00> : vector<1x64xf32>
    %285 = tpu.matmul %282, %284, %cst_116 {dimension_numbers = #tpu.dot_dimension_numbers<[1], [0], [0], [1], [0, 0, 1, 1], [], []>} : vector<1x128xbf16>, vector<128x64xbf16>, vector<1x64xf32> -> vector<1x64xf32>
    %286 = arith.addf %281, %285 : vector<1x64xf32>
    %287 = vector.extract_strided_slice %225 {offsets = [12, 0], sizes = [1, 128], strides = [1, 1]} : vector<16x128xbf16> to vector<1x128xbf16>
    %c12 = arith.constant 12 : index
    %c0_117 = arith.constant 0 : index
    %c0_118 = arith.constant 0 : index
    %288 = vector.load %arg7[%c12, %c0_117, %c0_118] : memref<16x128x64xbf16, #tpu.memory_space<vmem>>, vector<1x128x64xbf16>
    %289 = vector.shape_cast %288 : vector<1x128x64xbf16> to vector<128x64xbf16>
    %cst_119 = arith.constant dense<0.000000e+00> : vector<1x64xf32>
    %290 = tpu.matmul %287, %289, %cst_119 {dimension_numbers = #tpu.dot_dimension_numbers<[1], [0], [0], [1], [0, 0, 1, 1], [], []>} : vector<1x128xbf16>, vector<128x64xbf16>, vector<1x64xf32> -> vector<1x64xf32>
    %291 = arith.addf %286, %290 : vector<1x64xf32>
    %292 = vector.extract_strided_slice %225 {offsets = [13, 0], sizes = [1, 128], strides = [1, 1]} : vector<16x128xbf16> to vector<1x128xbf16>
    %c13 = arith.constant 13 : index
    %c0_120 = arith.constant 0 : index
    %c0_121 = arith.constant 0 : index
    %293 = vector.load %arg7[%c13, %c0_120, %c0_121] : memref<16x128x64xbf16, #tpu.memory_space<vmem>>, vector<1x128x64xbf16>
    %294 = vector.shape_cast %293 : vector<1x128x64xbf16> to vector<128x64xbf16>
    %cst_122 = arith.constant dense<0.000000e+00> : vector<1x64xf32>
    %295 = tpu.matmul %292, %294, %cst_122 {dimension_numbers = #tpu.dot_dimension_numbers<[1], [0], [0], [1], [0, 0, 1, 1], [], []>} : vector<1x128xbf16>, vector<128x64xbf16>, vector<1x64xf32> -> vector<1x64xf32>
    %296 = arith.addf %291, %295 : vector<1x64xf32>
    %297 = vector.extract_strided_slice %225 {offsets = [14, 0], sizes = [1, 128], strides = [1, 1]} : vector<16x128xbf16> to vector<1x128xbf16>
    %c14 = arith.constant 14 : index
    %c0_123 = arith.constant 0 : index
    %c0_124 = arith.constant 0 : index
    %298 = vector.load %arg7[%c14, %c0_123, %c0_124] : memref<16x128x64xbf16, #tpu.memory_space<vmem>>, vector<1x128x64xbf16>
    %299 = vector.shape_cast %298 : vector<1x128x64xbf16> to vector<128x64xbf16>
    %cst_125 = arith.constant dense<0.000000e+00> : vector<1x64xf32>
    %300 = tpu.matmul %297, %299, %cst_125 {dimension_numbers = #tpu.dot_dimension_numbers<[1], [0], [0], [1], [0, 0, 1, 1], [], []>} : vector<1x128xbf16>, vector<128x64xbf16>, vector<1x64xf32> -> vector<1x64xf32>
    %301 = arith.addf %296, %300 : vector<1x64xf32>
    %302 = vector.extract_strided_slice %225 {offsets = [15, 0], sizes = [1, 128], strides = [1, 1]} : vector<16x128xbf16> to vector<1x128xbf16>
    %c15 = arith.constant 15 : index
    %c0_126 = arith.constant 0 : index
    %c0_127 = arith.constant 0 : index
    %303 = vector.load %arg7[%c15, %c0_126, %c0_127] : memref<16x128x64xbf16, #tpu.memory_space<vmem>>, vector<1x128x64xbf16>
    %304 = vector.shape_cast %303 : vector<1x128x64xbf16> to vector<128x64xbf16>
    %cst_128 = arith.constant dense<0.000000e+00> : vector<1x64xf32>
    %305 = tpu.matmul %302, %304, %cst_128 {dimension_numbers = #tpu.dot_dimension_numbers<[1], [0], [0], [1], [0, 0, 1, 1], [], []>} : vector<1x128xbf16>, vector<128x64xbf16>, vector<1x64xf32> -> vector<1x64xf32>
    %306 = arith.addf %301, %305 : vector<1x64xf32>
    %cst_129 = arith.constant 0.000000e+00 : f32
    %307 = vector.broadcast %cst_129 : f32 to vector<1x64xf32>
    %308 = arith.maximumf %306, %307 : vector<1x64xf32>
    %309 = arith.truncf %308 : vector<1x64xf32> to vector<1x64xbf16>
    %c0_130 = arith.constant 0 : index
    %c0_131 = arith.constant 0 : index
    %310 = vector.load %arg9[%c0_130, %c0_131] : memref<64x16xbf16, #tpu.memory_space<vmem>>, vector<64x16xbf16>
    %cst_132 = arith.constant dense<0.000000e+00> : vector<1x16xf32>
    %311 = tpu.matmul %309, %310, %cst_132 {dimension_numbers = #tpu.dot_dimension_numbers<[1], [0], [0], [1], [0, 0, 1, 1], [], []>} : vector<1x64xbf16>, vector<64x16xbf16>, vector<1x16xf32> -> vector<1x16xf32>
    %c0_133 = arith.constant 0 : index
    %c0_134 = arith.constant 0 : index
    %312 = vector.load %arg10[%c0_133, %c0_134] : memref<1x16xf32, #tpu.memory_space<vmem>>, vector<1x16xf32>
    %313 = arith.addf %311, %312 : vector<1x16xf32>
    %cst_135 = arith.constant 0.000000e+00 : f32
    %314 = vector.broadcast %cst_135 : f32 to vector<1x16xf32>
    %315 = arith.maximumf %313, %314 : vector<1x16xf32>
    %316 = arith.truncf %315 : vector<1x16xf32> to vector<1x16xbf16>
    %c0_136 = arith.constant 0 : index
    %c0_137 = arith.constant 0 : index
    %317 = vector.load %arg11[%c0_136, %c0_137] : memref<16x10xbf16, #tpu.memory_space<vmem>>, vector<16x10xbf16>
    %cst_138 = arith.constant dense<0.000000e+00> : vector<1x10xf32>
    %318 = tpu.matmul %316, %317, %cst_138 {dimension_numbers = #tpu.dot_dimension_numbers<[1], [0], [0], [1], [0, 0, 1, 1], [], []>} : vector<1x16xbf16>, vector<16x10xbf16>, vector<1x10xf32> -> vector<1x10xf32>
    %c0_139 = arith.constant 0 : index
    %c0_140 = arith.constant 0 : index
    %319 = vector.load %arg12[%c0_139, %c0_140] : memref<1x10xf32, #tpu.memory_space<vmem>>, vector<1x10xf32>
    %320 = arith.addf %318, %319 : vector<1x10xf32>
    %c0_141 = arith.constant 0 : index
    %c0_142 = arith.constant 0 : index
    %c0_143 = arith.constant 0 : index
    %321 = vector.load %arg13[%c0_141, %c0_142, %c0_143] : memref<1x1x10xf32, #tpu.memory_space<vmem>>, vector<1x1x10xf32>
    %322 = vector.shape_cast %321 : vector<1x1x10xf32> to vector<1x10xf32>
    %323 = vector.shape_cast %320 : vector<1x10xf32> to vector<1x1x10xf32>
    tpu.vector_store %arg13[%c0_141, %c0_142, %c0_143], %323 {strides = array<i32>} : memref<1x1x10xf32, #tpu.memory_space<vmem>>, vector<1x1x10xf32>,
    return
  }
  func.func @transform_0(%arg0: i32) -> (i32, i32, i32) {
    %c0_i32 = arith.constant 0 : i32
    %c0_i32_0 = arith.constant 0 : i32
    %c0_i32_1 = arith.constant 0 : i32
    return %arg0, %c0_i32, %c0_i32_0 : i32, i32, i32
  }
  func.func @transform_1(%arg0: i32) -> (i32, i32) {
    %c0_i32 = arith.constant 0 : i32
    %c0_i32_0 = arith.constant 0 : i32
    %c0_i32_1 = arith.constant 0 : i32
    return %c0_i32, %c0_i32_0 : i32, i32
  }
  func.func @transform_2(%arg0: i32) -> (i32, i32) {
    %c0_i32 = arith.constant 0 : i32
    %c0_i32_0 = arith.constant 0 : i32
    %c0_i32_1 = arith.constant 0 : i32
    return %c0_i32, %c0_i32_0 : i32, i32
  }
  func.func @transform_3(%arg0: i32) -> (i32, i32) {
    %c0_i32 = arith.constant 0 : i32
    %c0_i32_0 = arith.constant 0 : i32
    %c0_i32_1 = arith.constant 0 : i32
    return %c0_i32, %c0_i32_0 : i32, i32
  }
  func.func @transform_4(%arg0: i32) -> (i32, i32) {
    %c0_i32 = arith.constant 0 : i32
    %c0_i32_0 = arith.constant 0 : i32
    %c0_i32_1 = arith.constant 0 : i32
    return %c0_i32, %c0_i32_0 : i32, i32
  }
  func.func @transform_5(%arg0: i32) -> (i32, i32) {
    %c0_i32 = arith.constant 0 : i32
    %c0_i32_0 = arith.constant 0 : i32
    %c0_i32_1 = arith.constant 0 : i32
    return %c0_i32, %c0_i32_0 : i32, i32
  }
  func.func @transform_6(%arg0: i32) -> (i32, i32, i32) {
    %c0_i32 = arith.constant 0 : i32
    %c0_i32_0 = arith.constant 0 : i32
    %c0_i32_1 = arith.constant 0 : i32
    %c0_i32_2 = arith.constant 0 : i32
    return %c0_i32, %c0_i32_0, %c0_i32_1 : i32, i32, i32
  }
  func.func @transform_7(%arg0: i32) -> (i32, i32) {
    %c0_i32 = arith.constant 0 : i32
    %c0_i32_0 = arith.constant 0 : i32
    %c0_i32_1 = arith.constant 0 : i32
    return %c0_i32, %c0_i32_0 : i32, i32
  }
  func.func @transform_8(%arg0: i32) -> (i32, i32) {
    %c0_i32 = arith.constant 0 : i32
    %c0_i32_0 = arith.constant 0 : i32
    %c0_i32_1 = arith.constant 0 : i32
    return %c0_i32, %c0_i32_0 : i32, i32
  }
  func.func @transform_9(%arg0: i32) -> (i32, i32) {
    %c0_i32 = arith.constant 0 : i32
    %c0_i32_0 = arith.constant 0 : i32
    %c0_i32_1 = arith.constant 0 : i32
    return %c0_i32, %c0_i32_0 : i32, i32
  }
  func.func @transform_10(%arg0: i32) -> (i32, i32) {
    %c0_i32 = arith.constant 0 : i32
    %c0_i32_0 = arith.constant 0 : i32
    %c0_i32_1 = arith.constant 0 : i32
    return %c0_i32, %c0_i32_0 : i32, i32
  }
  func.func @transform_11(%arg0: i32) -> (i32, i32) {
    %c0_i32 = arith.constant 0 : i32
    %c0_i32_0 = arith.constant 0 : i32
    %c0_i32_1 = arith.constant 0 : i32
    return %c0_i32, %c0_i32_0 : i32, i32
  }
  func.func @transform_12(%arg0: i32) -> (i32, i32, i32) {
    %c0_i32 = arith.constant 0 : i32
    %c0_i32_0 = arith.constant 0 : i32
    %c0_i32_1 = arith.constant 0 : i32
    return %arg0, %c0_i32, %c0_i32_0 : i32, i32, i32
  }
}

</mosaic_0001>

<llo_original>
// kernel: cnn32_forward.1
$region0: #{cnn32_forward.1}
  #allocation0 [shape = 'u32[]', space=smem, size = 0x4, offset = 0x4, fixed_abs, tag = 'smem constant byte address 0x4 - core index']
  #allocation1 [shape = 'u32[144,128]{1,0:T(1,128)}', space=vmem, size = 0x12000, scoped, tag = 'internal scratch']
  %s0 = inlined_call_operand.vmem [shape: f32[2,3,1024], index: 0, kind: input, shape index: {}]
  %s1 = inlined_call_operand.vmem [shape: bf16[6,75], index: 1, kind: input, shape index: {}]
  %s2 = inlined_call_operand.vmem [shape: f32[6,1], index: 2, kind: input, shape index: {}]
  %s3 = inlined_call_operand.vmem [shape: bf16[16,150], index: 3, kind: input, shape index: {}]
  %s4 = inlined_call_operand.vmem [shape: f32[16,1], index: 4, kind: input, shape index: {}]
  %s5 = inlined_call_operand.vmem [shape: bf16[1024,128], index: 5, kind: input, shape index: {}]
  %s6 = inlined_call_operand.vmem [shape: bf16[16,128,64], index: 6, kind: input, shape index: {}]
  %s7 = inlined_call_operand.vmem [shape: f32[1,64], index: 7, kind: input, shape index: {}]
  %s8 = inlined_call_operand.vmem [shape: bf16[64,16], index: 8, kind: input, shape index: {}]
  %s9 = inlined_call_operand.vmem [shape: f32[1,16], index: 9, kind: input, shape index: {}]
  %s10 = inlined_call_operand.vmem [shape: bf16[16,10], index: 10, kind: input, shape index: {}]
  %s11 = inlined_call_operand.vmem [shape: f32[1,10], index: 11, kind: input, shape index: {}]
  %s12 = inlined_call_operand.hbm [shape: f32[2,1,10], index: 12, kind: output, shape index: {}]
  %s13 = sld [smem:[#allocation0]]
  $region81: #{cnn32_forward.1} parent=0
    _
  %s15 = ssub.s32 1, %s13
  %s16 = scalar_select 0, %s15, %s13
  $region1: #{cnn32_forward.1} parent=0
    #allocation2 [shape = 'u8[1024]{0}', space=vmem, size = 0x400, scoped, tag = 'output window, operand 0']
    #allocation3 [shape = 's32[2]{0}', space=sflag, size = 0x8, scoped, tag = 'scoped memory for cnn32_forward.1']
    %17 = vsyncpa [#allocation3], 0
    %s18 = scalar_lea.sflag [#allocation3], 1
    %19 = vsyncpa %s18, 0
    loop: start=0, step=1, limit=4
    $region2: #{cnn32_forward.1} parent=1 // loop_pre_header
      _
    $region3: #{cnn32_forward.1} parent=1 // loop_header
      %s21 = sphi 0, %s25
      %p22 = scmp.ge.s32.totalorder %s21, 4
      %s31 = sphi 0, %s33
      %s34 = sphi 0, %s31
      %s35 = sphi 0, %s34
      %s51 = sphi 0, %s35
      %s55 = sphi 0, %s55
      %s57 = sphi 0, %s55
      %s58 = sphi 0, %s57
      %s72 = sphi 0, %s58
      %s76 = sphi 0, %s76
      %s78 = sphi 0, %s76
      %s79 = sphi 0, %s78
      %s93 = sphi 0, %s79
      %s97 = sphi 0, %s97
      %s99 = sphi 0, %s97
      %s100 = sphi 0, %s99
      %s114 = sphi 0, %s100
      %s118 = sphi 0, %s118
      %s120 = sphi 0, %s118
      %s121 = sphi 0, %s120
      %s135 = sphi 0, %s121
      %s139 = sphi 0, %s139
      %s141 = sphi 0, %s139
      %s142 = sphi 0, %s141
      %s156 = sphi 0, %s142
      %s160 = sphi 0, %s160
      %s162 = sphi 0, %s160
      %s163 = sphi 0, %s162
      %s177 = sphi 0, %s163
      %s181 = sphi 0, %s181
      %s183 = sphi 0, %s181
      %s184 = sphi 0, %s183
      %s198 = sphi 0, %s184
      %s202 = sphi 0, %s202
      %s204 = sphi 0, %s202
      %s205 = sphi 0, %s204
      %s219 = sphi 0, %s205
      %s223 = sphi 0, %s223
      %s225 = sphi 0, %s223
      %s226 = sphi 0, %s225
      %s240 = sphi 0, %s226
      %s244 = sphi 0, %s244
      %s246 = sphi 0, %s244
      %s247 = sphi 0, %s246
      %s261 = sphi 0, %s247
      %s265 = sphi 0, %s265
      %s267 = sphi 0, %s265
      %s268 = sphi 0, %s267
      %s282 = sphi 0, %s268
      %s288 = sphi 0, %s290
      %s291 = sphi 0, %s288
      %s292 = sphi 0, %s291
      %s308 = sphi 0, %s292
    $region4: #{cnn32_forward.1} parent=1 // loop_header_branch
      %24 = sbr.rel (%p22) target = $region8
    $region5: #{cnn32_forward.1} parent=1 // loop_body
      %s26 = ssub.s32 %s21, 1
      %s27 = ssub.s32 %s21, 2
      %s28 = sadd.s32 %s21, 1
      %s29 = ssub.s32 %s21, %s28
      %p30 = scmp.eq.s32.totalorder %s29, 0
      %s32 = sadd.s32 %s31, 1
      %s33 = scalar_select %p30, %s31, %s32
      %p36 = pneg %p30
      %p37 = scmp.eq.s32.totalorder %s21, 1
      %p38 = por %p36, %p37
      %p39 = scmp.ne.s32.totalorder %s31, %s34
      %p40 = scmp.eq.s32.totalorder %s21, 0
      %p41 = por %p39, %p40
      %p42 = scmp.ne.s32.totalorder %s31, %s34
      %p43 = scmp.eq.s32.totalorder %s26, 1
      %p44 = por %p42, %p43
      %p45 = scmp.ne.s32.totalorder %s34, %s35
      %p46 = scmp.eq.s32.totalorder %s26, 0
      %p47 = por %p45, %p46
      %p48 = scmp.ne.s32.totalorder %s34, %s35
      %p49 = scmp.eq.s32.totalorder %s27, 1
      %p50 = por %p48, %p49
      %p52 = scmp.ne.s32.totalorder %s35, %s51
      %p53 = scmp.eq.s32.totalorder %s27, 0
      %p54 = por %p52, %p53
      %s56 = sadd.s32 %s55, 1
      %p59 = scmp.eq.s32.totalorder %s21, 1
      %p60 = scmp.ne.s32.totalorder %s55, %s57
      %p61 = scmp.eq.s32.totalorder %s21, 0
      %p62 = por %p60, %p61
      %p63 = scmp.ne.s32.totalorder %s55, %s57
      %p64 = scmp.eq.s32.totalorder %s26, 1
      %p65 = por %p63, %p64
      %p66 = scmp.ne.s32.totalorder %s57, %s58
      %p67 = scmp.eq.s32.totalorder %s26, 0
      %p68 = por %p66, %p67
      %p69 = scmp.ne.s32.totalorder %s57, %s58
      %p70 = scmp.eq.s32.totalorder %s27, 1
      %p71 = por %p69, %p70
      %p73 = scmp.ne.s32.totalorder %s58, %s72
      %p74 = scmp.eq.s32.totalorder %s27, 0
      %p75 = por %p73, %p74
      %s77 = sadd.s32 %s76, 1
      %p80 = scmp.eq.s32.totalorder %s21, 1
      %p81 = scmp.ne.s32.totalorder %s76, %s78
      %p82 = scmp.eq.s32.totalorder %s21, 0
      %p83 = por %p81, %p82
      %p84 = scmp.ne.s32.totalorder %s76, %s78
      %p85 = scmp.eq.s32.totalorder %s26, 1
      %p86 = por %p84, %p85
      %p87 = scmp.ne.s32.totalorder %s78, %s79
      %p88 = scmp.eq.s32.totalorder %s26, 0
      %p89 = por %p87, %p88
      %p90 = scmp.ne.s32.totalorder %s78, %s79
      %p91 = scmp.eq.s32.totalorder %s27, 1
      %p92 = por %p90, %p91
      %p94 = scmp.ne.s32.totalorder %s79, %s93
      %p95 = scmp.eq.s32.totalorder %s27, 0
      %p96 = por %p94, %p95
      %s98 = sadd.s32 %s97, 1
      %p101 = scmp.eq.s32.totalorder %s21, 1
      %p102 = scmp.ne.s32.totalorder %s97, %s99
      %p103 = scmp.eq.s32.totalorder %s21, 0
      %p104 = por %p102, %p103
      %p105 = scmp.ne.s32.totalorder %s97, %s99
      %p106 = scmp.eq.s32.totalorder %s26, 1
      %p107 = por %p105, %p106
      %p108 = scmp.ne.s32.totalorder %s99, %s100
      %p109 = scmp.eq.s32.totalorder %s26, 0
      %p110 = por %p108, %p109
      %p111 = scmp.ne.s32.totalorder %s99, %s100
      %p112 = scmp.eq.s32.totalorder %s27, 1
      %p113 = por %p111, %p112
      %p115 = scmp.ne.s32.totalorder %s100, %s114
      %p116 = scmp.eq.s32.totalorder %s27, 0
      %p117 = por %p115, %p116
      %s119 = sadd.s32 %s118, 1
      %p122 = scmp.eq.s32.totalorder %s21, 1
      %p123 = scmp.ne.s32.totalorder %s118, %s120
      %p124 = scmp.eq.s32.totalorder %s21, 0
      %p125 = por %p123, %p124
      %p126 = scmp.ne.s32.totalorder %s118, %s120
      %p127 = scmp.eq.s32.totalorder %s26, 1
      %p128 = por %p126, %p127
      %p129 = scmp.ne.s32.totalorder %s120, %s121
      %p130 = scmp.eq.s32.totalorder %s26, 0
      %p131 = por %p129, %p130
      %p132 = scmp.ne.s32.totalorder %s120, %s121
      %p133 = scmp.eq.s32.totalorder %s27, 1
      %p134 = por %p132, %p133
      %p136 = scmp.ne.s32.totalorder %s121, %s135
      %p137 = scmp.eq.s32.totalorder %s27, 0
      %p138 = por %p136, %p137
      %s140 = sadd.s32 %s139, 1
      %p143 = scmp.eq.s32.totalorder %s21, 1
      %p144 = scmp.ne.s32.totalorder %s139, %s141
      %p145 = scmp.eq.s32.totalorder %s21, 0
      %p146 = por %p144, %p145
      %p147 = scmp.ne.s32.totalorder %s139, %s141
      %p148 = scmp.eq.s32.totalorder %s26, 1
      %p149 = por %p147, %p148
      %p150 = scmp.ne.s32.totalorder %s141, %s142
      %p151 = scmp.eq.s32.totalorder %s26, 0
      %p152 = por %p150, %p151
      %p153 = scmp.ne.s32.totalorder %s141, %s142
      %p154 = scmp.eq.s32.totalorder %s27, 1
      %p155 = por %p153, %p154
      %p157 = scmp.ne.s32.totalorder %s142, %s156
      %p158 = scmp.eq.s32.totalorder %s27, 0
      %p159 = por %p157, %p158
      %s161 = sadd.s32 %s160, 1
      %p164 = scmp.eq.s32.totalorder %s21, 1
      %p165 = scmp.ne.s32.totalorder %s160, %s162
      %p166 = scmp.eq.s32.totalorder %s21, 0
      %p167 = por %p165, %p166
      %p168 = scmp.ne.s32.totalorder %s160, %s162
      %p169 = scmp.eq.s32.totalorder %s26, 1
      %p170 = por %p168, %p169
      %p171 = scmp.ne.s32.totalorder %s162, %s163
      %p172 = scmp.eq.s32.totalorder %s26, 0
      %p173 = por %p171, %p172
      %p174 = scmp.ne.s32.totalorder %s162, %s163
      %p175 = scmp.eq.s32.totalorder %s27, 1
      %p176 = por %p174, %p175
      %p178 = scmp.ne.s32.totalorder %s163, %s177
      %p179 = scmp.eq.s32.totalorder %s27, 0
      %p180 = por %p178, %p179
      %s182 = sadd.s32 %s181, 1
      %p185 = scmp.eq.s32.totalorder %s21, 1
      %p186 = scmp.ne.s32.totalorder %s181, %s183
      %p187 = scmp.eq.s32.totalorder %s21, 0
      %p188 = por %p186, %p187
      %p189 = scmp.ne.s32.totalorder %s181, %s183
      %p190 = scmp.eq.s32.totalorder %s26, 1
      %p191 = por %p189, %p190
      %p192 = scmp.ne.s32.totalorder %s183, %s184
      %p193 = scmp.eq.s32.totalorder %s26, 0
      %p194 = por %p192, %p193
      %p195 = scmp.ne.s32.totalorder %s183, %s184
      %p196 = scmp.eq.s32.totalorder %s27, 1
      %p197 = por %p195, %p196
      %p199 = scmp.ne.s32.totalorder %s184, %s198
      %p200 = scmp.eq.s32.totalorder %s27, 0
      %p201 = por %p199, %p200
      %s203 = sadd.s32 %s202, 1
      %p206 = scmp.eq.s32.totalorder %s21, 1
      %p207 = scmp.ne.s32.totalorder %s202, %s204
      %p208 = scmp.eq.s32.totalorder %s21, 0
      %p209 = por %p207, %p208
      %p210 = scmp.ne.s32.totalorder %s202, %s204
      %p211 = scmp.eq.s32.totalorder %s26, 1
      %p212 = por %p210, %p211
      %p213 = scmp.ne.s32.totalorder %s204, %s205
      %p214 = scmp.eq.s32.totalorder %s26, 0
      %p215 = por %p213, %p214
      %p216 = scmp.ne.s32.totalorder %s204, %s205
      %p217 = scmp.eq.s32.totalorder %s27, 1
      %p218 = por %p216, %p217
      %p220 = scmp.ne.s32.totalorder %s205, %s219
      %p221 = scmp.eq.s32.totalorder %s27, 0
      %p222 = por %p220, %p221
      %s224 = sadd.s32 %s223, 1
      %p227 = scmp.eq.s32.totalorder %s21, 1
      %p228 = scmp.ne.s32.totalorder %s223, %s225
      %p229 = scmp.eq.s32.totalorder %s21, 0
      %p230 = por %p228, %p229
      %p231 = scmp.ne.s32.totalorder %s223, %s225
      %p232 = scmp.eq.s32.totalorder %s26, 1
      %p233 = por %p231, %p232
      %p234 = scmp.ne.s32.totalorder %s225, %s226
      %p235 = scmp.eq.s32.totalorder %s26, 0
      %p236 = por %p234, %p235
      %p237 = scmp.ne.s32.totalorder %s225, %s226
      %p238 = scmp.eq.s32.totalorder %s27, 1
      %p239 = por %p237, %p238
      %p241 = scmp.ne.s32.totalorder %s226, %s240
      %p242 = scmp.eq.s32.totalorder %s27, 0
      %p243 = por %p241, %p242
      %s245 = sadd.s32 %s244, 1
      %p248 = scmp.eq.s32.totalorder %s21, 1
      %p249 = scmp.ne.s32.totalorder %s244, %s246
      %p250 = scmp.eq.s32.totalorder %s21, 0
      %p251 = por %p249, %p250
      %p252 = scmp.ne.s32.totalorder %s244, %s246
      %p253 = scmp.eq.s32.totalorder %s26, 1
      %p254 = por %p252, %p253
      %p255 = scmp.ne.s32.totalorder %s246, %s247
      %p256 = scmp.eq.s32.totalorder %s26, 0
      %p257 = por %p255, %p256
      %p258 = scmp.ne.s32.totalorder %s246, %s247
      %p259 = scmp.eq.s32.totalorder %s27, 1
      %p260 = por %p258, %p259
      %p262 = scmp.ne.s32.totalorder %s247, %s261
      %p263 = scmp.eq.s32.totalorder %s27, 0
      %p264 = por %p262, %p263
      %s266 = sadd.s32 %s265, 1
      %p269 = scmp.eq.s32.totalorder %s21, 1
      %p270 = scmp.ne.s32.totalorder %s265, %s267
      %p271 = scmp.eq.s32.totalorder %s21, 0
      %p272 = por %p270, %p271
      %p273 = scmp.ne.s32.totalorder %s265, %s267
      %p274 = scmp.eq.s32.totalorder %s26, 1
      %p275 = por %p273, %p274
      %p276 = scmp.ne.s32.totalorder %s267, %s268
      %p277 = scmp.eq.s32.totalorder %s26, 0
      %p278 = por %p276, %p277
      %p279 = scmp.ne.s32.totalorder %s267, %s268
      %p280 = scmp.eq.s32.totalorder %s27, 1
      %p281 = por %p279, %p280
      %p283 = scmp.ne.s32.totalorder %s268, %s282
      %p284 = scmp.eq.s32.totalorder %s27, 0
      %p285 = por %p283, %p284
      %s286 = ssub.s32 %s21, %s28
      %p287 = scmp.eq.s32.totalorder %s286, 0
      %s289 = sadd.s32 %s288, 1
      %s290 = scalar_select %p287, %s288, %s289
      %p293 = pneg %p287
      %p294 = scmp.eq.s32.totalorder %s21, 1
      %p295 = por %p293, %p294
      %p296 = scmp.ne.s32.totalorder %s288, %s291
      %p297 = scmp.eq.s32.totalorder %s21, 0
      %p298 = por %p296, %p297
      %p299 = scmp.ne.s32.totalorder %s288, %s291
      %p300 = scmp.eq.s32.totalorder %s26, 1
      %p301 = por %p299, %p300
      %p302 = scmp.ne.s32.totalorder %s291, %s292
      %p303 = scmp.eq.s32.totalorder %s26, 0
      %p304 = por %p302, %p303
      %p305 = scmp.ne.s32.totalorder %s291, %s292
      %p306 = scmp.eq.s32.totalorder %s27, 1
      %p307 = por %p305, %p306
      %p309 = scmp.ne.s32.totalorder %s292, %s308
      %p310 = scmp.eq.s32.totalorder %s27, 0
      %p311 = por %p309, %p310
      %p312 = scmp.le.s32.totalorder 1, %s21
      %p313 = scmp.lt.s32.totalorder %s21, 3
      %p314 = pnand %p312, %p313
      %p315 = pneg %p314
      // Predicated region
      $region9: #{cnn32_forward.1} parent=5 // pred_check
        _
      $region10: #{cnn32_forward.1} parent=5 // pred_check_branch
        %317 = sbr.rel (%p314) target = $region12
      $region11: #{cnn32_forward.1} parent=5 // pred_region
        %s318 = ssub.s32 %s21, 1
        // Predicated region
        $region13: #{cnn32_forward.1} parent=11 // pred_check
          %p319 = pneg %p68
        $region14: #{cnn32_forward.1} parent=11 // pred_check_branch
          %321 = sbr.rel (%p319) target = $region16
        $region15: #{cnn32_forward.1} parent=11 // pred_region
          _
        $region16: #{cnn32_forward.1} parent=11 // pred_fallthru
          _
        // Predicated region
        $region17: #{cnn32_forward.1} parent=11 // pred_check
          %p322 = pneg %p89
        $region18: #{cnn32_forward.1} parent=11 // pred_check_branch
          %324 = sbr.rel (%p322) target = $region20
        $region19: #{cnn32_forward.1} parent=11 // pred_region
          _
        $region20: #{cnn32_forward.1} parent=11 // pred_fallthru
          _
        // Predicated region
        $region21: #{cnn32_forward.1} parent=11 // pred_check
          %p325 = pneg %p110
        $region22: #{cnn32_forward.1} parent=11 // pred_check_branch
          %327 = sbr.rel (%p325) target = $region24
        $region23: #{cnn32_forward.1} parent=11 // pred_region
          _
        $region24: #{cnn32_forward.1} parent=11 // pred_fallthru
          _
        // Predicated region
        $region25: #{cnn32_forward.1} parent=11 // pred_check
          %p328 = pneg %p131
        $region26: #{cnn32_forward.1} parent=11 // pred_check_branch
          %330 = sbr.rel (%p328) target = $region28
        $region27: #{cnn32_forward.1} parent=11 // pred_region
          _
        $region28: #{cnn32_forward.1} parent=11 // pred_fallthru
          _
        // Predicated region
        $region29: #{cnn32_forward.1} parent=11 // pred_check
          %p331 = pneg %p152
        $region30: #{cnn32_forward.1} parent=11 // pred_check_branch
          %333 = sbr.rel (%p331) target = $region32
        $region31: #{cnn32_forward.1} parent=11 // pred_region
          _
        $region32: #{cnn32_forward.1} parent=11 // pred_fallthru
          _
        // Predicated region
        $region33: #{cnn32_forward.1} parent=11 // pred_check
          %p334 = pneg %p173
        $region34: #{cnn32_forward.1} parent=11 // pred_check_branch
          %336 = sbr.rel (%p334) target = $region36
        $region35: #{cnn32_forward.1} parent=11 // pred_region
          _
        $region36: #{cnn32_forward.1} parent=11 // pred_fallthru
          _
        // Predicated region
        $region37: #{cnn32_forward.1} parent=11 // pred_check
          %p337 = pneg %p194
        $region38: #{cnn32_forward.1} parent=11 // pred_check_branch
          %339 = sbr.rel (%p337) target = $region40
        $region39: #{cnn32_forward.1} parent=11 // pred_region
          _
        $region40: #{cnn32_forward.1} parent=11 // pred_fallthru
          _
        // Predicated region
        $region41: #{cnn32_forward.1} parent=11 // pred_check
          %p340 = pneg %p215
        $region42: #{cnn32_forward.1} parent=11 // pred_check_branch
          %342 = sbr.rel (%p340) target = $region44
        $region43: #{cnn32_forward.1} parent=11 // pred_region
          _
        $region44: #{cnn32_forward.1} parent=11 // pred_fallthru
          _
        // Predicated region
        $region45: #{cnn32_forward.1} parent=11 // pred_check
          %p343 = pneg %p236
        $region46: #{cnn32_forward.1} parent=11 // pred_check_branch
          %345 = sbr.rel (%p343) target = $region48
        $region47: #{cnn32_forward.1} parent=11 // pred_region
          _
        $region48: #{cnn32_forward.1} parent=11 // pred_fallthru
          _
        // Predicated region
        $region49: #{cnn32_forward.1} parent=11 // pred_check
          %p346 = pneg %p257
        $region50: #{cnn32_forward.1} parent=11 // pred_check_branch
          %348 = sbr.rel (%p346) target = $region52
        $region51: #{cnn32_forward.1} parent=11 // pred_region
          _
        $region52: #{cnn32_forward.1} parent=11 // pred_fallthru
          _
        // Predicated region
        $region53: #{cnn32_forward.1} parent=11 // pred_check
          %p349 = pneg %p278
        $region54: #{cnn32_forward.1} parent=11 // pred_check_branch
          %351 = sbr.rel (%p349) target = $region56
        $region55: #{cnn32_forward.1} parent=11 // pred_region
          _
        $region56: #{cnn32_forward.1} parent=11 // pred_fallthru
          _
      $region12: #{cnn32_forward.1} parent=5 // pred_fallthru
        _
      %p352 = scmp.lt.s32.totalorder %s21, 2
      // Predicated region
      $region57: #{cnn32_forward.1} parent=5 // pred_check
        %p353 = pneg %p352
      $region58: #{cnn32_forward.1} parent=5 // pred_check_branch
        %355 = sbr.rel (%p353) target = $region60
      $region59: #{cnn32_forward.1} parent=5 // pred_region
        // Predicated region
        $region61: #{cnn32_forward.1} parent=59 // pred_check
          %p356 = pneg %p41
        $region62: #{cnn32_forward.1} parent=59 // pred_check_branch
          %358 = sbr.rel (%p356) target = $region64
        $region63: #{cnn32_forward.1} parent=59 // pred_region
          %p359 = scmp.lt.s32.totalorder %s21, 1
          %s360 = scalar_select %p359, %s21, 1
          %s361 = smul.addr %s360, 8
          %s362 = smul.addr %s361, 4
          %s363 = scalar_lea.vmem %s0, %s362
        $region64: #{cnn32_forward.1} parent=59 // pred_fallthru
          _
      $region60: #{cnn32_forward.1} parent=5 // pred_fallthru
        _
      %p364 = scmp.le.s32.totalorder 1, %s21
      %p365 = scmp.lt.s32.totalorder %s21, 3
      %p366 = pnand %p364, %p365
      %p367 = pneg %p366
      // Predicated region
      $region65: #{cnn32_forward.1} parent=5 // pred_check
        _
      $region66: #{cnn32_forward.1} parent=5 // pred_check_branch
        %369 = sbr.rel (%p366) target = $region68
      $region67: #{cnn32_forward.1} parent=5 // pred_region
        %s370 = ssub.s32 %s21, 1
        %p371 = scmp.lt.s32.totalorder %s26, 1
        %s372 = scalar_select %p371, %s26, 1
        %s373 = smul.addr %s372, 8
        %s374 = smul.addr %s373, 4
        %s375 = scalar_lea.vmem %s0, %s374
        %p376 = pneg %p47
        %p377 = pneg %p44
        %p378 = pneg %p68
        %p379 = pneg %p65
        %p380 = pneg %p89
        %p381 = pneg %p86
        %p382 = pneg %p110
        %p383 = pneg %p107
        %p384 = pneg %p131
        %p385 = pneg %p128
        %p386 = pneg %p152
        %p387 = pneg %p149
        %p388 = pneg %p173
        %p389 = pneg %p170
        %p390 = pneg %p194
        %p391 = pneg %p191
        %p392 = pneg %p215
        %p393 = pneg %p212
        %p394 = pneg %p236
        %p395 = pneg %p233
        %p396 = pneg %p257
        %p397 = pneg %p254
        %p398 = pneg %p278
        %p399 = pneg %p275
        %p400 = pneg %p304
        %p401 = pneg %p301
        %s402 = sand.u32 %s291, 1
        %s403 = scalar_lea.sflag [#allocation3], %s402
        %s404 = sand.u32 %s291, 1
        %s405 = scalar_lea.vmem [#allocation2], %s404
        %p406 = scmp.lt.s32.totalorder %s26, 1
        %s407 = scalar_select %p406, %s26, 1
        %s408 = smul.addr %s407, 8
        %s409 = smul.addr %s408, 4
        %s410 = scalar_lea.vmem %s0, %s409
        %v412 = vld [vmem:[%s410] sm:$0x77]
        %v413 = vld [vmem:[%s410 + $0x8] sm:$0x77]
        %v414 = vld [vmem:[%s410 + $0x10] sm:$0x77]
        %v415 = vld [vmem:[%s410 + $0x18] sm:$0x77]
        %v420 = vcombine.high %v412, %v412
        %v421 = vcombine.high %v413, %v413
        %v422 = vcombine.high %v414, %v414
        %v423 = vcombine.high %v415, %v415
        %v428 = vpack.c.bf16 %v412, %v412
        %v429 = vpack.c.bf16 %v420, %v420
        %v430 = vpack.c.bf16 %v413, %v413
        %v431 = vpack.c.bf16 %v421, %v421
        %v432 = vpack.c.bf16 %v414, %v414
        %v433 = vpack.c.bf16 %v422, %v422
        %v434 = vpack.c.bf16 %v415, %v415
        %v435 = vpack.c.bf16 %v423, %v423
        %v436 = vld [vmem:[%s1] sm:$0x7]
        %v437 = vld [vmem:[%s2] sm:$0x3f]
        %446 = vrot.lane.b32.xlu0 %v428, 127
        %v447 = vpop.permute.xlu0 %446
        %448 = vrot.lane.b32.xlu0 %v429, 127
        %v449 = vpop.permute.xlu0 %448
        %450 = vrot.lane.b32.xlu0 %v430, 127
        %v451 = vpop.permute.xlu0 %450
        %452 = vrot.lane.b32.xlu0 %v431, 127
        %v453 = vpop.permute.xlu0 %452
        %454 = vrot.lane.b32.xlu0 %v432, 127
        %v455 = vpop.permute.xlu0 %454
        %456 = vrot.lane.b32.xlu0 %v433, 127
        %v457 = vpop.permute.xlu0 %456
        %458 = vrot.lane.b32.xlu0 %v434, 127
        %v459 = vpop.permute.xlu0 %458
        %460 = vrot.lane.b32.xlu0 %v435, 127
        %v461 = vpop.permute.xlu0 %460
        %vm462 = vcmask 1039360
        %v463 = vsel %vm462, %v447, %v449
        %v464 = vsel %vm462, %v449, %v451
        %v465 = vsel %vm462, %v451, %v453
        %v466 = vsel %vm462, %v453, %v455
        %v467 = vsel %vm462, %v455, %v457
        %v468 = vsel %vm462, %v457, %v459
        %v469 = vsel %vm462, %v459, %v461
        %vm470 = vcmask 1039360
        %v473 = vsel %vm470, %v461, 0
        %474 = vrot.lane.b32.xlu0 %v428, 126
        %v475 = vpop.permute.xlu0 %474
        %476 = vrot.lane.b32.xlu0 %v429, 126
        %v477 = vpop.permute.xlu0 %476
        %478 = vrot.lane.b32.xlu0 %v430, 126
        %v479 = vpop.permute.xlu0 %478
        %480 = vrot.lane.b32.xlu0 %v431, 126
        %v481 = vpop.permute.xlu0 %480
        %482 = vrot.lane.b32.xlu0 %v432, 126
        %v483 = vpop.permute.xlu0 %482
        %484 = vrot.lane.b32.xlu0 %v433, 126
        %v485 = vpop.permute.xlu0 %484
        %486 = vrot.lane.b32.xlu0 %v434, 126
        %v487 = vpop.permute.xlu0 %486
        %488 = vrot.lane.b32.xlu0 %v435, 126
        %v489 = vpop.permute.xlu0 %488
        %vm490 = vcmask 1031168
        %v491 = vsel %vm490, %v475, %v477
        %v492 = vsel %vm490, %v477, %v479
        %v493 = vsel %vm490, %v479, %v481
        %v494 = vsel %vm490, %v481, %v483
        %v495 = vsel %vm490, %v483, %v485
        %v496 = vsel %vm490, %v485, %v487
        %v497 = vsel %vm490, %v487, %v489
        %vm498 = vcmask 1031168
        %v500 = vsel %vm498, %v489, 0
        %501 = vrot.lane.b32.xlu0 %v428, 125
        %v502 = vpop.permute.xlu0 %501
        %503 = vrot.lane.b32.xlu0 %v429, 125
        %v504 = vpop.permute.xlu0 %503
        %505 = vrot.lane.b32.xlu0 %v430, 125
        %v506 = vpop.permute.xlu0 %505
        %507 = vrot.lane.b32.xlu0 %v431, 125
        %v508 = vpop.permute.xlu0 %507
        %509 = vrot.lane.b32.xlu0 %v432, 125
        %v510 = vpop.permute.xlu0 %509
        %511 = vrot.lane.b32.xlu0 %v433, 125
        %v512 = vpop.permute.xlu0 %511
        %513 = vrot.lane.b32.xlu0 %v434, 125
        %v514 = vpop.permute.xlu0 %513
        %515 = vrot.lane.b32.xlu0 %v435, 125
        %v516 = vpop.permute.xlu0 %515
        %vm517 = vcmask 1022976
        %v518 = vsel %vm517, %v502, %v504
        %v519 = vsel %vm517, %v504, %v506
        %v520 = vsel %vm517, %v506, %v508
        %v521 = vsel %vm517, %v508, %v510
        %v522 = vsel %vm517, %v510, %v512
        %v523 = vsel %vm517, %v512, %v514
        %v524 = vsel %vm517, %v514, %v516
        %vm525 = vcmask 1022976
        %v527 = vsel %vm525, %v516, 0
        %528 = vrot.lane.b32.xlu0 %v428, 124
        %v529 = vpop.permute.xlu0 %528
        %530 = vrot.lane.b32.xlu0 %v429, 124
        %v531 = vpop.permute.xlu0 %530
        %532 = vrot.lane.b32.xlu0 %v430, 124
        %v533 = vpop.permute.xlu0 %532
        %534 = vrot.lane.b32.xlu0 %v431, 124
        %v535 = vpop.permute.xlu0 %534
        %536 = vrot.lane.b32.xlu0 %v432, 124
        %v537 = vpop.permute.xlu0 %536
        %538 = vrot.lane.b32.xlu0 %v433, 124
        %v539 = vpop.permute.xlu0 %538
        %540 = vrot.lane.b32.xlu0 %v434, 124
        %v541 = vpop.permute.xlu0 %540
        %542 = vrot.lane.b32.xlu0 %v435, 124
        %v543 = vpop.permute.xlu0 %542
        %vm544 = vcmask 1014784
        %v545 = vsel %vm544, %v529, %v531
        %v546 = vsel %vm544, %v531, %v533
        %v547 = vsel %vm544, %v533, %v535
        %v548 = vsel %vm544, %v535, %v537
        %v549 = vsel %vm544, %v537, %v539
        %v550 = vsel %vm544, %v539, %v541
        %v551 = vsel %vm544, %v541, %v543
        %vm552 = vcmask 1014784
        %v554 = vsel %vm552, %v543, 0
        %v556 = vshrl.u32 %v463, 16
        %v558 = vrot.slane %v556, 6
        %v559 = vshll.u32 %v463, 16
        %v561 = vrot.slane %v559, 7
        %v562 = vor.u32 %v558, %v561
        %v564 = vshrl.u32 %v464, 16
        %v566 = vrot.slane %v564, 6
        %v567 = vshll.u32 %v464, 16
        %v569 = vrot.slane %v567, 7
        %v570 = vor.u32 %v566, %v569
        %v572 = vshrl.u32 %v465, 16
        %v574 = vrot.slane %v572, 6
        %v575 = vshll.u32 %v465, 16
        %v577 = vrot.slane %v575, 7
        %v578 = vor.u32 %v574, %v577
        %v580 = vshrl.u32 %v466, 16
        %v582 = vrot.slane %v580, 6
        %v583 = vshll.u32 %v466, 16
        %v585 = vrot.slane %v583, 7
        %v586 = vor.u32 %v582, %v585
        %v588 = vshrl.u32 %v467, 16
        %v590 = vrot.slane %v588, 6
        %v591 = vshll.u32 %v467, 16
        %v593 = vrot.slane %v591, 7
        %v594 = vor.u32 %v590, %v593
        %v596 = vshrl.u32 %v468, 16
        %v598 = vrot.slane %v596, 6
        %v599 = vshll.u32 %v468, 16
        %v601 = vrot.slane %v599, 7
        %v602 = vor.u32 %v598, %v601
        %v604 = vshrl.u32 %v469, 16
        %v606 = vrot.slane %v604, 6
        %v607 = vshll.u32 %v469, 16
        %v609 = vrot.slane %v607, 7
        %v610 = vor.u32 %v606, %v609
        %v611 = vshrl.u32 %v473, 16
        %v613 = vrot.slane %v611, 6
        %v614 = vshll.u32 %v473, 16
        %v616 = vrot.slane %v614, 7
        %v617 = vor.u32 %v613, %v616
        %v627 = vrot.slane %v491, 5
        %v628 = vrot.slane %v492, 5
        %v629 = vrot.slane %v493, 5
        %v630 = vrot.slane %v494, 5
        %v631 = vrot.slane %v495, 5
        %v632 = vrot.slane %v496, 5
        %v633 = vrot.slane %v497, 5
        %v634 = vrot.slane %v500, 5
        %v636 = vshrl.u32 %v518, 16
        %v638 = vrot.slane %v636, 3
        %v639 = vshll.u32 %v518, 16
        %v641 = vrot.slane %v639, 4
        %v642 = vor.u32 %v638, %v641
        %v644 = vshrl.u32 %v519, 16
        %v646 = vrot.slane %v644, 3
        %v647 = vshll.u32 %v519, 16
        %v649 = vrot.slane %v647, 4
        %v650 = vor.u32 %v646, %v649
        %v652 = vshrl.u32 %v520, 16
        %v654 = vrot.slane %v652, 3
        %v655 = vshll.u32 %v520, 16
        %v657 = vrot.slane %v655, 4
        %v658 = vor.u32 %v654, %v657
        %v660 = vshrl.u32 %v521, 16
        %v662 = vrot.slane %v660, 3
        %v663 = vshll.u32 %v521, 16
        %v665 = vrot.slane %v663, 4
        %v666 = vor.u32 %v662, %v665
        %v668 = vshrl.u32 %v522, 16
        %v670 = vrot.slane %v668, 3
        %v671 = vshll.u32 %v522, 16
        %v673 = vrot.slane %v671, 4
        %v674 = vor.u32 %v670, %v673
        %v676 = vshrl.u32 %v523, 16
        %v678 = vrot.slane %v676, 3
        %v679 = vshll.u32 %v523, 16
        %v681 = vrot.slane %v679, 4
        %v682 = vor.u32 %v678, %v681
        %v684 = vshrl.u32 %v524, 16
        %v686 = vrot.slane %v684, 3
        %v687 = vshll.u32 %v524, 16
        %v689 = vrot.slane %v687, 4
        %v690 = vor.u32 %v686, %v689
        %v691 = vshrl.u32 %v527, 16
        %v693 = vrot.slane %v691, 3
        %v694 = vshll.u32 %v527, 16
        %v696 = vrot.slane %v694, 4
        %v697 = vor.u32 %v693, %v696
        %v707 = vrot.slane %v545, 2
        %v708 = vrot.slane %v546, 2
        %v709 = vrot.slane %v547, 2
        %v710 = vrot.slane %v548, 2
        %v711 = vrot.slane %v549, 2
        %v712 = vrot.slane %v550, 2
        %v713 = vrot.slane %v551, 2
        %v714 = vrot.slane %v554, 2
        %vm715 = vcmask 1041408
        %vm716 = vsmask.f32 1280
        %vm717 = vmand %vm715, %vm716
        %v718 = vsel %vm717, %v428, %v562
        %v719 = vsel %vm717, %v429, %v570
        %v720 = vsel %vm717, %v430, %v578
        %v721 = vsel %vm717, %v431, %v586
        %v722 = vsel %vm717, %v432, %v594
        %v723 = vsel %vm717, %v433, %v602
        %v724 = vsel %vm717, %v434, %v610
        %v725 = vsel %vm717, %v435, %v617
        %vm726 = vcmask 1042432
        %v729 = vsel %vm726, %v718, %v627
        %v733 = vsel %vm726, %v719, %v628
        %v737 = vsel %vm726, %v720, %v629
        %v741 = vsel %vm726, %v721, %v630
        %v745 = vsel %vm726, %v722, %v631
        %v749 = vsel %vm726, %v723, %v632
        %v753 = vsel %vm726, %v724, %v633
        %v757 = vsel %vm726, %v725, %v634
        %vm759 = vcmask 1044480
        %vm760 = vsmask.f32 4352
        %vm761 = vmand %vm759, %vm760
        %v762 = vsel %vm761, %v729, %v642
        %v763 = vsel %vm761, %v733, %v650
        %v764 = vsel %vm761, %v737, %v658
        %v765 = vsel %vm761, %v741, %v666
        %v766 = vsel %vm761, %v745, %v674
        %v767 = vsel %vm761, %v749, %v682
        %v768 = vsel %vm761, %v753, %v690
        %v769 = vsel %vm761, %v757, %v697
        %vm770 = vcmask 1045504
        %v773 = vsel %vm770, %v762, %v707
        %v776 = vsel %vm770, %v763, %v708
        %v779 = vsel %vm770, %v764, %v709
        %v782 = vsel %vm770, %v765, %v710
        %v785 = vsel %vm770, %v766, %v711
        %v788 = vsel %vm770, %v767, %v712
        %v791 = vsel %vm770, %v768, %v713
        %v794 = vsel %vm770, %v769, %v714
        %795 = vrot.lane.b32.xlu0 %v428, 96
        %v796 = vpop.permute.xlu0 %795
        %797 = vrot.lane.b32.xlu0 %v429, 96
        %v798 = vpop.permute.xlu0 %797
        %799 = vrot.lane.b32.xlu0 %v430, 96
        %v800 = vpop.permute.xlu0 %799
        %801 = vrot.lane.b32.xlu0 %v431, 96
        %v802 = vpop.permute.xlu0 %801
        %803 = vrot.lane.b32.xlu0 %v432, 96
        %v804 = vpop.permute.xlu0 %803
        %805 = vrot.lane.b32.xlu0 %v433, 96
        %v806 = vpop.permute.xlu0 %805
        %807 = vrot.lane.b32.xlu0 %v434, 96
        %v808 = vpop.permute.xlu0 %807
        %809 = vrot.lane.b32.xlu0 %v435, 96
        %v810 = vpop.permute.xlu0 %809
        %vm811 = vcmask 785408
        %v812 = vsel %vm811, %v796, %v798
        %v813 = vsel %vm811, %v798, %v800
        %v814 = vsel %vm811, %v800, %v802
        %v815 = vsel %vm811, %v802, %v804
        %v816 = vsel %vm811, %v804, %v806
        %v817 = vsel %vm811, %v806, %v808
        %v818 = vsel %vm811, %v808, %v810
        %vm826 = vcmask 785408
        %v828 = vsel %vm826, %v810, 0
        %830 = vrot.lane.b32.xlu0 %v428, 95
        %v831 = vpop.permute.xlu0 %830
        %832 = vrot.lane.b32.xlu0 %v429, 95
        %v833 = vpop.permute.xlu0 %832
        %834 = vrot.lane.b32.xlu0 %v430, 95
        %v835 = vpop.permute.xlu0 %834
        %836 = vrot.lane.b32.xlu0 %v431, 95
        %v837 = vpop.permute.xlu0 %836
        %838 = vrot.lane.b32.xlu0 %v432, 95
        %v839 = vpop.permute.xlu0 %838
        %840 = vrot.lane.b32.xlu0 %v433, 95
        %v841 = vpop.permute.xlu0 %840
        %842 = vrot.lane.b32.xlu0 %v434, 95
        %v843 = vpop.permute.xlu0 %842
        %844 = vrot.lane.b32.xlu0 %v435, 95
        %v845 = vpop.permute.xlu0 %844
        %vm846 = vcmask 777216
        %v847 = vsel %vm846, %v831, %v833
        %v848 = vsel %vm846, %v833, %v835
        %v849 = vsel %vm846, %v835, %v837
        %v850 = vsel %vm846, %v837, %v839
        %v851 = vsel %vm846, %v839, %v841
        %v852 = vsel %vm846, %v841, %v843
        %v853 = vsel %vm846, %v843, %v845
        %vm854 = vcmask 777216
        %v856 = vsel %vm854, %v845, 0
        %857 = vrot.lane.b32.xlu0 %v428, 94
        %v858 = vpop.permute.xlu0 %857
        %859 = vrot.lane.b32.xlu0 %v429, 94
        %v860 = vpop.permute.xlu0 %859
        %861 = vrot.lane.b32.xlu0 %v430, 94
        %v862 = vpop.permute.xlu0 %861
        %863 = vrot.lane.b32.xlu0 %v431, 94
        %v864 = vpop.permute.xlu0 %863
        %865 = vrot.lane.b32.xlu0 %v432, 94
        %v866 = vpop.permute.xlu0 %865
        %867 = vrot.lane.b32.xlu0 %v433, 94
        %v868 = vpop.permute.xlu0 %867
        %869 = vrot.lane.b32.xlu0 %v434, 94
        %v870 = vpop.permute.xlu0 %869
        %871 = vrot.lane.b32.xlu0 %v435, 94
        %v872 = vpop.permute.xlu0 %871
        %vm873 = vcmask 769024
        %v874 = vsel %vm873, %v858, %v860
        %v875 = vsel %vm873, %v860, %v862
        %v876 = vsel %vm873, %v862, %v864
        %v877 = vsel %vm873, %v864, %v866
        %v878 = vsel %vm873, %v866, %v868
        %v879 = vsel %vm873, %v868, %v870
        %v880 = vsel %vm873, %v870, %v872
        %vm881 = vcmask 769024
        %v883 = vsel %vm881, %v872, 0
        %884 = vrot.lane.b32.xlu0 %v428, 93
        %v885 = vpop.permute.xlu0 %884
        %886 = vrot.lane.b32.xlu0 %v429, 93
        %v887 = vpop.permute.xlu0 %886
        %888 = vrot.lane.b32.xlu0 %v430, 93
        %v889 = vpop.permute.xlu0 %888
        %890 = vrot.lane.b32.xlu0 %v431, 93
        %v891 = vpop.permute.xlu0 %890
        %892 = vrot.lane.b32.xlu0 %v432, 93
        %v893 = vpop.permute.xlu0 %892
        %894 = vrot.lane.b32.xlu0 %v433, 93
        %v895 = vpop.permute.xlu0 %894
        %896 = vrot.lane.b32.xlu0 %v434, 93
        %v897 = vpop.permute.xlu0 %896
        %898 = vrot.lane.b32.xlu0 %v435, 93
        %v899 = vpop.permute.xlu0 %898
        %vm900 = vcmask 760832
        %v901 = vsel %vm900, %v885, %v887
        %v902 = vsel %vm900, %v887, %v889
        %v903 = vsel %vm900, %v889, %v891
        %v904 = vsel %vm900, %v891, %v893
        %v905 = vsel %vm900, %v893, %v895
        %v906 = vsel %vm900, %v895, %v897
        %v907 = vsel %vm900, %v897, %v899
        %vm908 = vcmask 760832
        %v910 = vsel %vm908, %v899, 0
        %911 = vrot.lane.b32.xlu0 %v428, 92
        %v912 = vpop.permute.xlu0 %911
        %913 = vrot.lane.b32.xlu0 %v429, 92
        %v914 = vpop.permute.xlu0 %913
        %915 = vrot.lane.b32.xlu0 %v430, 92
        %v916 = vpop.permute.xlu0 %915
        %917 = vrot.lane.b32.xlu0 %v431, 92
        %v918 = vpop.permute.xlu0 %917
        %919 = vrot.lane.b32.xlu0 %v432, 92
        %v920 = vpop.permute.xlu0 %919
        %921 = vrot.lane.b32.xlu0 %v433, 92
        %v922 = vpop.permute.xlu0 %921
        %923 = vrot.lane.b32.xlu0 %v434, 92
        %v924 = vpop.permute.xlu0 %923
        %925 = vrot.lane.b32.xlu0 %v435, 92
        %v926 = vpop.permute.xlu0 %925
        %vm927 = vcmask 752640
        %v928 = vsel %vm927, %v912, %v914
        %v929 = vsel %vm927, %v914, %v916
        %v930 = vsel %vm927, %v916, %v918
        %v931 = vsel %vm927, %v918, %v920
        %v932 = vsel %vm927, %v920, %v922
        %v933 = vsel %vm927, %v922, %v924
        %v934 = vsel %vm927, %v924, %v926
        %vm935 = vcmask 752640
        %v937 = vsel %vm935, %v926, 0
        %v939 = vshrl.u32 %v847, 16
        %v941 = vrot.slane %v939, 6
        %v942 = vshll.u32 %v847, 16
        %v944 = vrot.slane %v942, 7
        %v945 = vor.u32 %v941, %v944
        %v947 = vshrl.u32 %v848, 16
        %v949 = vrot.slane %v947, 6
        %v950 = vshll.u32 %v848, 16
        %v952 = vrot.slane %v950, 7
        %v953 = vor.u32 %v949, %v952
        %v955 = vshrl.u32 %v849, 16
        %v957 = vrot.slane %v955, 6
        %v958 = vshll.u32 %v849, 16
        %v960 = vrot.slane %v958, 7
        %v961 = vor.u32 %v957, %v960
        %v963 = vshrl.u32 %v850, 16
        %v965 = vrot.slane %v963, 6
        %v966 = vshll.u32 %v850, 16
        %v968 = vrot.slane %v966, 7
        %v969 = vor.u32 %v965, %v968
        %v971 = vshrl.u32 %v851, 16
        %v973 = vrot.slane %v971, 6
        %v974 = vshll.u32 %v851, 16
        %v976 = vrot.slane %v974, 7
        %v977 = vor.u32 %v973, %v976
        %v979 = vshrl.u32 %v852, 16
        %v981 = vrot.slane %v979, 6
        %v982 = vshll.u32 %v852, 16
        %v984 = vrot.slane %v982, 7
        %v985 = vor.u32 %v981, %v984
        %v987 = vshrl.u32 %v853, 16
        %v989 = vrot.slane %v987, 6
        %v990 = vshll.u32 %v853, 16
        %v992 = vrot.slane %v990, 7
        %v993 = vor.u32 %v989, %v992
        %v994 = vshrl.u32 %v856, 16
        %v996 = vrot.slane %v994, 6
        %v997 = vshll.u32 %v856, 16
        %v999 = vrot.slane %v997, 7
        %v1000 = vor.u32 %v996, %v999
        %v1010 = vrot.slane %v874, 5
        %v1011 = vrot.slane %v875, 5
        %v1012 = vrot.slane %v876, 5
        %v1013 = vrot.slane %v877, 5
        %v1014 = vrot.slane %v878, 5
        %v1015 = vrot.slane %v879, 5
        %v1016 = vrot.slane %v880, 5
        %v1017 = vrot.slane %v883, 5
        %v1019 = vshrl.u32 %v901, 16
        %v1021 = vrot.slane %v1019, 3
        %v1022 = vshll.u32 %v901, 16
        %v1024 = vrot.slane %v1022, 4
        %v1025 = vor.u32 %v1021, %v1024
        %v1027 = vshrl.u32 %v902, 16
        %v1029 = vrot.slane %v1027, 3
        %v1030 = vshll.u32 %v902, 16
        %v1032 = vrot.slane %v1030, 4
        %v1033 = vor.u32 %v1029, %v1032
        %v1035 = vshrl.u32 %v903, 16
        %v1037 = vrot.slane %v1035, 3
        %v1038 = vshll.u32 %v903, 16
        %v1040 = vrot.slane %v1038, 4
        %v1041 = vor.u32 %v1037, %v1040
        %v1043 = vshrl.u32 %v904, 16
        %v1045 = vrot.slane %v1043, 3
        %v1046 = vshll.u32 %v904, 16
        %v1048 = vrot.slane %v1046, 4
        %v1049 = vor.u32 %v1045, %v1048
        %v1051 = vshrl.u32 %v905, 16
        %v1053 = vrot.slane %v1051, 3
        %v1054 = vshll.u32 %v905, 16
        %v1056 = vrot.slane %v1054, 4
        %v1057 = vor.u32 %v1053, %v1056
        %v1059 = vshrl.u32 %v906, 16
        %v1061 = vrot.slane %v1059, 3
        %v1062 = vshll.u32 %v906, 16
        %v1064 = vrot.slane %v1062, 4
        %v1065 = vor.u32 %v1061, %v1064
        %v1067 = vshrl.u32 %v907, 16
        %v1069 = vrot.slane %v1067, 3
        %v1070 = vshll.u32 %v907, 16
        %v1072 = vrot.slane %v1070, 4
        %v1073 = vor.u32 %v1069, %v1072
        %v1074 = vshrl.u32 %v910, 16
        %v1076 = vrot.slane %v1074, 3
        %v1077 = vshll.u32 %v910, 16
        %v1079 = vrot.slane %v1077, 4
        %v1080 = vor.u32 %v1076, %v1079
        %v1090 = vrot.slane %v928, 2
        %v1091 = vrot.slane %v929, 2
        %v1092 = vrot.slane %v930, 2
        %v1093 = vrot.slane %v931, 2
        %v1094 = vrot.slane %v932, 2
        %v1095 = vrot.slane %v933, 2
        %v1096 = vrot.slane %v934, 2
        %v1097 = vrot.slane %v937, 2
        %v1098 = vsel %vm717, %v812, %v945
        %v1099 = vsel %vm717, %v813, %v953
        %v1100 = vsel %vm717, %v814, %v961
        %v1101 = vsel %vm717, %v815, %v969
        %v1102 = vsel %vm717, %v816, %v977
        %v1103 = vsel %vm717, %v817, %v985
        %v1104 = vsel %vm717, %v818, %v993
        %v1105 = vsel %vm717, %v828, %v1000
        %v1108 = vsel %vm726, %v1098, %v1010
        %v1112 = vsel %vm726, %v1099, %v1011
        %v1116 = vsel %vm726, %v1100, %v1012
        %v1120 = vsel %vm726, %v1101, %v1013
        %v1124 = vsel %vm726, %v1102, %v1014
        %v1128 = vsel %vm726, %v1103, %v1015
        %v1132 = vsel %vm726, %v1104, %v1016
        %v1136 = vsel %vm726, %v1105, %v1017
        %v1138 = vsel %vm761, %v1108, %v1025
        %v1139 = vsel %vm761, %v1112, %v1033
        %v1140 = vsel %vm761, %v1116, %v1041
        %v1141 = vsel %vm761, %v1120, %v1049
        %v1142 = vsel %vm761, %v1124, %v1057
        %v1143 = vsel %vm761, %v1128, %v1065
        %v1144 = vsel %vm761, %v1132, %v1073
        %v1145 = vsel %vm761, %v1136, %v1080
        %v1148 = vsel %vm770, %v1138, %v1090
        %v1151 = vsel %vm770, %v1139, %v1091
        %v1154 = vsel %vm770, %v1140, %v1092
        %v1157 = vsel %vm770, %v1141, %v1093
        %v1160 = vsel %vm770, %v1142, %v1094
        %v1163 = vsel %vm770, %v1143, %v1095
        %v1166 = vsel %vm770, %v1144, %v1096
        %v1169 = vsel %vm770, %v1145, %v1097
        %v1171 = vunpack.c.l.b16 %v436
        %v1172 = vpack.c.b16 %v1171, %v1171
        %1173 = vrot.lane.b32.xlu0 %v1172, 113
        %v1174 = vpop.permute.xlu0 %1173
        %vm1175 = vcmask 121856
        %v1177 = vsel %vm1175, %v1174, 0
        %vm1179 = vcmask 1046528
        %vm1180 = vcmask 1047552
        %v1181 = vsel %vm1179, 4294967295, 65535
        %v1182 = vsel %vm1180, %v1181, 0
        %v1183 = vand.u32 %v1148, %v1182
        %v1185 = vand.u32 %v1151, %v1182
        %v1187 = vand.u32 %v1154, %v1182
        %v1189 = vand.u32 %v1157, %v1182
        %v1191 = vand.u32 %v1160, %v1182
        %v1193 = vand.u32 %v1163, %v1182
        %v1195 = vand.u32 %v1166, %v1182
        %v1197 = vand.u32 %v1169, %v1182
        %1199 = vmatprep.subr.bf16.mxu0 %v1185
        %1200 = vmatpush1.bf16.msra.mxu0 %v1183
        %1201 = vmatprep.subr.bf16.mxu0 0
        %1202 = vmatpush1.bf16.msra.mxu0 0
        %1203 = vmatprep.subr.bf16.mxu0 0
        %1204 = vmatpush1.bf16.msra.mxu0 0
        %1205 = vmatprep.subr.bf16.mxu0 0
        %1206 = vmatpush1.bf16.msra.mxu0 0
        %1207 = vmatprep.subr.bf16.mxu0 0
        %1208 = vmatpush1.bf16.msra.mxu0 0
        %1209 = vmatprep.subr.bf16.mxu0 0
        %1210 = vmatpush1.bf16.msra.mxu0 0
        %1211 = vmatprep.subr.bf16.mxu0 0
        %1212 = vmatpush1.bf16.msra.mxu0 0
        %1213 = vmatprep.subr.bf16.mxu0 0
        %1214 = vmatpush1.bf16.msra.mxu0 0
        %1215 = vmatprep.subr.bf16.mxu0 0
        %1216 = vmatpush1.bf16.msra.mxu0 0
        %1217 = vmatprep.subr.bf16.mxu0 0
        %1218 = vmatpush1.bf16.msra.mxu0 0
        %1219 = vmatprep.subr.bf16.mxu0 0
        %1220 = vmatpush1.bf16.msra.mxu0 0
        %1221 = vmatprep.subr.bf16.mxu0 0
        %1222 = vmatpush1.bf16.msra.mxu0 0
        %1223 = vmatprep.subr.bf16.mxu0 0
        %1224 = vmatpush1.bf16.msra.mxu0 0
        %1225 = vmatprep.subr.bf16.mxu0 0
        %1226 = vmatpush1.bf16.msra.mxu0 0
        %1227 = vmatprep.subr.bf16.mxu0 0
        %1228 = vmatpush1.bf16.msra.mxu0 0
        %1229 = vmatprep.subr.bf16.mxu0 0
        %1230 = vmatpush1.bf16.msra.mxu0 0
        %1231 = vmatprep.mubr.bf16.mxu0 0
        %1232 = vmatmul.mubr.bf16.gmra.mrb[0].mxu0 %v1177
        %v1233 = vpop.f32.mrb[0].mxu0
        %v1234 = vadd.f32 0.0, %v1233
        %v1235 = vpop.f32.mrb[0].mxu0
        %v1236 = vadd.f32 0.0, %v1235
        %v1237 = vpop.f32.mrb[0].mxu0
        %v1238 = vpop.f32.mrb[0].mxu0
        %1239 = vdwg.mxu0
        %1240 = vmatprep.subr.bf16.mxu0 %v1189
        %1241 = vmatpush1.bf16.msra.mxu0 %v1187
        %1242 = vmatprep.subr.bf16.mxu0 0
        %1243 = vmatpush1.bf16.msra.mxu0 0
        %1244 = vmatprep.subr.bf16.mxu0 0
        %1245 = vmatpush1.bf16.msra.mxu0 0
        %1246 = vmatprep.subr.bf16.mxu0 0
        %1247 = vmatpush1.bf16.msra.mxu0 0
        %1248 = vmatprep.subr.bf16.mxu0 0
        %1249 = vmatpush1.bf16.msra.mxu0 0
        %1250 = vmatprep.subr.bf16.mxu0 0
        %1251 = vmatpush1.bf16.msra.mxu0 0
        %1252 = vmatprep.subr.bf16.mxu0 0
        %1253 = vmatpush1.bf16.msra.mxu0 0
        %1254 = vmatprep.subr.bf16.mxu0 0
        %1255 = vmatpush1.bf16.msra.mxu0 0
        %1256 = vmatprep.subr.bf16.mxu0 0
        %1257 = vmatpush1.bf16.msra.mxu0 0
        %1258 = vmatprep.subr.bf16.mxu0 0
        %1259 = vmatpush1.bf16.msra.mxu0 0
        %1260 = vmatprep.subr.bf16.mxu0 0
        %1261 = vmatpush1.bf16.msra.mxu0 0
        %1262 = vmatprep.subr.bf16.mxu0 0
        %1263 = vmatpush1.bf16.msra.mxu0 0
        %1264 = vmatprep.subr.bf16.mxu0 0
        %1265 = vmatpush1.bf16.msra.mxu0 0
        %1266 = vmatprep.subr.bf16.mxu0 0
        %1267 = vmatpush1.bf16.msra.mxu0 0
        %1268 = vmatprep.subr.bf16.mxu0 0
        %1269 = vmatpush1.bf16.msra.mxu0 0
        %1270 = vmatprep.subr.bf16.mxu0 0
        %1271 = vmatpush1.bf16.msra.mxu0 0
        %1272 = vmatprep.mubr.bf16.mxu0 0
        %1273 = vmatmul.mubr.bf16.gmra.mrb[0].mxu0 %v1177
        %v1274 = vpop.f32.mrb[0].mxu0
        %v1275 = vadd.f32 0.0, %v1274
        %v1276 = vpop.f32.mrb[0].mxu0
        %v1277 = vadd.f32 0.0, %v1276
        %v1278 = vpop.f32.mrb[0].mxu0
        %v1279 = vpop.f32.mrb[0].mxu0
        %1280 = vdwg.mxu0
        %1281 = vmatprep.subr.bf16.mxu0 %v1193
        %1282 = vmatpush1.bf16.msra.mxu0 %v1191
        %1283 = vmatprep.subr.bf16.mxu0 0
        %1284 = vmatpush1.bf16.msra.mxu0 0
        %1285 = vmatprep.subr.bf16.mxu0 0
        %1286 = vmatpush1.bf16.msra.mxu0 0
        %1287 = vmatprep.subr.bf16.mxu0 0
        %1288 = vmatpush1.bf16.msra.mxu0 0
        %1289 = vmatprep.subr.bf16.mxu0 0
        %1290 = vmatpush1.bf16.msra.mxu0 0
        %1291 = vmatprep.subr.bf16.mxu0 0
        %1292 = vmatpush1.bf16.msra.mxu0 0
        %1293 = vmatprep.subr.bf16.mxu0 0
        %1294 = vmatpush1.bf16.msra.mxu0 0
        %1295 = vmatprep.subr.bf16.mxu0 0
        %1296 = vmatpush1.bf16.msra.mxu0 0
        %1297 = vmatprep.subr.bf16.mxu0 0
        %1298 = vmatpush1.bf16.msra.mxu0 0
        %1299 = vmatprep.subr.bf16.mxu0 0
        %1300 = vmatpush1.bf16.msra.mxu0 0
        %1301 = vmatprep.subr.bf16.mxu0 0
        %1302 = vmatpush1.bf16.msra.mxu0 0
        %1303 = vmatprep.subr.bf16.mxu0 0
        %1304 = vmatpush1.bf16.msra.mxu0 0
        %1305 = vmatprep.subr.bf16.mxu0 0
        %1306 = vmatpush1.bf16.msra.mxu0 0
        %1307 = vmatprep.subr.bf16.mxu0 0
        %1308 = vmatpush1.bf16.msra.mxu0 0
        %1309 = vmatprep.subr.bf16.mxu0 0
        %1310 = vmatpush1.bf16.msra.mxu0 0
        %1311 = vmatprep.subr.bf16.mxu0 0
        %1312 = vmatpush1.bf16.msra.mxu0 0
        %1313 = vmatprep.mubr.bf16.mxu0 0
        %1314 = vmatmul.mubr.bf16.gmra.mrb[0].mxu0 %v1177
        %v1315 = vpop.f32.mrb[0].mxu0
        %v1316 = vadd.f32 0.0, %v1315
        %v1317 = vpop.f32.mrb[0].mxu0
        %v1318 = vadd.f32 0.0, %v1317
        %v1319 = vpop.f32.mrb[0].mxu0
        %v1320 = vpop.f32.mrb[0].mxu0
        %1321 = vdwg.mxu0
        %1322 = vmatprep.subr.bf16.mxu0 %v1197
        %1323 = vmatpush1.bf16.msra.mxu0 %v1195
        %1324 = vmatprep.subr.bf16.mxu0 0
        %1325 = vmatpush1.bf16.msra.mxu0 0
        %1326 = vmatprep.subr.bf16.mxu0 0
        %1327 = vmatpush1.bf16.msra.mxu0 0
        %1328 = vmatprep.subr.bf16.mxu0 0
        %1329 = vmatpush1.bf16.msra.mxu0 0
        %1330 = vmatprep.subr.bf16.mxu0 0
        %1331 = vmatpush1.bf16.msra.mxu0 0
        %1332 = vmatprep.subr.bf16.mxu0 0
        %1333 = vmatpush1.bf16.msra.mxu0 0
        %1334 = vmatprep.subr.bf16.mxu0 0
        %1335 = vmatpush1.bf16.msra.mxu0 0
        %1336 = vmatprep.subr.bf16.mxu0 0
        %1337 = vmatpush1.bf16.msra.mxu0 0
        %1338 = vmatprep.subr.bf16.mxu0 0
        %1339 = vmatpush1.bf16.msra.mxu0 0
        %1340 = vmatprep.subr.bf16.mxu0 0
        %1341 = vmatpush1.bf16.msra.mxu0 0
        %1342 = vmatprep.subr.bf16.mxu0 0
        %1343 = vmatpush1.bf16.msra.mxu0 0
        %1344 = vmatprep.subr.bf16.mxu0 0
        %1345 = vmatpush1.bf16.msra.mxu0 0
        %1346 = vmatprep.subr.bf16.mxu0 0
        %1347 = vmatpush1.bf16.msra.mxu0 0
        %1348 = vmatprep.subr.bf16.mxu0 0
        %1349 = vmatpush1.bf16.msra.mxu0 0
        %1350 = vmatprep.subr.bf16.mxu0 0
        %1351 = vmatpush1.bf16.msra.mxu0 0
        %1352 = vmatprep.subr.bf16.mxu0 0
        %1353 = vmatpush1.bf16.msra.mxu0 0
        %1354 = vmatprep.mubr.bf16.mxu0 0
        %1355 = vmatmul.mubr.bf16.gmra.mrb[0].mxu0 %v1177
        %v1356 = vpop.f32.mrb[0].mxu0
        %v1357 = vadd.f32 0.0, %v1356
        %v1358 = vpop.f32.mrb[0].mxu0
        %v1359 = vadd.f32 0.0, %v1358
        %v1360 = vpop.f32.mrb[0].mxu0
        %v1361 = vpop.f32.mrb[0].mxu0
        %1362 = vdwg.mxu0
        %v1364 = vsel %vm1175, %v436, 0
        %v1366 = vand.u32 %v773, %v1182
        %v1368 = vand.u32 %v776, %v1182
        %v1370 = vand.u32 %v779, %v1182
        %v1372 = vand.u32 %v782, %v1182
        %v1374 = vand.u32 %v785, %v1182
        %v1376 = vand.u32 %v788, %v1182
        %v1378 = vand.u32 %v791, %v1182
        %v1380 = vand.u32 %v794, %v1182
        %1382 = vmatprep.subr.bf16.mxu0 %v1368
        %1383 = vmatpush1.bf16.msra.mxu0 %v1366
        %1384 = vmatprep.subr.bf16.mxu0 0
        %1385 = vmatpush1.bf16.msra.mxu0 0
        %1386 = vmatprep.subr.bf16.mxu0 0
        %1387 = vmatpush1.bf16.msra.mxu0 0
        %1388 = vmatprep.subr.bf16.mxu0 0
        %1389 = vmatpush1.bf16.msra.mxu0 0
        %1390 = vmatprep.subr.bf16.mxu0 0
        %1391 = vmatpush1.bf16.msra.mxu0 0
        %1392 = vmatprep.subr.bf16.mxu0 0
        %1393 = vmatpush1.bf16.msra.mxu0 0
        %1394 = vmatprep.subr.bf16.mxu0 0
        %1395 = vmatpush1.bf16.msra.mxu0 0
        %1396 = vmatprep.subr.bf16.mxu0 0
        %1397 = vmatpush1.bf16.msra.mxu0 0
        %1398 = vmatprep.subr.bf16.mxu0 0
        %1399 = vmatpush1.bf16.msra.mxu0 0
        %1400 = vmatprep.subr.bf16.mxu0 0
        %1401 = vmatpush1.bf16.msra.mxu0 0
        %1402 = vmatprep.subr.bf16.mxu0 0
        %1403 = vmatpush1.bf16.msra.mxu0 0
        %1404 = vmatprep.subr.bf16.mxu0 0
        %1405 = vmatpush1.bf16.msra.mxu0 0
        %1406 = vmatprep.subr.bf16.mxu0 0
        %1407 = vmatpush1.bf16.msra.mxu0 0
        %1408 = vmatprep.subr.bf16.mxu0 0
        %1409 = vmatpush1.bf16.msra.mxu0 0
        %1410 = vmatprep.subr.bf16.mxu0 0
        %1411 = vmatpush1.bf16.msra.mxu0 0
        %1412 = vmatprep.subr.bf16.mxu0 0
        %1413 = vmatpush1.bf16.msra.mxu0 0
        %1414 = vmatprep.mubr.bf16.mxu0 0
        %1415 = vmatmul.mubr.bf16.gmra.mrb[0].mxu0 %v1364
        %v1416 = vpop.f32.mrb[0].mxu0
        %v1417 = vadd.f32 %v1234, %v1416
        %v1418 = vpop.f32.mrb[0].mxu0
        %v1419 = vadd.f32 %v1236, %v1418
        %v1420 = vpop.f32.mrb[0].mxu0
        %v1421 = vpop.f32.mrb[0].mxu0
        %1422 = vdwg.mxu0
        %1423 = vmatprep.subr.bf16.mxu0 %v1372
        %1424 = vmatpush1.bf16.msra.mxu0 %v1370
        %1425 = vmatprep.subr.bf16.mxu0 0
        %1426 = vmatpush1.bf16.msra.mxu0 0
        %1427 = vmatprep.subr.bf16.mxu0 0
        %1428 = vmatpush1.bf16.msra.mxu0 0
        %1429 = vmatprep.subr.bf16.mxu0 0
        %1430 = vmatpush1.bf16.msra.mxu0 0
        %1431 = vmatprep.subr.bf16.mxu0 0
        %1432 = vmatpush1.bf16.msra.mxu0 0
        %1433 = vmatprep.subr.bf16.mxu0 0
        %1434 = vmatpush1.bf16.msra.mxu0 0
        %1435 = vmatprep.subr.bf16.mxu0 0
        %1436 = vmatpush1.bf16.msra.mxu0 0
        %1437 = vmatprep.subr.bf16.mxu0 0
        %1438 = vmatpush1.bf16.msra.mxu0 0
        %1439 = vmatprep.subr.bf16.mxu0 0
        %1440 = vmatpush1.bf16.msra.mxu0 0
        %1441 = vmatprep.subr.bf16.mxu0 0
        %1442 = vmatpush1.bf16.msra.mxu0 0
        %1443 = vmatprep.subr.bf16.mxu0 0
        %1444 = vmatpush1.bf16.msra.mxu0 0
        %1445 = vmatprep.subr.bf16.mxu0 0
        %1446 = vmatpush1.bf16.msra.mxu0 0
        %1447 = vmatprep.subr.bf16.mxu0 0
        %1448 = vmatpush1.bf16.msra.mxu0 0
        %1449 = vmatprep.subr.bf16.mxu0 0
        %1450 = vmatpush1.bf16.msra.mxu0 0
        %1451 = vmatprep.subr.bf16.mxu0 0
        %1452 = vmatpush1.bf16.msra.mxu0 0
        %1453 = vmatprep.subr.bf16.mxu0 0
        %1454 = vmatpush1.bf16.msra.mxu0 0
        %1455 = vmatprep.mubr.bf16.mxu0 0
        %1456 = vmatmul.mubr.bf16.gmra.mrb[0].mxu0 %v1364
        %v1457 = vpop.f32.mrb[0].mxu0
        %v1458 = vadd.f32 %v1275, %v1457
        %v1459 = vpop.f32.mrb[0].mxu0
        %v1460 = vadd.f32 %v1277, %v1459
        %v1461 = vpop.f32.mrb[0].mxu0
        %v1462 = vpop.f32.mrb[0].mxu0
        %1463 = vdwg.mxu0
        %1464 = vmatprep.subr.bf16.mxu0 %v1376
        %1465 = vmatpush1.bf16.msra.mxu0 %v1374
        %1466 = vmatprep.subr.bf16.mxu0 0
        %1467 = vmatpush1.bf16.msra.mxu0 0
        %1468 = vmatprep.subr.bf16.mxu0 0
        %1469 = vmatpush1.bf16.msra.mxu0 0
        %1470 = vmatprep.subr.bf16.mxu0 0
        %1471 = vmatpush1.bf16.msra.mxu0 0
        %1472 = vmatprep.subr.bf16.mxu0 0
        %1473 = vmatpush1.bf16.msra.mxu0 0
        %1474 = vmatprep.subr.bf16.mxu0 0
        %1475 = vmatpush1.bf16.msra.mxu0 0
        %1476 = vmatprep.subr.bf16.mxu0 0
        %1477 = vmatpush1.bf16.msra.mxu0 0
        %1478 = vmatprep.subr.bf16.mxu0 0
        %1479 = vmatpush1.bf16.msra.mxu0 0
        %1480 = vmatprep.subr.bf16.mxu0 0
        %1481 = vmatpush1.bf16.msra.mxu0 0
        %1482 = vmatprep.subr.bf16.mxu0 0
        %1483 = vmatpush1.bf16.msra.mxu0 0
        %1484 = vmatprep.subr.bf16.mxu0 0
        %1485 = vmatpush1.bf16.msra.mxu0 0
        %1486 = vmatprep.subr.bf16.mxu0 0
        %1487 = vmatpush1.bf16.msra.mxu0 0
        %1488 = vmatprep.subr.bf16.mxu0 0
        %1489 = vmatpush1.bf16.msra.mxu0 0
        %1490 = vmatprep.subr.bf16.mxu0 0
        %1491 = vmatpush1.bf16.msra.mxu0 0
        %1492 = vmatprep.subr.bf16.mxu0 0
        %1493 = vmatpush1.bf16.msra.mxu0 0
        %1494 = vmatprep.subr.bf16.mxu0 0
        %1495 = vmatpush1.bf16.msra.mxu0 0
        %1496 = vmatprep.mubr.bf16.mxu0 0
        %1497 = vmatmul.mubr.bf16.gmra.mrb[0].mxu0 %v1364
        %v1498 = vpop.f32.mrb[0].mxu0
        %v1499 = vadd.f32 %v1316, %v1498
        %v1500 = vpop.f32.mrb[0].mxu0
        %v1501 = vadd.f32 %v1318, %v1500
        %v1502 = vpop.f32.mrb[0].mxu0
        %v1503 = vpop.f32.mrb[0].mxu0
        %1504 = vdwg.mxu0
        %1505 = vmatprep.subr.bf16.mxu0 %v1380
        %1506 = vmatpush1.bf16.msra.mxu0 %v1378
        %1507 = vmatprep.subr.bf16.mxu0 0
        %1508 = vmatpush1.bf16.msra.mxu0 0
        %1509 = vmatprep.subr.bf16.mxu0 0
        %1510 = vmatpush1.bf16.msra.mxu0 0
        %1511 = vmatprep.subr.bf16.mxu0 0
        %1512 = vmatpush1.bf16.msra.mxu0 0
        %1513 = vmatprep.subr.bf16.mxu0 0
        %1514 = vmatpush1.bf16.msra.mxu0 0
        %1515 = vmatprep.subr.bf16.mxu0 0
        %1516 = vmatpush1.bf16.msra.mxu0 0
        %1517 = vmatprep.subr.bf16.mxu0 0
        %1518 = vmatpush1.bf16.msra.mxu0 0
        %1519 = vmatprep.subr.bf16.mxu0 0
        %1520 = vmatpush1.bf16.msra.mxu0 0
        %1521 = vmatprep.subr.bf16.mxu0 0
        %1522 = vmatpush1.bf16.msra.mxu0 0
        %1523 = vmatprep.subr.bf16.mxu0 0
        %1524 = vmatpush1.bf16.msra.mxu0 0
        %1525 = vmatprep.subr.bf16.mxu0 0
        %1526 = vmatpush1.bf16.msra.mxu0 0
        %1527 = vmatprep.subr.bf16.mxu0 0
        %1528 = vmatpush1.bf16.msra.mxu0 0
        %1529 = vmatprep.subr.bf16.mxu0 0
        %1530 = vmatpush1.bf16.msra.mxu0 0
        %1531 = vmatprep.subr.bf16.mxu0 0
        %1532 = vmatpush1.bf16.msra.mxu0 0
        %1533 = vmatprep.subr.bf16.mxu0 0
        %1534 = vmatpush1.bf16.msra.mxu0 0
        %1535 = vmatprep.subr.bf16.mxu0 0
        %1536 = vmatpush1.bf16.msra.mxu0 0
        %1537 = vmatprep.mubr.bf16.mxu0 0
        %1538 = vmatmul.mubr.bf16.gmra.mrb[0].mxu0 %v1364
        %v1539 = vpop.f32.mrb[0].mxu0
        %v1540 = vadd.f32 %v1357, %v1539
        %v1541 = vpop.f32.mrb[0].mxu0
        %v1542 = vadd.f32 %v1359, %v1541
        %v1543 = vpop.f32.mrb[0].mxu0
        %v1544 = vpop.f32.mrb[0].mxu0
        %1545 = vdwg.mxu0
        %1546 = vrot.lane.b32.xlu0 %v428, 64
        %v1547 = vpop.permute.xlu0 %1546
        %1548 = vrot.lane.b32.xlu0 %v429, 64
        %v1549 = vpop.permute.xlu0 %1548
        %1550 = vrot.lane.b32.xlu0 %v430, 64
        %v1551 = vpop.permute.xlu0 %1550
        %1552 = vrot.lane.b32.xlu0 %v431, 64
        %v1553 = vpop.permute.xlu0 %1552
        %1554 = vrot.lane.b32.xlu0 %v432, 64
        %v1555 = vpop.permute.xlu0 %1554
        %1556 = vrot.lane.b32.xlu0 %v433, 64
        %v1557 = vpop.permute.xlu0 %1556
        %1558 = vrot.lane.b32.xlu0 %v434, 64
        %v1559 = vpop.permute.xlu0 %1558
        %1560 = vrot.lane.b32.xlu0 %v435, 64
        %v1561 = vpop.permute.xlu0 %1560
        %vm1562 = vcmask 523264
        %v1563 = vsel %vm1562, %v1547, %v1549
        %v1564 = vsel %vm1562, %v1549, %v1551
        %v1565 = vsel %vm1562, %v1551, %v1553
        %v1566 = vsel %vm1562, %v1553, %v1555
        %v1567 = vsel %vm1562, %v1555, %v1557
        %v1568 = vsel %vm1562, %v1557, %v1559
        %v1569 = vsel %vm1562, %v1559, %v1561
        %vm1577 = vcmask 523264
        %v1579 = vsel %vm1577, %v1561, 0
        %1581 = vrot.lane.b32.xlu0 %v428, 63
        %v1582 = vpop.permute.xlu0 %1581
        %1583 = vrot.lane.b32.xlu0 %v429, 63
        %v1584 = vpop.permute.xlu0 %1583
        %1585 = vrot.lane.b32.xlu0 %v430, 63
        %v1586 = vpop.permute.xlu0 %1585
        %1587 = vrot.lane.b32.xlu0 %v431, 63
        %v1588 = vpop.permute.xlu0 %1587
        %1589 = vrot.lane.b32.xlu0 %v432, 63
        %v1590 = vpop.permute.xlu0 %1589
        %1591 = vrot.lane.b32.xlu0 %v433, 63
        %v1592 = vpop.permute.xlu0 %1591
        %1593 = vrot.lane.b32.xlu0 %v434, 63
        %v1594 = vpop.permute.xlu0 %1593
        %1595 = vrot.lane.b32.xlu0 %v435, 63
        %v1596 = vpop.permute.xlu0 %1595
        %vm1597 = vcmask 515072
        %v1598 = vsel %vm1597, %v1582, %v1584
        %v1599 = vsel %vm1597, %v1584, %v1586
        %v1600 = vsel %vm1597, %v1586, %v1588
        %v1601 = vsel %vm1597, %v1588, %v1590
        %v1602 = vsel %vm1597, %v1590, %v1592
        %v1603 = vsel %vm1597, %v1592, %v1594
        %v1604 = vsel %vm1597, %v1594, %v1596
        %vm1605 = vcmask 515072
        %v1607 = vsel %vm1605, %v1596, 0
        %1608 = vrot.lane.b32.xlu0 %v428, 62
        %v1609 = vpop.permute.xlu0 %1608
        %1610 = vrot.lane.b32.xlu0 %v429, 62
        %v1611 = vpop.permute.xlu0 %1610
        %1612 = vrot.lane.b32.xlu0 %v430, 62
        %v1613 = vpop.permute.xlu0 %1612
        %1614 = vrot.lane.b32.xlu0 %v431, 62
        %v1615 = vpop.permute.xlu0 %1614
        %1616 = vrot.lane.b32.xlu0 %v432, 62
        %v1617 = vpop.permute.xlu0 %1616
        %1618 = vrot.lane.b32.xlu0 %v433, 62
        %v1619 = vpop.permute.xlu0 %1618
        %1620 = vrot.lane.b32.xlu0 %v434, 62
        %v1621 = vpop.permute.xlu0 %1620
        %1622 = vrot.lane.b32.xlu0 %v435, 62
        %v1623 = vpop.permute.xlu0 %1622
        %vm1624 = vcmask 506880
        %v1625 = vsel %vm1624, %v1609, %v1611
        %v1626 = vsel %vm1624, %v1611, %v1613
        %v1627 = vsel %vm1624, %v1613, %v1615
        %v1628 = vsel %vm1624, %v1615, %v1617
        %v1629 = vsel %vm1624, %v1617, %v1619
        %v1630 = vsel %vm1624, %v1619, %v1621
        %v1631 = vsel %vm1624, %v1621, %v1623
        %vm1632 = vcmask 506880
        %v1634 = vsel %vm1632, %v1623, 0
        %1635 = vrot.lane.b32.xlu0 %v428, 61
        %v1636 = vpop.permute.xlu0 %1635
        %1637 = vrot.lane.b32.xlu0 %v429, 61
        %v1638 = vpop.permute.xlu0 %1637
        %1639 = vrot.lane.b32.xlu0 %v430, 61
        %v1640 = vpop.permute.xlu0 %1639
        %1641 = vrot.lane.b32.xlu0 %v431, 61
        %v1642 = vpop.permute.xlu0 %1641
        %1643 = vrot.lane.b32.xlu0 %v432, 61
        %v1644 = vpop.permute.xlu0 %1643
        %1645 = vrot.lane.b32.xlu0 %v433, 61
        %v1646 = vpop.permute.xlu0 %1645
        %1647 = vrot.lane.b32.xlu0 %v434, 61
        %v1648 = vpop.permute.xlu0 %1647
        %1649 = vrot.lane.b32.xlu0 %v435, 61
        %v1650 = vpop.permute.xlu0 %1649
        %vm1651 = vcmask 498688
        %v1652 = vsel %vm1651, %v1636, %v1638
        %v1653 = vsel %vm1651, %v1638, %v1640
        %v1654 = vsel %vm1651, %v1640, %v1642
        %v1655 = vsel %vm1651, %v1642, %v1644
        %v1656 = vsel %vm1651, %v1644, %v1646
        %v1657 = vsel %vm1651, %v1646, %v1648
        %v1658 = vsel %vm1651, %v1648, %v1650
        %vm1659 = vcmask 498688
        %v1661 = vsel %vm1659, %v1650, 0
        %1662 = vrot.lane.b32.xlu0 %v428, 60
        %v1663 = vpop.permute.xlu0 %1662
        %1664 = vrot.lane.b32.xlu0 %v429, 60
        %v1665 = vpop.permute.xlu0 %1664
        %1666 = vrot.lane.b32.xlu0 %v430, 60
        %v1667 = vpop.permute.xlu0 %1666
        %1668 = vrot.lane.b32.xlu0 %v431, 60
        %v1669 = vpop.permute.xlu0 %1668
        %1670 = vrot.lane.b32.xlu0 %v432, 60
        %v1671 = vpop.permute.xlu0 %1670
        %1672 = vrot.lane.b32.xlu0 %v433, 60
        %v1673 = vpop.permute.xlu0 %1672
        %1674 = vrot.lane.b32.xlu0 %v434, 60
        %v1675 = vpop.permute.xlu0 %1674
        %1676 = vrot.lane.b32.xlu0 %v435, 60
        %v1677 = vpop.permute.xlu0 %1676
        %vm1678 = vcmask 490496
        %v1679 = vsel %vm1678, %v1663, %v1665
        %v1680 = vsel %vm1678, %v1665, %v1667
        %v1681 = vsel %vm1678, %v1667, %v1669
        %v1682 = vsel %vm1678, %v1669, %v1671
        %v1683 = vsel %vm1678, %v1671, %v1673
        %v1684 = vsel %vm1678, %v1673, %v1675
        %v1685 = vsel %vm1678, %v1675, %v1677
        %vm1686 = vcmask 490496
        %v1688 = vsel %vm1686, %v1677, 0
        %v1690 = vshrl.u32 %v1598, 16
        %v1692 = vrot.slane %v1690, 6
        %v1693 = vshll.u32 %v1598, 16
        %v1695 = vrot.slane %v1693, 7
        %v1696 = vor.u32 %v1692, %v1695
        %v1698 = vshrl.u32 %v1599, 16
        %v1700 = vrot.slane %v1698, 6
        %v1701 = vshll.u32 %v1599, 16
        %v1703 = vrot.slane %v1701, 7
        %v1704 = vor.u32 %v1700, %v1703
        %v1706 = vshrl.u32 %v1600, 16
        %v1708 = vrot.slane %v1706, 6
        %v1709 = vshll.u32 %v1600, 16
        %v1711 = vrot.slane %v1709, 7
        %v1712 = vor.u32 %v1708, %v1711
        %v1714 = vshrl.u32 %v1601, 16
        %v1716 = vrot.slane %v1714, 6
        %v1717 = vshll.u32 %v1601, 16
        %v1719 = vrot.slane %v1717, 7
        %v1720 = vor.u32 %v1716, %v1719
        %v1722 = vshrl.u32 %v1602, 16
        %v1724 = vrot.slane %v1722, 6
        %v1725 = vshll.u32 %v1602, 16
        %v1727 = vrot.slane %v1725, 7
        %v1728 = vor.u32 %v1724, %v1727
        %v1730 = vshrl.u32 %v1603, 16
        %v1732 = vrot.slane %v1730, 6
        %v1733 = vshll.u32 %v1603, 16
        %v1735 = vrot.slane %v1733, 7
        %v1736 = vor.u32 %v1732, %v1735
        %v1738 = vshrl.u32 %v1604, 16
        %v1740 = vrot.slane %v1738, 6
        %v1741 = vshll.u32 %v1604, 16
        %v1743 = vrot.slane %v1741, 7
        %v1744 = vor.u32 %v1740, %v1743
        %v1745 = vshrl.u32 %v1607, 16
        %v1747 = vrot.slane %v1745, 6
        %v1748 = vshll.u32 %v1607, 16
        %v1750 = vrot.slane %v1748, 7
        %v1751 = vor.u32 %v1747, %v1750
        %v1761 = vrot.slane %v1625, 5
        %v1762 = vrot.slane %v1626, 5
        %v1763 = vrot.slane %v1627, 5
        %v1764 = vrot.slane %v1628, 5
        %v1765 = vrot.slane %v1629, 5
        %v1766 = vrot.slane %v1630, 5
        %v1767 = vrot.slane %v1631, 5
        %v1768 = vrot.slane %v1634, 5
        %v1770 = vshrl.u32 %v1652, 16
        %v1772 = vrot.slane %v1770, 3
        %v1773 = vshll.u32 %v1652, 16
        %v1775 = vrot.slane %v1773, 4
        %v1776 = vor.u32 %v1772, %v1775
        %v1778 = vshrl.u32 %v1653, 16
        %v1780 = vrot.slane %v1778, 3
        %v1781 = vshll.u32 %v1653, 16
        %v1783 = vrot.slane %v1781, 4
        %v1784 = vor.u32 %v1780, %v1783
        %v1786 = vshrl.u32 %v1654, 16
        %v1788 = vrot.slane %v1786, 3
        %v1789 = vshll.u32 %v1654, 16
        %v1791 = vrot.slane %v1789, 4
        %v1792 = vor.u32 %v1788, %v1791
        %v1794 = vshrl.u32 %v1655, 16
        %v1796 = vrot.slane %v1794, 3
        %v1797 = vshll.u32 %v1655, 16
        %v1799 = vrot.slane %v1797, 4
        %v1800 = vor.u32 %v1796, %v1799
        %v1802 = vshrl.u32 %v1656, 16
        %v1804 = vrot.slane %v1802, 3
        %v1805 = vshll.u32 %v1656, 16
        %v1807 = vrot.slane %v1805, 4
        %v1808 = vor.u32 %v1804, %v1807
        %v1810 = vshrl.u32 %v1657, 16
        %v1812 = vrot.slane %v1810, 3
        %v1813 = vshll.u32 %v1657, 16
        %v1815 = vrot.slane %v1813, 4
        %v1816 = vor.u32 %v1812, %v1815
        %v1818 = vshrl.u32 %v1658, 16
        %v1820 = vrot.slane %v1818, 3
        %v1821 = vshll.u32 %v1658, 16
        %v1823 = vrot.slane %v1821, 4
        %v1824 = vor.u32 %v1820, %v1823
        %v1825 = vshrl.u32 %v1661, 16
        %v1827 = vrot.slane %v1825, 3
        %v1828 = vshll.u32 %v1661, 16
        %v1830 = vrot.slane %v1828, 4
        %v1831 = vor.u32 %v1827, %v1830
        %v1841 = vrot.slane %v1679, 2
        %v1842 = vrot.slane %v1680, 2
        %v1843 = vrot.slane %v1681, 2
        %v1844 = vrot.slane %v1682, 2
        %v1845 = vrot.slane %v1683, 2
        %v1846 = vrot.slane %v1684, 2
        %v1847 = vrot.slane %v1685, 2
        %v1848 = vrot.slane %v1688, 2
        %v1849 = vsel %vm717, %v1563, %v1696
        %v1850 = vsel %vm717, %v1564, %v1704
        %v1851 = vsel %vm717, %v1565, %v1712
        %v1852 = vsel %vm717, %v1566, %v1720
        %v1853 = vsel %vm717, %v1567, %v1728
        %v1854 = vsel %vm717, %v1568, %v1736
        %v1855 = vsel %vm717, %v1569, %v1744
        %v1856 = vsel %vm717, %v1579, %v1751
        %v1859 = vsel %vm726, %v1849, %v1761
        %v1863 = vsel %vm726, %v1850, %v1762
        %v1867 = vsel %vm726, %v1851, %v1763
        %v1871 = vsel %vm726, %v1852, %v1764
        %v1875 = vsel %vm726, %v1853, %v1765
        %v1879 = vsel %vm726, %v1854, %v1766
        %v1883 = vsel %vm726, %v1855, %v1767
        %v1887 = vsel %vm726, %v1856, %v1768
        %v1889 = vsel %vm761, %v1859, %v1776
        %v1890 = vsel %vm761, %v1863, %v1784
        %v1891 = vsel %vm761, %v1867, %v1792
        %v1892 = vsel %vm761, %v1871, %v1800
        %v1893 = vsel %vm761, %v1875, %v1808
        %v1894 = vsel %vm761, %v1879, %v1816
        %v1895 = vsel %vm761, %v1883, %v1824
        %v1896 = vsel %vm761, %v1887, %v1831
        %v1899 = vsel %vm770, %v1889, %v1841
        %v1902 = vsel %vm770, %v1890, %v1842
        %v1905 = vsel %vm770, %v1891, %v1843
        %v1908 = vsel %vm770, %v1892, %v1844
        %v1911 = vsel %vm770, %v1893, %v1845
        %v1914 = vsel %vm770, %v1894, %v1846
        %v1917 = vsel %vm770, %v1895, %v1847
        %v1920 = vsel %vm770, %v1896, %v1848
        %1921 = vrot.lane.b32.xlu0 %v1172, 98
        %v1922 = vpop.permute.xlu0 %1921
        %v1924 = vsel %vm1175, %v1922, 0
        %v1926 = vand.u32 %v1899, %v1182
        %v1928 = vand.u32 %v1902, %v1182
        %v1930 = vand.u32 %v1905, %v1182
        %v1932 = vand.u32 %v1908, %v1182
        %v1934 = vand.u32 %v1911, %v1182
        %v1936 = vand.u32 %v1914, %v1182
        %v1938 = vand.u32 %v1917, %v1182
        %v1940 = vand.u32 %v1920, %v1182
        %1942 = vmatprep.subr.bf16.mxu0 %v1928
        %1943 = vmatpush1.bf16.msra.mxu0 %v1926
        %1944 = vmatprep.subr.bf16.mxu0 0
        %1945 = vmatpush1.bf16.msra.mxu0 0
        %1946 = vmatprep.subr.bf16.mxu0 0
        %1947 = vmatpush1.bf16.msra.mxu0 0
        %1948 = vmatprep.subr.bf16.mxu0 0
        %1949 = vmatpush1.bf16.msra.mxu0 0
        %1950 = vmatprep.subr.bf16.mxu0 0
        %1951 = vmatpush1.bf16.msra.mxu0 0
        %1952 = vmatprep.subr.bf16.mxu0 0
        %1953 = vmatpush1.bf16.msra.mxu0 0
        %1954 = vmatprep.subr.bf16.mxu0 0
        %1955 = vmatpush1.bf16.msra.mxu0 0
        %1956 = vmatprep.subr.bf16.mxu0 0
        %1957 = vmatpush1.bf16.msra.mxu0 0
        %1958 = vmatprep.subr.bf16.mxu0 0
        %1959 = vmatpush1.bf16.msra.mxu0 0
        %1960 = vmatprep.subr.bf16.mxu0 0
        %1961 = vmatpush1.bf16.msra.mxu0 0
        %1962 = vmatprep.subr.bf16.mxu0 0
        %1963 = vmatpush1.bf16.msra.mxu0 0
        %1964 = vmatprep.subr.bf16.mxu0 0
        %1965 = vmatpush1.bf16.msra.mxu0 0
        %1966 = vmatprep.subr.bf16.mxu0 0
        %1967 = vmatpush1.bf16.msra.mxu0 0
        %1968 = vmatprep.subr.bf16.mxu0 0
        %1969 = vmatpush1.bf16.msra.mxu0 0
        %1970 = vmatprep.subr.bf16.mxu0 0
        %1971 = vmatpush1.bf16.msra.mxu0 0
        %1972 = vmatprep.subr.bf16.mxu0 0
        %1973 = vmatpush1.bf16.msra.mxu0 0
        %1974 = vmatprep.mubr.bf16.mxu0 0
        %1975 = vmatmul.mubr.bf16.gmra.mrb[0].mxu0 %v1924
        %v1976 = vpop.f32.mrb[0].mxu0
        %v1977 = vadd.f32 0.0, %v1976
        %v1978 = vpop.f32.mrb[0].mxu0
        %v1979 = vadd.f32 0.0, %v1978
        %v1980 = vpop.f32.mrb[0].mxu0
        %v1981 = vpop.f32.mrb[0].mxu0
        %1982 = vdwg.mxu0
        %1983 = vmatprep.subr.bf16.mxu0 %v1932
        %1984 = vmatpush1.bf16.msra.mxu0 %v1930
        %1985 = vmatprep.subr.bf16.mxu0 0
        %1986 = vmatpush1.bf16.msra.mxu0 0
        %1987 = vmatprep.subr.bf16.mxu0 0
        %1988 = vmatpush1.bf16.msra.mxu0 0
        %1989 = vmatprep.subr.bf16.mxu0 0
        %1990 = vmatpush1.bf16.msra.mxu0 0
        %1991 = vmatprep.subr.bf16.mxu0 0
        %1992 = vmatpush1.bf16.msra.mxu0 0
        %1993 = vmatprep.subr.bf16.mxu0 0
        %1994 = vmatpush1.bf16.msra.mxu0 0
        %1995 = vmatprep.subr.bf16.mxu0 0
        %1996 = vmatpush1.bf16.msra.mxu0 0
        %1997 = vmatprep.subr.bf16.mxu0 0
        %1998 = vmatpush1.bf16.msra.mxu0 0
        %1999 = vmatprep.subr.bf16.mxu0 0
        %2000 = vmatpush1.bf16.msra.mxu0 0
        %2001 = vmatprep.subr.bf16.mxu0 0
        %2002 = vmatpush1.bf16.msra.mxu0 0
        %2003 = vmatprep.subr.bf16.mxu0 0
        %2004 = vmatpush1.bf16.msra.mxu0 0
        %2005 = vmatprep.subr.bf16.mxu0 0
        %2006 = vmatpush1.bf16.msra.mxu0 0
        %2007 = vmatprep.subr.bf16.mxu0 0
        %2008 = vmatpush1.bf16.msra.mxu0 0
        %2009 = vmatprep.subr.bf16.mxu0 0
        %2010 = vmatpush1.bf16.msra.mxu0 0
        %2011 = vmatprep.subr.bf16.mxu0 0
        %2012 = vmatpush1.bf16.msra.mxu0 0
        %2013 = vmatprep.subr.bf16.mxu0 0
        %2014 = vmatpush1.bf16.msra.mxu0 0
        %2015 = vmatprep.mubr.bf16.mxu0 0
        %2016 = vmatmul.mubr.bf16.gmra.mrb[0].mxu0 %v1924
        %v2017 = vpop.f32.mrb[0].mxu0
        %v2018 = vadd.f32 0.0, %v2017
        %v2019 = vpop.f32.mrb[0].mxu0
        %v2020 = vadd.f32 0.0, %v2019
        %v2021 = vpop.f32.mrb[0].mxu0
        %v2022 = vpop.f32.mrb[0].mxu0
        %2023 = vdwg.mxu0
        %2024 = vmatprep.subr.bf16.mxu0 %v1936
        %2025 = vmatpush1.bf16.msra.mxu0 %v1934
        %2026 = vmatprep.subr.bf16.mxu0 0
        %2027 = vmatpush1.bf16.msra.mxu0 0
        %2028 = vmatprep.subr.bf16.mxu0 0
        %2029 = vmatpush1.bf16.msra.mxu0 0
        %2030 = vmatprep.subr.bf16.mxu0 0
        %2031 = vmatpush1.bf16.msra.mxu0 0
        %2032 = vmatprep.subr.bf16.mxu0 0
        %2033 = vmatpush1.bf16.msra.mxu0 0
        %2034 = vmatprep.subr.bf16.mxu0 0
        %2035 = vmatpush1.bf16.msra.mxu0 0
        %2036 = vmatprep.subr.bf16.mxu0 0
        %2037 = vmatpush1.bf16.msra.mxu0 0
        %2038 = vmatprep.subr.bf16.mxu0 0
        %2039 = vmatpush1.bf16.msra.mxu0 0
        %2040 = vmatprep.subr.bf16.mxu0 0
        %2041 = vmatpush1.bf16.msra.mxu0 0
        %2042 = vmatprep.subr.bf16.mxu0 0
        %2043 = vmatpush1.bf16.msra.mxu0 0
        %2044 = vmatprep.subr.bf16.mxu0 0
        %2045 = vmatpush1.bf16.msra.mxu0 0
        %2046 = vmatprep.subr.bf16.mxu0 0
        %2047 = vmatpush1.bf16.msra.mxu0 0
        %2048 = vmatprep.subr.bf16.mxu0 0
        %2049 = vmatpush1.bf16.msra.mxu0 0
        %2050 = vmatprep.subr.bf16.mxu0 0
        %2051 = vmatpush1.bf16.msra.mxu0 0
        %2052 = vmatprep.subr.bf16.mxu0 0
        %2053 = vmatpush1.bf16.msra.mxu0 0
        %2054 = vmatprep.subr.bf16.mxu0 0
        %2055 = vmatpush1.bf16.msra.mxu0 0
        %2056 = vmatprep.mubr.bf16.mxu0 0
        %2057 = vmatmul.mubr.bf16.gmra.mrb[0].mxu0 %v1924
        %v2058 = vpop.f32.mrb[0].mxu0
        %v2059 = vadd.f32 0.0, %v2058
        %v2060 = vpop.f32.mrb[0].mxu0
        %v2061 = vadd.f32 0.0, %v2060
        %v2062 = vpop.f32.mrb[0].mxu0
        %v2063 = vpop.f32.mrb[0].mxu0
        %2064 = vdwg.mxu0
        %2065 = vmatprep.subr.bf16.mxu0 %v1940
        %2066 = vmatpush1.bf16.msra.mxu0 %v1938
        %2067 = vmatprep.subr.bf16.mxu0 0
        %2068 = vmatpush1.bf16.msra.mxu0 0
        %2069 = vmatprep.subr.bf16.mxu0 0
        %2070 = vmatpush1.bf16.msra.mxu0 0
        %2071 = vmatprep.subr.bf16.mxu0 0
        %2072 = vmatpush1.bf16.msra.mxu0 0
        %2073 = vmatprep.subr.bf16.mxu0 0
        %2074 = vmatpush1.bf16.msra.mxu0 0
        %2075 = vmatprep.subr.bf16.mxu0 0
        %2076 = vmatpush1.bf16.msra.mxu0 0
        %2077 = vmatprep.subr.bf16.mxu0 0
        %2078 = vmatpush1.bf16.msra.mxu0 0
        %2079 = vmatprep.subr.bf16.mxu0 0
        %2080 = vmatpush1.bf16.msra.mxu0 0
        %2081 = vmatprep.subr.bf16.mxu0 0
        %2082 = vmatpush1.bf16.msra.mxu0 0
        %2083 = vmatprep.subr.bf16.mxu0 0
        %2084 = vmatpush1.bf16.msra.mxu0 0
        %2085 = vmatprep.subr.bf16.mxu0 0
        %2086 = vmatpush1.bf16.msra.mxu0 0
        %2087 = vmatprep.subr.bf16.mxu0 0
        %2088 = vmatpush1.bf16.msra.mxu0 0
        %2089 = vmatprep.subr.bf16.mxu0 0
        %2090 = vmatpush1.bf16.msra.mxu0 0
        %2091 = vmatprep.subr.bf16.mxu0 0
        %2092 = vmatpush1.bf16.msra.mxu0 0
        %2093 = vmatprep.subr.bf16.mxu0 0
        %2094 = vmatpush1.bf16.msra.mxu0 0
        %2095 = vmatprep.subr.bf16.mxu0 0
        %2096 = vmatpush1.bf16.msra.mxu0 0
        %2097 = vmatprep.mubr.bf16.mxu0 0
        %2098 = vmatmul.mubr.bf16.gmra.mrb[0].mxu0 %v1924
        %v2099 = vpop.f32.mrb[0].mxu0
        %v2100 = vadd.f32 0.0, %v2099
        %v2101 = vpop.f32.mrb[0].mxu0
        %v2102 = vadd.f32 0.0, %v2101
        %v2103 = vpop.f32.mrb[0].mxu0
        %v2104 = vpop.f32.mrb[0].mxu0
        %2105 = vdwg.mxu0
        %v2106 = vadd.f32 %v1417, %v1977
        %v2107 = vadd.f32 %v1419, %v1979
        %v2108 = vadd.f32 %v1458, %v2018
        %v2109 = vadd.f32 %v1460, %v2020
        %v2110 = vadd.f32 %v1499, %v2059
        %v2111 = vadd.f32 %v1501, %v2061
        %v2112 = vadd.f32 %v1540, %v2100
        %v2113 = vadd.f32 %v1542, %v2102
        %2114 = vrot.lane.b32.xlu0 %v428, 32
        %v2115 = vpop.permute.xlu0 %2114
        %2116 = vrot.lane.b32.xlu0 %v429, 32
        %v2117 = vpop.permute.xlu0 %2116
        %2118 = vrot.lane.b32.xlu0 %v430, 32
        %v2119 = vpop.permute.xlu0 %2118
        %2120 = vrot.lane.b32.xlu0 %v431, 32
        %v2121 = vpop.permute.xlu0 %2120
        %2122 = vrot.lane.b32.xlu0 %v432, 32
        %v2123 = vpop.permute.xlu0 %2122
        %2124 = vrot.lane.b32.xlu0 %v433, 32
        %v2125 = vpop.permute.xlu0 %2124
        %2126 = vrot.lane.b32.xlu0 %v434, 32
        %v2127 = vpop.permute.xlu0 %2126
        %2128 = vrot.lane.b32.xlu0 %v435, 32
        %v2129 = vpop.permute.xlu0 %2128
        %vm2130 = vcmask 261120
        %v2131 = vsel %vm2130, %v2115, %v2117
        %v2132 = vsel %vm2130, %v2117, %v2119
        %v2133 = vsel %vm2130, %v2119, %v2121
        %v2134 = vsel %vm2130, %v2121, %v2123
        %v2135 = vsel %vm2130, %v2123, %v2125
        %v2136 = vsel %vm2130, %v2125, %v2127
        %v2137 = vsel %vm2130, %v2127, %v2129
        %vm2145 = vcmask 261120
        %v2147 = vsel %vm2145, %v2129, 0
        %2149 = vrot.lane.b32.xlu0 %v428, 31
        %v2150 = vpop.permute.xlu0 %2149
        %2151 = vrot.lane.b32.xlu0 %v429, 31
        %v2152 = vpop.permute.xlu0 %2151
        %2153 = vrot.lane.b32.xlu0 %v430, 31
        %v2154 = vpop.permute.xlu0 %2153
        %2155 = vrot.lane.b32.xlu0 %v431, 31
        %v2156 = vpop.permute.xlu0 %2155
        %2157 = vrot.lane.b32.xlu0 %v432, 31
        %v2158 = vpop.permute.xlu0 %2157
        %2159 = vrot.lane.b32.xlu0 %v433, 31
        %v2160 = vpop.permute.xlu0 %2159
        %2161 = vrot.lane.b32.xlu0 %v434, 31
        %v2162 = vpop.permute.xlu0 %2161
        %2163 = vrot.lane.b32.xlu0 %v435, 31
        %v2164 = vpop.permute.xlu0 %2163
        %vm2165 = vcmask 252928
        %v2166 = vsel %vm2165, %v2150, %v2152
        %v2167 = vsel %vm2165, %v2152, %v2154
        %v2168 = vsel %vm2165, %v2154, %v2156
        %v2169 = vsel %vm2165, %v2156, %v2158
        %v2170 = vsel %vm2165, %v2158, %v2160
        %v2171 = vsel %vm2165, %v2160, %v2162
        %v2172 = vsel %vm2165, %v2162, %v2164
        %vm2173 = vcmask 252928
        %v2175 = vsel %vm2173, %v2164, 0
        %2176 = vrot.lane.b32.xlu0 %v428, 30
        %v2177 = vpop.permute.xlu0 %2176
        %2178 = vrot.lane.b32.xlu0 %v429, 30
        %v2179 = vpop.permute.xlu0 %2178
        %2180 = vrot.lane.b32.xlu0 %v430, 30
        %v2181 = vpop.permute.xlu0 %2180
        %2182 = vrot.lane.b32.xlu0 %v431, 30
        %v2183 = vpop.permute.xlu0 %2182
        %2184 = vrot.lane.b32.xlu0 %v432, 30
        %v2185 = vpop.permute.xlu0 %2184
        %2186 = vrot.lane.b32.xlu0 %v433, 30
        %v2187 = vpop.permute.xlu0 %2186
        %2188 = vrot.lane.b32.xlu0 %v434, 30
        %v2189 = vpop.permute.xlu0 %2188
        %2190 = vrot.lane.b32.xlu0 %v435, 30
        %v2191 = vpop.permute.xlu0 %2190
        %vm2192 = vcmask 244736
        %v2193 = vsel %vm2192, %v2177, %v2179
        %v2194 = vsel %vm2192, %v2179, %v2181
        %v2195 = vsel %vm2192, %v2181, %v2183
        %v2196 = vsel %vm2192, %v2183, %v2185
        %v2197 = vsel %vm2192, %v2185, %v2187
        %v2198 = vsel %vm2192, %v2187, %v2189
        %v2199 = vsel %vm2192, %v2189, %v2191
        %vm2200 = vcmask 244736
        %v2202 = vsel %vm2200, %v2191, 0
        %2203 = vrot.lane.b32.xlu0 %v428, 29
        %v2204 = vpop.permute.xlu0 %2203
        %2205 = vrot.lane.b32.xlu0 %v429, 29
        %v2206 = vpop.permute.xlu0 %2205
        %2207 = vrot.lane.b32.xlu0 %v430, 29
        %v2208 = vpop.permute.xlu0 %2207
        %2209 = vrot.lane.b32.xlu0 %v431, 29
        %v2210 = vpop.permute.xlu0 %2209
        %2211 = vrot.lane.b32.xlu0 %v432, 29
        %v2212 = vpop.permute.xlu0 %2211
        %2213 = vrot.lane.b32.xlu0 %v433, 29
        %v2214 = vpop.permute.xlu0 %2213
        %2215 = vrot.lane.b32.xlu0 %v434, 29
        %v2216 = vpop.permute.xlu0 %2215
        %2217 = vrot.lane.b32.xlu0 %v435, 29
        %v2218 = vpop.permute.xlu0 %2217
        %vm2219 = vcmask 236544
        %v2220 = vsel %vm2219, %v2204, %v2206
        %v2221 = vsel %vm2219, %v2206, %v2208
        %v2222 = vsel %vm2219, %v2208, %v2210
        %v2223 = vsel %vm2219, %v2210, %v2212
        %v2224 = vsel %vm2219, %v2212, %v2214
        %v2225 = vsel %vm2219, %v2214, %v2216
        %v2226 = vsel %vm2219, %v2216, %v2218
        %vm2227 = vcmask 236544
        %v2229 = vsel %vm2227, %v2218, 0
        %2230 = vrot.lane.b32.xlu0 %v428, 28
        %v2231 = vpop.permute.xlu0 %2230
        %2232 = vrot.lane.b32.xlu0 %v429, 28
        %v2233 = vpop.permute.xlu0 %2232
        %2234 = vrot.lane.b32.xlu0 %v430, 28
        %v2235 = vpop.permute.xlu0 %2234
        %2236 = vrot.lane.b32.xlu0 %v431, 28
        %v2237 = vpop.permute.xlu0 %2236
        %2238 = vrot.lane.b32.xlu0 %v432, 28
        %v2239 = vpop.permute.xlu0 %2238
        %2240 = vrot.lane.b32.xlu0 %v433, 28
        %v2241 = vpop.permute.xlu0 %2240
        %2242 = vrot.lane.b32.xlu0 %v434, 28
        %v2243 = vpop.permute.xlu0 %2242
        %2244 = vrot.lane.b32.xlu0 %v435, 28
        %v2245 = vpop.permute.xlu0 %2244
        %vm2246 = vcmask 228352
        %v2247 = vsel %vm2246, %v2231, %v2233
        %v2248 = vsel %vm2246, %v2233, %v2235
        %v2249 = vsel %vm2246, %v2235, %v2237
        %v2250 = vsel %vm2246, %v2237, %v2239
        %v2251 = vsel %vm2246, %v2239, %v2241
        %v2252 = vsel %vm2246, %v2241, %v2243
        %v2253 = vsel %vm2246, %v2243, %v2245
        %vm2254 = vcmask 228352
        %v2256 = vsel %vm2254, %v2245, 0
        %v2258 = vshrl.u32 %v2166, 16
        %v2260 = vrot.slane %v2258, 6
        %v2261 = vshll.u32 %v2166, 16
        %v2263 = vrot.slane %v2261, 7
        %v2264 = vor.u32 %v2260, %v2263
        %v2266 = vshrl.u32 %v2167, 16
        %v2268 = vrot.slane %v2266, 6
        %v2269 = vshll.u32 %v2167, 16
        %v2271 = vrot.slane %v2269, 7
        %v2272 = vor.u32 %v2268, %v2271
        %v2274 = vshrl.u32 %v2168, 16
        %v2276 = vrot.slane %v2274, 6
        %v2277 = vshll.u32 %v2168, 16
        %v2279 = vrot.slane %v2277, 7
        %v2280 = vor.u32 %v2276, %v2279
        %v2282 = vshrl.u32 %v2169, 16
        %v2284 = vrot.slane %v2282, 6
        %v2285 = vshll.u32 %v2169, 16
        %v2287 = vrot.slane %v2285, 7
        %v2288 = vor.u32 %v2284, %v2287
        %v2290 = vshrl.u32 %v2170, 16
        %v2292 = vrot.slane %v2290, 6
        %v2293 = vshll.u32 %v2170, 16
        %v2295 = vrot.slane %v2293, 7
        %v2296 = vor.u32 %v2292, %v2295
        %v2298 = vshrl.u32 %v2171, 16
        %v2300 = vrot.slane %v2298, 6
        %v2301 = vshll.u32 %v2171, 16
        %v2303 = vrot.slane %v2301, 7
        %v2304 = vor.u32 %v2300, %v2303
        %v2306 = vshrl.u32 %v2172, 16
        %v2308 = vrot.slane %v2306, 6
        %v2309 = vshll.u32 %v2172, 16
        %v2311 = vrot.slane %v2309, 7
        %v2312 = vor.u32 %v2308, %v2311
        %v2313 = vshrl.u32 %v2175, 16
        %v2315 = vrot.slane %v2313, 6
        %v2316 = vshll.u32 %v2175, 16
        %v2318 = vrot.slane %v2316, 7
        %v2319 = vor.u32 %v2315, %v2318
        %v2329 = vrot.slane %v2193, 5
        %v2330 = vrot.slane %v2194, 5
        %v2331 = vrot.slane %v2195, 5
        %v2332 = vrot.slane %v2196, 5
        %v2333 = vrot.slane %v2197, 5
        %v2334 = vrot.slane %v2198, 5
        %v2335 = vrot.slane %v2199, 5
        %v2336 = vrot.slane %v2202, 5
        %v2338 = vshrl.u32 %v2220, 16
        %v2340 = vrot.slane %v2338, 3
        %v2341 = vshll.u32 %v2220, 16
        %v2343 = vrot.slane %v2341, 4
        %v2344 = vor.u32 %v2340, %v2343
        %v2346 = vshrl.u32 %v2221, 16
        %v2348 = vrot.slane %v2346, 3
        %v2349 = vshll.u32 %v2221, 16
        %v2351 = vrot.slane %v2349, 4
        %v2352 = vor.u32 %v2348, %v2351
        %v2354 = vshrl.u32 %v2222, 16
        %v2356 = vrot.slane %v2354, 3
        %v2357 = vshll.u32 %v2222, 16
        %v2359 = vrot.slane %v2357, 4
        %v2360 = vor.u32 %v2356, %v2359
        %v2362 = vshrl.u32 %v2223, 16
        %v2364 = vrot.slane %v2362, 3
        %v2365 = vshll.u32 %v2223, 16
        %v2367 = vrot.slane %v2365, 4
        %v2368 = vor.u32 %v2364, %v2367
        %v2370 = vshrl.u32 %v2224, 16
        %v2372 = vrot.slane %v2370, 3
        %v2373 = vshll.u32 %v2224, 16
        %v2375 = vrot.slane %v2373, 4
        %v2376 = vor.u32 %v2372, %v2375
        %v2378 = vshrl.u32 %v2225, 16
        %v2380 = vrot.slane %v2378, 3
        %v2381 = vshll.u32 %v2225, 16
        %v2383 = vrot.slane %v2381, 4
        %v2384 = vor.u32 %v2380, %v2383
        %v2386 = vshrl.u32 %v2226, 16
        %v2388 = vrot.slane %v2386, 3
        %v2389 = vshll.u32 %v2226, 16
        %v2391 = vrot.slane %v2389, 4
        %v2392 = vor.u32 %v2388, %v2391
        %v2393 = vshrl.u32 %v2229, 16
        %v2395 = vrot.slane %v2393, 3
        %v2396 = vshll.u32 %v2229, 16
        %v2398 = vrot.slane %v2396, 4
        %v2399 = vor.u32 %v2395, %v2398
        %v2409 = vrot.slane %v2247, 2
        %v2410 = vrot.slane %v2248, 2
        %v2411 = vrot.slane %v2249, 2
        %v2412 = vrot.slane %v2250, 2
        %v2413 = vrot.slane %v2251, 2
        %v2414 = vrot.slane %v2252, 2
        %v2415 = vrot.slane %v2253, 2
        %v2416 = vrot.slane %v2256, 2
        %v2417 = vsel %vm717, %v2131, %v2264
        %v2418 = vsel %vm717, %v2132, %v2272
        %v2419 = vsel %vm717, %v2133, %v2280
        %v2420 = vsel %vm717, %v2134, %v2288
        %v2421 = vsel %vm717, %v2135, %v2296
        %v2422 = vsel %vm717, %v2136, %v2304
        %v2423 = vsel %vm717, %v2137, %v2312
        %v2424 = vsel %vm717, %v2147, %v2319
        %v2427 = vsel %vm726, %v2417, %v2329
        %v2431 = vsel %vm726, %v2418, %v2330
        %v2435 = vsel %vm726, %v2419, %v2331
        %v2439 = vsel %vm726, %v2420, %v2332
        %v2443 = vsel %vm726, %v2421, %v2333
        %v2447 = vsel %vm726, %v2422, %v2334
        %v2451 = vsel %vm726, %v2423, %v2335
        %v2455 = vsel %vm726, %v2424, %v2336
        %v2457 = vsel %vm761, %v2427, %v2344
        %v2458 = vsel %vm761, %v2431, %v2352
        %v2459 = vsel %vm761, %v2435, %v2360
        %v2460 = vsel %vm761, %v2439, %v2368
        %v2461 = vsel %vm761, %v2443, %v2376
        %v2462 = vsel %vm761, %v2447, %v2384
        %v2463 = vsel %vm761, %v2451, %v2392
        %v2464 = vsel %vm761, %v2455, %v2399
        %v2467 = vsel %vm770, %v2457, %v2409
        %v2470 = vsel %vm770, %v2458, %v2410
        %v2473 = vsel %vm770, %v2459, %v2411
        %v2476 = vsel %vm770, %v2460, %v2412
        %v2479 = vsel %vm770, %v2461, %v2413
        %v2482 = vsel %vm770, %v2462, %v2414
        %v2485 = vsel %vm770, %v2463, %v2415
        %v2488 = vsel %vm770, %v2464, %v2416
        %2489 = vrot.lane.b32.xlu0 %v1172, 83
        %v2490 = vpop.permute.xlu0 %2489
        %v2492 = vsel %vm1175, %v2490, 0
        %v2494 = vand.u32 %v2467, %v1182
        %v2496 = vand.u32 %v2470, %v1182
        %v2498 = vand.u32 %v2473, %v1182
        %v2500 = vand.u32 %v2476, %v1182
        %v2502 = vand.u32 %v2479, %v1182
        %v2504 = vand.u32 %v2482, %v1182
        %v2506 = vand.u32 %v2485, %v1182
        %v2508 = vand.u32 %v2488, %v1182
        %2510 = vmatprep.subr.bf16.mxu0 %v2496
        %2511 = vmatpush1.bf16.msra.mxu0 %v2494
        %2512 = vmatprep.subr.bf16.mxu0 0
        %2513 = vmatpush1.bf16.msra.mxu0 0
        %2514 = vmatprep.subr.bf16.mxu0 0
        %2515 = vmatpush1.bf16.msra.mxu0 0
        %2516 = vmatprep.subr.bf16.mxu0 0
        %2517 = vmatpush1.bf16.msra.mxu0 0
        %2518 = vmatprep.subr.bf16.mxu0 0
        %2519 = vmatpush1.bf16.msra.mxu0 0
        %2520 = vmatprep.subr.bf16.mxu0 0
        %2521 = vmatpush1.bf16.msra.mxu0 0
        %2522 = vmatprep.subr.bf16.mxu0 0
        %2523 = vmatpush1.bf16.msra.mxu0 0
        %2524 = vmatprep.subr.bf16.mxu0 0
        %2525 = vmatpush1.bf16.msra.mxu0 0
        %2526 = vmatprep.subr.bf16.mxu0 0
        %2527 = vmatpush1.bf16.msra.mxu0 0
        %2528 = vmatprep.subr.bf16.mxu0 0
        %2529 = vmatpush1.bf16.msra.mxu0 0
        %2530 = vmatprep.subr.bf16.mxu0 0
        %2531 = vmatpush1.bf16.msra.mxu0 0
        %2532 = vmatprep.subr.bf16.mxu0 0
        %2533 = vmatpush1.bf16.msra.mxu0 0
        %2534 = vmatprep.subr.bf16.mxu0 0
        %2535 = vmatpush1.bf16.msra.mxu0 0
        %2536 = vmatprep.subr.bf16.mxu0 0
        %2537 = vmatpush1.bf16.msra.mxu0 0
        %2538 = vmatprep.subr.bf16.mxu0 0
        %2539 = vmatpush1.bf16.msra.mxu0 0
        %2540 = vmatprep.subr.bf16.mxu0 0
        %2541 = vmatpush1.bf16.msra.mxu0 0
        %2542 = vmatprep.mubr.bf16.mxu0 0
        %2543 = vmatmul.mubr.bf16.gmra.mrb[0].mxu0 %v2492
        %v2544 = vpop.f32.mrb[0].mxu0
        %v2545 = vadd.f32 0.0, %v2544
        %v2546 = vpop.f32.mrb[0].mxu0
        %v2547 = vadd.f32 0.0, %v2546
        %v2548 = vpop.f32.mrb[0].mxu0
        %v2549 = vpop.f32.mrb[0].mxu0
        %2550 = vdwg.mxu0
        %2551 = vmatprep.subr.bf16.mxu0 %v2500
        %2552 = vmatpush1.bf16.msra.mxu0 %v2498
        %2553 = vmatprep.subr.bf16.mxu0 0
        %2554 = vmatpush1.bf16.msra.mxu0 0
        %2555 = vmatprep.subr.bf16.mxu0 0
        %2556 = vmatpush1.bf16.msra.mxu0 0
        %2557 = vmatprep.subr.bf16.mxu0 0
        %2558 = vmatpush1.bf16.msra.mxu0 0
        %2559 = vmatprep.subr.bf16.mxu0 0
        %2560 = vmatpush1.bf16.msra.mxu0 0
        %2561 = vmatprep.subr.bf16.mxu0 0
        %2562 = vmatpush1.bf16.msra.mxu0 0
        %2563 = vmatprep.subr.bf16.mxu0 0
        %2564 = vmatpush1.bf16.msra.mxu0 0
        %2565 = vmatprep.subr.bf16.mxu0 0
        %2566 = vmatpush1.bf16.msra.mxu0 0
        %2567 = vmatprep.subr.bf16.mxu0 0
        %2568 = vmatpush1.bf16.msra.mxu0 0
        %2569 = vmatprep.subr.bf16.mxu0 0
        %2570 = vmatpush1.bf16.msra.mxu0 0
        %2571 = vmatprep.subr.bf16.mxu0 0
        %2572 = vmatpush1.bf16.msra.mxu0 0
        %2573 = vmatprep.subr.bf16.mxu0 0
        %2574 = vmatpush1.bf16.msra.mxu0 0
        %2575 = vmatprep.subr.bf16.mxu0 0
        %2576 = vmatpush1.bf16.msra.mxu0 0
        %2577 = vmatprep.subr.bf16.mxu0 0
        %2578 = vmatpush1.bf16.msra.mxu0 0
        %2579 = vmatprep.subr.bf16.mxu0 0
        %2580 = vmatpush1.bf16.msra.mxu0 0
        %2581 = vmatprep.subr.bf16.mxu0 0
        %2582 = vmatpush1.bf16.msra.mxu0 0
        %2583 = vmatprep.mubr.bf16.mxu0 0
        %2584 = vmatmul.mubr.bf16.gmra.mrb[0].mxu0 %v2492
        %v2585 = vpop.f32.mrb[0].mxu0
        %v2586 = vadd.f32 0.0, %v2585
        %v2587 = vpop.f32.mrb[0].mxu0
        %v2588 = vadd.f32 0.0, %v2587
        %v2589 = vpop.f32.mrb[0].mxu0
        %v2590 = vpop.f32.mrb[0].mxu0
        %2591 = vdwg.mxu0
        %2592 = vmatprep.subr.bf16.mxu0 %v2504
        %2593 = vmatpush1.bf16.msra.mxu0 %v2502
        %2594 = vmatprep.subr.bf16.mxu0 0
        %2595 = vmatpush1.bf16.msra.mxu0 0
        %2596 = vmatprep.subr.bf16.mxu0 0
        %2597 = vmatpush1.bf16.msra.mxu0 0
        %2598 = vmatprep.subr.bf16.mxu0 0
        %2599 = vmatpush1.bf16.msra.mxu0 0
        %2600 = vmatprep.subr.bf16.mxu0 0
        %2601 = vmatpush1.bf16.msra.mxu0 0
        %2602 = vmatprep.subr.bf16.mxu0 0
        %2603 = vmatpush1.bf16.msra.mxu0 0
        %2604 = vmatprep.subr.bf16.mxu0 0
        %2605 = vmatpush1.bf16.msra.mxu0 0
        %2606 = vmatprep.subr.bf16.mxu0 0
        %2607 = vmatpush1.bf16.msra.mxu0 0
        %2608 = vmatprep.subr.bf16.mxu0 0
        %2609 = vmatpush1.bf16.msra.mxu0 0
        %2610 = vmatprep.subr.bf16.mxu0 0
        %2611 = vmatpush1.bf16.msra.mxu0 0
        %2612 = vmatprep.subr.bf16.mxu0 0
        %2613 = vmatpush1.bf16.msra.mxu0 0
        %2614 = vmatprep.subr.bf16.mxu0 0
        %2615 = vmatpush1.bf16.msra.mxu0 0
        %2616 = vmatprep.subr.bf16.mxu0 0
        %2617 = vmatpush1.bf16.msra.mxu0 0
        %2618 = vmatprep.subr.bf16.mxu0 0
        %2619 = vmatpush1.bf16.msra.mxu0 0
        %2620 = vmatprep.subr.bf16.mxu0 0
        %2621 = vmatpush1.bf16.msra.mxu0 0
        %2622 = vmatprep.subr.bf16.mxu0 0
        %2623 = vmatpush1.bf16.msra.mxu0 0
        %2624 = vmatprep.mubr.bf16.mxu0 0
        %2625 = vmatmul.mubr.bf16.gmra.mrb[0].mxu0 %v2492
        %v2626 = vpop.f32.mrb[0].mxu0
        %v2627 = vadd.f32 0.0, %v2626
        %v2628 = vpop.f32.mrb[0].mxu0
        %v2629 = vadd.f32 0.0, %v2628
        %v2630 = vpop.f32.mrb[0].mxu0
        %v2631 = vpop.f32.mrb[0].mxu0
        %2632 = vdwg.mxu0
        %2633 = vmatprep.subr.bf16.mxu0 %v2508
        %2634 = vmatpush1.bf16.msra.mxu0 %v2506
        %2635 = vmatprep.subr.bf16.mxu0 0
        %2636 = vmatpush1.bf16.msra.mxu0 0
        %2637 = vmatprep.subr.bf16.mxu0 0
        %2638 = vmatpush1.bf16.msra.mxu0 0
        %2639 = vmatprep.subr.bf16.mxu0 0
        %2640 = vmatpush1.bf16.msra.mxu0 0
        %2641 = vmatprep.subr.bf16.mxu0 0
        %2642 = vmatpush1.bf16.msra.mxu0 0
        %2643 = vmatprep.subr.bf16.mxu0 0
        %2644 = vmatpush1.bf16.msra.mxu0 0
        %2645 = vmatprep.subr.bf16.mxu0 0
        %2646 = vmatpush1.bf16.msra.mxu0 0
        %2647 = vmatprep.subr.bf16.mxu0 0
        %2648 = vmatpush1.bf16.msra.mxu0 0
        %2649 = vmatprep.subr.bf16.mxu0 0
        %2650 = vmatpush1.bf16.msra.mxu0 0
        %2651 = vmatprep.subr.bf16.mxu0 0
        %2652 = vmatpush1.bf16.msra.mxu0 0
        %2653 = vmatprep.subr.bf16.mxu0 0
        %2654 = vmatpush1.bf16.msra.mxu0 0
        %2655 = vmatprep.subr.bf16.mxu0 0
        %2656 = vmatpush1.bf16.msra.mxu0 0
        %2657 = vmatprep.subr.bf16.mxu0 0
        %2658 = vmatpush1.bf16.msra.mxu0 0
        %2659 = vmatprep.subr.bf16.mxu0 0
        %2660 = vmatpush1.bf16.msra.mxu0 0
        %2661 = vmatprep.subr.bf16.mxu0 0
        %2662 = vmatpush1.bf16.msra.mxu0 0
        %2663 = vmatprep.subr.bf16.mxu0 0
        %2664 = vmatpush1.bf16.msra.mxu0 0
        %2665 = vmatprep.mubr.bf16.mxu0 0
        %2666 = vmatmul.mubr.bf16.gmra.mrb[0].mxu0 %v2492
        %v2667 = vpop.f32.mrb[0].mxu0
        %v2668 = vadd.f32 0.0, %v2667
        %v2669 = vpop.f32.mrb[0].mxu0
        %v2670 = vadd.f32 0.0, %v2669
        %v2671 = vpop.f32.mrb[0].mxu0
        %v2672 = vpop.f32.mrb[0].mxu0
        %2673 = vdwg.mxu0
        %v2674 = vadd.f32 %v2106, %v2545
        %v2675 = vadd.f32 %v2107, %v2547
        %v2676 = vadd.f32 %v2108, %v2586
        %v2677 = vadd.f32 %v2109, %v2588
        %v2678 = vadd.f32 %v2110, %v2627
        %v2679 = vadd.f32 %v2111, %v2629
        %v2680 = vadd.f32 %v2112, %v2668
        %v2681 = vadd.f32 %v2113, %v2670
        %v2682 = vshrl.u32 0, 16
        %v2684 = vrot.slane %v2682, 6
        %v2685 = vshll.u32 0, 16
        %v2687 = vrot.slane %v2685, 7
        %v2688 = vor.u32 %v2684, %v2687
        %v2691 = vrot.slane 0, 5
        %v2692 = vrot.slane %v2682, 3
        %v2693 = vrot.slane %v2685, 4
        %v2694 = vor.u32 %v2692, %v2693
        %v2696 = vrot.slane 0, 2
        %v2697 = vsel %vm717, 0, %v2688
        %v2700 = vsel %vm726, %v2697, %v2691
        %v2702 = vsel %vm761, %v2700, %v2694
        %v2705 = vsel %vm770, %v2702, %v2696
        %2706 = vrot.lane.b32.xlu0 %v1172, 68
        %v2707 = vpop.permute.xlu0 %2706
        %v2709 = vsel %vm1175, %v2707, 0
        %v2711 = vand.u32 %v2705, %v1182
        %2713 = vmatprep.subr.bf16.mxu0 %v1370
        %2714 = vmatpush1.bf16.msra.mxu0 %v1368
        %2715 = vmatprep.subr.bf16.mxu0 0
        %2716 = vmatpush1.bf16.msra.mxu0 0
        %2717 = vmatprep.subr.bf16.mxu0 0
        %2718 = vmatpush1.bf16.msra.mxu0 0
        %2719 = vmatprep.subr.bf16.mxu0 0
        %2720 = vmatpush1.bf16.msra.mxu0 0
        %2721 = vmatprep.subr.bf16.mxu0 0
        %2722 = vmatpush1.bf16.msra.mxu0 0
        %2723 = vmatprep.subr.bf16.mxu0 0
        %2724 = vmatpush1.bf16.msra.mxu0 0
        %2725 = vmatprep.subr.bf16.mxu0 0
        %2726 = vmatpush1.bf16.msra.mxu0 0
        %2727 = vmatprep.subr.bf16.mxu0 0
        %2728 = vmatpush1.bf16.msra.mxu0 0
        %2729 = vmatprep.subr.bf16.mxu0 0
        %2730 = vmatpush1.bf16.msra.mxu0 0
        %2731 = vmatprep.subr.bf16.mxu0 0
        %2732 = vmatpush1.bf16.msra.mxu0 0
        %2733 = vmatprep.subr.bf16.mxu0 0
        %2734 = vmatpush1.bf16.msra.mxu0 0
        %2735 = vmatprep.subr.bf16.mxu0 0
        %2736 = vmatpush1.bf16.msra.mxu0 0
        %2737 = vmatprep.subr.bf16.mxu0 0
        %2738 = vmatpush1.bf16.msra.mxu0 0
        %2739 = vmatprep.subr.bf16.mxu0 0
        %2740 = vmatpush1.bf16.msra.mxu0 0
        %2741 = vmatprep.subr.bf16.mxu0 0
        %2742 = vmatpush1.bf16.msra.mxu0 0
        %2743 = vmatprep.subr.bf16.mxu0 0
        %2744 = vmatpush1.bf16.msra.mxu0 0
        %2745 = vmatprep.mubr.bf16.mxu0 0
        %2746 = vmatmul.mubr.bf16.gmra.mrb[0].mxu0 %v2709
        %v2747 = vpop.f32.mrb[0].mxu0
        %v2748 = vadd.f32 0.0, %v2747
        %v2749 = vpop.f32.mrb[0].mxu0
        %v2750 = vadd.f32 0.0, %v2749
        %v2751 = vpop.f32.mrb[0].mxu0
        %v2752 = vpop.f32.mrb[0].mxu0
        %2753 = vdwg.mxu0
        %2754 = vmatprep.subr.bf16.mxu0 %v1374
        %2755 = vmatpush1.bf16.msra.mxu0 %v1372
        %2756 = vmatprep.subr.bf16.mxu0 0
        %2757 = vmatpush1.bf16.msra.mxu0 0
        %2758 = vmatprep.subr.bf16.mxu0 0
        %2759 = vmatpush1.bf16.msra.mxu0 0
        %2760 = vmatprep.subr.bf16.mxu0 0
        %2761 = vmatpush1.bf16.msra.mxu0 0
        %2762 = vmatprep.subr.bf16.mxu0 0
        %2763 = vmatpush1.bf16.msra.mxu0 0
        %2764 = vmatprep.subr.bf16.mxu0 0
        %2765 = vmatpush1.bf16.msra.mxu0 0
        %2766 = vmatprep.subr.bf16.mxu0 0
        %2767 = vmatpush1.bf16.msra.mxu0 0
        %2768 = vmatprep.subr.bf16.mxu0 0
        %2769 = vmatpush1.bf16.msra.mxu0 0
        %2770 = vmatprep.subr.bf16.mxu0 0
        %2771 = vmatpush1.bf16.msra.mxu0 0
        %2772 = vmatprep.subr.bf16.mxu0 0
        %2773 = vmatpush1.bf16.msra.mxu0 0
        %2774 = vmatprep.subr.bf16.mxu0 0
        %2775 = vmatpush1.bf16.msra.mxu0 0
        %2776 = vmatprep.subr.bf16.mxu0 0
        %2777 = vmatpush1.bf16.msra.mxu0 0
        %2778 = vmatprep.subr.bf16.mxu0 0
        %2779 = vmatpush1.bf16.msra.mxu0 0
        %2780 = vmatprep.subr.bf16.mxu0 0
        %2781 = vmatpush1.bf16.msra.mxu0 0
        %2782 = vmatprep.subr.bf16.mxu0 0
        %2783 = vmatpush1.bf16.msra.mxu0 0
        %2784 = vmatprep.subr.bf16.mxu0 0
        %2785 = vmatpush1.bf16.msra.mxu0 0
        %2786 = vmatprep.mubr.bf16.mxu0 0
        %2787 = vmatmul.mubr.bf16.gmra.mrb[0].mxu0 %v2709
        %v2788 = vpop.f32.mrb[0].mxu0
        %v2789 = vadd.f32 0.0, %v2788
        %v2790 = vpop.f32.mrb[0].mxu0
        %v2791 = vadd.f32 0.0, %v2790
        %v2792 = vpop.f32.mrb[0].mxu0
        %v2793 = vpop.f32.mrb[0].mxu0
        %2794 = vdwg.mxu0
        %2795 = vmatprep.subr.bf16.mxu0 %v1378
        %2796 = vmatpush1.bf16.msra.mxu0 %v1376
        %2797 = vmatprep.subr.bf16.mxu0 0
        %2798 = vmatpush1.bf16.msra.mxu0 0
        %2799 = vmatprep.subr.bf16.mxu0 0
        %2800 = vmatpush1.bf16.msra.mxu0 0
        %2801 = vmatprep.subr.bf16.mxu0 0
        %2802 = vmatpush1.bf16.msra.mxu0 0
        %2803 = vmatprep.subr.bf16.mxu0 0
        %2804 = vmatpush1.bf16.msra.mxu0 0
        %2805 = vmatprep.subr.bf16.mxu0 0
        %2806 = vmatpush1.bf16.msra.mxu0 0
        %2807 = vmatprep.subr.bf16.mxu0 0
        %2808 = vmatpush1.bf16.msra.mxu0 0
        %2809 = vmatprep.subr.bf16.mxu0 0
        %2810 = vmatpush1.bf16.msra.mxu0 0
        %2811 = vmatprep.subr.bf16.mxu0 0
        %2812 = vmatpush1.bf16.msra.mxu0 0
        %2813 = vmatprep.subr.bf16.mxu0 0
        %2814 = vmatpush1.bf16.msra.mxu0 0
        %2815 = vmatprep.subr.bf16.mxu0 0
        %2816 = vmatpush1.bf16.msra.mxu0 0
        %2817 = vmatprep.subr.bf16.mxu0 0
        %2818 = vmatpush1.bf16.msra.mxu0 0
        %2819 = vmatprep.subr.bf16.mxu0 0
        %2820 = vmatpush1.bf16.msra.mxu0 0
        %2821 = vmatprep.subr.bf16.mxu0 0
        %2822 = vmatpush1.bf16.msra.mxu0 0
        %2823 = vmatprep.subr.bf16.mxu0 0
        %2824 = vmatpush1.bf16.msra.mxu0 0
        %2825 = vmatprep.subr.bf16.mxu0 0
        %2826 = vmatpush1.bf16.msra.mxu0 0
        %2827 = vmatprep.mubr.bf16.mxu0 0
        %2828 = vmatmul.mubr.bf16.gmra.mrb[0].mxu0 %v2709
        %v2829 = vpop.f32.mrb[0].mxu0
        %v2830 = vadd.f32 0.0, %v2829
        %v2831 = vpop.f32.mrb[0].mxu0
        %v2832 = vadd.f32 0.0, %v2831
        %v2833 = vpop.f32.mrb[0].mxu0
        %v2834 = vpop.f32.mrb[0].mxu0
        %2835 = vdwg.mxu0
        %2836 = vmatprep.subr.bf16.mxu0 %v2711
        %2837 = vmatpush1.bf16.msra.mxu0 %v1380
        %2838 = vmatprep.subr.bf16.mxu0 0
        %2839 = vmatpush1.bf16.msra.mxu0 0
        %2840 = vmatprep.subr.bf16.mxu0 0
        %2841 = vmatpush1.bf16.msra.mxu0 0
        %2842 = vmatprep.subr.bf16.mxu0 0
        %2843 = vmatpush1.bf16.msra.mxu0 0
        %2844 = vmatprep.subr.bf16.mxu0 0
        %2845 = vmatpush1.bf16.msra.mxu0 0
        %2846 = vmatprep.subr.bf16.mxu0 0
        %2847 = vmatpush1.bf16.msra.mxu0 0
        %2848 = vmatprep.subr.bf16.mxu0 0
        %2849 = vmatpush1.bf16.msra.mxu0 0
        %2850 = vmatprep.subr.bf16.mxu0 0
        %2851 = vmatpush1.bf16.msra.mxu0 0
        %2852 = vmatprep.subr.bf16.mxu0 0
        %2853 = vmatpush1.bf16.msra.mxu0 0
        %2854 = vmatprep.subr.bf16.mxu0 0
        %2855 = vmatpush1.bf16.msra.mxu0 0
        %2856 = vmatprep.subr.bf16.mxu0 0
        %2857 = vmatpush1.bf16.msra.mxu0 0
        %2858 = vmatprep.subr.bf16.mxu0 0
        %2859 = vmatpush1.bf16.msra.mxu0 0
        %2860 = vmatprep.subr.bf16.mxu0 0
        %2861 = vmatpush1.bf16.msra.mxu0 0
        %2862 = vmatprep.subr.bf16.mxu0 0
        %2863 = vmatpush1.bf16.msra.mxu0 0
        %2864 = vmatprep.subr.bf16.mxu0 0
        %2865 = vmatpush1.bf16.msra.mxu0 0
        %2866 = vmatprep.subr.bf16.mxu0 0
        %2867 = vmatpush1.bf16.msra.mxu0 0
        %2868 = vmatprep.mubr.bf16.mxu0 0
        %2869 = vmatmul.mubr.bf16.gmra.mrb[0].mxu0 %v2709
        %v2870 = vpop.f32.mrb[0].mxu0
        %v2871 = vadd.f32 0.0, %v2870
        %v2872 = vpop.f32.mrb[0].mxu0
        %v2873 = vadd.f32 0.0, %v2872
        %v2874 = vpop.f32.mrb[0].mxu0
        %v2875 = vpop.f32.mrb[0].mxu0
        %2876 = vdwg.mxu0
        %v2877 = vadd.f32 %v2674, %v2748
        %v2878 = vadd.f32 %v2675, %v2750
        %v2879 = vadd.f32 %v2676, %v2789
        %v2880 = vadd.f32 %v2677, %v2791
        %v2881 = vadd.f32 %v2678, %v2830
        %v2882 = vadd.f32 %v2679, %v2832
        %v2883 = vadd.f32 %v2680, %v2871
        %v2884 = vadd.f32 %v2681, %v2873
        %2886 = vset.pattern.permute.xlu0 0
        %2887 = vperm.xlu0 %2886, %v437
        %v2888 = vpop.permute.xlu0 %2887
        %v2890 = vadd.f32 %v2877, %v2888
        %v2891 = vadd.f32 %v2878, %v2888
        %v2892 = vadd.f32 %v2879, %v2888
        %v2893 = vadd.f32 %v2880, %v2888
        %v2894 = vadd.f32 %v2881, %v2888
        %v2895 = vadd.f32 %v2882, %v2888
        %v2896 = vadd.f32 %v2883, %v2888
        %v2897 = vadd.f32 %v2884, %v2888
        %v2898 = vmax.f32 %v2890, 0.0
        %v2899 = vmax.f32 %v2891, 0.0
        %v2900 = vmax.f32 %v2892, 0.0
        %v2901 = vmax.f32 %v2893, 0.0
        %v2902 = vmax.f32 %v2894, 0.0
        %v2903 = vmax.f32 %v2895, 0.0
        %v2904 = vmax.f32 %v2896, 0.0
        %v2905 = vmax.f32 %v2897, 0.0
        %2914 = vrot.lane.b32.xlu0 %v2898, 127
        %v2915 = vpop.permute.xlu0 %2914
        %2916 = vrot.lane.b32.xlu0 %v2899, 127
        %v2917 = vpop.permute.xlu0 %2916
        %2918 = vrot.lane.b32.xlu0 %v2900, 127
        %v2919 = vpop.permute.xlu0 %2918
        %2920 = vrot.lane.b32.xlu0 %v2901, 127
        %v2921 = vpop.permute.xlu0 %2920
        %2922 = vrot.lane.b32.xlu0 %v2902, 127
        %v2923 = vpop.permute.xlu0 %2922
        %2924 = vrot.lane.b32.xlu0 %v2903, 127
        %v2925 = vpop.permute.xlu0 %2924
        %2926 = vrot.lane.b32.xlu0 %v2904, 127
        %v2927 = vpop.permute.xlu0 %2926
        %2928 = vrot.lane.b32.xlu0 %v2905, 127
        %v2929 = vpop.permute.xlu0 %2928
        %v2930 = vsel %vm470, %v2915, %v2917
        %v2931 = vsel %vm470, %v2917, %v2919
        %v2932 = vsel %vm470, %v2919, %v2921
        %v2933 = vsel %vm470, %v2921, %v2923
        %v2934 = vsel %vm470, %v2923, %v2925
        %v2935 = vsel %vm470, %v2925, %v2927
        %v2936 = vsel %vm470, %v2927, %v2929
        %v2945 = vsel %vm470, %v2929, 0.0
        %v2946 = vmax.f32 %v2898, %v2930
        %v2947 = vmax.f32 %v2899, %v2931
        %v2948 = vmax.f32 %v2900, %v2932
        %v2949 = vmax.f32 %v2901, %v2933
        %v2950 = vmax.f32 %v2902, %v2934
        %v2951 = vmax.f32 %v2903, %v2935
        %v2952 = vmax.f32 %v2904, %v2936
        %v2953 = vmax.f32 %v2905, %v2945
        %2954 = vrot.lane.b32.xlu0 %v2898, 96
        %v2955 = vpop.permute.xlu0 %2954
        %2956 = vrot.lane.b32.xlu0 %v2899, 96
        %v2957 = vpop.permute.xlu0 %2956
        %2958 = vrot.lane.b32.xlu0 %v2900, 96
        %v2959 = vpop.permute.xlu0 %2958
        %2960 = vrot.lane.b32.xlu0 %v2901, 96
        %v2961 = vpop.permute.xlu0 %2960
        %2962 = vrot.lane.b32.xlu0 %v2902, 96
        %v2963 = vpop.permute.xlu0 %2962
        %2964 = vrot.lane.b32.xlu0 %v2903, 96
        %v2965 = vpop.permute.xlu0 %2964
        %2966 = vrot.lane.b32.xlu0 %v2904, 96
        %v2967 = vpop.permute.xlu0 %2966
        %2968 = vrot.lane.b32.xlu0 %v2905, 96
        %v2969 = vpop.permute.xlu0 %2968
        %v2970 = vsel %vm826, %v2955, %v2957
        %v2971 = vsel %vm826, %v2957, %v2959
        %v2972 = vsel %vm826, %v2959, %v2961
        %v2973 = vsel %vm826, %v2961, %v2963
        %v2974 = vsel %vm826, %v2963, %v2965
        %v2975 = vsel %vm826, %v2965, %v2967
        %v2976 = vsel %vm826, %v2967, %v2969
        %v2985 = vsel %vm826, %v2969, 0.0
        %2986 = vrot.lane.b32.xlu0 %v2898, 95
        %v2987 = vpop.permute.xlu0 %2986
        %2988 = vrot.lane.b32.xlu0 %v2899, 95
        %v2989 = vpop.permute.xlu0 %2988
        %2990 = vrot.lane.b32.xlu0 %v2900, 95
        %v2991 = vpop.permute.xlu0 %2990
        %2992 = vrot.lane.b32.xlu0 %v2901, 95
        %v2993 = vpop.permute.xlu0 %2992
        %2994 = vrot.lane.b32.xlu0 %v2902, 95
        %v2995 = vpop.permute.xlu0 %2994
        %2996 = vrot.lane.b32.xlu0 %v2903, 95
        %v2997 = vpop.permute.xlu0 %2996
        %2998 = vrot.lane.b32.xlu0 %v2904, 95
        %v2999 = vpop.permute.xlu0 %2998
        %3000 = vrot.lane.b32.xlu0 %v2905, 95
        %v3001 = vpop.permute.xlu0 %3000
        %v3002 = vsel %vm854, %v2987, %v2989
        %v3003 = vsel %vm854, %v2989, %v2991
        %v3004 = vsel %vm854, %v2991, %v2993
        %v3005 = vsel %vm854, %v2993, %v2995
        %v3006 = vsel %vm854, %v2995, %v2997
        %v3007 = vsel %vm854, %v2997, %v2999
        %v3008 = vsel %vm854, %v2999, %v3001
        %v3017 = vsel %vm854, %v3001, 0.0
        %v3018 = vmax.f32 %v2970, %v3002
        %v3019 = vmax.f32 %v2971, %v3003
        %v3020 = vmax.f32 %v2972, %v3004
        %v3021 = vmax.f32 %v2973, %v3005
        %v3022 = vmax.f32 %v2974, %v3006
        %v3023 = vmax.f32 %v2975, %v3007
        %v3024 = vmax.f32 %v2976, %v3008
        %v3025 = vmax.f32 %v2985, %v3017
        %v3026 = vmax.f32 %v2946, %v3018
        %v3027 = vmax.f32 %v2947, %v3019
        %v3028 = vmax.f32 %v2948, %v3020
        %v3029 = vmax.f32 %v2949, %v3021
        %v3030 = vmax.f32 %v2950, %v3022
        %v3031 = vmax.f32 %v2951, %v3023
        %v3032 = vmax.f32 %v2952, %v3024
        %v3033 = vmax.f32 %v2953, %v3025
        %v3034 = vpack.c.bf16 %v3026, %v3026
        %v3035 = vpack.c.bf16 %v3027, %v3027
        %v3036 = vpack.c.bf16 %v3028, %v3028
        %v3037 = vpack.c.bf16 %v3029, %v3029
        %v3038 = vpack.c.bf16 %v3030, %v3030
        %v3039 = vpack.c.bf16 %v3031, %v3031
        %v3040 = vpack.c.bf16 %v3032, %v3032
        %v3041 = vpack.c.bf16 %v3033, %v3033
        %v3042 = vld [vmem:[%s3] sm:$0xff]
        %v3043 = vld [vmem:[%s3 + $0x8] sm:$0xff]
        %v3044 = vld [vmem:[%s4] sm:$0xff]
        %v3045 = vld [vmem:[%s4 + $0x8] sm:$0xff]
        %3054 = vrot.lane.b32.xlu0 %v3034, 126
        %v3055 = vpop.permute.xlu0 %3054
        %3056 = vrot.lane.b32.xlu0 %v3035, 126
        %v3057 = vpop.permute.xlu0 %3056
        %3058 = vrot.lane.b32.xlu0 %v3036, 126
        %v3059 = vpop.permute.xlu0 %3058
        %3060 = vrot.lane.b32.xlu0 %v3037, 126
        %v3061 = vpop.permute.xlu0 %3060
        %3062 = vrot.lane.b32.xlu0 %v3038, 126
        %v3063 = vpop.permute.xlu0 %3062
        %3064 = vrot.lane.b32.xlu0 %v3039, 126
        %v3065 = vpop.permute.xlu0 %3064
        %3066 = vrot.lane.b32.xlu0 %v3040, 126
        %v3067 = vpop.permute.xlu0 %3066
        %3068 = vrot.lane.b32.xlu0 %v3041, 126
        %v3069 = vpop.permute.xlu0 %3068
        %v3070 = vsel %vm490, %v3055, %v3057
        %v3071 = vsel %vm490, %v3057, %v3059
        %v3072 = vsel %vm490, %v3059, %v3061
        %v3073 = vsel %vm490, %v3061, %v3063
        %v3074 = vsel %vm490, %v3063, %v3065
        %v3075 = vsel %vm490, %v3065, %v3067
        %v3076 = vsel %vm490, %v3067, %v3069
        %v3078 = vsel %vm498, %v3069, 0
        %3079 = vrot.lane.b32.xlu0 %v3034, 124
        %v3080 = vpop.permute.xlu0 %3079
        %3081 = vrot.lane.b32.xlu0 %v3035, 124
        %v3082 = vpop.permute.xlu0 %3081
        %3083 = vrot.lane.b32.xlu0 %v3036, 124
        %v3084 = vpop.permute.xlu0 %3083
        %3085 = vrot.lane.b32.xlu0 %v3037, 124
        %v3086 = vpop.permute.xlu0 %3085
        %3087 = vrot.lane.b32.xlu0 %v3038, 124
        %v3088 = vpop.permute.xlu0 %3087
        %3089 = vrot.lane.b32.xlu0 %v3039, 124
        %v3090 = vpop.permute.xlu0 %3089
        %3091 = vrot.lane.b32.xlu0 %v3040, 124
        %v3092 = vpop.permute.xlu0 %3091
        %3093 = vrot.lane.b32.xlu0 %v3041, 124
        %v3094 = vpop.permute.xlu0 %3093
        %v3095 = vsel %vm544, %v3080, %v3082
        %v3096 = vsel %vm544, %v3082, %v3084
        %v3097 = vsel %vm544, %v3084, %v3086
        %v3098 = vsel %vm544, %v3086, %v3088
        %v3099 = vsel %vm544, %v3088, %v3090
        %v3100 = vsel %vm544, %v3090, %v3092
        %v3101 = vsel %vm544, %v3092, %v3094
        %v3103 = vsel %vm552, %v3094, 0
        %3104 = vrot.lane.b32.xlu0 %v3034, 122
        %v3105 = vpop.permute.xlu0 %3104
        %3106 = vrot.lane.b32.xlu0 %v3035, 122
        %v3107 = vpop.permute.xlu0 %3106
        %3108 = vrot.lane.b32.xlu0 %v3036, 122
        %v3109 = vpop.permute.xlu0 %3108
        %3110 = vrot.lane.b32.xlu0 %v3037, 122
        %v3111 = vpop.permute.xlu0 %3110
        %3112 = vrot.lane.b32.xlu0 %v3038, 122
        %v3113 = vpop.permute.xlu0 %3112
        %3114 = vrot.lane.b32.xlu0 %v3039, 122
        %v3115 = vpop.permute.xlu0 %3114
        %3116 = vrot.lane.b32.xlu0 %v3040, 122
        %v3117 = vpop.permute.xlu0 %3116
        %3118 = vrot.lane.b32.xlu0 %v3041, 122
        %v3119 = vpop.permute.xlu0 %3118
        %vm3120 = vcmask 998400
        %v3121 = vsel %vm3120, %v3105, %v3107
        %v3122 = vsel %vm3120, %v3107, %v3109
        %v3123 = vsel %vm3120, %v3109, %v3111
        %v3124 = vsel %vm3120, %v3111, %v3113
        %v3125 = vsel %vm3120, %v3113, %v3115
        %v3126 = vsel %vm3120, %v3115, %v3117
        %v3127 = vsel %vm3120, %v3117, %v3119
        %vm3128 = vcmask 998400
        %v3130 = vsel %vm3128, %v3119, 0
        %3131 = vrot.lane.b32.xlu0 %v3034, 120
        %v3132 = vpop.permute.xlu0 %3131
        %3133 = vrot.lane.b32.xlu0 %v3035, 120
        %v3134 = vpop.permute.xlu0 %3133
        %3135 = vrot.lane.b32.xlu0 %v3036, 120
        %v3136 = vpop.permute.xlu0 %3135
        %3137 = vrot.lane.b32.xlu0 %v3037, 120
        %v3138 = vpop.permute.xlu0 %3137
        %3139 = vrot.lane.b32.xlu0 %v3038, 120
        %v3140 = vpop.permute.xlu0 %3139
        %3141 = vrot.lane.b32.xlu0 %v3039, 120
        %v3142 = vpop.permute.xlu0 %3141
        %3143 = vrot.lane.b32.xlu0 %v3040, 120
        %v3144 = vpop.permute.xlu0 %3143
        %3145 = vrot.lane.b32.xlu0 %v3041, 120
        %v3146 = vpop.permute.xlu0 %3145
        %vm3147 = vcmask 982016
        %v3148 = vsel %vm3147, %v3132, %v3134
        %v3149 = vsel %vm3147, %v3134, %v3136
        %v3150 = vsel %vm3147, %v3136, %v3138
        %v3151 = vsel %vm3147, %v3138, %v3140
        %v3152 = vsel %vm3147, %v3140, %v3142
        %v3153 = vsel %vm3147, %v3142, %v3144
        %v3154 = vsel %vm3147, %v3144, %v3146
        %vm3155 = vcmask 982016
        %v3157 = vsel %vm3155, %v3146, 0
        %v3159 = vrot.slane %v3070, 5
        %v3160 = vrot.slane %v3071, 5
        %v3161 = vrot.slane %v3072, 5
        %v3162 = vrot.slane %v3073, 5
        %v3163 = vrot.slane %v3074, 5
        %v3164 = vrot.slane %v3075, 5
        %v3165 = vrot.slane %v3076, 5
        %v3166 = vrot.slane %v3078, 5
        %v3168 = vrot.slane %v3095, 2
        %v3169 = vrot.slane %v3096, 2
        %v3170 = vrot.slane %v3097, 2
        %v3171 = vrot.slane %v3098, 2
        %v3172 = vrot.slane %v3099, 2
        %v3173 = vrot.slane %v3100, 2
        %v3174 = vrot.slane %v3101, 2
        %v3175 = vrot.slane %v3103, 2
        %v3177 = vrot.slane %v3121, 7
        %v3178 = vrot.slane %v3122, 7
        %v3179 = vrot.slane %v3123, 7
        %v3180 = vrot.slane %v3124, 7
        %v3181 = vrot.slane %v3125, 7
        %v3182 = vrot.slane %v3126, 7
        %v3183 = vrot.slane %v3127, 7
        %v3184 = vrot.slane %v3130, 7
        %v3186 = vrot.slane %v3148, 4
        %v3187 = vrot.slane %v3149, 4
        %v3188 = vrot.slane %v3150, 4
        %v3189 = vrot.slane %v3151, 4
        %v3190 = vrot.slane %v3152, 4
        %v3191 = vrot.slane %v3153, 4
        %v3192 = vrot.slane %v3154, 4
        %v3193 = vrot.slane %v3157, 4
        %v3196 = vsel %vm726, %v3034, %v3159
        %v3199 = vsel %vm726, %v3035, %v3160
        %v3202 = vsel %vm726, %v3036, %v3161
        %v3205 = vsel %vm726, %v3037, %v3162
        %v3208 = vsel %vm726, %v3038, %v3163
        %v3211 = vsel %vm726, %v3039, %v3164
        %v3214 = vsel %vm726, %v3040, %v3165
        %v3217 = vsel %vm726, %v3041, %v3166
        %v3219 = vsel %vm770, %v3196, %v3168
        %v3222 = vsel %vm770, %v3199, %v3169
        %v3225 = vsel %vm770, %v3202, %v3170
        %v3228 = vsel %vm770, %v3205, %v3171
        %v3231 = vsel %vm770, %v3208, %v3172
        %v3234 = vsel %vm770, %v3211, %v3173
        %v3237 = vsel %vm770, %v3214, %v3174
        %v3240 = vsel %vm770, %v3217, %v3175
        %vm3242 = vcmask 1040384
        %v3244 = vsel %vm3242, %v3168, %v3177
        %v3246 = vsel %vm3242, %v3169, %v3178
        %v3248 = vsel %vm3242, %v3170, %v3179
        %v3250 = vsel %vm3242, %v3171, %v3180
        %v3252 = vsel %vm3242, %v3172, %v3181
        %v3254 = vsel %vm3242, %v3173, %v3182
        %v3256 = vsel %vm3242, %v3174, %v3183
        %v3258 = vsel %vm3242, %v3175, %v3184
        %vm3259 = vcmask 1043456
        %v3261 = vsel %vm3259, %v3244, %v3186
        %v3263 = vsel %vm3259, %v3246, %v3187
        %v3265 = vsel %vm3259, %v3248, %v3188
        %v3267 = vsel %vm3259, %v3250, %v3189
        %v3269 = vsel %vm3259, %v3252, %v3190
        %v3271 = vsel %vm3259, %v3254, %v3191
        %v3273 = vsel %vm3259, %v3256, %v3192
        %v3275 = vsel %vm3259, %v3258, %v3193
        %3276 = vrot.lane.b32.xlu0 %v3034, 64
        %v3277 = vpop.permute.xlu0 %3276
        %3278 = vrot.lane.b32.xlu0 %v3035, 64
        %v3279 = vpop.permute.xlu0 %3278
        %3280 = vrot.lane.b32.xlu0 %v3036, 64
        %v3281 = vpop.permute.xlu0 %3280
        %3282 = vrot.lane.b32.xlu0 %v3037, 64
        %v3283 = vpop.permute.xlu0 %3282
        %3284 = vrot.lane.b32.xlu0 %v3038, 64
        %v3285 = vpop.permute.xlu0 %3284
        %3286 = vrot.lane.b32.xlu0 %v3039, 64
        %v3287 = vpop.permute.xlu0 %3286
        %3288 = vrot.lane.b32.xlu0 %v3040, 64
        %v3289 = vpop.permute.xlu0 %3288
        %3290 = vrot.lane.b32.xlu0 %v3041, 64
        %v3291 = vpop.permute.xlu0 %3290
        %v3292 = vsel %vm1562, %v3277, %v3279
        %v3293 = vsel %vm1562, %v3279, %v3281
        %v3294 = vsel %vm1562, %v3281, %v3283
        %v3295 = vsel %vm1562, %v3283, %v3285
        %v3296 = vsel %vm1562, %v3285, %v3287
        %v3297 = vsel %vm1562, %v3287, %v3289
        %v3298 = vsel %vm1562, %v3289, %v3291
        %v3300 = vsel %vm1577, %v3291, 0
        %3301 = vrot.lane.b32.xlu0 %v3034, 62
        %v3302 = vpop.permute.xlu0 %3301
        %3303 = vrot.lane.b32.xlu0 %v3035, 62
        %v3304 = vpop.permute.xlu0 %3303
        %3305 = vrot.lane.b32.xlu0 %v3036, 62
        %v3306 = vpop.permute.xlu0 %3305
        %3307 = vrot.lane.b32.xlu0 %v3037, 62
        %v3308 = vpop.permute.xlu0 %3307
        %3309 = vrot.lane.b32.xlu0 %v3038, 62
        %v3310 = vpop.permute.xlu0 %3309
        %3311 = vrot.lane.b32.xlu0 %v3039, 62
        %v3312 = vpop.permute.xlu0 %3311
        %3313 = vrot.lane.b32.xlu0 %v3040, 62
        %v3314 = vpop.permute.xlu0 %3313
        %3315 = vrot.lane.b32.xlu0 %v3041, 62
        %v3316 = vpop.permute.xlu0 %3315
        %v3317 = vsel %vm1624, %v3302, %v3304
        %v3318 = vsel %vm1624, %v3304, %v3306
        %v3319 = vsel %vm1624, %v3306, %v3308
        %v3320 = vsel %vm1624, %v3308, %v3310
        %v3321 = vsel %vm1624, %v3310, %v3312
        %v3322 = vsel %vm1624, %v3312, %v3314
        %v3323 = vsel %vm1624, %v3314, %v3316
        %v3325 = vsel %vm1632, %v3316, 0
        %3326 = vrot.lane.b32.xlu0 %v3034, 60
        %v3327 = vpop.permute.xlu0 %3326
        %3328 = vrot.lane.b32.xlu0 %v3035, 60
        %v3329 = vpop.permute.xlu0 %3328
        %3330 = vrot.lane.b32.xlu0 %v3036, 60
        %v3331 = vpop.permute.xlu0 %3330
        %3332 = vrot.lane.b32.xlu0 %v3037, 60
        %v3333 = vpop.permute.xlu0 %3332
        %3334 = vrot.lane.b32.xlu0 %v3038, 60
        %v3335 = vpop.permute.xlu0 %3334
        %3336 = vrot.lane.b32.xlu0 %v3039, 60
        %v3337 = vpop.permute.xlu0 %3336
        %3338 = vrot.lane.b32.xlu0 %v3040, 60
        %v3339 = vpop.permute.xlu0 %3338
        %3340 = vrot.lane.b32.xlu0 %v3041, 60
        %v3341 = vpop.permute.xlu0 %3340
        %v3342 = vsel %vm1678, %v3327, %v3329
        %v3343 = vsel %vm1678, %v3329, %v3331
        %v3344 = vsel %vm1678, %v3331, %v3333
        %v3345 = vsel %vm1678, %v3333, %v3335
        %v3346 = vsel %vm1678, %v3335, %v3337
        %v3347 = vsel %vm1678, %v3337, %v3339
        %v3348 = vsel %vm1678, %v3339, %v3341
        %v3350 = vsel %vm1686, %v3341, 0
        %3351 = vrot.lane.b32.xlu0 %v3034, 58
        %v3352 = vpop.permute.xlu0 %3351
        %3353 = vrot.lane.b32.xlu0 %v3035, 58
        %v3354 = vpop.permute.xlu0 %3353
        %3355 = vrot.lane.b32.xlu0 %v3036, 58
        %v3356 = vpop.permute.xlu0 %3355
        %3357 = vrot.lane.b32.xlu0 %v3037, 58
        %v3358 = vpop.permute.xlu0 %3357
        %3359 = vrot.lane.b32.xlu0 %v3038, 58
        %v3360 = vpop.permute.xlu0 %3359
        %3361 = vrot.lane.b32.xlu0 %v3039, 58
        %v3362 = vpop.permute.xlu0 %3361
        %3363 = vrot.lane.b32.xlu0 %v3040, 58
        %v3364 = vpop.permute.xlu0 %3363
        %3365 = vrot.lane.b32.xlu0 %v3041, 58
        %v3366 = vpop.permute.xlu0 %3365
        %vm3367 = vcmask 474112
        %v3368 = vsel %vm3367, %v3352, %v3354
        %v3369 = vsel %vm3367, %v3354, %v3356
        %v3370 = vsel %vm3367, %v3356, %v3358
        %v3371 = vsel %vm3367, %v3358, %v3360
        %v3372 = vsel %vm3367, %v3360, %v3362
        %v3373 = vsel %vm3367, %v3362, %v3364
        %v3374 = vsel %vm3367, %v3364, %v3366
        %vm3375 = vcmask 474112
        %v3377 = vsel %vm3375, %v3366, 0
        %3378 = vrot.lane.b32.xlu0 %v3034, 56
        %v3379 = vpop.permute.xlu0 %3378
        %3380 = vrot.lane.b32.xlu0 %v3035, 56
        %v3381 = vpop.permute.xlu0 %3380
        %3382 = vrot.lane.b32.xlu0 %v3036, 56
        %v3383 = vpop.permute.xlu0 %3382
        %3384 = vrot.lane.b32.xlu0 %v3037, 56
        %v3385 = vpop.permute.xlu0 %3384
        %3386 = vrot.lane.b32.xlu0 %v3038, 56
        %v3387 = vpop.permute.xlu0 %3386
        %3388 = vrot.lane.b32.xlu0 %v3039, 56
        %v3389 = vpop.permute.xlu0 %3388
        %3390 = vrot.lane.b32.xlu0 %v3040, 56
        %v3391 = vpop.permute.xlu0 %3390
        %3392 = vrot.lane.b32.xlu0 %v3041, 56
        %v3393 = vpop.permute.xlu0 %3392
        %vm3394 = vcmask 457728
        %v3395 = vsel %vm3394, %v3379, %v3381
        %v3396 = vsel %vm3394, %v3381, %v3383
        %v3397 = vsel %vm3394, %v3383, %v3385
        %v3398 = vsel %vm3394, %v3385, %v3387
        %v3399 = vsel %vm3394, %v3387, %v3389
        %v3400 = vsel %vm3394, %v3389, %v3391
        %v3401 = vsel %vm3394, %v3391, %v3393
        %vm3402 = vcmask 457728
        %v3404 = vsel %vm3402, %v3393, 0
        %v3406 = vrot.slane %v3317, 5
        %v3407 = vrot.slane %v3318, 5
        %v3408 = vrot.slane %v3319, 5
        %v3409 = vrot.slane %v3320, 5
        %v3410 = vrot.slane %v3321, 5
        %v3411 = vrot.slane %v3322, 5
        %v3412 = vrot.slane %v3323, 5
        %v3413 = vrot.slane %v3325, 5
        %v3415 = vrot.slane %v3342, 2
        %v3416 = vrot.slane %v3343, 2
        %v3417 = vrot.slane %v3344, 2
        %v3418 = vrot.slane %v3345, 2
        %v3419 = vrot.slane %v3346, 2
        %v3420 = vrot.slane %v3347, 2
        %v3421 = vrot.slane %v3348, 2
        %v3422 = vrot.slane %v3350, 2
        %v3424 = vrot.slane %v3368, 7
        %v3425 = vrot.slane %v3369, 7
        %v3426 = vrot.slane %v3370, 7
        %v3427 = vrot.slane %v3371, 7
        %v3428 = vrot.slane %v3372, 7
        %v3429 = vrot.slane %v3373, 7
        %v3430 = vrot.slane %v3374, 7
        %v3431 = vrot.slane %v3377, 7
        %v3433 = vrot.slane %v3395, 4
        %v3434 = vrot.slane %v3396, 4
        %v3435 = vrot.slane %v3397, 4
        %v3436 = vrot.slane %v3398, 4
        %v3437 = vrot.slane %v3399, 4
        %v3438 = vrot.slane %v3400, 4
        %v3439 = vrot.slane %v3401, 4
        %v3440 = vrot.slane %v3404, 4
        %v3443 = vsel %vm726, %v3292, %v3406
        %v3446 = vsel %vm726, %v3293, %v3407
        %v3449 = vsel %vm726, %v3294, %v3408
        %v3452 = vsel %vm726, %v3295, %v3409
        %v3455 = vsel %vm726, %v3296, %v3410
        %v3458 = vsel %vm726, %v3297, %v3411
        %v3461 = vsel %vm726, %v3298, %v3412
        %v3463 = vsel %vm726, %v3300, %v3413
        %v3465 = vsel %vm770, %v3443, %v3415
        %v3468 = vsel %vm770, %v3446, %v3416
        %v3471 = vsel %vm770, %v3449, %v3417
        %v3474 = vsel %vm770, %v3452, %v3418
        %v3477 = vsel %vm770, %v3455, %v3419
        %v3480 = vsel %vm770, %v3458, %v3420
        %v3483 = vsel %vm770, %v3461, %v3421
        %v3486 = vsel %vm770, %v3463, %v3422
        %v3489 = vsel %vm3242, %v3415, %v3424
        %v3491 = vsel %vm3242, %v3416, %v3425
        %v3493 = vsel %vm3242, %v3417, %v3426
        %v3495 = vsel %vm3242, %v3418, %v3427
        %v3497 = vsel %vm3242, %v3419, %v3428
        %v3499 = vsel %vm3242, %v3420, %v3429
        %v3501 = vsel %vm3242, %v3421, %v3430
        %v3503 = vsel %vm3242, %v3422, %v3431
        %v3505 = vsel %vm3259, %v3489, %v3433
        %v3507 = vsel %vm3259, %v3491, %v3434
        %v3509 = vsel %vm3259, %v3493, %v3435
        %v3511 = vsel %vm3259, %v3495, %v3436
        %v3513 = vsel %vm3259, %v3497, %v3437
        %v3515 = vsel %vm3259, %v3499, %v3438
        %v3517 = vsel %vm3259, %v3501, %v3439
        %v3519 = vsel %vm3259, %v3503, %v3440
        %v3522 = vunpack.c.l.b16 %v3042
        %v3523 = vunpack.c.l.b16 %v3043
        %v3524 = vpack.c.b16 %v3523, %v3522
        %3525 = vrot.lane.b32.xlu0 %v3524, 98
        %v3526 = vpop.permute.xlu0 %3525
        %v3528 = vsel %vm2200, %v3526, 0
        %v3530 = vsel %vm1179, %v3505, 0
        %v3532 = vsel %vm1179, %v3507, 0
        %v3534 = vsel %vm1179, %v3509, 0
        %v3536 = vsel %vm1179, %v3511, 0
        %v3538 = vsel %vm1179, %v3513, 0
        %v3540 = vsel %vm1179, %v3515, 0
        %v3542 = vsel %vm1179, %v3517, 0
        %v3544 = vsel %vm1179, %v3519, 0
        %3546 = vmatprep.subr.bf16.mxu0 %v3468
        %3547 = vmatpush1.bf16.msra.mxu0 %v3465
        %3548 = vmatprep.subr.bf16.mxu0 %v3532
        %3549 = vmatpush1.bf16.msra.mxu0 %v3530
        %3550 = vmatprep.subr.bf16.mxu0 0
        %3551 = vmatpush1.bf16.msra.mxu0 0
        %3552 = vmatprep.subr.bf16.mxu0 0
        %3553 = vmatpush1.bf16.msra.mxu0 0
        %3554 = vmatprep.subr.bf16.mxu0 0
        %3555 = vmatpush1.bf16.msra.mxu0 0
        %3556 = vmatprep.subr.bf16.mxu0 0
        %3557 = vmatpush1.bf16.msra.mxu0 0
        %3558 = vmatprep.subr.bf16.mxu0 0
        %3559 = vmatpush1.bf16.msra.mxu0 0
        %3560 = vmatprep.subr.bf16.mxu0 0
        %3561 = vmatpush1.bf16.msra.mxu0 0
        %3562 = vmatprep.subr.bf16.mxu0 0
        %3563 = vmatpush1.bf16.msra.mxu0 0
        %3564 = vmatprep.subr.bf16.mxu0 0
        %3565 = vmatpush1.bf16.msra.mxu0 0
        %3566 = vmatprep.subr.bf16.mxu0 0
        %3567 = vmatpush1.bf16.msra.mxu0 0
        %3568 = vmatprep.subr.bf16.mxu0 0
        %3569 = vmatpush1.bf16.msra.mxu0 0
        %3570 = vmatprep.subr.bf16.mxu0 0
        %3571 = vmatpush1.bf16.msra.mxu0 0
        %3572 = vmatprep.subr.bf16.mxu0 0
        %3573 = vmatpush1.bf16.msra.mxu0 0
        %3574 = vmatprep.subr.bf16.mxu0 0
        %3575 = vmatpush1.bf16.msra.mxu0 0
        %3576 = vmatprep.subr.bf16.mxu0 0
        %3577 = vmatpush1.bf16.msra.mxu0 0
        %3578 = vmatprep.mubr.bf16.mxu0 0
        %3579 = vmatmul.mubr.bf16.gmra.mrb[0].mxu0 %v3528
        %v3580 = vpop.f32.mrb[0].mxu0
        %v3581 = vadd.f32 0.0, %v3580
        %v3582 = vpop.f32.mrb[0].mxu0
        %v3583 = vadd.f32 0.0, %v3582
        %v3584 = vpop.f32.mrb[0].mxu0
        %v3585 = vadd.f32 0.0, %v3584
        %v3586 = vpop.f32.mrb[0].mxu0
        %v3587 = vadd.f32 0.0, %v3586
        %3588 = vdwg.mxu0
        %3589 = vmatprep.subr.bf16.mxu0 %v3474
        %3590 = vmatpush1.bf16.msra.mxu0 %v3471
        %3591 = vmatprep.subr.bf16.mxu0 %v3536
        %3592 = vmatpush1.bf16.msra.mxu0 %v3534
        %3593 = vmatprep.subr.bf16.mxu0 0
        %3594 = vmatpush1.bf16.msra.mxu0 0
        %3595 = vmatprep.subr.bf16.mxu0 0
        %3596 = vmatpush1.bf16.msra.mxu0 0
        %3597 = vmatprep.subr.bf16.mxu0 0
        %3598 = vmatpush1.bf16.msra.mxu0 0
        %3599 = vmatprep.subr.bf16.mxu0 0
        %3600 = vmatpush1.bf16.msra.mxu0 0
        %3601 = vmatprep.subr.bf16.mxu0 0
        %3602 = vmatpush1.bf16.msra.mxu0 0
        %3603 = vmatprep.subr.bf16.mxu0 0
        %3604 = vmatpush1.bf16.msra.mxu0 0
        %3605 = vmatprep.subr.bf16.mxu0 0
        %3606 = vmatpush1.bf16.msra.mxu0 0
        %3607 = vmatprep.subr.bf16.mxu0 0
        %3608 = vmatpush1.bf16.msra.mxu0 0
        %3609 = vmatprep.subr.bf16.mxu0 0
        %3610 = vmatpush1.bf16.msra.mxu0 0
        %3611 = vmatprep.subr.bf16.mxu0 0
        %3612 = vmatpush1.bf16.msra.mxu0 0
        %3613 = vmatprep.subr.bf16.mxu0 0
        %3614 = vmatpush1.bf16.msra.mxu0 0
        %3615 = vmatprep.subr.bf16.mxu0 0
        %3616 = vmatpush1.bf16.msra.mxu0 0
        %3617 = vmatprep.subr.bf16.mxu0 0
        %3618 = vmatpush1.bf16.msra.mxu0 0
        %3619 = vmatprep.subr.bf16.mxu0 0
        %3620 = vmatpush1.bf16.msra.mxu0 0
        %3621 = vmatprep.mubr.bf16.mxu0 0
        %3622 = vmatmul.mubr.bf16.gmra.mrb[0].mxu0 %v3528
        %v3623 = vpop.f32.mrb[0].mxu0
        %v3624 = vadd.f32 0.0, %v3623
        %v3625 = vpop.f32.mrb[0].mxu0
        %v3626 = vadd.f32 0.0, %v3625
        %v3627 = vpop.f32.mrb[0].mxu0
        %v3628 = vadd.f32 0.0, %v3627
        %v3629 = vpop.f32.mrb[0].mxu0
        %v3630 = vadd.f32 0.0, %v3629
        %3631 = vdwg.mxu0
        %3632 = vmatprep.subr.bf16.mxu0 %v3480
        %3633 = vmatpush1.bf16.msra.mxu0 %v3477
        %3634 = vmatprep.subr.bf16.mxu0 %v3540
        %3635 = vmatpush1.bf16.msra.mxu0 %v3538
        %3636 = vmatprep.subr.bf16.mxu0 0
        %3637 = vmatpush1.bf16.msra.mxu0 0
        %3638 = vmatprep.subr.bf16.mxu0 0
        %3639 = vmatpush1.bf16.msra.mxu0 0
        %3640 = vmatprep.subr.bf16.mxu0 0
        %3641 = vmatpush1.bf16.msra.mxu0 0
        %3642 = vmatprep.subr.bf16.mxu0 0
        %3643 = vmatpush1.bf16.msra.mxu0 0
        %3644 = vmatprep.subr.bf16.mxu0 0
        %3645 = vmatpush1.bf16.msra.mxu0 0
        %3646 = vmatprep.subr.bf16.mxu0 0
        %3647 = vmatpush1.bf16.msra.mxu0 0
        %3648 = vmatprep.subr.bf16.mxu0 0
        %3649 = vmatpush1.bf16.msra.mxu0 0
        %3650 = vmatprep.subr.bf16.mxu0 0
        %3651 = vmatpush1.bf16.msra.mxu0 0
        %3652 = vmatprep.subr.bf16.mxu0 0
        %3653 = vmatpush1.bf16.msra.mxu0 0
        %3654 = vmatprep.subr.bf16.mxu0 0
        %3655 = vmatpush1.bf16.msra.mxu0 0
        %3656 = vmatprep.subr.bf16.mxu0 0
        %3657 = vmatpush1.bf16.msra.mxu0 0
        %3658 = vmatprep.subr.bf16.mxu0 0
        %3659 = vmatpush1.bf16.msra.mxu0 0
        %3660 = vmatprep.subr.bf16.mxu0 0
        %3661 = vmatpush1.bf16.msra.mxu0 0
        %3662 = vmatprep.subr.bf16.mxu0 0
        %3663 = vmatpush1.bf16.msra.mxu0 0
        %3664 = vmatprep.mubr.bf16.mxu0 0
        %3665 = vmatmul.mubr.bf16.gmra.mrb[0].mxu0 %v3528
        %v3666 = vpop.f32.mrb[0].mxu0
        %v3667 = vadd.f32 0.0, %v3666
        %v3668 = vpop.f32.mrb[0].mxu0
        %v3669 = vadd.f32 0.0, %v3668
        %v3670 = vpop.f32.mrb[0].mxu0
        %v3671 = vadd.f32 0.0, %v3670
        %v3672 = vpop.f32.mrb[0].mxu0
        %v3673 = vadd.f32 0.0, %v3672
        %3674 = vdwg.mxu0
        %3675 = vmatprep.subr.bf16.mxu0 %v3486
        %3676 = vmatpush1.bf16.msra.mxu0 %v3483
        %3677 = vmatprep.subr.bf16.mxu0 %v3544
        %3678 = vmatpush1.bf16.msra.mxu0 %v3542
        %3679 = vmatprep.subr.bf16.mxu0 0
        %3680 = vmatpush1.bf16.msra.mxu0 0
        %3681 = vmatprep.subr.bf16.mxu0 0
        %3682 = vmatpush1.bf16.msra.mxu0 0
        %3683 = vmatprep.subr.bf16.mxu0 0
        %3684 = vmatpush1.bf16.msra.mxu0 0
        %3685 = vmatprep.subr.bf16.mxu0 0
        %3686 = vmatpush1.bf16.msra.mxu0 0
        %3687 = vmatprep.subr.bf16.mxu0 0
        %3688 = vmatpush1.bf16.msra.mxu0 0
        %3689 = vmatprep.subr.bf16.mxu0 0
        %3690 = vmatpush1.bf16.msra.mxu0 0
        %3691 = vmatprep.subr.bf16.mxu0 0
        %3692 = vmatpush1.bf16.msra.mxu0 0
        %3693 = vmatprep.subr.bf16.mxu0 0
        %3694 = vmatpush1.bf16.msra.mxu0 0
        %3695 = vmatprep.subr.bf16.mxu0 0
        %3696 = vmatpush1.bf16.msra.mxu0 0
        %3697 = vmatprep.subr.bf16.mxu0 0
        %3698 = vmatpush1.bf16.msra.mxu0 0
        %3699 = vmatprep.subr.bf16.mxu0 0
        %3700 = vmatpush1.bf16.msra.mxu0 0
        %3701 = vmatprep.subr.bf16.mxu0 0
        %3702 = vmatpush1.bf16.msra.mxu0 0
        %3703 = vmatprep.subr.bf16.mxu0 0
        %3704 = vmatpush1.bf16.msra.mxu0 0
        %3705 = vmatprep.subr.bf16.mxu0 0
        %3706 = vmatpush1.bf16.msra.mxu0 0
        %3707 = vmatprep.mubr.bf16.mxu0 0
        %3708 = vmatmul.mubr.bf16.gmra.mrb[0].mxu0 %v3528
        %v3709 = vpop.f32.mrb[0].mxu0
        %v3710 = vadd.f32 0.0, %v3709
        %v3711 = vpop.f32.mrb[0].mxu0
        %v3712 = vadd.f32 0.0, %v3711
        %v3713 = vpop.f32.mrb[0].mxu0
        %v3714 = vadd.f32 0.0, %v3713
        %v3715 = vpop.f32.mrb[0].mxu0
        %v3716 = vadd.f32 0.0, %v3715
        %3717 = vdwg.mxu0
        %v3719 = vsel %vm2200, %v3524, 0
        %v3721 = vsel %vm1179, %v3261, 0
        %v3723 = vsel %vm1179, %v3263, 0
        %v3725 = vsel %vm1179, %v3265, 0
        %v3727 = vsel %vm1179, %v3267, 0
        %v3729 = vsel %vm1179, %v3269, 0
        %v3731 = vsel %vm1179, %v3271, 0
        %v3733 = vsel %vm1179, %v3273, 0
        %v3735 = vsel %vm1179, %v3275, 0
        %3737 = vmatprep.subr.bf16.mxu0 %v3222
        %3738 = vmatpush1.bf16.msra.mxu0 %v3219
        %3739 = vmatprep.subr.bf16.mxu0 %v3723
        %3740 = vmatpush1.bf16.msra.mxu0 %v3721
        %3741 = vmatprep.subr.bf16.mxu0 0
        %3742 = vmatpush1.bf16.msra.mxu0 0
        %3743 = vmatprep.subr.bf16.mxu0 0
        %3744 = vmatpush1.bf16.msra.mxu0 0
        %3745 = vmatprep.subr.bf16.mxu0 0
        %3746 = vmatpush1.bf16.msra.mxu0 0
        %3747 = vmatprep.subr.bf16.mxu0 0
        %3748 = vmatpush1.bf16.msra.mxu0 0
        %3749 = vmatprep.subr.bf16.mxu0 0
        %3750 = vmatpush1.bf16.msra.mxu0 0
        %3751 = vmatprep.subr.bf16.mxu0 0
        %3752 = vmatpush1.bf16.msra.mxu0 0
        %3753 = vmatprep.subr.bf16.mxu0 0
        %3754 = vmatpush1.bf16.msra.mxu0 0
        %3755 = vmatprep.subr.bf16.mxu0 0
        %3756 = vmatpush1.bf16.msra.mxu0 0
        %3757 = vmatprep.subr.bf16.mxu0 0
        %3758 = vmatpush1.bf16.msra.mxu0 0
        %3759 = vmatprep.subr.bf16.mxu0 0
        %3760 = vmatpush1.bf16.msra.mxu0 0
        %3761 = vmatprep.subr.bf16.mxu0 0
        %3762 = vmatpush1.bf16.msra.mxu0 0
        %3763 = vmatprep.subr.bf16.mxu0 0
        %3764 = vmatpush1.bf16.msra.mxu0 0
        %3765 = vmatprep.subr.bf16.mxu0 0
        %3766 = vmatpush1.bf16.msra.mxu0 0
        %3767 = vmatprep.subr.bf16.mxu0 0
        %3768 = vmatpush1.bf16.msra.mxu0 0
        %3769 = vmatprep.mubr.bf16.mxu0 0
        %3770 = vmatmul.mubr.bf16.gmra.mrb[0].mxu0 %v3719
        %v3771 = vpop.f32.mrb[0].mxu0
        %v3772 = vadd.f32 %v3581, %v3771
        %v3773 = vpop.f32.mrb[0].mxu0
        %v3774 = vadd.f32 %v3583, %v3773
        %v3775 = vpop.f32.mrb[0].mxu0
        %v3776 = vadd.f32 %v3585, %v3775
        %v3777 = vpop.f32.mrb[0].mxu0
        %v3778 = vadd.f32 %v3587, %v3777
        %3779 = vdwg.mxu0
        %3780 = vmatprep.subr.bf16.mxu0 %v3228
        %3781 = vmatpush1.bf16.msra.mxu0 %v3225
        %3782 = vmatprep.subr.bf16.mxu0 %v3727
        %3783 = vmatpush1.bf16.msra.mxu0 %v3725
        %3784 = vmatprep.subr.bf16.mxu0 0
        %3785 = vmatpush1.bf16.msra.mxu0 0
        %3786 = vmatprep.subr.bf16.mxu0 0
        %3787 = vmatpush1.bf16.msra.mxu0 0
        %3788 = vmatprep.subr.bf16.mxu0 0
        %3789 = vmatpush1.bf16.msra.mxu0 0
        %3790 = vmatprep.subr.bf16.mxu0 0
        %3791 = vmatpush1.bf16.msra.mxu0 0
        %3792 = vmatprep.subr.bf16.mxu0 0
        %3793 = vmatpush1.bf16.msra.mxu0 0
        %3794 = vmatprep.subr.bf16.mxu0 0
        %3795 = vmatpush1.bf16.msra.mxu0 0
        %3796 = vmatprep.subr.bf16.mxu0 0
        %3797 = vmatpush1.bf16.msra.mxu0 0
        %3798 = vmatprep.subr.bf16.mxu0 0
        %3799 = vmatpush1.bf16.msra.mxu0 0
        %3800 = vmatprep.subr.bf16.mxu0 0
        %3801 = vmatpush1.bf16.msra.mxu0 0
        %3802 = vmatprep.subr.bf16.mxu0 0
        %3803 = vmatpush1.bf16.msra.mxu0 0
        %3804 = vmatprep.subr.bf16.mxu0 0
        %3805 = vmatpush1.bf16.msra.mxu0 0
        %3806 = vmatprep.subr.bf16.mxu0 0
        %3807 = vmatpush1.bf16.msra.mxu0 0
        %3808 = vmatprep.subr.bf16.mxu0 0
        %3809 = vmatpush1.bf16.msra.mxu0 0
        %3810 = vmatprep.subr.bf16.mxu0 0
        %3811 = vmatpush1.bf16.msra.mxu0 0
        %3812 = vmatprep.mubr.bf16.mxu0 0
        %3813 = vmatmul.mubr.bf16.gmra.mrb[0].mxu0 %v3719
        %v3814 = vpop.f32.mrb[0].mxu0
        %v3815 = vadd.f32 %v3624, %v3814
        %v3816 = vpop.f32.mrb[0].mxu0
        %v3817 = vadd.f32 %v3626, %v3816
        %v3818 = vpop.f32.mrb[0].mxu0
        %v3819 = vadd.f32 %v3628, %v3818
        %v3820 = vpop.f32.mrb[0].mxu0
        %v3821 = vadd.f32 %v3630, %v3820
        %3822 = vdwg.mxu0
        %3823 = vmatprep.subr.bf16.mxu0 %v3234
        %3824 = vmatpush1.bf16.msra.mxu0 %v3231
        %3825 = vmatprep.subr.bf16.mxu0 %v3731
        %3826 = vmatpush1.bf16.msra.mxu0 %v3729
        %3827 = vmatprep.subr.bf16.mxu0 0
        %3828 = vmatpush1.bf16.msra.mxu0 0
        %3829 = vmatprep.subr.bf16.mxu0 0
        %3830 = vmatpush1.bf16.msra.mxu0 0
        %3831 = vmatprep.subr.bf16.mxu0 0
        %3832 = vmatpush1.bf16.msra.mxu0 0
        %3833 = vmatprep.subr.bf16.mxu0 0
        %3834 = vmatpush1.bf16.msra.mxu0 0
        %3835 = vmatprep.subr.bf16.mxu0 0
        %3836 = vmatpush1.bf16.msra.mxu0 0
        %3837 = vmatprep.subr.bf16.mxu0 0
        %3838 = vmatpush1.bf16.msra.mxu0 0
        %3839 = vmatprep.subr.bf16.mxu0 0
        %3840 = vmatpush1.bf16.msra.mxu0 0
        %3841 = vmatprep.subr.bf16.mxu0 0
        %3842 = vmatpush1.bf16.msra.mxu0 0
        %3843 = vmatprep.subr.bf16.mxu0 0
        %3844 = vmatpush1.bf16.msra.mxu0 0
        %3845 = vmatprep.subr.bf16.mxu0 0
        %3846 = vmatpush1.bf16.msra.mxu0 0
        %3847 = vmatprep.subr.bf16.mxu0 0
        %3848 = vmatpush1.bf16.msra.mxu0 0
        %3849 = vmatprep.subr.bf16.mxu0 0
        %3850 = vmatpush1.bf16.msra.mxu0 0
        %3851 = vmatprep.subr.bf16.mxu0 0
        %3852 = vmatpush1.bf16.msra.mxu0 0
        %3853 = vmatprep.subr.bf16.mxu0 0
        %3854 = vmatpush1.bf16.msra.mxu0 0
        %3855 = vmatprep.mubr.bf16.mxu0 0
        %3856 = vmatmul.mubr.bf16.gmra.mrb[0].mxu0 %v3719
        %v3857 = vpop.f32.mrb[0].mxu0
        %v3858 = vadd.f32 %v3667, %v3857
        %v3859 = vpop.f32.mrb[0].mxu0
        %v3860 = vadd.f32 %v3669, %v3859
        %v3861 = vpop.f32.mrb[0].mxu0
        %v3862 = vadd.f32 %v3671, %v3861
        %v3863 = vpop.f32.mrb[0].mxu0
        %v3864 = vadd.f32 %v3673, %v3863
        %3865 = vdwg.mxu0
        %3866 = vmatprep.subr.bf16.mxu0 %v3240
        %3867 = vmatpush1.bf16.msra.mxu0 %v3237
        %3868 = vmatprep.subr.bf16.mxu0 %v3735
        %3869 = vmatpush1.bf16.msra.mxu0 %v3733
        %3870 = vmatprep.subr.bf16.mxu0 0
        %3871 = vmatpush1.bf16.msra.mxu0 0
        %3872 = vmatprep.subr.bf16.mxu0 0
        %3873 = vmatpush1.bf16.msra.mxu0 0
        %3874 = vmatprep.subr.bf16.mxu0 0
        %3875 = vmatpush1.bf16.msra.mxu0 0
        %3876 = vmatprep.subr.bf16.mxu0 0
        %3877 = vmatpush1.bf16.msra.mxu0 0
        %3878 = vmatprep.subr.bf16.mxu0 0
        %3879 = vmatpush1.bf16.msra.mxu0 0
        %3880 = vmatprep.subr.bf16.mxu0 0
        %3881 = vmatpush1.bf16.msra.mxu0 0
        %3882 = vmatprep.subr.bf16.mxu0 0
        %3883 = vmatpush1.bf16.msra.mxu0 0
        %3884 = vmatprep.subr.bf16.mxu0 0
        %3885 = vmatpush1.bf16.msra.mxu0 0
        %3886 = vmatprep.subr.bf16.mxu0 0
        %3887 = vmatpush1.bf16.msra.mxu0 0
        %3888 = vmatprep.subr.bf16.mxu0 0
        %3889 = vmatpush1.bf16.msra.mxu0 0
        %3890 = vmatprep.subr.bf16.mxu0 0
        %3891 = vmatpush1.bf16.msra.mxu0 0
        %3892 = vmatprep.subr.bf16.mxu0 0
        %3893 = vmatpush1.bf16.msra.mxu0 0
        %3894 = vmatprep.subr.bf16.mxu0 0
        %3895 = vmatpush1.bf16.msra.mxu0 0
        %3896 = vmatprep.subr.bf16.mxu0 0
        %3897 = vmatpush1.bf16.msra.mxu0 0
        %3898 = vmatprep.mubr.bf16.mxu0 0
        %3899 = vmatmul.mubr.bf16.gmra.mrb[0].mxu0 %v3719
        %v3900 = vpop.f32.mrb[0].mxu0
        %v3901 = vadd.f32 %v3710, %v3900
        %v3902 = vpop.f32.mrb[0].mxu0
        %v3903 = vadd.f32 %v3712, %v3902
        %v3904 = vpop.f32.mrb[0].mxu0
        %v3905 = vadd.f32 %v3714, %v3904
        %v3906 = vpop.f32.mrb[0].mxu0
        %v3907 = vadd.f32 %v3716, %v3906
        %3908 = vdwg.mxu0
        %v3909 = vrot.slane 0, 7
        %v3910 = vrot.slane 0, 4
        %v3911 = vsel %vm726, 0, %v2691
        %v3912 = vsel %vm770, %v3911, %v2696
        %v3915 = vsel %vm3242, %v2696, %v3909
        %v3917 = vsel %vm3259, %v3915, %v3910
        %3918 = vrot.lane.b32.xlu0 %v3524, 68
        %v3919 = vpop.permute.xlu0 %3918
        %v3921 = vsel %vm2200, %v3919, 0
        %v3923 = vsel %vm1179, %v3917, 0
        %3925 = vmatprep.subr.bf16.mxu0 %v3225
        %3926 = vmatpush1.bf16.msra.mxu0 %v3222
        %3927 = vmatprep.subr.bf16.mxu0 %v3725
        %3928 = vmatpush1.bf16.msra.mxu0 %v3723
        %3929 = vmatprep.subr.bf16.mxu0 0
        %3930 = vmatpush1.bf16.msra.mxu0 0
        %3931 = vmatprep.subr.bf16.mxu0 0
        %3932 = vmatpush1.bf16.msra.mxu0 0
        %3933 = vmatprep.subr.bf16.mxu0 0
        %3934 = vmatpush1.bf16.msra.mxu0 0
        %3935 = vmatprep.subr.bf16.mxu0 0
        %3936 = vmatpush1.bf16.msra.mxu0 0
        %3937 = vmatprep.subr.bf16.mxu0 0
        %3938 = vmatpush1.bf16.msra.mxu0 0
        %3939 = vmatprep.subr.bf16.mxu0 0
        %3940 = vmatpush1.bf16.msra.mxu0 0
        %3941 = vmatprep.subr.bf16.mxu0 0
        %3942 = vmatpush1.bf16.msra.mxu0 0
        %3943 = vmatprep.subr.bf16.mxu0 0
        %3944 = vmatpush1.bf16.msra.mxu0 0
        %3945 = vmatprep.subr.bf16.mxu0 0
        %3946 = vmatpush1.bf16.msra.mxu0 0
        %3947 = vmatprep.subr.bf16.mxu0 0
        %3948 = vmatpush1.bf16.msra.mxu0 0
        %3949 = vmatprep.subr.bf16.mxu0 0
        %3950 = vmatpush1.bf16.msra.mxu0 0
        %3951 = vmatprep.subr.bf16.mxu0 0
        %3952 = vmatpush1.bf16.msra.mxu0 0
        %3953 = vmatprep.subr.bf16.mxu0 0
        %3954 = vmatpush1.bf16.msra.mxu0 0
        %3955 = vmatprep.subr.bf16.mxu0 0
        %3956 = vmatpush1.bf16.msra.mxu0 0
        %3957 = vmatprep.mubr.bf16.mxu0 0
        %3958 = vmatmul.mubr.bf16.gmra.mrb[0].mxu0 %v3921
        %v3959 = vpop.f32.mrb[0].mxu0
        %v3960 = vadd.f32 0.0, %v3959
        %v3961 = vpop.f32.mrb[0].mxu0
        %v3962 = vadd.f32 0.0, %v3961
        %v3963 = vpop.f32.mrb[0].mxu0
        %v3964 = vadd.f32 0.0, %v3963
        %v3965 = vpop.f32.mrb[0].mxu0
        %v3966 = vadd.f32 0.0, %v3965
        %3967 = vdwg.mxu0
        %3968 = vmatprep.subr.bf16.mxu0 %v3231
        %3969 = vmatpush1.bf16.msra.mxu0 %v3228
        %3970 = vmatprep.subr.bf16.mxu0 %v3729
        %3971 = vmatpush1.bf16.msra.mxu0 %v3727
        %3972 = vmatprep.subr.bf16.mxu0 0
        %3973 = vmatpush1.bf16.msra.mxu0 0
        %3974 = vmatprep.subr.bf16.mxu0 0
        %3975 = vmatpush1.bf16.msra.mxu0 0
        %3976 = vmatprep.subr.bf16.mxu0 0
        %3977 = vmatpush1.bf16.msra.mxu0 0
        %3978 = vmatprep.subr.bf16.mxu0 0
        %3979 = vmatpush1.bf16.msra.mxu0 0
        %3980 = vmatprep.subr.bf16.mxu0 0
        %3981 = vmatpush1.bf16.msra.mxu0 0
        %3982 = vmatprep.subr.bf16.mxu0 0
        %3983 = vmatpush1.bf16.msra.mxu0 0
        %3984 = vmatprep.subr.bf16.mxu0 0
        %3985 = vmatpush1.bf16.msra.mxu0 0
        %3986 = vmatprep.subr.bf16.mxu0 0
        %3987 = vmatpush1.bf16.msra.mxu0 0
        %3988 = vmatprep.subr.bf16.mxu0 0
        %3989 = vmatpush1.bf16.msra.mxu0 0
        %3990 = vmatprep.subr.bf16.mxu0 0
        %3991 = vmatpush1.bf16.msra.mxu0 0
        %3992 = vmatprep.subr.bf16.mxu0 0
        %3993 = vmatpush1.bf16.msra.mxu0 0
        %3994 = vmatprep.subr.bf16.mxu0 0
        %3995 = vmatpush1.bf16.msra.mxu0 0
        %3996 = vmatprep.subr.bf16.mxu0 0
        %3997 = vmatpush1.bf16.msra.mxu0 0
        %3998 = vmatprep.subr.bf16.mxu0 0
        %3999 = vmatpush1.bf16.msra.mxu0 0
        %4000 = vmatprep.mubr.bf16.mxu0 0
        %4001 = vmatmul.mubr.bf16.gmra.mrb[0].mxu0 %v3921
        %v4002 = vpop.f32.mrb[0].mxu0
        %v4003 = vadd.f32 0.0, %v4002
        %v4004 = vpop.f32.mrb[0].mxu0
        %v4005 = vadd.f32 0.0, %v4004
        %v4006 = vpop.f32.mrb[0].mxu0
        %v4007 = vadd.f32 0.0, %v4006
        %v4008 = vpop.f32.mrb[0].mxu0
        %v4009 = vadd.f32 0.0, %v4008
        %4010 = vdwg.mxu0
        %4011 = vmatprep.subr.bf16.mxu0 %v3237
        %4012 = vmatpush1.bf16.msra.mxu0 %v3234
        %4013 = vmatprep.subr.bf16.mxu0 %v3733
        %4014 = vmatpush1.bf16.msra.mxu0 %v3731
        %4015 = vmatprep.subr.bf16.mxu0 0
        %4016 = vmatpush1.bf16.msra.mxu0 0
        %4017 = vmatprep.subr.bf16.mxu0 0
        %4018 = vmatpush1.bf16.msra.mxu0 0
        %4019 = vmatprep.subr.bf16.mxu0 0
        %4020 = vmatpush1.bf16.msra.mxu0 0
        %4021 = vmatprep.subr.bf16.mxu0 0
        %4022 = vmatpush1.bf16.msra.mxu0 0
        %4023 = vmatprep.subr.bf16.mxu0 0
        %4024 = vmatpush1.bf16.msra.mxu0 0
        %4025 = vmatprep.subr.bf16.mxu0 0
        %4026 = vmatpush1.bf16.msra.mxu0 0
        %4027 = vmatprep.subr.bf16.mxu0 0
        %4028 = vmatpush1.bf16.msra.mxu0 0
        %4029 = vmatprep.subr.bf16.mxu0 0
        %4030 = vmatpush1.bf16.msra.mxu0 0
        %4031 = vmatprep.subr.bf16.mxu0 0
        %4032 = vmatpush1.bf16.msra.mxu0 0
        %4033 = vmatprep.subr.bf16.mxu0 0
        %4034 = vmatpush1.bf16.msra.mxu0 0
        %4035 = vmatprep.subr.bf16.mxu0 0
        %4036 = vmatpush1.bf16.msra.mxu0 0
        %4037 = vmatprep.subr.bf16.mxu0 0
        %4038 = vmatpush1.bf16.msra.mxu0 0
        %4039 = vmatprep.subr.bf16.mxu0 0
        %4040 = vmatpush1.bf16.msra.mxu0 0
        %4041 = vmatprep.subr.bf16.mxu0 0
        %4042 = vmatpush1.bf16.msra.mxu0 0
        %4043 = vmatprep.mubr.bf16.mxu0 0
        %4044 = vmatmul.mubr.bf16.gmra.mrb[0].mxu0 %v3921
        %v4045 = vpop.f32.mrb[0].mxu0
        %v4046 = vadd.f32 0.0, %v4045
        %v4047 = vpop.f32.mrb[0].mxu0
        %v4048 = vadd.f32 0.0, %v4047
        %v4049 = vpop.f32.mrb[0].mxu0
        %v4050 = vadd.f32 0.0, %v4049
        %v4051 = vpop.f32.mrb[0].mxu0
        %v4052 = vadd.f32 0.0, %v4051
        %4053 = vdwg.mxu0
        %4054 = vmatprep.subr.bf16.mxu0 %v3912
        %4055 = vmatpush1.bf16.msra.mxu0 %v3240
        %4056 = vmatprep.subr.bf16.mxu0 %v3923
        %4057 = vmatpush1.bf16.msra.mxu0 %v3735
        %4058 = vmatprep.subr.bf16.mxu0 0
        %4059 = vmatpush1.bf16.msra.mxu0 0
        %4060 = vmatprep.subr.bf16.mxu0 0
        %4061 = vmatpush1.bf16.msra.mxu0 0
        %4062 = vmatprep.subr.bf16.mxu0 0
        %4063 = vmatpush1.bf16.msra.mxu0 0
        %4064 = vmatprep.subr.bf16.mxu0 0
        %4065 = vmatpush1.bf16.msra.mxu0 0
        %4066 = vmatprep.subr.bf16.mxu0 0
        %4067 = vmatpush1.bf16.msra.mxu0 0
        %4068 = vmatprep.subr.bf16.mxu0 0
        %4069 = vmatpush1.bf16.msra.mxu0 0
        %4070 = vmatprep.subr.bf16.mxu0 0
        %4071 = vmatpush1.bf16.msra.mxu0 0
        %4072 = vmatprep.subr.bf16.mxu0 0
        %4073 = vmatpush1.bf16.msra.mxu0 0
        %4074 = vmatprep.subr.bf16.mxu0 0
        %4075 = vmatpush1.bf16.msra.mxu0 0
        %4076 = vmatprep.subr.bf16.mxu0 0
        %4077 = vmatpush1.bf16.msra.mxu0 0
        %4078 = vmatprep.subr.bf16.mxu0 0
        %4079 = vmatpush1.bf16.msra.mxu0 0
        %4080 = vmatprep.subr.bf16.mxu0 0
        %4081 = vmatpush1.bf16.msra.mxu0 0
        %4082 = vmatprep.subr.bf16.mxu0 0
        %4083 = vmatpush1.bf16.msra.mxu0 0
        %4084 = vmatprep.subr.bf16.mxu0 0
        %4085 = vmatpush1.bf16.msra.mxu0 0
        %4086 = vmatprep.mubr.bf16.mxu0 0
        %4087 = vmatmul.mubr.bf16.gmra.mrb[0].mxu0 %v3921
        %v4088 = vpop.f32.mrb[0].mxu0
        %v4089 = vadd.f32 0.0, %v4088
        %v4090 = vpop.f32.mrb[0].mxu0
        %v4091 = vadd.f32 0.0, %v4090
        %v4092 = vpop.f32.mrb[0].mxu0
        %v4093 = vadd.f32 0.0, %v4092
        %v4094 = vpop.f32.mrb[0].mxu0
        %v4095 = vadd.f32 0.0, %v4094
        %4096 = vdwg.mxu0
        %v4097 = vadd.f32 %v3772, %v3960
        %v4098 = vadd.f32 %v3774, %v3962
        %v4099 = vadd.f32 %v3815, %v4003
        %v4100 = vadd.f32 %v3817, %v4005
        %v4101 = vadd.f32 %v3858, %v4046
        %v4102 = vadd.f32 %v3860, %v4048
        %v4103 = vadd.f32 %v3901, %v4089
        %v4104 = vadd.f32 %v3903, %v4091
        %v4105 = vadd.f32 %v3776, %v3964
        %v4106 = vadd.f32 %v3778, %v3966
        %v4107 = vadd.f32 %v3819, %v4007
        %v4108 = vadd.f32 %v3821, %v4009
        %v4109 = vadd.f32 %v3862, %v4050
        %v4110 = vadd.f32 %v3864, %v4052
        %v4111 = vadd.f32 %v3905, %v4093
        %v4112 = vadd.f32 %v3907, %v4095
        %4113 = vrot.lane.b32.xlu0 %v3524, 38
        %v4114 = vpop.permute.xlu0 %4113
        %v4116 = vsel %vm2200, %v4114, 0
        %4118 = vmatprep.subr.bf16.mxu0 %v3471
        %4119 = vmatpush1.bf16.msra.mxu0 %v3468
        %4120 = vmatprep.subr.bf16.mxu0 %v3534
        %4121 = vmatpush1.bf16.msra.mxu0 %v3532
        %4122 = vmatprep.subr.bf16.mxu0 0
        %4123 = vmatpush1.bf16.msra.mxu0 0
        %4124 = vmatprep.subr.bf16.mxu0 0
        %4125 = vmatpush1.bf16.msra.mxu0 0
        %4126 = vmatprep.subr.bf16.mxu0 0
        %4127 = vmatpush1.bf16.msra.mxu0 0
        %4128 = vmatprep.subr.bf16.mxu0 0
        %4129 = vmatpush1.bf16.msra.mxu0 0
        %4130 = vmatprep.subr.bf16.mxu0 0
        %4131 = vmatpush1.bf16.msra.mxu0 0
        %4132 = vmatprep.subr.bf16.mxu0 0
        %4133 = vmatpush1.bf16.msra.mxu0 0
        %4134 = vmatprep.subr.bf16.mxu0 0
        %4135 = vmatpush1.bf16.msra.mxu0 0
        %4136 = vmatprep.subr.bf16.mxu0 0
        %4137 = vmatpush1.bf16.msra.mxu0 0
        %4138 = vmatprep.subr.bf16.mxu0 0
        %4139 = vmatpush1.bf16.msra.mxu0 0
        %4140 = vmatprep.subr.bf16.mxu0 0
        %4141 = vmatpush1.bf16.msra.mxu0 0
        %4142 = vmatprep.subr.bf16.mxu0 0
        %4143 = vmatpush1.bf16.msra.mxu0 0
        %4144 = vmatprep.subr.bf16.mxu0 0
        %4145 = vmatpush1.bf16.msra.mxu0 0
        %4146 = vmatprep.subr.bf16.mxu0 0
        %4147 = vmatpush1.bf16.msra.mxu0 0
        %4148 = vmatprep.subr.bf16.mxu0 0
        %4149 = vmatpush1.bf16.msra.mxu0 0
        %4150 = vmatprep.mubr.bf16.mxu0 0
        %4151 = vmatmul.mubr.bf16.gmra.mrb[0].mxu0 %v4116
        %v4152 = vpop.f32.mrb[0].mxu0
        %v4153 = vadd.f32 0.0, %v4152
        %v4154 = vpop.f32.mrb[0].mxu0
        %v4155 = vadd.f32 0.0, %v4154
        %v4156 = vpop.f32.mrb[0].mxu0
        %v4157 = vadd.f32 0.0, %v4156
        %v4158 = vpop.f32.mrb[0].mxu0
        %v4159 = vadd.f32 0.0, %v4158
        %4160 = vdwg.mxu0
        %4161 = vmatprep.subr.bf16.mxu0 %v3477
        %4162 = vmatpush1.bf16.msra.mxu0 %v3474
        %4163 = vmatprep.subr.bf16.mxu0 %v3538
        %4164 = vmatpush1.bf16.msra.mxu0 %v3536
        %4165 = vmatprep.subr.bf16.mxu0 0
        %4166 = vmatpush1.bf16.msra.mxu0 0
        %4167 = vmatprep.subr.bf16.mxu0 0
        %4168 = vmatpush1.bf16.msra.mxu0 0
        %4169 = vmatprep.subr.bf16.mxu0 0
        %4170 = vmatpush1.bf16.msra.mxu0 0
        %4171 = vmatprep.subr.bf16.mxu0 0
        %4172 = vmatpush1.bf16.msra.mxu0 0
        %4173 = vmatprep.subr.bf16.mxu0 0
        %4174 = vmatpush1.bf16.msra.mxu0 0
        %4175 = vmatprep.subr.bf16.mxu0 0
        %4176 = vmatpush1.bf16.msra.mxu0 0
        %4177 = vmatprep.subr.bf16.mxu0 0
        %4178 = vmatpush1.bf16.msra.mxu0 0
        %4179 = vmatprep.subr.bf16.mxu0 0
        %4180 = vmatpush1.bf16.msra.mxu0 0
        %4181 = vmatprep.subr.bf16.mxu0 0
        %4182 = vmatpush1.bf16.msra.mxu0 0
        %4183 = vmatprep.subr.bf16.mxu0 0
        %4184 = vmatpush1.bf16.msra.mxu0 0
        %4185 = vmatprep.subr.bf16.mxu0 0
        %4186 = vmatpush1.bf16.msra.mxu0 0
        %4187 = vmatprep.subr.bf16.mxu0 0
        %4188 = vmatpush1.bf16.msra.mxu0 0
        %4189 = vmatprep.subr.bf16.mxu0 0
        %4190 = vmatpush1.bf16.msra.mxu0 0
        %4191 = vmatprep.subr.bf16.mxu0 0
        %4192 = vmatpush1.bf16.msra.mxu0 0
        %4193 = vmatprep.mubr.bf16.mxu0 0
        %4194 = vmatmul.mubr.bf16.gmra.mrb[0].mxu0 %v4116
        %v4195 = vpop.f32.mrb[0].mxu0
        %v4196 = vadd.f32 0.0, %v4195
        %v4197 = vpop.f32.mrb[0].mxu0
        %v4198 = vadd.f32 0.0, %v4197
        %v4199 = vpop.f32.mrb[0].mxu0
        %v4200 = vadd.f32 0.0, %v4199
        %v4201 = vpop.f32.mrb[0].mxu0
        %v4202 = vadd.f32 0.0, %v4201
        %4203 = vdwg.mxu0
        %4204 = vmatprep.subr.bf16.mxu0 %v3483
        %4205 = vmatpush1.bf16.msra.mxu0 %v3480
        %4206 = vmatprep.subr.bf16.mxu0 %v3542
        %4207 = vmatpush1.bf16.msra.mxu0 %v3540
        %4208 = vmatprep.subr.bf16.mxu0 0
        %4209 = vmatpush1.bf16.msra.mxu0 0
        %4210 = vmatprep.subr.bf16.mxu0 0
        %4211 = vmatpush1.bf16.msra.mxu0 0
        %4212 = vmatprep.subr.bf16.mxu0 0
        %4213 = vmatpush1.bf16.msra.mxu0 0
        %4214 = vmatprep.subr.bf16.mxu0 0
        %4215 = vmatpush1.bf16.msra.mxu0 0
        %4216 = vmatprep.subr.bf16.mxu0 0
        %4217 = vmatpush1.bf16.msra.mxu0 0
        %4218 = vmatprep.subr.bf16.mxu0 0
        %4219 = vmatpush1.bf16.msra.mxu0 0
        %4220 = vmatprep.subr.bf16.mxu0 0
        %4221 = vmatpush1.bf16.msra.mxu0 0
        %4222 = vmatprep.subr.bf16.mxu0 0
        %4223 = vmatpush1.bf16.msra.mxu0 0
        %4224 = vmatprep.subr.bf16.mxu0 0
        %4225 = vmatpush1.bf16.msra.mxu0 0
        %4226 = vmatprep.subr.bf16.mxu0 0
        %4227 = vmatpush1.bf16.msra.mxu0 0
        %4228 = vmatprep.subr.bf16.mxu0 0
        %4229 = vmatpush1.bf16.msra.mxu0 0
        %4230 = vmatprep.subr.bf16.mxu0 0
        %4231 = vmatpush1.bf16.msra.mxu0 0
        %4232 = vmatprep.subr.bf16.mxu0 0
        %4233 = vmatpush1.bf16.msra.mxu0 0
        %4234 = vmatprep.subr.bf16.mxu0 0
        %4235 = vmatpush1.bf16.msra.mxu0 0
        %4236 = vmatprep.mubr.bf16.mxu0 0
        %4237 = vmatmul.mubr.bf16.gmra.mrb[0].mxu0 %v4116
        %v4238 = vpop.f32.mrb[0].mxu0
        %v4239 = vadd.f32 0.0, %v4238
        %v4240 = vpop.f32.mrb[0].mxu0
        %v4241 = vadd.f32 0.0, %v4240
        %v4242 = vpop.f32.mrb[0].mxu0
        %v4243 = vadd.f32 0.0, %v4242
        %v4244 = vpop.f32.mrb[0].mxu0
        %v4245 = vadd.f32 0.0, %v4244
        %4246 = vdwg.mxu0
        %4247 = vmatprep.subr.bf16.mxu0 %v3912
        %4248 = vmatpush1.bf16.msra.mxu0 %v3486
        %4249 = vmatprep.subr.bf16.mxu0 %v3923
        %4250 = vmatpush1.bf16.msra.mxu0 %v3544
        %4251 = vmatprep.subr.bf16.mxu0 0
        %4252 = vmatpush1.bf16.msra.mxu0 0
        %4253 = vmatprep.subr.bf16.mxu0 0
        %4254 = vmatpush1.bf16.msra.mxu0 0
        %4255 = vmatprep.subr.bf16.mxu0 0
        %4256 = vmatpush1.bf16.msra.mxu0 0
        %4257 = vmatprep.subr.bf16.mxu0 0
        %4258 = vmatpush1.bf16.msra.mxu0 0
        %4259 = vmatprep.subr.bf16.mxu0 0
        %4260 = vmatpush1.bf16.msra.mxu0 0
        %4261 = vmatprep.subr.bf16.mxu0 0
        %4262 = vmatpush1.bf16.msra.mxu0 0
        %4263 = vmatprep.subr.bf16.mxu0 0
        %4264 = vmatpush1.bf16.msra.mxu0 0
        %4265 = vmatprep.subr.bf16.mxu0 0
        %4266 = vmatpush1.bf16.msra.mxu0 0
        %4267 = vmatprep.subr.bf16.mxu0 0
        %4268 = vmatpush1.bf16.msra.mxu0 0
        %4269 = vmatprep.subr.bf16.mxu0 0
        %4270 = vmatpush1.bf16.msra.mxu0 0
        %4271 = vmatprep.subr.bf16.mxu0 0
        %4272 = vmatpush1.bf16.msra.mxu0 0
        %4273 = vmatprep.subr.bf16.mxu0 0
        %4274 = vmatpush1.bf16.msra.mxu0 0
        %4275 = vmatprep.subr.bf16.mxu0 0
        %4276 = vmatpush1.bf16.msra.mxu0 0
        %4277 = vmatprep.subr.bf16.mxu0 0
        %4278 = vmatpush1.bf16.msra.mxu0 0
        %4279 = vmatprep.mubr.bf16.mxu0 0
        %4280 = vmatmul.mubr.bf16.gmra.mrb[0].mxu0 %v4116
        %v4281 = vpop.f32.mrb[0].mxu0
        %v4282 = vadd.f32 0.0, %v4281
        %v4283 = vpop.f32.mrb[0].mxu0
        %v4284 = vadd.f32 0.0, %v4283
        %v4285 = vpop.f32.mrb[0].mxu0
        %v4286 = vadd.f32 0.0, %v4285
        %v4287 = vpop.f32.mrb[0].mxu0
        %v4288 = vadd.f32 0.0, %v4287
        %4289 = vdwg.mxu0
        %v4290 = vadd.f32 %v4097, %v4153
        %v4291 = vadd.f32 %v4098, %v4155
        %v4292 = vadd.f32 %v4099, %v4196
        %v4293 = vadd.f32 %v4100, %v4198
        %v4294 = vadd.f32 %v4101, %v4239
        %v4295 = vadd.f32 %v4102, %v4241
        %v4296 = vadd.f32 %v4103, %v4282
        %v4297 = vadd.f32 %v4104, %v4284
        %v4298 = vadd.f32 %v4105, %v4157
        %v4299 = vadd.f32 %v4106, %v4159
        %v4300 = vadd.f32 %v4107, %v4200
        %v4301 = vadd.f32 %v4108, %v4202
        %v4302 = vadd.f32 %v4109, %v4243
        %v4303 = vadd.f32 %v4110, %v4245
        %v4304 = vadd.f32 %v4111, %v4286
        %v4305 = vadd.f32 %v4112, %v4288
        %v4306 = vunpack.c.h.b16 %v3042
        %v4307 = vunpack.c.h.b16 %v3043
        %v4308 = vpack.c.b16 %v4307, %v4306
        %4309 = vrot.lane.b32.xlu0 %v3524, 8
        %v4310 = vpop.permute.xlu0 %4309
        %4311 = vrot.lane.b32.xlu0 %v4308, 8
        %v4312 = vpop.permute.xlu0 %4311
        %vm4313 = vcmask 64512
        %v4314 = vsel %vm4313, %v4310, %v4312
        %v4316 = vsel %vm2200, %v4314, 0
        %4318 = vmatprep.subr.bf16.mxu0 %v3228
        %4319 = vmatpush1.bf16.msra.mxu0 %v3225
        %4320 = vmatprep.subr.bf16.mxu0 %v3727
        %4321 = vmatpush1.bf16.msra.mxu0 %v3725
        %4322 = vmatprep.subr.bf16.mxu0 0
        %4323 = vmatpush1.bf16.msra.mxu0 0
        %4324 = vmatprep.subr.bf16.mxu0 0
        %4325 = vmatpush1.bf16.msra.mxu0 0
        %4326 = vmatprep.subr.bf16.mxu0 0
        %4327 = vmatpush1.bf16.msra.mxu0 0
        %4328 = vmatprep.subr.bf16.mxu0 0
        %4329 = vmatpush1.bf16.msra.mxu0 0
        %4330 = vmatprep.subr.bf16.mxu0 0
        %4331 = vmatpush1.bf16.msra.mxu0 0
        %4332 = vmatprep.subr.bf16.mxu0 0
        %4333 = vmatpush1.bf16.msra.mxu0 0
        %4334 = vmatprep.subr.bf16.mxu0 0
        %4335 = vmatpush1.bf16.msra.mxu0 0
        %4336 = vmatprep.subr.bf16.mxu0 0
        %4337 = vmatpush1.bf16.msra.mxu0 0
        %4338 = vmatprep.subr.bf16.mxu0 0
        %4339 = vmatpush1.bf16.msra.mxu0 0
        %4340 = vmatprep.subr.bf16.mxu0 0
        %4341 = vmatpush1.bf16.msra.mxu0 0
        %4342 = vmatprep.subr.bf16.mxu0 0
        %4343 = vmatpush1.bf16.msra.mxu0 0
        %4344 = vmatprep.subr.bf16.mxu0 0
        %4345 = vmatpush1.bf16.msra.mxu0 0
        %4346 = vmatprep.subr.bf16.mxu0 0
        %4347 = vmatpush1.bf16.msra.mxu0 0
        %4348 = vmatprep.subr.bf16.mxu0 0
        %4349 = vmatpush1.bf16.msra.mxu0 0
        %4350 = vmatprep.mubr.bf16.mxu0 0
        %4351 = vmatmul.mubr.bf16.gmra.mrb[0].mxu0 %v4316
        %v4352 = vpop.f32.mrb[0].mxu0
        %v4353 = vadd.f32 0.0, %v4352
        %v4354 = vpop.f32.mrb[0].mxu0
        %v4355 = vadd.f32 0.0, %v4354
        %v4356 = vpop.f32.mrb[0].mxu0
        %v4357 = vadd.f32 0.0, %v4356
        %v4358 = vpop.f32.mrb[0].mxu0
        %v4359 = vadd.f32 0.0, %v4358
        %4360 = vdwg.mxu0
        %4361 = vmatprep.subr.bf16.mxu0 %v3234
        %4362 = vmatpush1.bf16.msra.mxu0 %v3231
        %4363 = vmatprep.subr.bf16.mxu0 %v3731
        %4364 = vmatpush1.bf16.msra.mxu0 %v3729
        %4365 = vmatprep.subr.bf16.mxu0 0
        %4366 = vmatpush1.bf16.msra.mxu0 0
        %4367 = vmatprep.subr.bf16.mxu0 0
        %4368 = vmatpush1.bf16.msra.mxu0 0
        %4369 = vmatprep.subr.bf16.mxu0 0
        %4370 = vmatpush1.bf16.msra.mxu0 0
        %4371 = vmatprep.subr.bf16.mxu0 0
        %4372 = vmatpush1.bf16.msra.mxu0 0
        %4373 = vmatprep.subr.bf16.mxu0 0
        %4374 = vmatpush1.bf16.msra.mxu0 0
        %4375 = vmatprep.subr.bf16.mxu0 0
        %4376 = vmatpush1.bf16.msra.mxu0 0
        %4377 = vmatprep.subr.bf16.mxu0 0
        %4378 = vmatpush1.bf16.msra.mxu0 0
        %4379 = vmatprep.subr.bf16.mxu0 0
        %4380 = vmatpush1.bf16.msra.mxu0 0
        %4381 = vmatprep.subr.bf16.mxu0 0
        %4382 = vmatpush1.bf16.msra.mxu0 0
        %4383 = vmatprep.subr.bf16.mxu0 0
        %4384 = vmatpush1.bf16.msra.mxu0 0
        %4385 = vmatprep.subr.bf16.mxu0 0
        %4386 = vmatpush1.bf16.msra.mxu0 0
        %4387 = vmatprep.subr.bf16.mxu0 0
        %4388 = vmatpush1.bf16.msra.mxu0 0
        %4389 = vmatprep.subr.bf16.mxu0 0
        %4390 = vmatpush1.bf16.msra.mxu0 0
        %4391 = vmatprep.subr.bf16.mxu0 0
        %4392 = vmatpush1.bf16.msra.mxu0 0
        %4393 = vmatprep.mubr.bf16.mxu0 0
        %4394 = vmatmul.mubr.bf16.gmra.mrb[0].mxu0 %v4316
        %v4395 = vpop.f32.mrb[0].mxu0
        %v4396 = vadd.f32 0.0, %v4395
        %v4397 = vpop.f32.mrb[0].mxu0
        %v4398 = vadd.f32 0.0, %v4397
        %v4399 = vpop.f32.mrb[0].mxu0
        %v4400 = vadd.f32 0.0, %v4399
        %v4401 = vpop.f32.mrb[0].mxu0
        %v4402 = vadd.f32 0.0, %v4401
        %4403 = vdwg.mxu0
        %4404 = vmatprep.subr.bf16.mxu0 %v3240
        %4405 = vmatpush1.bf16.msra.mxu0 %v3237
        %4406 = vmatprep.subr.bf16.mxu0 %v3735
        %4407 = vmatpush1.bf16.msra.mxu0 %v3733
        %4408 = vmatprep.subr.bf16.mxu0 0
        %4409 = vmatpush1.bf16.msra.mxu0 0
        %4410 = vmatprep.subr.bf16.mxu0 0
        %4411 = vmatpush1.bf16.msra.mxu0 0
        %4412 = vmatprep.subr.bf16.mxu0 0
        %4413 = vmatpush1.bf16.msra.mxu0 0
        %4414 = vmatprep.subr.bf16.mxu0 0
        %4415 = vmatpush1.bf16.msra.mxu0 0
        %4416 = vmatprep.subr.bf16.mxu0 0
        %4417 = vmatpush1.bf16.msra.mxu0 0
        %4418 = vmatprep.subr.bf16.mxu0 0
        %4419 = vmatpush1.bf16.msra.mxu0 0
        %4420 = vmatprep.subr.bf16.mxu0 0
        %4421 = vmatpush1.bf16.msra.mxu0 0
        %4422 = vmatprep.subr.bf16.mxu0 0
        %4423 = vmatpush1.bf16.msra.mxu0 0
        %4424 = vmatprep.subr.bf16.mxu0 0
        %4425 = vmatpush1.bf16.msra.mxu0 0
        %4426 = vmatprep.subr.bf16.mxu0 0
        %4427 = vmatpush1.bf16.msra.mxu0 0
        %4428 = vmatprep.subr.bf16.mxu0 0
        %4429 = vmatpush1.bf16.msra.mxu0 0
        %4430 = vmatprep.subr.bf16.mxu0 0
        %4431 = vmatpush1.bf16.msra.mxu0 0
        %4432 = vmatprep.subr.bf16.mxu0 0
        %4433 = vmatpush1.bf16.msra.mxu0 0
        %4434 = vmatprep.subr.bf16.mxu0 0
        %4435 = vmatpush1.bf16.msra.mxu0 0
        %4436 = vmatprep.mubr.bf16.mxu0 0
        %4437 = vmatmul.mubr.bf16.gmra.mrb[0].mxu0 %v4316
        %v4438 = vpop.f32.mrb[0].mxu0
        %v4439 = vadd.f32 0.0, %v4438
        %v4440 = vpop.f32.mrb[0].mxu0
        %v4441 = vadd.f32 0.0, %v4440
        %v4442 = vpop.f32.mrb[0].mxu0
        %v4443 = vadd.f32 0.0, %v4442
        %v4444 = vpop.f32.mrb[0].mxu0
        %v4445 = vadd.f32 0.0, %v4444
        %4446 = vdwg.mxu0
        %4447 = vmatprep.subr.bf16.mxu0 %v3912
        %4448 = vmatpush1.bf16.msra.mxu0 %v3912
        %4449 = vmatprep.subr.bf16.mxu0 %v3923
        %4450 = vmatpush1.bf16.msra.mxu0 %v3923
        %4451 = vmatprep.subr.bf16.mxu0 0
        %4452 = vmatpush1.bf16.msra.mxu0 0
        %4453 = vmatprep.subr.bf16.mxu0 0
        %4454 = vmatpush1.bf16.msra.mxu0 0
        %4455 = vmatprep.subr.bf16.mxu0 0
        %4456 = vmatpush1.bf16.msra.mxu0 0
        %4457 = vmatprep.subr.bf16.mxu0 0
        %4458 = vmatpush1.bf16.msra.mxu0 0
        %4459 = vmatprep.subr.bf16.mxu0 0
        %4460 = vmatpush1.bf16.msra.mxu0 0
        %4461 = vmatprep.subr.bf16.mxu0 0
        %4462 = vmatpush1.bf16.msra.mxu0 0
        %4463 = vmatprep.subr.bf16.mxu0 0
        %4464 = vmatpush1.bf16.msra.mxu0 0
        %4465 = vmatprep.subr.bf16.mxu0 0
        %4466 = vmatpush1.bf16.msra.mxu0 0
        %4467 = vmatprep.subr.bf16.mxu0 0
        %4468 = vmatpush1.bf16.msra.mxu0 0
        %4469 = vmatprep.subr.bf16.mxu0 0
        %4470 = vmatpush1.bf16.msra.mxu0 0
        %4471 = vmatprep.subr.bf16.mxu0 0
        %4472 = vmatpush1.bf16.msra.mxu0 0
        %4473 = vmatprep.subr.bf16.mxu0 0
        %4474 = vmatpush1.bf16.msra.mxu0 0
        %4475 = vmatprep.subr.bf16.mxu0 0
        %4476 = vmatpush1.bf16.msra.mxu0 0
        %4477 = vmatprep.subr.bf16.mxu0 0
        %4478 = vmatpush1.bf16.msra.mxu0 0
        %4479 = vmatprep.mubr.bf16.mxu0 0
        %4480 = vmatmul.mubr.bf16.gmra.mrb[0].mxu0 %v4316
        %v4481 = vpop.f32.mrb[0].mxu0
        %v4482 = vadd.f32 0.0, %v4481
        %v4483 = vpop.f32.mrb[0].mxu0
        %v4484 = vadd.f32 0.0, %v4483
        %v4485 = vpop.f32.mrb[0].mxu0
        %v4486 = vadd.f32 0.0, %v4485
        %v4487 = vpop.f32.mrb[0].mxu0
        %v4488 = vadd.f32 0.0, %v4487
        %4489 = vdwg.mxu0
        %v4490 = vadd.f32 %v4290, %v4353
        %v4491 = vadd.f32 %v4291, %v4355
        %v4492 = vadd.f32 %v4292, %v4396
        %v4493 = vadd.f32 %v4293, %v4398
        %v4494 = vadd.f32 %v4294, %v4439
        %v4495 = vadd.f32 %v4295, %v4441
        %v4496 = vadd.f32 %v4296, %v4482
        %v4497 = vadd.f32 %v4297, %v4484
        %v4498 = vadd.f32 %v4298, %v4357
        %v4499 = vadd.f32 %v4299, %v4359
        %v4500 = vadd.f32 %v4300, %v4400
        %v4501 = vadd.f32 %v4301, %v4402
        %v4502 = vadd.f32 %v4302, %v4443
        %v4503 = vadd.f32 %v4303, %v4445
        %v4504 = vadd.f32 %v4304, %v4486
        %v4505 = vadd.f32 %v4305, %v4488
        %4507 = vset.pattern.permute.xlu0 0
        %4508 = vperm.xlu0 %4507, %v3044
        %v4509 = vpop.permute.xlu0 %4508
        %4512 = vset.pattern.permute.xlu0 0
        %4513 = vperm.xlu0 %4512, %v3045
        %v4514 = vpop.permute.xlu0 %4513
        %v4516 = vadd.f32 %v4490, %v4509
        %v4517 = vadd.f32 %v4491, %v4509
        %v4518 = vadd.f32 %v4492, %v4509
        %v4519 = vadd.f32 %v4493, %v4509
        %v4520 = vadd.f32 %v4494, %v4509
        %v4521 = vadd.f32 %v4495, %v4509
        %v4522 = vadd.f32 %v4496, %v4509
        %v4523 = vadd.f32 %v4497, %v4509
        %v4524 = vadd.f32 %v4498, %v4514
        %v4525 = vadd.f32 %v4499, %v4514
        %v4526 = vadd.f32 %v4500, %v4514
        %v4527 = vadd.f32 %v4501, %v4514
        %v4528 = vadd.f32 %v4502, %v4514
        %v4529 = vadd.f32 %v4503, %v4514
        %v4530 = vadd.f32 %v4504, %v4514
        %v4531 = vadd.f32 %v4505, %v4514
        %v4532 = vmax.f32 %v4516, 0.0
        %v4533 = vmax.f32 %v4517, 0.0
        %v4534 = vmax.f32 %v4518, 0.0
        %v4535 = vmax.f32 %v4519, 0.0
        %v4536 = vmax.f32 %v4520, 0.0
        %v4537 = vmax.f32 %v4521, 0.0
        %v4538 = vmax.f32 %v4522, 0.0
        %v4539 = vmax.f32 %v4523, 0.0
        %v4540 = vmax.f32 %v4524, 0.0
        %v4541 = vmax.f32 %v4525, 0.0
        %v4542 = vmax.f32 %v4526, 0.0
        %v4543 = vmax.f32 %v4527, 0.0
        %v4544 = vmax.f32 %v4528, 0.0
        %v4545 = vmax.f32 %v4529, 0.0
        %v4546 = vmax.f32 %v4530, 0.0
        %v4547 = vmax.f32 %v4531, 0.0
        %4564 = vrot.lane.b32.xlu0 %v4532, 126
        %v4565 = vpop.permute.xlu0 %4564
        %4566 = vrot.lane.b32.xlu0 %v4533, 126
        %v4567 = vpop.permute.xlu0 %4566
        %4568 = vrot.lane.b32.xlu0 %v4534, 126
        %v4569 = vpop.permute.xlu0 %4568
        %4570 = vrot.lane.b32.xlu0 %v4535, 126
        %v4571 = vpop.permute.xlu0 %4570
        %4572 = vrot.lane.b32.xlu0 %v4536, 126
        %v4573 = vpop.permute.xlu0 %4572
        %4574 = vrot.lane.b32.xlu0 %v4537, 126
        %v4575 = vpop.permute.xlu0 %4574
        %4576 = vrot.lane.b32.xlu0 %v4538, 126
        %v4577 = vpop.permute.xlu0 %4576
        %4578 = vrot.lane.b32.xlu0 %v4539, 126
        %v4579 = vpop.permute.xlu0 %4578
        %4580 = vrot.lane.b32.xlu0 %v4540, 126
        %v4581 = vpop.permute.xlu0 %4580
        %4582 = vrot.lane.b32.xlu0 %v4541, 126
        %v4583 = vpop.permute.xlu0 %4582
        %4584 = vrot.lane.b32.xlu0 %v4542, 126
        %v4585 = vpop.permute.xlu0 %4584
        %4586 = vrot.lane.b32.xlu0 %v4543, 126
        %v4587 = vpop.permute.xlu0 %4586
        %4588 = vrot.lane.b32.xlu0 %v4544, 126
        %v4589 = vpop.permute.xlu0 %4588
        %4590 = vrot.lane.b32.xlu0 %v4545, 126
        %v4591 = vpop.permute.xlu0 %4590
        %4592 = vrot.lane.b32.xlu0 %v4546, 126
        %v4593 = vpop.permute.xlu0 %4592
        %4594 = vrot.lane.b32.xlu0 %v4547, 126
        %v4595 = vpop.permute.xlu0 %4594
        %v4596 = vsel %vm498, %v4565, %v4567
        %v4597 = vsel %vm498, %v4567, %v4569
        %v4598 = vsel %vm498, %v4569, %v4571
        %v4599 = vsel %vm498, %v4571, %v4573
        %v4600 = vsel %vm498, %v4573, %v4575
        %v4601 = vsel %vm498, %v4575, %v4577
        %v4602 = vsel %vm498, %v4577, %v4579
        %v4603 = vsel %vm498, %v4581, %v4583
        %v4604 = vsel %vm498, %v4583, %v4585
        %v4605 = vsel %vm498, %v4585, %v4587
        %v4606 = vsel %vm498, %v4587, %v4589
        %v4607 = vsel %vm498, %v4589, %v4591
        %v4608 = vsel %vm498, %v4591, %v4593
        %v4609 = vsel %vm498, %v4593, %v4595
        %v4626 = vsel %vm498, %v4579, 0.0
        %v4627 = vsel %vm498, %v4595, 0.0
        %v4628 = vmax.f32 %v4532, %v4596
        %v4629 = vmax.f32 %v4533, %v4597
        %v4630 = vmax.f32 %v4534, %v4598
        %v4631 = vmax.f32 %v4535, %v4599
        %v4632 = vmax.f32 %v4536, %v4600
        %v4633 = vmax.f32 %v4537, %v4601
        %v4634 = vmax.f32 %v4538, %v4602
        %v4635 = vmax.f32 %v4539, %v4626
        %v4636 = vmax.f32 %v4540, %v4603
        %v4637 = vmax.f32 %v4541, %v4604
        %v4638 = vmax.f32 %v4542, %v4605
        %v4639 = vmax.f32 %v4543, %v4606
        %v4640 = vmax.f32 %v4544, %v4607
        %v4641 = vmax.f32 %v4545, %v4608
        %v4642 = vmax.f32 %v4546, %v4609
        %v4643 = vmax.f32 %v4547, %v4627
        %4644 = vrot.lane.b32.xlu0 %v4532, 64
        %v4645 = vpop.permute.xlu0 %4644
        %4646 = vrot.lane.b32.xlu0 %v4533, 64
        %v4647 = vpop.permute.xlu0 %4646
        %4648 = vrot.lane.b32.xlu0 %v4534, 64
        %v4649 = vpop.permute.xlu0 %4648
        %4650 = vrot.lane.b32.xlu0 %v4535, 64
        %v4651 = vpop.permute.xlu0 %4650
        %4652 = vrot.lane.b32.xlu0 %v4536, 64
        %v4653 = vpop.permute.xlu0 %4652
        %4654 = vrot.lane.b32.xlu0 %v4537, 64
        %v4655 = vpop.permute.xlu0 %4654
        %4656 = vrot.lane.b32.xlu0 %v4538, 64
        %v4657 = vpop.permute.xlu0 %4656
        %4658 = vrot.lane.b32.xlu0 %v4539, 64
        %v4659 = vpop.permute.xlu0 %4658
        %4660 = vrot.lane.b32.xlu0 %v4540, 64
        %v4661 = vpop.permute.xlu0 %4660
        %4662 = vrot.lane.b32.xlu0 %v4541, 64
        %v4663 = vpop.permute.xlu0 %4662
        %4664 = vrot.lane.b32.xlu0 %v4542, 64
        %v4665 = vpop.permute.xlu0 %4664
        %4666 = vrot.lane.b32.xlu0 %v4543, 64
        %v4667 = vpop.permute.xlu0 %4666
        %4668 = vrot.lane.b32.xlu0 %v4544, 64
        %v4669 = vpop.permute.xlu0 %4668
        %4670 = vrot.lane.b32.xlu0 %v4545, 64
        %v4671 = vpop.permute.xlu0 %4670
        %4672 = vrot.lane.b32.xlu0 %v4546, 64
        %v4673 = vpop.permute.xlu0 %4672
        %4674 = vrot.lane.b32.xlu0 %v4547, 64
        %v4675 = vpop.permute.xlu0 %4674
        %v4676 = vsel %vm1577, %v4645, %v4647
        %v4677 = vsel %vm1577, %v4647, %v4649
        %v4678 = vsel %vm1577, %v4649, %v4651
        %v4679 = vsel %vm1577, %v4651, %v4653
        %v4680 = vsel %vm1577, %v4653, %v4655
        %v4681 = vsel %vm1577, %v4655, %v4657
        %v4682 = vsel %vm1577, %v4657, %v4659
        %v4683 = vsel %vm1577, %v4661, %v4663
        %v4684 = vsel %vm1577, %v4663, %v4665
        %v4685 = vsel %vm1577, %v4665, %v4667
        %v4686 = vsel %vm1577, %v4667, %v4669
        %v4687 = vsel %vm1577, %v4669, %v4671
        %v4688 = vsel %vm1577, %v4671, %v4673
        %v4689 = vsel %vm1577, %v4673, %v4675
        %v4706 = vsel %vm1577, %v4659, 0.0
        %v4707 = vsel %vm1577, %v4675, 0.0
        %4708 = vrot.lane.b32.xlu0 %v4532, 62
        %v4709 = vpop.permute.xlu0 %4708
        %4710 = vrot.lane.b32.xlu0 %v4533, 62
        %v4711 = vpop.permute.xlu0 %4710
        %4712 = vrot.lane.b32.xlu0 %v4534, 62
        %v4713 = vpop.permute.xlu0 %4712
        %4714 = vrot.lane.b32.xlu0 %v4535, 62
        %v4715 = vpop.permute.xlu0 %4714
        %4716 = vrot.lane.b32.xlu0 %v4536, 62
        %v4717 = vpop.permute.xlu0 %4716
        %4718 = vrot.lane.b32.xlu0 %v4537, 62
        %v4719 = vpop.permute.xlu0 %4718
        %4720 = vrot.lane.b32.xlu0 %v4538, 62
        %v4721 = vpop.permute.xlu0 %4720
        %4722 = vrot.lane.b32.xlu0 %v4539, 62
        %v4723 = vpop.permute.xlu0 %4722
        %4724 = vrot.lane.b32.xlu0 %v4540, 62
        %v4725 = vpop.permute.xlu0 %4724
        %4726 = vrot.lane.b32.xlu0 %v4541, 62
        %v4727 = vpop.permute.xlu0 %4726
        %4728 = vrot.lane.b32.xlu0 %v4542, 62
        %v4729 = vpop.permute.xlu0 %4728
        %4730 = vrot.lane.b32.xlu0 %v4543, 62
        %v4731 = vpop.permute.xlu0 %4730
        %4732 = vrot.lane.b32.xlu0 %v4544, 62
        %v4733 = vpop.permute.xlu0 %4732
        %4734 = vrot.lane.b32.xlu0 %v4545, 62
        %v4735 = vpop.permute.xlu0 %4734
        %4736 = vrot.lane.b32.xlu0 %v4546, 62
        %v4737 = vpop.permute.xlu0 %4736
        %4738 = vrot.lane.b32.xlu0 %v4547, 62
        %v4739 = vpop.permute.xlu0 %4738
        %v4740 = vsel %vm1632, %v4709, %v4711
        %v4741 = vsel %vm1632, %v4711, %v4713
        %v4742 = vsel %vm1632, %v4713, %v4715
        %v4743 = vsel %vm1632, %v4715, %v4717
        %v4744 = vsel %vm1632, %v4717, %v4719
        %v4745 = vsel %vm1632, %v4719, %v4721
        %v4746 = vsel %vm1632, %v4721, %v4723
        %v4747 = vsel %vm1632, %v4725, %v4727
        %v4748 = vsel %vm1632, %v4727, %v4729
        %v4749 = vsel %vm1632, %v4729, %v4731
        %v4750 = vsel %vm1632, %v4731, %v4733
        %v4751 = vsel %vm1632, %v4733, %v4735
        %v4752 = vsel %vm1632, %v4735, %v4737
        %v4753 = vsel %vm1632, %v4737, %v4739
        %v4770 = vsel %vm1632, %v4723, 0.0
        %v4771 = vsel %vm1632, %v4739, 0.0
        %v4772 = vmax.f32 %v4676, %v4740
        %v4773 = vmax.f32 %v4677, %v4741
        %v4774 = vmax.f32 %v4678, %v4742
        %v4775 = vmax.f32 %v4679, %v4743
        %v4776 = vmax.f32 %v4680, %v4744
        %v4777 = vmax.f32 %v4681, %v4745
        %v4778 = vmax.f32 %v4682, %v4746
        %v4779 = vmax.f32 %v4706, %v4770
        %v4780 = vmax.f32 %v4683, %v4747
        %v4781 = vmax.f32 %v4684, %v4748
        %v4782 = vmax.f32 %v4685, %v4749
        %v4783 = vmax.f32 %v4686, %v4750
        %v4784 = vmax.f32 %v4687, %v4751
        %v4785 = vmax.f32 %v4688, %v4752
        %v4786 = vmax.f32 %v4689, %v4753
        %v4787 = vmax.f32 %v4707, %v4771
        %v4788 = vmax.f32 %v4628, %v4772
        %v4789 = vmax.f32 %v4629, %v4773
        %v4790 = vmax.f32 %v4630, %v4774
        %v4791 = vmax.f32 %v4631, %v4775
        %v4792 = vmax.f32 %v4632, %v4776
        %v4793 = vmax.f32 %v4633, %v4777
        %v4794 = vmax.f32 %v4634, %v4778
        %v4795 = vmax.f32 %v4635, %v4779
        %v4796 = vmax.f32 %v4636, %v4780
        %v4797 = vmax.f32 %v4637, %v4781
        %v4798 = vmax.f32 %v4638, %v4782
        %v4799 = vmax.f32 %v4639, %v4783
        %v4800 = vmax.f32 %v4640, %v4784
        %v4801 = vmax.f32 %v4641, %v4785
        %v4802 = vmax.f32 %v4642, %v4786
        %v4803 = vmax.f32 %v4643, %v4787
        %v4804 = vpack.c.bf16 %v4796, %v4788
        %v4805 = vpack.c.bf16 %v4797, %v4789
        %v4806 = vpack.c.bf16 %v4798, %v4790
        %v4807 = vpack.c.bf16 %v4799, %v4791
        %v4808 = vpack.c.bf16 %v4800, %v4792
        %v4809 = vpack.c.bf16 %v4801, %v4793
        %v4810 = vpack.c.bf16 %v4802, %v4794
        %v4811 = vpack.c.bf16 %v4803, %v4795
        %v4812 = vld [vmem:[%s5] sm:$0xf]
        %v4813 = vld [vmem:[%s5 + $0x4] sm:$0xf]
        %v4814 = vld [vmem:[%s5 + $0x8] sm:$0xf]
        %v4815 = vld [vmem:[%s5 + $0xc] sm:$0xf]
        %v4816 = vld [vmem:[%s5 + $0x10] sm:$0xf]
        %v4817 = vld [vmem:[%s5 + $0x14] sm:$0xf]
        %v4818 = vld [vmem:[%s5 + $0x18] sm:$0xf]
        %v4819 = vld [vmem:[%s5 + $0x1c] sm:$0xf]
        %v4820 = vld [vmem:[%s5 + $0x20] sm:$0xf]
        %v4821 = vld [vmem:[%s5 + $0x24] sm:$0xf]
        %v4822 = vld [vmem:[%s5 + $0x28] sm:$0xf]
        %v4823 = vld [vmem:[%s5 + $0x2c] sm:$0xf]
        %v4824 = vld [vmem:[%s5 + $0x30] sm:$0xf]
        %v4825 = vld [vmem:[%s5 + $0x34] sm:$0xf]
        %v4826 = vld [vmem:[%s5 + $0x38] sm:$0xf]
        %v4827 = vld [vmem:[%s5 + $0x3c] sm:$0xf]
        %v4828 = vld [vmem:[%s5 + $0x40] sm:$0xf]
        %v4829 = vld [vmem:[%s5 + $0x44] sm:$0xf]
        %v4830 = vld [vmem:[%s5 + $0x48] sm:$0xf]
        %v4831 = vld [vmem:[%s5 + $0x4c] sm:$0xf]
        %v4832 = vld [vmem:[%s5 + $0x50] sm:$0xf]
        %v4833 = vld [vmem:[%s5 + $0x54] sm:$0xf]
        %v4834 = vld [vmem:[%s5 + $0x58] sm:$0xf]
        %v4835 = vld [vmem:[%s5 + $0x5c] sm:$0xf]
        %v4836 = vld [vmem:[%s5 + $0x60] sm:$0xf]
        %v4837 = vld [vmem:[%s5 + $0x64] sm:$0xf]
        %v4838 = vld [vmem:[%s5 + $0x68] sm:$0xf]
        %v4839 = vld [vmem:[%s5 + $0x6c] sm:$0xf]
        %v4840 = vld [vmem:[%s5 + $0x70] sm:$0xf]
        %v4841 = vld [vmem:[%s5 + $0x74] sm:$0xf]
        %v4842 = vld [vmem:[%s5 + $0x78] sm:$0xf]
        %v4843 = vld [vmem:[%s5 + $0x7c] sm:$0xf]
        %v4844 = vld [vmem:[%s5 + $0x80] sm:$0xf]
        %v4845 = vld [vmem:[%s5 + $0x84] sm:$0xf]
        %v4846 = vld [vmem:[%s5 + $0x88] sm:$0xf]
        %v4847 = vld [vmem:[%s5 + $0x8c] sm:$0xf]
        %v4848 = vld [vmem:[%s5 + $0x90] sm:$0xf]
        %v4849 = vld [vmem:[%s5 + $0x94] sm:$0xf]
        %v4850 = vld [vmem:[%s5 + $0x98] sm:$0xf]
        %v4851 = vld [vmem:[%s5 + $0x9c] sm:$0xf]
        %v4852 = vld [vmem:[%s5 + $0xa0] sm:$0xf]
        %v4853 = vld [vmem:[%s5 + $0xa4] sm:$0xf]
        %v4854 = vld [vmem:[%s5 + $0xa8] sm:$0xf]
        %v4855 = vld [vmem:[%s5 + $0xac] sm:$0xf]
        %v4856 = vld [vmem:[%s5 + $0xb0] sm:$0xf]
        %v4857 = vld [vmem:[%s5 + $0xb4] sm:$0xf]
        %v4858 = vld [vmem:[%s5 + $0xb8] sm:$0xf]
        %v4859 = vld [vmem:[%s5 + $0xbc] sm:$0xf]
        %v4860 = vld [vmem:[%s5 + $0xc0] sm:$0xf]
        %v4861 = vld [vmem:[%s5 + $0xc4] sm:$0xf]
        %v4862 = vld [vmem:[%s5 + $0xc8] sm:$0xf]
        %v4863 = vld [vmem:[%s5 + $0xcc] sm:$0xf]
        %v4864 = vld [vmem:[%s5 + $0xd0] sm:$0xf]
        %v4865 = vld [vmem:[%s5 + $0xd4] sm:$0xf]
        %v4866 = vld [vmem:[%s5 + $0xd8] sm:$0xf]
        %v4867 = vld [vmem:[%s5 + $0xdc] sm:$0xf]
        %v4868 = vld [vmem:[%s5 + $0xe0] sm:$0xf]
        %v4869 = vld [vmem:[%s5 + $0xe4] sm:$0xf]
        %v4870 = vld [vmem:[%s5 + $0xe8] sm:$0xf]
        %v4871 = vld [vmem:[%s5 + $0xec] sm:$0xf]
        %v4872 = vld [vmem:[%s5 + $0xf0] sm:$0xf]
        %v4873 = vld [vmem:[%s5 + $0xf4] sm:$0xf]
        %v4874 = vld [vmem:[%s5 + $0xf8] sm:$0xf]
        %v4875 = vld [vmem:[%s5 + $0xfc] sm:$0xf]
        %v4876 = vld [vmem:[%s5 + $0x100] sm:$0xf]
        %v4877 = vld [vmem:[%s5 + $0x104] sm:$0xf]
        %v4878 = vld [vmem:[%s5 + $0x108] sm:$0xf]
        %v4879 = vld [vmem:[%s5 + $0x10c] sm:$0xf]
        %v4880 = vld [vmem:[%s5 + $0x110] sm:$0xf]
        %v4881 = vld [vmem:[%s5 + $0x114] sm:$0xf]
        %v4882 = vld [vmem:[%s5 + $0x118] sm:$0xf]
        %v4883 = vld [vmem:[%s5 + $0x11c] sm:$0xf]
        %v4884 = vld [vmem:[%s5 + $0x120] sm:$0xf]
        %v4885 = vld [vmem:[%s5 + $0x124] sm:$0xf]
        %v4886 = vld [vmem:[%s5 + $0x128] sm:$0xf]
        %v4887 = vld [vmem:[%s5 + $0x12c] sm:$0xf]
        %v4888 = vld [vmem:[%s5 + $0x130] sm:$0xf]
        %v4889 = vld [vmem:[%s5 + $0x134] sm:$0xf]
        %v4890 = vld [vmem:[%s5 + $0x138] sm:$0xf]
        %v4891 = vld [vmem:[%s5 + $0x13c] sm:$0xf]
        %v4892 = vld [vmem:[%s5 + $0x140] sm:$0xf]
        %v4893 = vld [vmem:[%s5 + $0x144] sm:$0xf]
        %v4894 = vld [vmem:[%s5 + $0x148] sm:$0xf]
        %v4895 = vld [vmem:[%s5 + $0x14c] sm:$0xf]
        %v4896 = vld [vmem:[%s5 + $0x150] sm:$0xf]
        %v4897 = vld [vmem:[%s5 + $0x154] sm:$0xf]
        %v4898 = vld [vmem:[%s5 + $0x158] sm:$0xf]
        %v4899 = vld [vmem:[%s5 + $0x15c] sm:$0xf]
        %v4900 = vld [vmem:[%s5 + $0x160] sm:$0xf]
        %v4901 = vld [vmem:[%s5 + $0x164] sm:$0xf]
        %v4902 = vld [vmem:[%s5 + $0x168] sm:$0xf]
        %v4903 = vld [vmem:[%s5 + $0x16c] sm:$0xf]
        %v4904 = vld [vmem:[%s5 + $0x170] sm:$0xf]
        %v4905 = vld [vmem:[%s5 + $0x174] sm:$0xf]
        %v4906 = vld [vmem:[%s5 + $0x178] sm:$0xf]
        %v4907 = vld [vmem:[%s5 + $0x17c] sm:$0xf]
        %v4908 = vld [vmem:[%s5 + $0x180] sm:$0xf]
        %v4909 = vld [vmem:[%s5 + $0x184] sm:$0xf]
        %v4910 = vld [vmem:[%s5 + $0x188] sm:$0xf]
        %v4911 = vld [vmem:[%s5 + $0x18c] sm:$0xf]
        %v4912 = vld [vmem:[%s5 + $0x190] sm:$0xf]
        %v4913 = vld [vmem:[%s5 + $0x194] sm:$0xf]
        %v4914 = vld [vmem:[%s5 + $0x198] sm:$0xf]
        %v4915 = vld [vmem:[%s5 + $0x19c] sm:$0xf]
        %v4916 = vld [vmem:[%s5 + $0x1a0] sm:$0xf]
        %v4917 = vld [vmem:[%s5 + $0x1a4] sm:$0xf]
        %v4918 = vld [vmem:[%s5 + $0x1a8] sm:$0xf]
        %v4919 = vld [vmem:[%s5 + $0x1ac] sm:$0xf]
        %v4920 = vld [vmem:[%s5 + $0x1b0] sm:$0xf]
        %v4921 = vld [vmem:[%s5 + $0x1b4] sm:$0xf]
        %v4922 = vld [vmem:[%s5 + $0x1b8] sm:$0xf]
        %v4923 = vld [vmem:[%s5 + $0x1bc] sm:$0xf]
        %v4924 = vld [vmem:[%s5 + $0x1c0] sm:$0xf]
        %v4925 = vld [vmem:[%s5 + $0x1c4] sm:$0xf]
        %v4926 = vld [vmem:[%s5 + $0x1c8] sm:$0xf]
        %v4927 = vld [vmem:[%s5 + $0x1cc] sm:$0xf]
        %v4928 = vld [vmem:[%s5 + $0x1d0] sm:$0xf]
        %v4929 = vld [vmem:[%s5 + $0x1d4] sm:$0xf]
        %v4930 = vld [vmem:[%s5 + $0x1d8] sm:$0xf]
        %v4931 = vld [vmem:[%s5 + $0x1dc] sm:$0xf]
        %v4932 = vld [vmem:[%s5 + $0x1e0] sm:$0xf]
        %v4933 = vld [vmem:[%s5 + $0x1e4] sm:$0xf]
        %v4934 = vld [vmem:[%s5 + $0x1e8] sm:$0xf]
        %v4935 = vld [vmem:[%s5 + $0x1ec] sm:$0xf]
        %v4936 = vld [vmem:[%s5 + $0x1f0] sm:$0xf]
        %v4937 = vld [vmem:[%s5 + $0x1f4] sm:$0xf]
        %v4938 = vld [vmem:[%s5 + $0x1f8] sm:$0xf]
        %v4939 = vld [vmem:[%s5 + $0x1fc] sm:$0xf]
        %v5068 = vunpack.c.l.b16 %v4812
        %v5069 = vunpack.c.l.b16 %v4813
        %v5070 = vunpack.c.l.b16 %v4814
        %v5071 = vunpack.c.l.b16 %v4815
        %v5072 = vunpack.c.l.b16 %v4816
        %v5073 = vunpack.c.l.b16 %v4817
        %v5074 = vunpack.c.l.b16 %v4818
        %v5075 = vunpack.c.l.b16 %v4819
        %v5076 = vunpack.c.l.b16 %v4820
        %v5077 = vunpack.c.l.b16 %v4821
        %v5078 = vunpack.c.l.b16 %v4822
        %v5079 = vunpack.c.l.b16 %v4823
        %v5080 = vunpack.c.l.b16 %v4824
        %v5081 = vunpack.c.l.b16 %v4825
        %v5082 = vunpack.c.l.b16 %v4826
        %v5083 = vunpack.c.l.b16 %v4827
        %v5084 = vunpack.c.l.b16 %v4828
        %v5085 = vunpack.c.l.b16 %v4829
        %v5086 = vunpack.c.l.b16 %v4830
        %v5087 = vunpack.c.l.b16 %v4831
        %v5088 = vunpack.c.l.b16 %v4832
        %v5089 = vunpack.c.l.b16 %v4833
        %v5090 = vunpack.c.l.b16 %v4834
        %v5091 = vunpack.c.l.b16 %v4835
        %v5092 = vunpack.c.l.b16 %v4836
        %v5093 = vunpack.c.l.b16 %v4837
        %v5094 = vunpack.c.l.b16 %v4838
        %v5095 = vunpack.c.l.b16 %v4839
        %v5096 = vunpack.c.l.b16 %v4840
        %v5097 = vunpack.c.l.b16 %v4841
        %v5098 = vunpack.c.l.b16 %v4842
        %v5099 = vunpack.c.l.b16 %v4843
        %v5100 = vunpack.c.l.b16 %v4844
        %v5101 = vunpack.c.l.b16 %v4845
        %v5102 = vunpack.c.l.b16 %v4846
        %v5103 = vunpack.c.l.b16 %v4847
        %v5104 = vunpack.c.l.b16 %v4848
        %v5105 = vunpack.c.l.b16 %v4849
        %v5106 = vunpack.c.l.b16 %v4850
        %v5107 = vunpack.c.l.b16 %v4851
        %v5108 = vunpack.c.l.b16 %v4852
        %v5109 = vunpack.c.l.b16 %v4853
        %v5110 = vunpack.c.l.b16 %v4854
        %v5111 = vunpack.c.l.b16 %v4855
        %v5112 = vunpack.c.l.b16 %v4856
        %v5113 = vunpack.c.l.b16 %v4857
        %v5114 = vunpack.c.l.b16 %v4858
        %v5115 = vunpack.c.l.b16 %v4859
        %v5116 = vunpack.c.l.b16 %v4860
        %v5117 = vunpack.c.l.b16 %v4861
        %v5118 = vunpack.c.l.b16 %v4862
        %v5119 = vunpack.c.l.b16 %v4863
        %v5120 = vunpack.c.l.b16 %v4864
        %v5121 = vunpack.c.l.b16 %v4865
        %v5122 = vunpack.c.l.b16 %v4866
        %v5123 = vunpack.c.l.b16 %v4867
        %v5124 = vunpack.c.l.b16 %v4868
        %v5125 = vunpack.c.l.b16 %v4869
        %v5126 = vunpack.c.l.b16 %v4870
        %v5127 = vunpack.c.l.b16 %v4871
        %v5128 = vunpack.c.l.b16 %v4872
        %v5129 = vunpack.c.l.b16 %v4873
        %v5130 = vunpack.c.l.b16 %v4874
        %v5131 = vunpack.c.l.b16 %v4875
        %v5132 = vunpack.c.l.b16 %v4876
        %v5133 = vunpack.c.l.b16 %v4877
        %v5134 = vunpack.c.l.b16 %v4878
        %v5135 = vunpack.c.l.b16 %v4879
        %v5136 = vunpack.c.l.b16 %v4880
        %v5137 = vunpack.c.l.b16 %v4881
        %v5138 = vunpack.c.l.b16 %v4882
        %v5139 = vunpack.c.l.b16 %v4883
        %v5140 = vunpack.c.l.b16 %v4884
        %v5141 = vunpack.c.l.b16 %v4885
        %v5142 = vunpack.c.l.b16 %v4886
        %v5143 = vunpack.c.l.b16 %v4887
        %v5144 = vunpack.c.l.b16 %v4888
        %v5145 = vunpack.c.l.b16 %v4889
        %v5146 = vunpack.c.l.b16 %v4890
        %v5147 = vunpack.c.l.b16 %v4891
        %v5148 = vunpack.c.l.b16 %v4892
        %v5149 = vunpack.c.l.b16 %v4893
        %v5150 = vunpack.c.l.b16 %v4894
        %v5151 = vunpack.c.l.b16 %v4895
        %v5152 = vunpack.c.l.b16 %v4896
        %v5153 = vunpack.c.l.b16 %v4897
        %v5154 = vunpack.c.l.b16 %v4898
        %v5155 = vunpack.c.l.b16 %v4899
        %v5156 = vunpack.c.l.b16 %v4900
        %v5157 = vunpack.c.l.b16 %v4901
        %v5158 = vunpack.c.l.b16 %v4902
        %v5159 = vunpack.c.l.b16 %v4903
        %v5160 = vunpack.c.l.b16 %v4904
        %v5161 = vunpack.c.l.b16 %v4905
        %v5162 = vunpack.c.l.b16 %v4906
        %v5163 = vunpack.c.l.b16 %v4907
        %v5164 = vunpack.c.l.b16 %v4908
        %v5165 = vunpack.c.l.b16 %v4909
        %v5166 = vunpack.c.l.b16 %v4910
        %v5167 = vunpack.c.l.b16 %v4911
        %v5168 = vunpack.c.l.b16 %v4912
        %v5169 = vunpack.c.l.b16 %v4913
        %v5170 = vunpack.c.l.b16 %v4914
        %v5171 = vunpack.c.l.b16 %v4915
        %v5172 = vunpack.c.l.b16 %v4916
        %v5173 = vunpack.c.l.b16 %v4917
        %v5174 = vunpack.c.l.b16 %v4918
        %v5175 = vunpack.c.l.b16 %v4919
        %v5176 = vunpack.c.l.b16 %v4920
        %v5177 = vunpack.c.l.b16 %v4921
        %v5178 = vunpack.c.l.b16 %v4922
        %v5179 = vunpack.c.l.b16 %v4923
        %v5180 = vunpack.c.l.b16 %v4924
        %v5181 = vunpack.c.l.b16 %v4925
        %v5182 = vunpack.c.l.b16 %v4926
        %v5183 = vunpack.c.l.b16 %v4927
        %v5184 = vunpack.c.l.b16 %v4928
        %v5185 = vunpack.c.l.b16 %v4929
        %v5186 = vunpack.c.l.b16 %v4930
        %v5187 = vunpack.c.l.b16 %v4931
        %v5188 = vunpack.c.l.b16 %v4932
        %v5189 = vunpack.c.l.b16 %v4933
        %v5190 = vunpack.c.l.b16 %v4934
        %v5191 = vunpack.c.l.b16 %v4935
        %v5192 = vunpack.c.l.b16 %v4936
        %v5193 = vunpack.c.l.b16 %v4937
        %v5194 = vunpack.c.l.b16 %v4938
        %v5195 = vunpack.c.l.b16 %v4939
        %v5196 = vpack.c.b16 %v5069, %v5068
        %v5197 = vpack.c.b16 %v5071, %v5070
        %v5198 = vpack.c.b16 %v5073, %v5072
        %v5199 = vpack.c.b16 %v5075, %v5074
        %v5200 = vpack.c.b16 %v5077, %v5076
        %v5201 = vpack.c.b16 %v5079, %v5078
        %v5202 = vpack.c.b16 %v5081, %v5080
        %v5203 = vpack.c.b16 %v5083, %v5082
        %v5204 = vpack.c.b16 %v5085, %v5084
        %v5205 = vpack.c.b16 %v5087, %v5086
        %v5206 = vpack.c.b16 %v5089, %v5088
        %v5207 = vpack.c.b16 %v5091, %v5090
        %v5208 = vpack.c.b16 %v5093, %v5092
        %v5209 = vpack.c.b16 %v5095, %v5094
        %v5210 = vpack.c.b16 %v5097, %v5096
        %v5211 = vpack.c.b16 %v5099, %v5098
        %v5212 = vpack.c.b16 %v5101, %v5100
        %v5213 = vpack.c.b16 %v5103, %v5102
        %v5214 = vpack.c.b16 %v5105, %v5104
        %v5215 = vpack.c.b16 %v5107, %v5106
        %v5216 = vpack.c.b16 %v5109, %v5108
        %v5217 = vpack.c.b16 %v5111, %v5110
        %v5218 = vpack.c.b16 %v5113, %v5112
        %v5219 = vpack.c.b16 %v5115, %v5114
        %v5220 = vpack.c.b16 %v5117, %v5116
        %v5221 = vpack.c.b16 %v5119, %v5118
        %v5222 = vpack.c.b16 %v5121, %v5120
        %v5223 = vpack.c.b16 %v5123, %v5122
        %v5224 = vpack.c.b16 %v5125, %v5124
        %v5225 = vpack.c.b16 %v5127, %v5126
        %v5226 = vpack.c.b16 %v5129, %v5128
        %v5227 = vpack.c.b16 %v5131, %v5130
        %v5228 = vpack.c.b16 %v5133, %v5132
        %v5229 = vpack.c.b16 %v5135, %v5134
        %v5230 = vpack.c.b16 %v5137, %v5136
        %v5231 = vpack.c.b16 %v5139, %v5138
        %v5232 = vpack.c.b16 %v5141, %v5140
        %v5233 = vpack.c.b16 %v5143, %v5142
        %v5234 = vpack.c.b16 %v5145, %v5144
        %v5235 = vpack.c.b16 %v5147, %v5146
        %v5236 = vpack.c.b16 %v5149, %v5148
        %v5237 = vpack.c.b16 %v5151, %v5150
        %v5238 = vpack.c.b16 %v5153, %v5152
        %v5239 = vpack.c.b16 %v5155, %v5154
        %v5240 = vpack.c.b16 %v5157, %v5156
        %v5241 = vpack.c.b16 %v5159, %v5158
        %v5242 = vpack.c.b16 %v5161, %v5160
        %v5243 = vpack.c.b16 %v5163, %v5162
        %v5244 = vpack.c.b16 %v5165, %v5164
        %v5245 = vpack.c.b16 %v5167, %v5166
        %v5246 = vpack.c.b16 %v5169, %v5168
        %v5247 = vpack.c.b16 %v5171, %v5170
        %v5248 = vpack.c.b16 %v5173, %v5172
        %v5249 = vpack.c.b16 %v5175, %v5174
        %v5250 = vpack.c.b16 %v5177, %v5176
        %v5251 = vpack.c.b16 %v5179, %v5178
        %v5252 = vpack.c.b16 %v5181, %v5180
        %v5253 = vpack.c.b16 %v5183, %v5182
        %v5254 = vpack.c.b16 %v5185, %v5184
        %v5255 = vpack.c.b16 %v5187, %v5186
        %v5256 = vpack.c.b16 %v5189, %v5188
        %v5257 = vpack.c.b16 %v5191, %v5190
        %v5258 = vpack.c.b16 %v5193, %v5192
        %v5259 = vpack.c.b16 %v5195, %v5194
        %5324 = vmatprep.subr.bf16.mxu0 0
        %5325 = vmatpush1.bf16.msra.mxu0 %v5196
        %5326 = vmatprep.subr.bf16.mxu0 0
        %5327 = vmatpush1.bf16.msra.mxu0 %v5197
        %5328 = vmatprep.subr.bf16.mxu0 0
        %5329 = vmatpush1.bf16.msra.mxu0 %v5198
        %5330 = vmatprep.subr.bf16.mxu0 0
        %5331 = vmatpush1.bf16.msra.mxu0 %v5199
        %5332 = vmatprep.subr.bf16.mxu0 0
        %5333 = vmatpush1.bf16.msra.mxu0 %v5200
        %5334 = vmatprep.subr.bf16.mxu0 0
        %5335 = vmatpush1.bf16.msra.mxu0 %v5201
        %5336 = vmatprep.subr.bf16.mxu0 0
        %5337 = vmatpush1.bf16.msra.mxu0 %v5202
        %5338 = vmatprep.subr.bf16.mxu0 0
        %5339 = vmatpush1.bf16.msra.mxu0 %v5203
        %5340 = vmatprep.subr.bf16.mxu0 0
        %5341 = vmatpush1.bf16.msra.mxu0 %v5204
        %5342 = vmatprep.subr.bf16.mxu0 0
        %5343 = vmatpush1.bf16.msra.mxu0 %v5205
        %5344 = vmatprep.subr.bf16.mxu0 0
        %5345 = vmatpush1.bf16.msra.mxu0 %v5206
        %5346 = vmatprep.subr.bf16.mxu0 0
        %5347 = vmatpush1.bf16.msra.mxu0 %v5207
        %5348 = vmatprep.subr.bf16.mxu0 0
        %5349 = vmatpush1.bf16.msra.mxu0 %v5208
        %5350 = vmatprep.subr.bf16.mxu0 0
        %5351 = vmatpush1.bf16.msra.mxu0 %v5209
        %5352 = vmatprep.subr.bf16.mxu0 0
        %5353 = vmatpush1.bf16.msra.mxu0 %v5210
        %5354 = vmatprep.subr.bf16.mxu0 0
        %5355 = vmatpush1.bf16.msra.mxu0 %v5211
        %5356 = vmatprep.mubr.bf16.mxu0 %v4805
        %5357 = vmatmul.mubr.bf16.gmra.mrb[0].mxu0 %v4804
        %v5358 = vpop.f32.mrb[0].mxu0
        %v5359 = vadd.f32 0.0, %v5358
        %v5360 = vpop.f32.mrb[0].mxu0
        %v5361 = vpop.f32.mrb[0].mxu0
        %v5362 = vadd.f32 0.0, %v5361
        %v5363 = vpop.f32.mrb[0].mxu0
        %5364 = vdwg.mxu0
        %5365 = vmatprep.subr.bf16.mxu0 0
        %5366 = vmatpush1.bf16.msra.mxu0 %v5212
        %5367 = vmatprep.subr.bf16.mxu0 0
        %5368 = vmatpush1.bf16.msra.mxu0 %v5213
        %5369 = vmatprep.subr.bf16.mxu0 0
        %5370 = vmatpush1.bf16.msra.mxu0 %v5214
        %5371 = vmatprep.subr.bf16.mxu0 0
        %5372 = vmatpush1.bf16.msra.mxu0 %v5215
        %5373 = vmatprep.subr.bf16.mxu0 0
        %5374 = vmatpush1.bf16.msra.mxu0 %v5216
        %5375 = vmatprep.subr.bf16.mxu0 0
        %5376 = vmatpush1.bf16.msra.mxu0 %v5217
        %5377 = vmatprep.subr.bf16.mxu0 0
        %5378 = vmatpush1.bf16.msra.mxu0 %v5218
        %5379 = vmatprep.subr.bf16.mxu0 0
        %5380 = vmatpush1.bf16.msra.mxu0 %v5219
        %5381 = vmatprep.subr.bf16.mxu0 0
        %5382 = vmatpush1.bf16.msra.mxu0 %v5220
        %5383 = vmatprep.subr.bf16.mxu0 0
        %5384 = vmatpush1.bf16.msra.mxu0 %v5221
        %5385 = vmatprep.subr.bf16.mxu0 0
        %5386 = vmatpush1.bf16.msra.mxu0 %v5222
        %5387 = vmatprep.subr.bf16.mxu0 0
        %5388 = vmatpush1.bf16.msra.mxu0 %v5223
        %5389 = vmatprep.subr.bf16.mxu0 0
        %5390 = vmatpush1.bf16.msra.mxu0 %v5224
        %5391 = vmatprep.subr.bf16.mxu0 0
        %5392 = vmatpush1.bf16.msra.mxu0 %v5225
        %5393 = vmatprep.subr.bf16.mxu0 0
        %5394 = vmatpush1.bf16.msra.mxu0 %v5226
        %5395 = vmatprep.subr.bf16.mxu0 0
        %5396 = vmatpush1.bf16.msra.mxu0 %v5227
        %5397 = vmatprep.mubr.bf16.mxu0 %v4807
        %5398 = vmatmul.mubr.bf16.gmra.mrb[0].mxu0 %v4806
        %v5399 = vpop.f32.mrb[0].mxu0
        %v5400 = vadd.f32 %v5359, %v5399
        %v5401 = vpop.f32.mrb[0].mxu0
        %v5402 = vpop.f32.mrb[0].mxu0
        %v5403 = vadd.f32 %v5362, %v5402
        %v5404 = vpop.f32.mrb[0].mxu0
        %5405 = vdwg.mxu0
        %5406 = vmatprep.subr.bf16.mxu0 0
        %5407 = vmatpush1.bf16.msra.mxu0 %v5228
        %5408 = vmatprep.subr.bf16.mxu0 0
        %5409 = vmatpush1.bf16.msra.mxu0 %v5229
        %5410 = vmatprep.subr.bf16.mxu0 0
        %5411 = vmatpush1.bf16.msra.mxu0 %v5230
        %5412 = vmatprep.subr.bf16.mxu0 0
        %5413 = vmatpush1.bf16.msra.mxu0 %v5231
        %5414 = vmatprep.subr.bf16.mxu0 0
        %5415 = vmatpush1.bf16.msra.mxu0 %v5232
        %5416 = vmatprep.subr.bf16.mxu0 0
        %5417 = vmatpush1.bf16.msra.mxu0 %v5233
        %5418 = vmatprep.subr.bf16.mxu0 0
        %5419 = vmatpush1.bf16.msra.mxu0 %v5234
        %5420 = vmatprep.subr.bf16.mxu0 0
        %5421 = vmatpush1.bf16.msra.mxu0 %v5235
        %5422 = vmatprep.subr.bf16.mxu0 0
        %5423 = vmatpush1.bf16.msra.mxu0 %v5236
        %5424 = vmatprep.subr.bf16.mxu0 0
        %5425 = vmatpush1.bf16.msra.mxu0 %v5237
        %5426 = vmatprep.subr.bf16.mxu0 0
        %5427 = vmatpush1.bf16.msra.mxu0 %v5238
        %5428 = vmatprep.subr.bf16.mxu0 0
        %5429 = vmatpush1.bf16.msra.mxu0 %v5239
        %5430 = vmatprep.subr.bf16.mxu0 0
        %5431 = vmatpush1.bf16.msra.mxu0 %v5240
        %5432 = vmatprep.subr.bf16.mxu0 0
        %5433 = vmatpush1.bf16.msra.mxu0 %v5241
        %5434 = vmatprep.subr.bf16.mxu0 0
        %5435 = vmatpush1.bf16.msra.mxu0 %v5242
        %5436 = vmatprep.subr.bf16.mxu0 0
        %5437 = vmatpush1.bf16.msra.mxu0 %v5243
        %5438 = vmatprep.mubr.bf16.mxu0 %v4809
        %5439 = vmatmul.mubr.bf16.gmra.mrb[0].mxu0 %v4808
        %v5440 = vpop.f32.mrb[0].mxu0
        %v5441 = vadd.f32 %v5400, %v5440
        %v5442 = vpop.f32.mrb[0].mxu0
        %v5443 = vpop.f32.mrb[0].mxu0
        %v5444 = vadd.f32 %v5403, %v5443
        %v5445 = vpop.f32.mrb[0].mxu0
        %5446 = vdwg.mxu0
        %5447 = vmatprep.subr.bf16.mxu0 0
        %5448 = vmatpush1.bf16.msra.mxu0 %v5244
        %5449 = vmatprep.subr.bf16.mxu0 0
        %5450 = vmatpush1.bf16.msra.mxu0 %v5245
        %5451 = vmatprep.subr.bf16.mxu0 0
        %5452 = vmatpush1.bf16.msra.mxu0 %v5246
        %5453 = vmatprep.subr.bf16.mxu0 0
        %5454 = vmatpush1.bf16.msra.mxu0 %v5247
        %5455 = vmatprep.subr.bf16.mxu0 0
        %5456 = vmatpush1.bf16.msra.mxu0 %v5248
        %5457 = vmatprep.subr.bf16.mxu0 0
        %5458 = vmatpush1.bf16.msra.mxu0 %v5249
        %5459 = vmatprep.subr.bf16.mxu0 0
        %5460 = vmatpush1.bf16.msra.mxu0 %v5250
        %5461 = vmatprep.subr.bf16.mxu0 0
        %5462 = vmatpush1.bf16.msra.mxu0 %v5251
        %5463 = vmatprep.subr.bf16.mxu0 0
        %5464 = vmatpush1.bf16.msra.mxu0 %v5252
        %5465 = vmatprep.subr.bf16.mxu0 0
        %5466 = vmatpush1.bf16.msra.mxu0 %v5253
        %5467 = vmatprep.subr.bf16.mxu0 0
        %5468 = vmatpush1.bf16.msra.mxu0 %v5254
        %5469 = vmatprep.subr.bf16.mxu0 0
        %5470 = vmatpush1.bf16.msra.mxu0 %v5255
        %5471 = vmatprep.subr.bf16.mxu0 0
        %5472 = vmatpush1.bf16.msra.mxu0 %v5256
        %5473 = vmatprep.subr.bf16.mxu0 0
        %5474 = vmatpush1.bf16.msra.mxu0 %v5257
        %5475 = vmatprep.subr.bf16.mxu0 0
        %5476 = vmatpush1.bf16.msra.mxu0 %v5258
        %5477 = vmatprep.subr.bf16.mxu0 0
        %5478 = vmatpush1.bf16.msra.mxu0 %v5259
        %5479 = vmatprep.mubr.bf16.mxu0 %v4811
        %5480 = vmatmul.mubr.bf16.gmra.mrb[0].mxu0 %v4810
        %v5481 = vpop.f32.mrb[0].mxu0
        %v5482 = vadd.f32 %v5441, %v5481
        %v5483 = vpop.f32.mrb[0].mxu0
        %v5484 = vpop.f32.mrb[0].mxu0
        %v5485 = vadd.f32 %v5444, %v5484
        %v5486 = vpop.f32.mrb[0].mxu0
        %5487 = vdwg.mxu0
        %v5488 = vpack.c.bf16 %v5485, %v5482
        %v5489 = vld [vmem:[%s7] sm:$0x1]
        %v5490 = vld [vmem:[%s6] sm:$0xf]
        %v5491 = vld [vmem:[%s6 + $0x4] sm:$0xf]
        %v5492 = vld [vmem:[%s6 + $0x8] sm:$0xf]
        %v5493 = vld [vmem:[%s6 + $0xc] sm:$0xf]
        %v5494 = vld [vmem:[%s6 + $0x10] sm:$0xf]
        %v5495 = vld [vmem:[%s6 + $0x14] sm:$0xf]
        %v5496 = vld [vmem:[%s6 + $0x18] sm:$0xf]
        %v5497 = vld [vmem:[%s6 + $0x1c] sm:$0xf]
        %v5498 = vld [vmem:[%s6 + $0x20] sm:$0xf]
        %v5499 = vld [vmem:[%s6 + $0x24] sm:$0xf]
        %v5500 = vld [vmem:[%s6 + $0x28] sm:$0xf]
        %v5501 = vld [vmem:[%s6 + $0x2c] sm:$0xf]
        %v5502 = vld [vmem:[%s6 + $0x30] sm:$0xf]
        %v5503 = vld [vmem:[%s6 + $0x34] sm:$0xf]
        %v5504 = vld [vmem:[%s6 + $0x38] sm:$0xf]
        %v5505 = vld [vmem:[%s6 + $0x3c] sm:$0xf]
        %v5522 = vunpack.c.l.b16 %v5490
        %v5523 = vunpack.c.l.b16 %v5491
        %v5524 = vunpack.c.l.b16 %v5492
        %v5525 = vunpack.c.l.b16 %v5493
        %v5526 = vunpack.c.l.b16 %v5494
        %v5527 = vunpack.c.l.b16 %v5495
        %v5528 = vunpack.c.l.b16 %v5496
        %v5529 = vunpack.c.l.b16 %v5497
        %v5530 = vunpack.c.l.b16 %v5498
        %v5531 = vunpack.c.l.b16 %v5499
        %v5532 = vunpack.c.l.b16 %v5500
        %v5533 = vunpack.c.l.b16 %v5501
        %v5534 = vunpack.c.l.b16 %v5502
        %v5535 = vunpack.c.l.b16 %v5503
        %v5536 = vunpack.c.l.b16 %v5504
        %v5537 = vunpack.c.l.b16 %v5505
        %v5538 = vpack.c.b16 %v5523, %v5522
        %v5539 = vpack.c.b16 %v5525, %v5524
        %v5540 = vpack.c.b16 %v5527, %v5526
        %v5541 = vpack.c.b16 %v5529, %v5528
        %v5542 = vpack.c.b16 %v5531, %v5530
        %v5543 = vpack.c.b16 %v5533, %v5532
        %v5544 = vpack.c.b16 %v5535, %v5534
        %v5545 = vpack.c.b16 %v5537, %v5536
        %5554 = vmatprep.subr.bf16.mxu0 0
        %5555 = vmatpush1.bf16.msra.mxu0 %v5538
        %5556 = vmatprep.subr.bf16.mxu0 0
        %5557 = vmatpush1.bf16.msra.mxu0 %v5539
        %5558 = vmatprep.subr.bf16.mxu0 0
        %5559 = vmatpush1.bf16.msra.mxu0 %v5540
        %5560 = vmatprep.subr.bf16.mxu0 0
        %5561 = vmatpush1.bf16.msra.mxu0 %v5541
        %5562 = vmatprep.subr.bf16.mxu0 0
        %5563 = vmatpush1.bf16.msra.mxu0 %v5542
        %5564 = vmatprep.subr.bf16.mxu0 0
        %5565 = vmatpush1.bf16.msra.mxu0 %v5543
        %5566 = vmatprep.subr.bf16.mxu0 0
        %5567 = vmatpush1.bf16.msra.mxu0 %v5544
        %5568 = vmatprep.subr.bf16.mxu0 0
        %5569 = vmatpush1.bf16.msra.mxu0 %v5545
        %5570 = vmatprep.subr.bf16.mxu0 0
        %5571 = vmatpush1.bf16.msra.mxu0 0
        %5572 = vmatprep.subr.bf16.mxu0 0
        %5573 = vmatpush1.bf16.msra.mxu0 0
        %5574 = vmatprep.subr.bf16.mxu0 0
        %5575 = vmatpush1.bf16.msra.mxu0 0
        %5576 = vmatprep.subr.bf16.mxu0 0
        %5577 = vmatpush1.bf16.msra.mxu0 0
        %5578 = vmatprep.subr.bf16.mxu0 0
        %5579 = vmatpush1.bf16.msra.mxu0 0
        %5580 = vmatprep.subr.bf16.mxu0 0
        %5581 = vmatpush1.bf16.msra.mxu0 0
        %5582 = vmatprep.subr.bf16.mxu0 0
        %5583 = vmatpush1.bf16.msra.mxu0 0
        %5584 = vmatprep.subr.bf16.mxu0 0
        %5585 = vmatpush1.bf16.msra.mxu0 0
        %5586 = vmatprep.mubr.bf16.mxu0 0
        %5587 = vmatmul.mubr.bf16.gmra.mrb[0].mxu0 %v5488
        %v5588 = vpop.f32.mrb[0].mxu0
        %v5589 = vadd.f32 0.0, %v5588
        %v5590 = vpop.f32.mrb[0].mxu0
        %v5591 = vpop.f32.mrb[0].mxu0
        %v5592 = vpop.f32.mrb[0].mxu0
        %5593 = vdwg.mxu0
        %v5594 = vadd.f32 %v5489, %v5589
        %s5595 = scalar_lea.vmem %s6, 64
        %v5596 = vld [vmem:[%s5595] sm:$0xf]
        %v5597 = vld [vmem:[%s5595 + $0x4] sm:$0xf]
        %v5598 = vld [vmem:[%s5595 + $0x8] sm:$0xf]
        %v5599 = vld [vmem:[%s5595 + $0xc] sm:$0xf]
        %v5600 = vld [vmem:[%s5595 + $0x10] sm:$0xf]
        %v5601 = vld [vmem:[%s5595 + $0x14] sm:$0xf]
        %v5602 = vld [vmem:[%s5595 + $0x18] sm:$0xf]
        %v5603 = vld [vmem:[%s5595 + $0x1c] sm:$0xf]
        %v5604 = vld [vmem:[%s5595 + $0x20] sm:$0xf]
        %v5605 = vld [vmem:[%s5595 + $0x24] sm:$0xf]
        %v5606 = vld [vmem:[%s5595 + $0x28] sm:$0xf]
        %v5607 = vld [vmem:[%s5595 + $0x2c] sm:$0xf]
        %v5608 = vld [vmem:[%s5595 + $0x30] sm:$0xf]
        %v5609 = vld [vmem:[%s5595 + $0x34] sm:$0xf]
        %v5610 = vld [vmem:[%s5595 + $0x38] sm:$0xf]
        %v5611 = vld [vmem:[%s5595 + $0x3c] sm:$0xf]
        %v5613 = vshrl.u32 %v5488, 16
        %v5632 = vunpack.c.l.b16 %v5596
        %v5633 = vunpack.c.l.b16 %v5597
        %v5634 = vunpack.c.l.b16 %v5598
        %v5635 = vunpack.c.l.b16 %v5599
        %v5636 = vunpack.c.l.b16 %v5600
        %v5637 = vunpack.c.l.b16 %v5601
        %v5638 = vunpack.c.l.b16 %v5602
        %v5639 = vunpack.c.l.b16 %v5603
        %v5640 = vunpack.c.l.b16 %v5604
        %v5641 = vunpack.c.l.b16 %v5605
        %v5642 = vunpack.c.l.b16 %v5606
        %v5643 = vunpack.c.l.b16 %v5607
        %v5644 = vunpack.c.l.b16 %v5608
        %v5645 = vunpack.c.l.b16 %v5609
        %v5646 = vunpack.c.l.b16 %v5610
        %v5647 = vunpack.c.l.b16 %v5611
        %v5648 = vpack.c.b16 %v5633, %v5632
        %v5649 = vpack.c.b16 %v5635, %v5634
        %v5650 = vpack.c.b16 %v5637, %v5636
        %v5651 = vpack.c.b16 %v5639, %v5638
        %v5652 = vpack.c.b16 %v5641, %v5640
        %v5653 = vpack.c.b16 %v5643, %v5642
        %v5654 = vpack.c.b16 %v5645, %v5644
        %v5655 = vpack.c.b16 %v5647, %v5646
        %5664 = vmatprep.subr.bf16.mxu0 0
        %5665 = vmatpush1.bf16.msra.mxu0 %v5648
        %5666 = vmatprep.subr.bf16.mxu0 0
        %5667 = vmatpush1.bf16.msra.mxu0 %v5649
        %5668 = vmatprep.subr.bf16.mxu0 0
        %5669 = vmatpush1.bf16.msra.mxu0 %v5650
        %5670 = vmatprep.subr.bf16.mxu0 0
        %5671 = vmatpush1.bf16.msra.mxu0 %v5651
        %5672 = vmatprep.subr.bf16.mxu0 0
        %5673 = vmatpush1.bf16.msra.mxu0 %v5652
        %5674 = vmatprep.subr.bf16.mxu0 0
        %5675 = vmatpush1.bf16.msra.mxu0 %v5653
        %5676 = vmatprep.subr.bf16.mxu0 0
        %5677 = vmatpush1.bf16.msra.mxu0 %v5654
        %5678 = vmatprep.subr.bf16.mxu0 0
        %5679 = vmatpush1.bf16.msra.mxu0 %v5655
        %5680 = vmatprep.subr.bf16.mxu0 0
        %5681 = vmatpush1.bf16.msra.mxu0 0
        %5682 = vmatprep.subr.bf16.mxu0 0
        %5683 = vmatpush1.bf16.msra.mxu0 0
        %5684 = vmatprep.subr.bf16.mxu0 0
        %5685 = vmatpush1.bf16.msra.mxu0 0
        %5686 = vmatprep.subr.bf16.mxu0 0
        %5687 = vmatpush1.bf16.msra.mxu0 0
        %5688 = vmatprep.subr.bf16.mxu0 0
        %5689 = vmatpush1.bf16.msra.mxu0 0
        %5690 = vmatprep.subr.bf16.mxu0 0
        %5691 = vmatpush1.bf16.msra.mxu0 0
        %5692 = vmatprep.subr.bf16.mxu0 0
        %5693 = vmatpush1.bf16.msra.mxu0 0
        %5694 = vmatprep.subr.bf16.mxu0 0
        %5695 = vmatpush1.bf16.msra.mxu0 0
        %5696 = vmatprep.mubr.bf16.mxu0 0
        %5697 = vmatmul.mubr.bf16.gmra.mrb[0].mxu0 %v5613
        %v5698 = vpop.f32.mrb[0].mxu0
        %v5699 = vadd.f32 0.0, %v5698
        %v5700 = vpop.f32.mrb[0].mxu0
        %v5701 = vpop.f32.mrb[0].mxu0
        %v5702 = vpop.f32.mrb[0].mxu0
        %5703 = vdwg.mxu0
        %v5704 = vadd.f32 %v5594, %v5699
        %s5705 = scalar_lea.vmem %s6, 128
        %v5706 = vld [vmem:[%s5705] sm:$0xf]
        %v5707 = vld [vmem:[%s5705 + $0x4] sm:$0xf]
        %v5708 = vld [vmem:[%s5705 + $0x8] sm:$0xf]
        %v5709 = vld [vmem:[%s5705 + $0xc] sm:$0xf]
        %v5710 = vld [vmem:[%s5705 + $0x10] sm:$0xf]
        %v5711 = vld [vmem:[%s5705 + $0x14] sm:$0xf]
        %v5712 = vld [vmem:[%s5705 + $0x18] sm:$0xf]
        %v5713 = vld [vmem:[%s5705 + $0x1c] sm:$0xf]
        %v5714 = vld [vmem:[%s5705 + $0x20] sm:$0xf]
        %v5715 = vld [vmem:[%s5705 + $0x24] sm:$0xf]
        %v5716 = vld [vmem:[%s5705 + $0x28] sm:$0xf]
        %v5717 = vld [vmem:[%s5705 + $0x2c] sm:$0xf]
        %v5718 = vld [vmem:[%s5705 + $0x30] sm:$0xf]
        %v5719 = vld [vmem:[%s5705 + $0x34] sm:$0xf]
        %v5720 = vld [vmem:[%s5705 + $0x38] sm:$0xf]
        %v5721 = vld [vmem:[%s5705 + $0x3c] sm:$0xf]
        %v5723 = vrot.slane %v5488, 1
        %v5741 = vunpack.c.l.b16 %v5706
        %v5742 = vunpack.c.l.b16 %v5707
        %v5743 = vunpack.c.l.b16 %v5708
        %v5744 = vunpack.c.l.b16 %v5709
        %v5745 = vunpack.c.l.b16 %v5710
        %v5746 = vunpack.c.l.b16 %v5711
        %v5747 = vunpack.c.l.b16 %v5712
        %v5748 = vunpack.c.l.b16 %v5713
        %v5749 = vunpack.c.l.b16 %v5714
        %v5750 = vunpack.c.l.b16 %v5715
        %v5751 = vunpack.c.l.b16 %v5716
        %v5752 = vunpack.c.l.b16 %v5717
        %v5753 = vunpack.c.l.b16 %v5718
        %v5754 = vunpack.c.l.b16 %v5719
        %v5755 = vunpack.c.l.b16 %v5720
        %v5756 = vunpack.c.l.b16 %v5721
        %v5757 = vpack.c.b16 %v5742, %v5741
        %v5758 = vpack.c.b16 %v5744, %v5743
        %v5759 = vpack.c.b16 %v5746, %v5745
        %v5760 = vpack.c.b16 %v5748, %v5747
        %v5761 = vpack.c.b16 %v5750, %v5749
        %v5762 = vpack.c.b16 %v5752, %v5751
        %v5763 = vpack.c.b16 %v5754, %v5753
        %v5764 = vpack.c.b16 %v5756, %v5755
        %5773 = vmatprep.subr.bf16.mxu0 0
        %5774 = vmatpush1.bf16.msra.mxu0 %v5757
        %5775 = vmatprep.subr.bf16.mxu0 0
        %5776 = vmatpush1.bf16.msra.mxu0 %v5758
        %5777 = vmatprep.subr.bf16.mxu0 0
        %5778 = vmatpush1.bf16.msra.mxu0 %v5759
        %5779 = vmatprep.subr.bf16.mxu0 0
        %5780 = vmatpush1.bf16.msra.mxu0 %v5760
        %5781 = vmatprep.subr.bf16.mxu0 0
        %5782 = vmatpush1.bf16.msra.mxu0 %v5761
        %5783 = vmatprep.subr.bf16.mxu0 0
        %5784 = vmatpush1.bf16.msra.mxu0 %v5762
        %5785 = vmatprep.subr.bf16.mxu0 0
        %5786 = vmatpush1.bf16.msra.mxu0 %v5763
        %5787 = vmatprep.subr.bf16.mxu0 0
        %5788 = vmatpush1.bf16.msra.mxu0 %v5764
        %5789 = vmatprep.subr.bf16.mxu0 0
        %5790 = vmatpush1.bf16.msra.mxu0 0
        %5791 = vmatprep.subr.bf16.mxu0 0
        %5792 = vmatpush1.bf16.msra.mxu0 0
        %5793 = vmatprep.subr.bf16.mxu0 0
        %5794 = vmatpush1.bf16.msra.mxu0 0
        %5795 = vmatprep.subr.bf16.mxu0 0
        %5796 = vmatpush1.bf16.msra.mxu0 0
        %5797 = vmatprep.subr.bf16.mxu0 0
        %5798 = vmatpush1.bf16.msra.mxu0 0
        %5799 = vmatprep.subr.bf16.mxu0 0
        %5800 = vmatpush1.bf16.msra.mxu0 0
        %5801 = vmatprep.subr.bf16.mxu0 0
        %5802 = vmatpush1.bf16.msra.mxu0 0
        %5803 = vmatprep.subr.bf16.mxu0 0
        %5804 = vmatpush1.bf16.msra.mxu0 0
        %5805 = vmatprep.mubr.bf16.mxu0 0
        %5806 = vmatmul.mubr.bf16.gmra.mrb[0].mxu0 %v5723
        %v5807 = vpop.f32.mrb[0].mxu0
        %v5808 = vadd.f32 0.0, %v5807
        %v5809 = vpop.f32.mrb[0].mxu0
        %v5810 = vpop.f32.mrb[0].mxu0
        %v5811 = vpop.f32.mrb[0].mxu0
        %5812 = vdwg.mxu0
        %v5813 = vadd.f32 %v5704, %v5808
        %s5814 = scalar_lea.vmem %s6, 192
        %v5815 = vld [vmem:[%s5814] sm:$0xf]
        %v5816 = vld [vmem:[%s5814 + $0x4] sm:$0xf]
        %v5817 = vld [vmem:[%s5814 + $0x8] sm:$0xf]
        %v5818 = vld [vmem:[%s5814 + $0xc] sm:$0xf]
        %v5819 = vld [vmem:[%s5814 + $0x10] sm:$0xf]
        %v5820 = vld [vmem:[%s5814 + $0x14] sm:$0xf]
        %v5821 = vld [vmem:[%s5814 + $0x18] sm:$0xf]
        %v5822 = vld [vmem:[%s5814 + $0x1c] sm:$0xf]
        %v5823 = vld [vmem:[%s5814 + $0x20] sm:$0xf]
        %v5824 = vld [vmem:[%s5814 + $0x24] sm:$0xf]
        %v5825 = vld [vmem:[%s5814 + $0x28] sm:$0xf]
        %v5826 = vld [vmem:[%s5814 + $0x2c] sm:$0xf]
        %v5827 = vld [vmem:[%s5814 + $0x30] sm:$0xf]
        %v5828 = vld [vmem:[%s5814 + $0x34] sm:$0xf]
        %v5829 = vld [vmem:[%s5814 + $0x38] sm:$0xf]
        %v5830 = vld [vmem:[%s5814 + $0x3c] sm:$0xf]
        %v5831 = vrot.slane %v5613, 1
        %v5849 = vunpack.c.l.b16 %v5815
        %v5850 = vunpack.c.l.b16 %v5816
        %v5851 = vunpack.c.l.b16 %v5817
        %v5852 = vunpack.c.l.b16 %v5818
        %v5853 = vunpack.c.l.b16 %v5819
        %v5854 = vunpack.c.l.b16 %v5820
        %v5855 = vunpack.c.l.b16 %v5821
        %v5856 = vunpack.c.l.b16 %v5822
        %v5857 = vunpack.c.l.b16 %v5823
        %v5858 = vunpack.c.l.b16 %v5824
        %v5859 = vunpack.c.l.b16 %v5825
        %v5860 = vunpack.c.l.b16 %v5826
        %v5861 = vunpack.c.l.b16 %v5827
        %v5862 = vunpack.c.l.b16 %v5828
        %v5863 = vunpack.c.l.b16 %v5829
        %v5864 = vunpack.c.l.b16 %v5830
        %v5865 = vpack.c.b16 %v5850, %v5849
        %v5866 = vpack.c.b16 %v5852, %v5851
        %v5867 = vpack.c.b16 %v5854, %v5853
        %v5868 = vpack.c.b16 %v5856, %v5855
        %v5869 = vpack.c.b16 %v5858, %v5857
        %v5870 = vpack.c.b16 %v5860, %v5859
        %v5871 = vpack.c.b16 %v5862, %v5861
        %v5872 = vpack.c.b16 %v5864, %v5863
        %5881 = vmatprep.subr.bf16.mxu0 0
        %5882 = vmatpush1.bf16.msra.mxu0 %v5865
        %5883 = vmatprep.subr.bf16.mxu0 0
        %5884 = vmatpush1.bf16.msra.mxu0 %v5866
        %5885 = vmatprep.subr.bf16.mxu0 0
        %5886 = vmatpush1.bf16.msra.mxu0 %v5867
        %5887 = vmatprep.subr.bf16.mxu0 0
        %5888 = vmatpush1.bf16.msra.mxu0 %v5868
        %5889 = vmatprep.subr.bf16.mxu0 0
        %5890 = vmatpush1.bf16.msra.mxu0 %v5869
        %5891 = vmatprep.subr.bf16.mxu0 0
        %5892 = vmatpush1.bf16.msra.mxu0 %v5870
        %5893 = vmatprep.subr.bf16.mxu0 0
        %5894 = vmatpush1.bf16.msra.mxu0 %v5871
        %5895 = vmatprep.subr.bf16.mxu0 0
        %5896 = vmatpush1.bf16.msra.mxu0 %v5872
        %5897 = vmatprep.subr.bf16.mxu0 0
        %5898 = vmatpush1.bf16.msra.mxu0 0
        %5899 = vmatprep.subr.bf16.mxu0 0
        %5900 = vmatpush1.bf16.msra.mxu0 0
        %5901 = vmatprep.subr.bf16.mxu0 0
        %5902 = vmatpush1.bf16.msra.mxu0 0
        %5903 = vmatprep.subr.bf16.mxu0 0
        %5904 = vmatpush1.bf16.msra.mxu0 0
        %5905 = vmatprep.subr.bf16.mxu0 0
        %5906 = vmatpush1.bf16.msra.mxu0 0
        %5907 = vmatprep.subr.bf16.mxu0 0
        %5908 = vmatpush1.bf16.msra.mxu0 0
        %5909 = vmatprep.subr.bf16.mxu0 0
        %5910 = vmatpush1.bf16.msra.mxu0 0
        %5911 = vmatprep.subr.bf16.mxu0 0
        %5912 = vmatpush1.bf16.msra.mxu0 0
        %5913 = vmatprep.mubr.bf16.mxu0 0
        %5914 = vmatmul.mubr.bf16.gmra.mrb[0].mxu0 %v5831
        %v5915 = vpop.f32.mrb[0].mxu0
        %v5916 = vadd.f32 0.0, %v5915
        %v5917 = vpop.f32.mrb[0].mxu0
        %v5918 = vpop.f32.mrb[0].mxu0
        %v5919 = vpop.f32.mrb[0].mxu0
        %5920 = vdwg.mxu0
        %v5921 = vadd.f32 %v5813, %v5916
        %s5922 = scalar_lea.vmem %s6, 256
        %v5923 = vld [vmem:[%s5922] sm:$0xf]
        %v5924 = vld [vmem:[%s5922 + $0x4] sm:$0xf]
        %v5925 = vld [vmem:[%s5922 + $0x8] sm:$0xf]
        %v5926 = vld [vmem:[%s5922 + $0xc] sm:$0xf]
        %v5927 = vld [vmem:[%s5922 + $0x10] sm:$0xf]
        %v5928 = vld [vmem:[%s5922 + $0x14] sm:$0xf]
        %v5929 = vld [vmem:[%s5922 + $0x18] sm:$0xf]
        %v5930 = vld [vmem:[%s5922 + $0x1c] sm:$0xf]
        %v5931 = vld [vmem:[%s5922 + $0x20] sm:$0xf]
        %v5932 = vld [vmem:[%s5922 + $0x24] sm:$0xf]
        %v5933 = vld [vmem:[%s5922 + $0x28] sm:$0xf]
        %v5934 = vld [vmem:[%s5922 + $0x2c] sm:$0xf]
        %v5935 = vld [vmem:[%s5922 + $0x30] sm:$0xf]
        %v5936 = vld [vmem:[%s5922 + $0x34] sm:$0xf]
        %v5937 = vld [vmem:[%s5922 + $0x38] sm:$0xf]
        %v5938 = vld [vmem:[%s5922 + $0x3c] sm:$0xf]
        %v5939 = vrot.slane %v5488, 2
        %v5957 = vunpack.c.l.b16 %v5923
        %v5958 = vunpack.c.l.b16 %v5924
        %v5959 = vunpack.c.l.b16 %v5925
        %v5960 = vunpack.c.l.b16 %v5926
        %v5961 = vunpack.c.l.b16 %v5927
        %v5962 = vunpack.c.l.b16 %v5928
        %v5963 = vunpack.c.l.b16 %v5929
        %v5964 = vunpack.c.l.b16 %v5930
        %v5965 = vunpack.c.l.b16 %v5931
        %v5966 = vunpack.c.l.b16 %v5932
        %v5967 = vunpack.c.l.b16 %v5933
        %v5968 = vunpack.c.l.b16 %v5934
        %v5969 = vunpack.c.l.b16 %v5935
        %v5970 = vunpack.c.l.b16 %v5936
        %v5971 = vunpack.c.l.b16 %v5937
        %v5972 = vunpack.c.l.b16 %v5938
        %v5973 = vpack.c.b16 %v5958, %v5957
        %v5974 = vpack.c.b16 %v5960, %v5959
        %v5975 = vpack.c.b16 %v5962, %v5961
        %v5976 = vpack.c.b16 %v5964, %v5963
        %v5977 = vpack.c.b16 %v5966, %v5965
        %v5978 = vpack.c.b16 %v5968, %v5967
        %v5979 = vpack.c.b16 %v5970, %v5969
        %v5980 = vpack.c.b16 %v5972, %v5971
        %5989 = vmatprep.subr.bf16.mxu0 0
        %5990 = vmatpush1.bf16.msra.mxu0 %v5973
        %5991 = vmatprep.subr.bf16.mxu0 0
        %5992 = vmatpush1.bf16.msra.mxu0 %v5974
        %5993 = vmatprep.subr.bf16.mxu0 0
        %5994 = vmatpush1.bf16.msra.mxu0 %v5975
        %5995 = vmatprep.subr.bf16.mxu0 0
        %5996 = vmatpush1.bf16.msra.mxu0 %v5976
        %5997 = vmatprep.subr.bf16.mxu0 0
        %5998 = vmatpush1.bf16.msra.mxu0 %v5977
        %5999 = vmatprep.subr.bf16.mxu0 0
        %6000 = vmatpush1.bf16.msra.mxu0 %v5978
        %6001 = vmatprep.subr.bf16.mxu0 0
        %6002 = vmatpush1.bf16.msra.mxu0 %v5979
        %6003 = vmatprep.subr.bf16.mxu0 0
        %6004 = vmatpush1.bf16.msra.mxu0 %v5980
        %6005 = vmatprep.subr.bf16.mxu0 0
        %6006 = vmatpush1.bf16.msra.mxu0 0
        %6007 = vmatprep.subr.bf16.mxu0 0
        %6008 = vmatpush1.bf16.msra.mxu0 0
        %6009 = vmatprep.subr.bf16.mxu0 0
        %6010 = vmatpush1.bf16.msra.mxu0 0
        %6011 = vmatprep.subr.bf16.mxu0 0
        %6012 = vmatpush1.bf16.msra.mxu0 0
        %6013 = vmatprep.subr.bf16.mxu0 0
        %6014 = vmatpush1.bf16.msra.mxu0 0
        %6015 = vmatprep.subr.bf16.mxu0 0
        %6016 = vmatpush1.bf16.msra.mxu0 0
        %6017 = vmatprep.subr.bf16.mxu0 0
        %6018 = vmatpush1.bf16.msra.mxu0 0
        %6019 = vmatprep.subr.bf16.mxu0 0
        %6020 = vmatpush1.bf16.msra.mxu0 0
        %6021 = vmatprep.mubr.bf16.mxu0 0
        %6022 = vmatmul.mubr.bf16.gmra.mrb[0].mxu0 %v5939
        %v6023 = vpop.f32.mrb[0].mxu0
        %v6024 = vadd.f32 0.0, %v6023
        %v6025 = vpop.f32.mrb[0].mxu0
        %v6026 = vpop.f32.mrb[0].mxu0
        %v6027 = vpop.f32.mrb[0].mxu0
        %6028 = vdwg.mxu0
        %v6029 = vadd.f32 %v5921, %v6024
        %s6030 = scalar_lea.vmem %s6, 320
        %v6031 = vld [vmem:[%s6030] sm:$0xf]
        %v6032 = vld [vmem:[%s6030 + $0x4] sm:$0xf]
        %v6033 = vld [vmem:[%s6030 + $0x8] sm:$0xf]
        %v6034 = vld [vmem:[%s6030 + $0xc] sm:$0xf]
        %v6035 = vld [vmem:[%s6030 + $0x10] sm:$0xf]
        %v6036 = vld [vmem:[%s6030 + $0x14] sm:$0xf]
        %v6037 = vld [vmem:[%s6030 + $0x18] sm:$0xf]
        %v6038 = vld [vmem:[%s6030 + $0x1c] sm:$0xf]
        %v6039 = vld [vmem:[%s6030 + $0x20] sm:$0xf]
        %v6040 = vld [vmem:[%s6030 + $0x24] sm:$0xf]
        %v6041 = vld [vmem:[%s6030 + $0x28] sm:$0xf]
        %v6042 = vld [vmem:[%s6030 + $0x2c] sm:$0xf]
        %v6043 = vld [vmem:[%s6030 + $0x30] sm:$0xf]
        %v6044 = vld [vmem:[%s6030 + $0x34] sm:$0xf]
        %v6045 = vld [vmem:[%s6030 + $0x38] sm:$0xf]
        %v6046 = vld [vmem:[%s6030 + $0x3c] sm:$0xf]
        %v6047 = vrot.slane %v5613, 2
        %v6065 = vunpack.c.l.b16 %v6031
        %v6066 = vunpack.c.l.b16 %v6032
        %v6067 = vunpack.c.l.b16 %v6033
        %v6068 = vunpack.c.l.b16 %v6034
        %v6069 = vunpack.c.l.b16 %v6035
        %v6070 = vunpack.c.l.b16 %v6036
        %v6071 = vunpack.c.l.b16 %v6037
        %v6072 = vunpack.c.l.b16 %v6038
        %v6073 = vunpack.c.l.b16 %v6039
        %v6074 = vunpack.c.l.b16 %v6040
        %v6075 = vunpack.c.l.b16 %v6041
        %v6076 = vunpack.c.l.b16 %v6042
        %v6077 = vunpack.c.l.b16 %v6043
        %v6078 = vunpack.c.l.b16 %v6044
        %v6079 = vunpack.c.l.b16 %v6045
        %v6080 = vunpack.c.l.b16 %v6046
        %v6081 = vpack.c.b16 %v6066, %v6065
        %v6082 = vpack.c.b16 %v6068, %v6067
        %v6083 = vpack.c.b16 %v6070, %v6069
        %v6084 = vpack.c.b16 %v6072, %v6071
        %v6085 = vpack.c.b16 %v6074, %v6073
        %v6086 = vpack.c.b16 %v6076, %v6075
        %v6087 = vpack.c.b16 %v6078, %v6077
        %v6088 = vpack.c.b16 %v6080, %v6079
        %6097 = vmatprep.subr.bf16.mxu0 0
        %6098 = vmatpush1.bf16.msra.mxu0 %v6081
        %6099 = vmatprep.subr.bf16.mxu0 0
        %6100 = vmatpush1.bf16.msra.mxu0 %v6082
        %6101 = vmatprep.subr.bf16.mxu0 0
        %6102 = vmatpush1.bf16.msra.mxu0 %v6083
        %6103 = vmatprep.subr.bf16.mxu0 0
        %6104 = vmatpush1.bf16.msra.mxu0 %v6084
        %6105 = vmatprep.subr.bf16.mxu0 0
        %6106 = vmatpush1.bf16.msra.mxu0 %v6085
        %6107 = vmatprep.subr.bf16.mxu0 0
        %6108 = vmatpush1.bf16.msra.mxu0 %v6086
        %6109 = vmatprep.subr.bf16.mxu0 0
        %6110 = vmatpush1.bf16.msra.mxu0 %v6087
        %6111 = vmatprep.subr.bf16.mxu0 0
        %6112 = vmatpush1.bf16.msra.mxu0 %v6088
        %6113 = vmatprep.subr.bf16.mxu0 0
        %6114 = vmatpush1.bf16.msra.mxu0 0
        %6115 = vmatprep.subr.bf16.mxu0 0
        %6116 = vmatpush1.bf16.msra.mxu0 0
        %6117 = vmatprep.subr.bf16.mxu0 0
        %6118 = vmatpush1.bf16.msra.mxu0 0
        %6119 = vmatprep.subr.bf16.mxu0 0
        %6120 = vmatpush1.bf16.msra.mxu0 0
        %6121 = vmatprep.subr.bf16.mxu0 0
        %6122 = vmatpush1.bf16.msra.mxu0 0
        %6123 = vmatprep.subr.bf16.mxu0 0
        %6124 = vmatpush1.bf16.msra.mxu0 0
        %6125 = vmatprep.subr.bf16.mxu0 0
        %6126 = vmatpush1.bf16.msra.mxu0 0
        %6127 = vmatprep.subr.bf16.mxu0 0
        %6128 = vmatpush1.bf16.msra.mxu0 0
        %6129 = vmatprep.mubr.bf16.mxu0 0
        %6130 = vmatmul.mubr.bf16.gmra.mrb[0].mxu0 %v6047
        %v6131 = vpop.f32.mrb[0].mxu0
        %v6132 = vadd.f32 0.0, %v6131
        %v6133 = vpop.f32.mrb[0].mxu0
        %v6134 = vpop.f32.mrb[0].mxu0
        %v6135 = vpop.f32.mrb[0].mxu0
        %6136 = vdwg.mxu0
        %v6137 = vadd.f32 %v6029, %v6132
        %s6138 = scalar_lea.vmem %s6, 384
        %v6139 = vld [vmem:[%s6138] sm:$0xf]
        %v6140 = vld [vmem:[%s6138 + $0x4] sm:$0xf]
        %v6141 = vld [vmem:[%s6138 + $0x8] sm:$0xf]
        %v6142 = vld [vmem:[%s6138 + $0xc] sm:$0xf]
        %v6143 = vld [vmem:[%s6138 + $0x10] sm:$0xf]
        %v6144 = vld [vmem:[%s6138 + $0x14] sm:$0xf]
        %v6145 = vld [vmem:[%s6138 + $0x18] sm:$0xf]
        %v6146 = vld [vmem:[%s6138 + $0x1c] sm:$0xf]
        %v6147 = vld [vmem:[%s6138 + $0x20] sm:$0xf]
        %v6148 = vld [vmem:[%s6138 + $0x24] sm:$0xf]
        %v6149 = vld [vmem:[%s6138 + $0x28] sm:$0xf]
        %v6150 = vld [vmem:[%s6138 + $0x2c] sm:$0xf]
        %v6151 = vld [vmem:[%s6138 + $0x30] sm:$0xf]
        %v6152 = vld [vmem:[%s6138 + $0x34] sm:$0xf]
        %v6153 = vld [vmem:[%s6138 + $0x38] sm:$0xf]
        %v6154 = vld [vmem:[%s6138 + $0x3c] sm:$0xf]
        %v6155 = vrot.slane %v5488, 3
        %v6173 = vunpack.c.l.b16 %v6139
        %v6174 = vunpack.c.l.b16 %v6140
        %v6175 = vunpack.c.l.b16 %v6141
        %v6176 = vunpack.c.l.b16 %v6142
        %v6177 = vunpack.c.l.b16 %v6143
        %v6178 = vunpack.c.l.b16 %v6144
        %v6179 = vunpack.c.l.b16 %v6145
        %v6180 = vunpack.c.l.b16 %v6146
        %v6181 = vunpack.c.l.b16 %v6147
        %v6182 = vunpack.c.l.b16 %v6148
        %v6183 = vunpack.c.l.b16 %v6149
        %v6184 = vunpack.c.l.b16 %v6150
        %v6185 = vunpack.c.l.b16 %v6151
        %v6186 = vunpack.c.l.b16 %v6152
        %v6187 = vunpack.c.l.b16 %v6153
        %v6188 = vunpack.c.l.b16 %v6154
        %v6189 = vpack.c.b16 %v6174, %v6173
        %v6190 = vpack.c.b16 %v6176, %v6175
        %v6191 = vpack.c.b16 %v6178, %v6177
        %v6192 = vpack.c.b16 %v6180, %v6179
        %v6193 = vpack.c.b16 %v6182, %v6181
        %v6194 = vpack.c.b16 %v6184, %v6183
        %v6195 = vpack.c.b16 %v6186, %v6185
        %v6196 = vpack.c.b16 %v6188, %v6187
        %6205 = vmatprep.subr.bf16.mxu0 0
        %6206 = vmatpush1.bf16.msra.mxu0 %v6189
        %6207 = vmatprep.subr.bf16.mxu0 0
        %6208 = vmatpush1.bf16.msra.mxu0 %v6190
        %6209 = vmatprep.subr.bf16.mxu0 0
        %6210 = vmatpush1.bf16.msra.mxu0 %v6191
        %6211 = vmatprep.subr.bf16.mxu0 0
        %6212 = vmatpush1.bf16.msra.mxu0 %v6192
        %6213 = vmatprep.subr.bf16.mxu0 0
        %6214 = vmatpush1.bf16.msra.mxu0 %v6193
        %6215 = vmatprep.subr.bf16.mxu0 0
        %6216 = vmatpush1.bf16.msra.mxu0 %v6194
        %6217 = vmatprep.subr.bf16.mxu0 0
        %6218 = vmatpush1.bf16.msra.mxu0 %v6195
        %6219 = vmatprep.subr.bf16.mxu0 0
        %6220 = vmatpush1.bf16.msra.mxu0 %v6196
        %6221 = vmatprep.subr.bf16.mxu0 0
        %6222 = vmatpush1.bf16.msra.mxu0 0
        %6223 = vmatprep.subr.bf16.mxu0 0
        %6224 = vmatpush1.bf16.msra.mxu0 0
        %6225 = vmatprep.subr.bf16.mxu0 0
        %6226 = vmatpush1.bf16.msra.mxu0 0
        %6227 = vmatprep.subr.bf16.mxu0 0
        %6228 = vmatpush1.bf16.msra.mxu0 0
        %6229 = vmatprep.subr.bf16.mxu0 0
        %6230 = vmatpush1.bf16.msra.mxu0 0
        %6231 = vmatprep.subr.bf16.mxu0 0
        %6232 = vmatpush1.bf16.msra.mxu0 0
        %6233 = vmatprep.subr.bf16.mxu0 0
        %6234 = vmatpush1.bf16.msra.mxu0 0
        %6235 = vmatprep.subr.bf16.mxu0 0
        %6236 = vmatpush1.bf16.msra.mxu0 0
        %6237 = vmatprep.mubr.bf16.mxu0 0
        %6238 = vmatmul.mubr.bf16.gmra.mrb[0].mxu0 %v6155
        %v6239 = vpop.f32.mrb[0].mxu0
        %v6240 = vadd.f32 0.0, %v6239
        %v6241 = vpop.f32.mrb[0].mxu0
        %v6242 = vpop.f32.mrb[0].mxu0
        %v6243 = vpop.f32.mrb[0].mxu0
        %6244 = vdwg.mxu0
        %v6245 = vadd.f32 %v6137, %v6240
        %s6246 = scalar_lea.vmem %s6, 448
        %v6247 = vld [vmem:[%s6246] sm:$0xf]
        %v6248 = vld [vmem:[%s6246 + $0x4] sm:$0xf]
        %v6249 = vld [vmem:[%s6246 + $0x8] sm:$0xf]
        %v6250 = vld [vmem:[%s6246 + $0xc] sm:$0xf]
        %v6251 = vld [vmem:[%s6246 + $0x10] sm:$0xf]
        %v6252 = vld [vmem:[%s6246 + $0x14] sm:$0xf]
        %v6253 = vld [vmem:[%s6246 + $0x18] sm:$0xf]
        %v6254 = vld [vmem:[%s6246 + $0x1c] sm:$0xf]
        %v6255 = vld [vmem:[%s6246 + $0x20] sm:$0xf]
        %v6256 = vld [vmem:[%s6246 + $0x24] sm:$0xf]
        %v6257 = vld [vmem:[%s6246 + $0x28] sm:$0xf]
        %v6258 = vld [vmem:[%s6246 + $0x2c] sm:$0xf]
        %v6259 = vld [vmem:[%s6246 + $0x30] sm:$0xf]
        %v6260 = vld [vmem:[%s6246 + $0x34] sm:$0xf]
        %v6261 = vld [vmem:[%s6246 + $0x38] sm:$0xf]
        %v6262 = vld [vmem:[%s6246 + $0x3c] sm:$0xf]
        %v6263 = vrot.slane %v5613, 3
        %v6281 = vunpack.c.l.b16 %v6247
        %v6282 = vunpack.c.l.b16 %v6248
        %v6283 = vunpack.c.l.b16 %v6249
        %v6284 = vunpack.c.l.b16 %v6250
        %v6285 = vunpack.c.l.b16 %v6251
        %v6286 = vunpack.c.l.b16 %v6252
        %v6287 = vunpack.c.l.b16 %v6253
        %v6288 = vunpack.c.l.b16 %v6254
        %v6289 = vunpack.c.l.b16 %v6255
        %v6290 = vunpack.c.l.b16 %v6256
        %v6291 = vunpack.c.l.b16 %v6257
        %v6292 = vunpack.c.l.b16 %v6258
        %v6293 = vunpack.c.l.b16 %v6259
        %v6294 = vunpack.c.l.b16 %v6260
        %v6295 = vunpack.c.l.b16 %v6261
        %v6296 = vunpack.c.l.b16 %v6262
        %v6297 = vpack.c.b16 %v6282, %v6281
        %v6298 = vpack.c.b16 %v6284, %v6283
        %v6299 = vpack.c.b16 %v6286, %v6285
        %v6300 = vpack.c.b16 %v6288, %v6287
        %v6301 = vpack.c.b16 %v6290, %v6289
        %v6302 = vpack.c.b16 %v6292, %v6291
        %v6303 = vpack.c.b16 %v6294, %v6293
        %v6304 = vpack.c.b16 %v6296, %v6295
        %6313 = vmatprep.subr.bf16.mxu0 0
        %6314 = vmatpush1.bf16.msra.mxu0 %v6297
        %6315 = vmatprep.subr.bf16.mxu0 0
        %6316 = vmatpush1.bf16.msra.mxu0 %v6298
        %6317 = vmatprep.subr.bf16.mxu0 0
        %6318 = vmatpush1.bf16.msra.mxu0 %v6299
        %6319 = vmatprep.subr.bf16.mxu0 0
        %6320 = vmatpush1.bf16.msra.mxu0 %v6300
        %6321 = vmatprep.subr.bf16.mxu0 0
        %6322 = vmatpush1.bf16.msra.mxu0 %v6301
        %6323 = vmatprep.subr.bf16.mxu0 0
        %6324 = vmatpush1.bf16.msra.mxu0 %v6302
        %6325 = vmatprep.subr.bf16.mxu0 0
        %6326 = vmatpush1.bf16.msra.mxu0 %v6303
        %6327 = vmatprep.subr.bf16.mxu0 0
        %6328 = vmatpush1.bf16.msra.mxu0 %v6304
        %6329 = vmatprep.subr.bf16.mxu0 0
        %6330 = vmatpush1.bf16.msra.mxu0 0
        %6331 = vmatprep.subr.bf16.mxu0 0
        %6332 = vmatpush1.bf16.msra.mxu0 0
        %6333 = vmatprep.subr.bf16.mxu0 0
        %6334 = vmatpush1.bf16.msra.mxu0 0
        %6335 = vmatprep.subr.bf16.mxu0 0
        %6336 = vmatpush1.bf16.msra.mxu0 0
        %6337 = vmatprep.subr.bf16.mxu0 0
        %6338 = vmatpush1.bf16.msra.mxu0 0
        %6339 = vmatprep.subr.bf16.mxu0 0
        %6340 = vmatpush1.bf16.msra.mxu0 0
        %6341 = vmatprep.subr.bf16.mxu0 0
        %6342 = vmatpush1.bf16.msra.mxu0 0
        %6343 = vmatprep.subr.bf16.mxu0 0
        %6344 = vmatpush1.bf16.msra.mxu0 0
        %6345 = vmatprep.mubr.bf16.mxu0 0
        %6346 = vmatmul.mubr.bf16.gmra.mrb[0].mxu0 %v6263
        %v6347 = vpop.f32.mrb[0].mxu0
        %v6348 = vadd.f32 0.0, %v6347
        %v6349 = vpop.f32.mrb[0].mxu0
        %v6350 = vpop.f32.mrb[0].mxu0
        %v6351 = vpop.f32.mrb[0].mxu0
        %6352 = vdwg.mxu0
        %v6353 = vadd.f32 %v6245, %v6348
        %s6354 = scalar_lea.vmem %s6, 512
        %v6355 = vld [vmem:[%s6354] sm:$0xf]
        %v6356 = vld [vmem:[%s6354 + $0x4] sm:$0xf]
        %v6357 = vld [vmem:[%s6354 + $0x8] sm:$0xf]
        %v6358 = vld [vmem:[%s6354 + $0xc] sm:$0xf]
        %v6359 = vld [vmem:[%s6354 + $0x10] sm:$0xf]
        %v6360 = vld [vmem:[%s6354 + $0x14] sm:$0xf]
        %v6361 = vld [vmem:[%s6354 + $0x18] sm:$0xf]
        %v6362 = vld [vmem:[%s6354 + $0x1c] sm:$0xf]
        %v6363 = vld [vmem:[%s6354 + $0x20] sm:$0xf]
        %v6364 = vld [vmem:[%s6354 + $0x24] sm:$0xf]
        %v6365 = vld [vmem:[%s6354 + $0x28] sm:$0xf]
        %v6366 = vld [vmem:[%s6354 + $0x2c] sm:$0xf]
        %v6367 = vld [vmem:[%s6354 + $0x30] sm:$0xf]
        %v6368 = vld [vmem:[%s6354 + $0x34] sm:$0xf]
        %v6369 = vld [vmem:[%s6354 + $0x38] sm:$0xf]
        %v6370 = vld [vmem:[%s6354 + $0x3c] sm:$0xf]
        %v6371 = vrot.slane %v5488, 4
        %v6389 = vunpack.c.l.b16 %v6355
        %v6390 = vunpack.c.l.b16 %v6356
        %v6391 = vunpack.c.l.b16 %v6357
        %v6392 = vunpack.c.l.b16 %v6358
        %v6393 = vunpack.c.l.b16 %v6359
        %v6394 = vunpack.c.l.b16 %v6360
        %v6395 = vunpack.c.l.b16 %v6361
        %v6396 = vunpack.c.l.b16 %v6362
        %v6397 = vunpack.c.l.b16 %v6363
        %v6398 = vunpack.c.l.b16 %v6364
        %v6399 = vunpack.c.l.b16 %v6365
        %v6400 = vunpack.c.l.b16 %v6366
        %v6401 = vunpack.c.l.b16 %v6367
        %v6402 = vunpack.c.l.b16 %v6368
        %v6403 = vunpack.c.l.b16 %v6369
        %v6404 = vunpack.c.l.b16 %v6370
        %v6405 = vpack.c.b16 %v6390, %v6389
        %v6406 = vpack.c.b16 %v6392, %v6391
        %v6407 = vpack.c.b16 %v6394, %v6393
        %v6408 = vpack.c.b16 %v6396, %v6395
        %v6409 = vpack.c.b16 %v6398, %v6397
        %v6410 = vpack.c.b16 %v6400, %v6399
        %v6411 = vpack.c.b16 %v6402, %v6401
        %v6412 = vpack.c.b16 %v6404, %v6403
        %6421 = vmatprep.subr.bf16.mxu0 0
        %6422 = vmatpush1.bf16.msra.mxu0 %v6405
        %6423 = vmatprep.subr.bf16.mxu0 0
        %6424 = vmatpush1.bf16.msra.mxu0 %v6406
        %6425 = vmatprep.subr.bf16.mxu0 0
        %6426 = vmatpush1.bf16.msra.mxu0 %v6407
        %6427 = vmatprep.subr.bf16.mxu0 0
        %6428 = vmatpush1.bf16.msra.mxu0 %v6408
        %6429 = vmatprep.subr.bf16.mxu0 0
        %6430 = vmatpush1.bf16.msra.mxu0 %v6409
        %6431 = vmatprep.subr.bf16.mxu0 0
        %6432 = vmatpush1.bf16.msra.mxu0 %v6410
        %6433 = vmatprep.subr.bf16.mxu0 0
        %6434 = vmatpush1.bf16.msra.mxu0 %v6411
        %6435 = vmatprep.subr.bf16.mxu0 0
        %6436 = vmatpush1.bf16.msra.mxu0 %v6412
        %6437 = vmatprep.subr.bf16.mxu0 0
        %6438 = vmatpush1.bf16.msra.mxu0 0
        %6439 = vmatprep.subr.bf16.mxu0 0
        %6440 = vmatpush1.bf16.msra.mxu0 0
        %6441 = vmatprep.subr.bf16.mxu0 0
        %6442 = vmatpush1.bf16.msra.mxu0 0
        %6443 = vmatprep.subr.bf16.mxu0 0
        %6444 = vmatpush1.bf16.msra.mxu0 0
        %6445 = vmatprep.subr.bf16.mxu0 0
        %6446 = vmatpush1.bf16.msra.mxu0 0
        %6447 = vmatprep.subr.bf16.mxu0 0
        %6448 = vmatpush1.bf16.msra.mxu0 0
        %6449 = vmatprep.subr.bf16.mxu0 0
        %6450 = vmatpush1.bf16.msra.mxu0 0
        %6451 = vmatprep.subr.bf16.mxu0 0
        %6452 = vmatpush1.bf16.msra.mxu0 0
        %6453 = vmatprep.mubr.bf16.mxu0 0
        %6454 = vmatmul.mubr.bf16.gmra.mrb[0].mxu0 %v6371
        %v6455 = vpop.f32.mrb[0].mxu0
        %v6456 = vadd.f32 0.0, %v6455
        %v6457 = vpop.f32.mrb[0].mxu0
        %v6458 = vpop.f32.mrb[0].mxu0
        %v6459 = vpop.f32.mrb[0].mxu0
        %6460 = vdwg.mxu0
        %v6461 = vadd.f32 %v6353, %v6456
        %s6462 = scalar_lea.vmem %s6, 576
        %v6463 = vld [vmem:[%s6462] sm:$0xf]
        %v6464 = vld [vmem:[%s6462 + $0x4] sm:$0xf]
        %v6465 = vld [vmem:[%s6462 + $0x8] sm:$0xf]
        %v6466 = vld [vmem:[%s6462 + $0xc] sm:$0xf]
        %v6467 = vld [vmem:[%s6462 + $0x10] sm:$0xf]
        %v6468 = vld [vmem:[%s6462 + $0x14] sm:$0xf]
        %v6469 = vld [vmem:[%s6462 + $0x18] sm:$0xf]
        %v6470 = vld [vmem:[%s6462 + $0x1c] sm:$0xf]
        %v6471 = vld [vmem:[%s6462 + $0x20] sm:$0xf]
        %v6472 = vld [vmem:[%s6462 + $0x24] sm:$0xf]
        %v6473 = vld [vmem:[%s6462 + $0x28] sm:$0xf]
        %v6474 = vld [vmem:[%s6462 + $0x2c] sm:$0xf]
        %v6475 = vld [vmem:[%s6462 + $0x30] sm:$0xf]
        %v6476 = vld [vmem:[%s6462 + $0x34] sm:$0xf]
        %v6477 = vld [vmem:[%s6462 + $0x38] sm:$0xf]
        %v6478 = vld [vmem:[%s6462 + $0x3c] sm:$0xf]
        %v6479 = vrot.slane %v5613, 4
        %v6497 = vunpack.c.l.b16 %v6463
        %v6498 = vunpack.c.l.b16 %v6464
        %v6499 = vunpack.c.l.b16 %v6465
        %v6500 = vunpack.c.l.b16 %v6466
        %v6501 = vunpack.c.l.b16 %v6467
        %v6502 = vunpack.c.l.b16 %v6468
        %v6503 = vunpack.c.l.b16 %v6469
        %v6504 = vunpack.c.l.b16 %v6470
        %v6505 = vunpack.c.l.b16 %v6471
        %v6506 = vunpack.c.l.b16 %v6472
        %v6507 = vunpack.c.l.b16 %v6473
        %v6508 = vunpack.c.l.b16 %v6474
        %v6509 = vunpack.c.l.b16 %v6475
        %v6510 = vunpack.c.l.b16 %v6476
        %v6511 = vunpack.c.l.b16 %v6477
        %v6512 = vunpack.c.l.b16 %v6478
        %v6513 = vpack.c.b16 %v6498, %v6497
        %v6514 = vpack.c.b16 %v6500, %v6499
        %v6515 = vpack.c.b16 %v6502, %v6501
        %v6516 = vpack.c.b16 %v6504, %v6503
        %v6517 = vpack.c.b16 %v6506, %v6505
        %v6518 = vpack.c.b16 %v6508, %v6507
        %v6519 = vpack.c.b16 %v6510, %v6509
        %v6520 = vpack.c.b16 %v6512, %v6511
        %6529 = vmatprep.subr.bf16.mxu0 0
        %6530 = vmatpush1.bf16.msra.mxu0 %v6513
        %6531 = vmatprep.subr.bf16.mxu0 0
        %6532 = vmatpush1.bf16.msra.mxu0 %v6514
        %6533 = vmatprep.subr.bf16.mxu0 0
        %6534 = vmatpush1.bf16.msra.mxu0 %v6515
        %6535 = vmatprep.subr.bf16.mxu0 0
        %6536 = vmatpush1.bf16.msra.mxu0 %v6516
        %6537 = vmatprep.subr.bf16.mxu0 0
        %6538 = vmatpush1.bf16.msra.mxu0 %v6517
        %6539 = vmatprep.subr.bf16.mxu0 0
        %6540 = vmatpush1.bf16.msra.mxu0 %v6518
        %6541 = vmatprep.subr.bf16.mxu0 0
        %6542 = vmatpush1.bf16.msra.mxu0 %v6519
        %6543 = vmatprep.subr.bf16.mxu0 0
        %6544 = vmatpush1.bf16.msra.mxu0 %v6520
        %6545 = vmatprep.subr.bf16.mxu0 0
        %6546 = vmatpush1.bf16.msra.mxu0 0
        %6547 = vmatprep.subr.bf16.mxu0 0
        %6548 = vmatpush1.bf16.msra.mxu0 0
        %6549 = vmatprep.subr.bf16.mxu0 0
        %6550 = vmatpush1.bf16.msra.mxu0 0
        %6551 = vmatprep.subr.bf16.mxu0 0
        %6552 = vmatpush1.bf16.msra.mxu0 0
        %6553 = vmatprep.subr.bf16.mxu0 0
        %6554 = vmatpush1.bf16.msra.mxu0 0
        %6555 = vmatprep.subr.bf16.mxu0 0
        %6556 = vmatpush1.bf16.msra.mxu0 0
        %6557 = vmatprep.subr.bf16.mxu0 0
        %6558 = vmatpush1.bf16.msra.mxu0 0
        %6559 = vmatprep.subr.bf16.mxu0 0
        %6560 = vmatpush1.bf16.msra.mxu0 0
        %6561 = vmatprep.mubr.bf16.mxu0 0
        %6562 = vmatmul.mubr.bf16.gmra.mrb[0].mxu0 %v6479
        %v6563 = vpop.f32.mrb[0].mxu0
        %v6564 = vadd.f32 0.0, %v6563
        %v6565 = vpop.f32.mrb[0].mxu0
        %v6566 = vpop.f32.mrb[0].mxu0
        %v6567 = vpop.f32.mrb[0].mxu0
        %6568 = vdwg.mxu0
        %v6569 = vadd.f32 %v6461, %v6564
        %s6570 = scalar_lea.vmem %s6, 640
        %v6571 = vld [vmem:[%s6570] sm:$0xf]
        %v6572 = vld [vmem:[%s6570 + $0x4] sm:$0xf]
        %v6573 = vld [vmem:[%s6570 + $0x8] sm:$0xf]
        %v6574 = vld [vmem:[%s6570 + $0xc] sm:$0xf]
        %v6575 = vld [vmem:[%s6570 + $0x10] sm:$0xf]
        %v6576 = vld [vmem:[%s6570 + $0x14] sm:$0xf]
        %v6577 = vld [vmem:[%s6570 + $0x18] sm:$0xf]
        %v6578 = vld [vmem:[%s6570 + $0x1c] sm:$0xf]
        %v6579 = vld [vmem:[%s6570 + $0x20] sm:$0xf]
        %v6580 = vld [vmem:[%s6570 + $0x24] sm:$0xf]
        %v6581 = vld [vmem:[%s6570 + $0x28] sm:$0xf]
        %v6582 = vld [vmem:[%s6570 + $0x2c] sm:$0xf]
        %v6583 = vld [vmem:[%s6570 + $0x30] sm:$0xf]
        %v6584 = vld [vmem:[%s6570 + $0x34] sm:$0xf]
        %v6585 = vld [vmem:[%s6570 + $0x38] sm:$0xf]
        %v6586 = vld [vmem:[%s6570 + $0x3c] sm:$0xf]
        %v6587 = vrot.slane %v5488, 5
        %v6605 = vunpack.c.l.b16 %v6571
        %v6606 = vunpack.c.l.b16 %v6572
        %v6607 = vunpack.c.l.b16 %v6573
        %v6608 = vunpack.c.l.b16 %v6574
        %v6609 = vunpack.c.l.b16 %v6575
        %v6610 = vunpack.c.l.b16 %v6576
        %v6611 = vunpack.c.l.b16 %v6577
        %v6612 = vunpack.c.l.b16 %v6578
        %v6613 = vunpack.c.l.b16 %v6579
        %v6614 = vunpack.c.l.b16 %v6580
        %v6615 = vunpack.c.l.b16 %v6581
        %v6616 = vunpack.c.l.b16 %v6582
        %v6617 = vunpack.c.l.b16 %v6583
        %v6618 = vunpack.c.l.b16 %v6584
        %v6619 = vunpack.c.l.b16 %v6585
        %v6620 = vunpack.c.l.b16 %v6586
        %v6621 = vpack.c.b16 %v6606, %v6605
        %v6622 = vpack.c.b16 %v6608, %v6607
        %v6623 = vpack.c.b16 %v6610, %v6609
        %v6624 = vpack.c.b16 %v6612, %v6611
        %v6625 = vpack.c.b16 %v6614, %v6613
        %v6626 = vpack.c.b16 %v6616, %v6615
        %v6627 = vpack.c.b16 %v6618, %v6617
        %v6628 = vpack.c.b16 %v6620, %v6619
        %6637 = vmatprep.subr.bf16.mxu0 0
        %6638 = vmatpush1.bf16.msra.mxu0 %v6621
        %6639 = vmatprep.subr.bf16.mxu0 0
        %6640 = vmatpush1.bf16.msra.mxu0 %v6622
        %6641 = vmatprep.subr.bf16.mxu0 0
        %6642 = vmatpush1.bf16.msra.mxu0 %v6623
        %6643 = vmatprep.subr.bf16.mxu0 0
        %6644 = vmatpush1.bf16.msra.mxu0 %v6624
        %6645 = vmatprep.subr.bf16.mxu0 0
        %6646 = vmatpush1.bf16.msra.mxu0 %v6625
        %6647 = vmatprep.subr.bf16.mxu0 0
        %6648 = vmatpush1.bf16.msra.mxu0 %v6626
        %6649 = vmatprep.subr.bf16.mxu0 0
        %6650 = vmatpush1.bf16.msra.mxu0 %v6627
        %6651 = vmatprep.subr.bf16.mxu0 0
        %6652 = vmatpush1.bf16.msra.mxu0 %v6628
        %6653 = vmatprep.subr.bf16.mxu0 0
        %6654 = vmatpush1.bf16.msra.mxu0 0
        %6655 = vmatprep.subr.bf16.mxu0 0
        %6656 = vmatpush1.bf16.msra.mxu0 0
        %6657 = vmatprep.subr.bf16.mxu0 0
        %6658 = vmatpush1.bf16.msra.mxu0 0
        %6659 = vmatprep.subr.bf16.mxu0 0
        %6660 = vmatpush1.bf16.msra.mxu0 0
        %6661 = vmatprep.subr.bf16.mxu0 0
        %6662 = vmatpush1.bf16.msra.mxu0 0
        %6663 = vmatprep.subr.bf16.mxu0 0
        %6664 = vmatpush1.bf16.msra.mxu0 0
        %6665 = vmatprep.subr.bf16.mxu0 0
        %6666 = vmatpush1.bf16.msra.mxu0 0
        %6667 = vmatprep.subr.bf16.mxu0 0
        %6668 = vmatpush1.bf16.msra.mxu0 0
        %6669 = vmatprep.mubr.bf16.mxu0 0
        %6670 = vmatmul.mubr.bf16.gmra.mrb[0].mxu0 %v6587
        %v6671 = vpop.f32.mrb[0].mxu0
        %v6672 = vadd.f32 0.0, %v6671
        %v6673 = vpop.f32.mrb[0].mxu0
        %v6674 = vpop.f32.mrb[0].mxu0
        %v6675 = vpop.f32.mrb[0].mxu0
        %6676 = vdwg.mxu0
        %v6677 = vadd.f32 %v6569, %v6672
        %s6678 = scalar_lea.vmem %s6, 704
        %v6679 = vld [vmem:[%s6678] sm:$0xf]
        %v6680 = vld [vmem:[%s6678 + $0x4] sm:$0xf]
        %v6681 = vld [vmem:[%s6678 + $0x8] sm:$0xf]
        %v6682 = vld [vmem:[%s6678 + $0xc] sm:$0xf]
        %v6683 = vld [vmem:[%s6678 + $0x10] sm:$0xf]
        %v6684 = vld [vmem:[%s6678 + $0x14] sm:$0xf]
        %v6685 = vld [vmem:[%s6678 + $0x18] sm:$0xf]
        %v6686 = vld [vmem:[%s6678 + $0x1c] sm:$0xf]
        %v6687 = vld [vmem:[%s6678 + $0x20] sm:$0xf]
        %v6688 = vld [vmem:[%s6678 + $0x24] sm:$0xf]
        %v6689 = vld [vmem:[%s6678 + $0x28] sm:$0xf]
        %v6690 = vld [vmem:[%s6678 + $0x2c] sm:$0xf]
        %v6691 = vld [vmem:[%s6678 + $0x30] sm:$0xf]
        %v6692 = vld [vmem:[%s6678 + $0x34] sm:$0xf]
        %v6693 = vld [vmem:[%s6678 + $0x38] sm:$0xf]
        %v6694 = vld [vmem:[%s6678 + $0x3c] sm:$0xf]
        %v6695 = vrot.slane %v5613, 5
        %v6713 = vunpack.c.l.b16 %v6679
        %v6714 = vunpack.c.l.b16 %v6680
        %v6715 = vunpack.c.l.b16 %v6681
        %v6716 = vunpack.c.l.b16 %v6682
        %v6717 = vunpack.c.l.b16 %v6683
        %v6718 = vunpack.c.l.b16 %v6684
        %v6719 = vunpack.c.l.b16 %v6685
        %v6720 = vunpack.c.l.b16 %v6686
        %v6721 = vunpack.c.l.b16 %v6687
        %v6722 = vunpack.c.l.b16 %v6688
        %v6723 = vunpack.c.l.b16 %v6689
        %v6724 = vunpack.c.l.b16 %v6690
        %v6725 = vunpack.c.l.b16 %v6691
        %v6726 = vunpack.c.l.b16 %v6692
        %v6727 = vunpack.c.l.b16 %v6693
        %v6728 = vunpack.c.l.b16 %v6694
        %v6729 = vpack.c.b16 %v6714, %v6713
        %v6730 = vpack.c.b16 %v6716, %v6715
        %v6731 = vpack.c.b16 %v6718, %v6717
        %v6732 = vpack.c.b16 %v6720, %v6719
        %v6733 = vpack.c.b16 %v6722, %v6721
        %v6734 = vpack.c.b16 %v6724, %v6723
        %v6735 = vpack.c.b16 %v6726, %v6725
        %v6736 = vpack.c.b16 %v6728, %v6727
        %6745 = vmatprep.subr.bf16.mxu0 0
        %6746 = vmatpush1.bf16.msra.mxu0 %v6729
        %6747 = vmatprep.subr.bf16.mxu0 0
        %6748 = vmatpush1.bf16.msra.mxu0 %v6730
        %6749 = vmatprep.subr.bf16.mxu0 0
        %6750 = vmatpush1.bf16.msra.mxu0 %v6731
        %6751 = vmatprep.subr.bf16.mxu0 0
        %6752 = vmatpush1.bf16.msra.mxu0 %v6732
        %6753 = vmatprep.subr.bf16.mxu0 0
        %6754 = vmatpush1.bf16.msra.mxu0 %v6733
        %6755 = vmatprep.subr.bf16.mxu0 0
        %6756 = vmatpush1.bf16.msra.mxu0 %v6734
        %6757 = vmatprep.subr.bf16.mxu0 0
        %6758 = vmatpush1.bf16.msra.mxu0 %v6735
        %6759 = vmatprep.subr.bf16.mxu0 0
        %6760 = vmatpush1.bf16.msra.mxu0 %v6736
        %6761 = vmatprep.subr.bf16.mxu0 0
        %6762 = vmatpush1.bf16.msra.mxu0 0
        %6763 = vmatprep.subr.bf16.mxu0 0
        %6764 = vmatpush1.bf16.msra.mxu0 0
        %6765 = vmatprep.subr.bf16.mxu0 0
        %6766 = vmatpush1.bf16.msra.mxu0 0
        %6767 = vmatprep.subr.bf16.mxu0 0
        %6768 = vmatpush1.bf16.msra.mxu0 0
        %6769 = vmatprep.subr.bf16.mxu0 0
        %6770 = vmatpush1.bf16.msra.mxu0 0
        %6771 = vmatprep.subr.bf16.mxu0 0
        %6772 = vmatpush1.bf16.msra.mxu0 0
        %6773 = vmatprep.subr.bf16.mxu0 0
        %6774 = vmatpush1.bf16.msra.mxu0 0
        %6775 = vmatprep.subr.bf16.mxu0 0
        %6776 = vmatpush1.bf16.msra.mxu0 0
        %6777 = vmatprep.mubr.bf16.mxu0 0
        %6778 = vmatmul.mubr.bf16.gmra.mrb[0].mxu0 %v6695
        %v6779 = vpop.f32.mrb[0].mxu0
        %v6780 = vadd.f32 0.0, %v6779
        %v6781 = vpop.f32.mrb[0].mxu0
        %v6782 = vpop.f32.mrb[0].mxu0
        %v6783 = vpop.f32.mrb[0].mxu0
        %6784 = vdwg.mxu0
        %v6785 = vadd.f32 %v6677, %v6780
        %s6786 = scalar_lea.vmem %s6, 768
        %v6787 = vld [vmem:[%s6786] sm:$0xf]
        %v6788 = vld [vmem:[%s6786 + $0x4] sm:$0xf]
        %v6789 = vld [vmem:[%s6786 + $0x8] sm:$0xf]
        %v6790 = vld [vmem:[%s6786 + $0xc] sm:$0xf]
        %v6791 = vld [vmem:[%s6786 + $0x10] sm:$0xf]
        %v6792 = vld [vmem:[%s6786 + $0x14] sm:$0xf]
        %v6793 = vld [vmem:[%s6786 + $0x18] sm:$0xf]
        %v6794 = vld [vmem:[%s6786 + $0x1c] sm:$0xf]
        %v6795 = vld [vmem:[%s6786 + $0x20] sm:$0xf]
        %v6796 = vld [vmem:[%s6786 + $0x24] sm:$0xf]
        %v6797 = vld [vmem:[%s6786 + $0x28] sm:$0xf]
        %v6798 = vld [vmem:[%s6786 + $0x2c] sm:$0xf]
        %v6799 = vld [vmem:[%s6786 + $0x30] sm:$0xf]
        %v6800 = vld [vmem:[%s6786 + $0x34] sm:$0xf]
        %v6801 = vld [vmem:[%s6786 + $0x38] sm:$0xf]
        %v6802 = vld [vmem:[%s6786 + $0x3c] sm:$0xf]
        %v6803 = vrot.slane %v5488, 6
        %v6821 = vunpack.c.l.b16 %v6787
        %v6822 = vunpack.c.l.b16 %v6788
        %v6823 = vunpack.c.l.b16 %v6789
        %v6824 = vunpack.c.l.b16 %v6790
        %v6825 = vunpack.c.l.b16 %v6791
        %v6826 = vunpack.c.l.b16 %v6792
        %v6827 = vunpack.c.l.b16 %v6793
        %v6828 = vunpack.c.l.b16 %v6794
        %v6829 = vunpack.c.l.b16 %v6795
        %v6830 = vunpack.c.l.b16 %v6796
        %v6831 = vunpack.c.l.b16 %v6797
        %v6832 = vunpack.c.l.b16 %v6798
        %v6833 = vunpack.c.l.b16 %v6799
        %v6834 = vunpack.c.l.b16 %v6800
        %v6835 = vunpack.c.l.b16 %v6801
        %v6836 = vunpack.c.l.b16 %v6802
        %v6837 = vpack.c.b16 %v6822, %v6821
        %v6838 = vpack.c.b16 %v6824, %v6823
        %v6839 = vpack.c.b16 %v6826, %v6825
        %v6840 = vpack.c.b16 %v6828, %v6827
        %v6841 = vpack.c.b16 %v6830, %v6829
        %v6842 = vpack.c.b16 %v6832, %v6831
        %v6843 = vpack.c.b16 %v6834, %v6833
        %v6844 = vpack.c.b16 %v6836, %v6835
        %6853 = vmatprep.subr.bf16.mxu0 0
        %6854 = vmatpush1.bf16.msra.mxu0 %v6837
        %6855 = vmatprep.subr.bf16.mxu0 0
        %6856 = vmatpush1.bf16.msra.mxu0 %v6838
        %6857 = vmatprep.subr.bf16.mxu0 0
        %6858 = vmatpush1.bf16.msra.mxu0 %v6839
        %6859 = vmatprep.subr.bf16.mxu0 0
        %6860 = vmatpush1.bf16.msra.mxu0 %v6840
        %6861 = vmatprep.subr.bf16.mxu0 0
        %6862 = vmatpush1.bf16.msra.mxu0 %v6841
        %6863 = vmatprep.subr.bf16.mxu0 0
        %6864 = vmatpush1.bf16.msra.mxu0 %v6842
        %6865 = vmatprep.subr.bf16.mxu0 0
        %6866 = vmatpush1.bf16.msra.mxu0 %v6843
        %6867 = vmatprep.subr.bf16.mxu0 0
        %6868 = vmatpush1.bf16.msra.mxu0 %v6844
        %6869 = vmatprep.subr.bf16.mxu0 0
        %6870 = vmatpush1.bf16.msra.mxu0 0
        %6871 = vmatprep.subr.bf16.mxu0 0
        %6872 = vmatpush1.bf16.msra.mxu0 0
        %6873 = vmatprep.subr.bf16.mxu0 0
        %6874 = vmatpush1.bf16.msra.mxu0 0
        %6875 = vmatprep.subr.bf16.mxu0 0
        %6876 = vmatpush1.bf16.msra.mxu0 0
        %6877 = vmatprep.subr.bf16.mxu0 0
        %6878 = vmatpush1.bf16.msra.mxu0 0
        %6879 = vmatprep.subr.bf16.mxu0 0
        %6880 = vmatpush1.bf16.msra.mxu0 0
        %6881 = vmatprep.subr.bf16.mxu0 0
        %6882 = vmatpush1.bf16.msra.mxu0 0
        %6883 = vmatprep.subr.bf16.mxu0 0
        %6884 = vmatpush1.bf16.msra.mxu0 0
        %6885 = vmatprep.mubr.bf16.mxu0 0
        %6886 = vmatmul.mubr.bf16.gmra.mrb[0].mxu0 %v6803
        %v6887 = vpop.f32.mrb[0].mxu0
        %v6888 = vadd.f32 0.0, %v6887
        %v6889 = vpop.f32.mrb[0].mxu0
        %v6890 = vpop.f32.mrb[0].mxu0
        %v6891 = vpop.f32.mrb[0].mxu0
        %6892 = vdwg.mxu0
        %v6893 = vadd.f32 %v6785, %v6888
        %s6894 = scalar_lea.vmem %s6, 832
        %v6895 = vld [vmem:[%s6894] sm:$0xf]
        %v6896 = vld [vmem:[%s6894 + $0x4] sm:$0xf]
        %v6897 = vld [vmem:[%s6894 + $0x8] sm:$0xf]
        %v6898 = vld [vmem:[%s6894 + $0xc] sm:$0xf]
        %v6899 = vld [vmem:[%s6894 + $0x10] sm:$0xf]
        %v6900 = vld [vmem:[%s6894 + $0x14] sm:$0xf]
        %v6901 = vld [vmem:[%s6894 + $0x18] sm:$0xf]
        %v6902 = vld [vmem:[%s6894 + $0x1c] sm:$0xf]
        %v6903 = vld [vmem:[%s6894 + $0x20] sm:$0xf]
        %v6904 = vld [vmem:[%s6894 + $0x24] sm:$0xf]
        %v6905 = vld [vmem:[%s6894 + $0x28] sm:$0xf]
        %v6906 = vld [vmem:[%s6894 + $0x2c] sm:$0xf]
        %v6907 = vld [vmem:[%s6894 + $0x30] sm:$0xf]
        %v6908 = vld [vmem:[%s6894 + $0x34] sm:$0xf]
        %v6909 = vld [vmem:[%s6894 + $0x38] sm:$0xf]
        %v6910 = vld [vmem:[%s6894 + $0x3c] sm:$0xf]
        %v6911 = vrot.slane %v5613, 6
        %v6929 = vunpack.c.l.b16 %v6895
        %v6930 = vunpack.c.l.b16 %v6896
        %v6931 = vunpack.c.l.b16 %v6897
        %v6932 = vunpack.c.l.b16 %v6898
        %v6933 = vunpack.c.l.b16 %v6899
        %v6934 = vunpack.c.l.b16 %v6900
        %v6935 = vunpack.c.l.b16 %v6901
        %v6936 = vunpack.c.l.b16 %v6902
        %v6937 = vunpack.c.l.b16 %v6903
        %v6938 = vunpack.c.l.b16 %v6904
        %v6939 = vunpack.c.l.b16 %v6905
        %v6940 = vunpack.c.l.b16 %v6906
        %v6941 = vunpack.c.l.b16 %v6907
        %v6942 = vunpack.c.l.b16 %v6908
        %v6943 = vunpack.c.l.b16 %v6909
        %v6944 = vunpack.c.l.b16 %v6910
        %v6945 = vpack.c.b16 %v6930, %v6929
        %v6946 = vpack.c.b16 %v6932, %v6931
        %v6947 = vpack.c.b16 %v6934, %v6933
        %v6948 = vpack.c.b16 %v6936, %v6935
        %v6949 = vpack.c.b16 %v6938, %v6937
        %v6950 = vpack.c.b16 %v6940, %v6939
        %v6951 = vpack.c.b16 %v6942, %v6941
        %v6952 = vpack.c.b16 %v6944, %v6943
        %6961 = vmatprep.subr.bf16.mxu0 0
        %6962 = vmatpush1.bf16.msra.mxu0 %v6945
        %6963 = vmatprep.subr.bf16.mxu0 0
        %6964 = vmatpush1.bf16.msra.mxu0 %v6946
        %6965 = vmatprep.subr.bf16.mxu0 0
        %6966 = vmatpush1.bf16.msra.mxu0 %v6947
        %6967 = vmatprep.subr.bf16.mxu0 0
        %6968 = vmatpush1.bf16.msra.mxu0 %v6948
        %6969 = vmatprep.subr.bf16.mxu0 0
        %6970 = vmatpush1.bf16.msra.mxu0 %v6949
        %6971 = vmatprep.subr.bf16.mxu0 0
        %6972 = vmatpush1.bf16.msra.mxu0 %v6950
        %6973 = vmatprep.subr.bf16.mxu0 0
        %6974 = vmatpush1.bf16.msra.mxu0 %v6951
        %6975 = vmatprep.subr.bf16.mxu0 0
        %6976 = vmatpush1.bf16.msra.mxu0 %v6952
        %6977 = vmatprep.subr.bf16.mxu0 0
        %6978 = vmatpush1.bf16.msra.mxu0 0
        %6979 = vmatprep.subr.bf16.mxu0 0
        %6980 = vmatpush1.bf16.msra.mxu0 0
        %6981 = vmatprep.subr.bf16.mxu0 0
        %6982 = vmatpush1.bf16.msra.mxu0 0
        %6983 = vmatprep.subr.bf16.mxu0 0
        %6984 = vmatpush1.bf16.msra.mxu0 0
        %6985 = vmatprep.subr.bf16.mxu0 0
        %6986 = vmatpush1.bf16.msra.mxu0 0
        %6987 = vmatprep.subr.bf16.mxu0 0
        %6988 = vmatpush1.bf16.msra.mxu0 0
        %6989 = vmatprep.subr.bf16.mxu0 0
        %6990 = vmatpush1.bf16.msra.mxu0 0
        %6991 = vmatprep.subr.bf16.mxu0 0
        %6992 = vmatpush1.bf16.msra.mxu0 0
        %6993 = vmatprep.mubr.bf16.mxu0 0
        %6994 = vmatmul.mubr.bf16.gmra.mrb[0].mxu0 %v6911
        %v6995 = vpop.f32.mrb[0].mxu0
        %v6996 = vadd.f32 0.0, %v6995
        %v6997 = vpop.f32.mrb[0].mxu0
        %v6998 = vpop.f32.mrb[0].mxu0
        %v6999 = vpop.f32.mrb[0].mxu0
        %7000 = vdwg.mxu0
        %v7001 = vadd.f32 %v6893, %v6996
        %s7002 = scalar_lea.vmem %s6, 896
        %v7003 = vld [vmem:[%s7002] sm:$0xf]
        %v7004 = vld [vmem:[%s7002 + $0x4] sm:$0xf]
        %v7005 = vld [vmem:[%s7002 + $0x8] sm:$0xf]
        %v7006 = vld [vmem:[%s7002 + $0xc] sm:$0xf]
        %v7007 = vld [vmem:[%s7002 + $0x10] sm:$0xf]
        %v7008 = vld [vmem:[%s7002 + $0x14] sm:$0xf]
        %v7009 = vld [vmem:[%s7002 + $0x18] sm:$0xf]
        %v7010 = vld [vmem:[%s7002 + $0x1c] sm:$0xf]
        %v7011 = vld [vmem:[%s7002 + $0x20] sm:$0xf]
        %v7012 = vld [vmem:[%s7002 + $0x24] sm:$0xf]
        %v7013 = vld [vmem:[%s7002 + $0x28] sm:$0xf]
        %v7014 = vld [vmem:[%s7002 + $0x2c] sm:$0xf]
        %v7015 = vld [vmem:[%s7002 + $0x30] sm:$0xf]
        %v7016 = vld [vmem:[%s7002 + $0x34] sm:$0xf]
        %v7017 = vld [vmem:[%s7002 + $0x38] sm:$0xf]
        %v7018 = vld [vmem:[%s7002 + $0x3c] sm:$0xf]
        %v7019 = vrot.slane %v5488, 7
        %v7037 = vunpack.c.l.b16 %v7003
        %v7038 = vunpack.c.l.b16 %v7004
        %v7039 = vunpack.c.l.b16 %v7005
        %v7040 = vunpack.c.l.b16 %v7006
        %v7041 = vunpack.c.l.b16 %v7007
        %v7042 = vunpack.c.l.b16 %v7008
        %v7043 = vunpack.c.l.b16 %v7009
        %v7044 = vunpack.c.l.b16 %v7010
        %v7045 = vunpack.c.l.b16 %v7011
        %v7046 = vunpack.c.l.b16 %v7012
        %v7047 = vunpack.c.l.b16 %v7013
        %v7048 = vunpack.c.l.b16 %v7014
        %v7049 = vunpack.c.l.b16 %v7015
        %v7050 = vunpack.c.l.b16 %v7016
        %v7051 = vunpack.c.l.b16 %v7017
        %v7052 = vunpack.c.l.b16 %v7018
        %v7053 = vpack.c.b16 %v7038, %v7037
        %v7054 = vpack.c.b16 %v7040, %v7039
        %v7055 = vpack.c.b16 %v7042, %v7041
        %v7056 = vpack.c.b16 %v7044, %v7043
        %v7057 = vpack.c.b16 %v7046, %v7045
        %v7058 = vpack.c.b16 %v7048, %v7047
        %v7059 = vpack.c.b16 %v7050, %v7049
        %v7060 = vpack.c.b16 %v7052, %v7051
        %7069 = vmatprep.subr.bf16.mxu0 0
        %7070 = vmatpush1.bf16.msra.mxu0 %v7053
        %7071 = vmatprep.subr.bf16.mxu0 0
        %7072 = vmatpush1.bf16.msra.mxu0 %v7054
        %7073 = vmatprep.subr.bf16.mxu0 0
        %7074 = vmatpush1.bf16.msra.mxu0 %v7055
        %7075 = vmatprep.subr.bf16.mxu0 0
        %7076 = vmatpush1.bf16.msra.mxu0 %v7056
        %7077 = vmatprep.subr.bf16.mxu0 0
        %7078 = vmatpush1.bf16.msra.mxu0 %v7057
        %7079 = vmatprep.subr.bf16.mxu0 0
        %7080 = vmatpush1.bf16.msra.mxu0 %v7058
        %7081 = vmatprep.subr.bf16.mxu0 0
        %7082 = vmatpush1.bf16.msra.mxu0 %v7059
        %7083 = vmatprep.subr.bf16.mxu0 0
        %7084 = vmatpush1.bf16.msra.mxu0 %v7060
        %7085 = vmatprep.subr.bf16.mxu0 0
        %7086 = vmatpush1.bf16.msra.mxu0 0
        %7087 = vmatprep.subr.bf16.mxu0 0
        %7088 = vmatpush1.bf16.msra.mxu0 0
        %7089 = vmatprep.subr.bf16.mxu0 0
        %7090 = vmatpush1.bf16.msra.mxu0 0
        %7091 = vmatprep.subr.bf16.mxu0 0
        %7092 = vmatpush1.bf16.msra.mxu0 0
        %7093 = vmatprep.subr.bf16.mxu0 0
        %7094 = vmatpush1.bf16.msra.mxu0 0
        %7095 = vmatprep.subr.bf16.mxu0 0
        %7096 = vmatpush1.bf16.msra.mxu0 0
        %7097 = vmatprep.subr.bf16.mxu0 0
        %7098 = vmatpush1.bf16.msra.mxu0 0
        %7099 = vmatprep.subr.bf16.mxu0 0
        %7100 = vmatpush1.bf16.msra.mxu0 0
        %7101 = vmatprep.mubr.bf16.mxu0 0
        %7102 = vmatmul.mubr.bf16.gmra.mrb[0].mxu0 %v7019
        %v7103 = vpop.f32.mrb[0].mxu0
        %v7104 = vadd.f32 0.0, %v7103
        %v7105 = vpop.f32.mrb[0].mxu0
        %v7106 = vpop.f32.mrb[0].mxu0
        %v7107 = vpop.f32.mrb[0].mxu0
        %7108 = vdwg.mxu0
        %v7109 = vadd.f32 %v7001, %v7104
        %s7110 = scalar_lea.vmem %s6, 960
        %v7111 = vld [vmem:[%s7110] sm:$0xf]
        %v7112 = vld [vmem:[%s7110 + $0x4] sm:$0xf]
        %v7113 = vld [vmem:[%s7110 + $0x8] sm:$0xf]
        %v7114 = vld [vmem:[%s7110 + $0xc] sm:$0xf]
        %v7115 = vld [vmem:[%s7110 + $0x10] sm:$0xf]
        %v7116 = vld [vmem:[%s7110 + $0x14] sm:$0xf]
        %v7117 = vld [vmem:[%s7110 + $0x18] sm:$0xf]
        %v7118 = vld [vmem:[%s7110 + $0x1c] sm:$0xf]
        %v7119 = vld [vmem:[%s7110 + $0x20] sm:$0xf]
        %v7120 = vld [vmem:[%s7110 + $0x24] sm:$0xf]
        %v7121 = vld [vmem:[%s7110 + $0x28] sm:$0xf]
        %v7122 = vld [vmem:[%s7110 + $0x2c] sm:$0xf]
        %v7123 = vld [vmem:[%s7110 + $0x30] sm:$0xf]
        %v7124 = vld [vmem:[%s7110 + $0x34] sm:$0xf]
        %v7125 = vld [vmem:[%s7110 + $0x38] sm:$0xf]
        %v7126 = vld [vmem:[%s7110 + $0x3c] sm:$0xf]
        %v7127 = vrot.slane %v5613, 7
        %v7145 = vunpack.c.l.b16 %v7111
        %v7146 = vunpack.c.l.b16 %v7112
        %v7147 = vunpack.c.l.b16 %v7113
        %v7148 = vunpack.c.l.b16 %v7114
        %v7149 = vunpack.c.l.b16 %v7115
        %v7150 = vunpack.c.l.b16 %v7116
        %v7151 = vunpack.c.l.b16 %v7117
        %v7152 = vunpack.c.l.b16 %v7118
        %v7153 = vunpack.c.l.b16 %v7119
        %v7154 = vunpack.c.l.b16 %v7120
        %v7155 = vunpack.c.l.b16 %v7121
        %v7156 = vunpack.c.l.b16 %v7122
        %v7157 = vunpack.c.l.b16 %v7123
        %v7158 = vunpack.c.l.b16 %v7124
        %v7159 = vunpack.c.l.b16 %v7125
        %v7160 = vunpack.c.l.b16 %v7126
        %v7161 = vpack.c.b16 %v7146, %v7145
        %v7162 = vpack.c.b16 %v7148, %v7147
        %v7163 = vpack.c.b16 %v7150, %v7149
        %v7164 = vpack.c.b16 %v7152, %v7151
        %v7165 = vpack.c.b16 %v7154, %v7153
        %v7166 = vpack.c.b16 %v7156, %v7155
        %v7167 = vpack.c.b16 %v7158, %v7157
        %v7168 = vpack.c.b16 %v7160, %v7159
        %7177 = vmatprep.subr.bf16.mxu0 0
        %7178 = vmatpush1.bf16.msra.mxu0 %v7161
        %7179 = vmatprep.subr.bf16.mxu0 0
        %7180 = vmatpush1.bf16.msra.mxu0 %v7162
        %7181 = vmatprep.subr.bf16.mxu0 0
        %7182 = vmatpush1.bf16.msra.mxu0 %v7163
        %7183 = vmatprep.subr.bf16.mxu0 0
        %7184 = vmatpush1.bf16.msra.mxu0 %v7164
        %7185 = vmatprep.subr.bf16.mxu0 0
        %7186 = vmatpush1.bf16.msra.mxu0 %v7165
        %7187 = vmatprep.subr.bf16.mxu0 0
        %7188 = vmatpush1.bf16.msra.mxu0 %v7166
        %7189 = vmatprep.subr.bf16.mxu0 0
        %7190 = vmatpush1.bf16.msra.mxu0 %v7167
        %7191 = vmatprep.subr.bf16.mxu0 0
        %7192 = vmatpush1.bf16.msra.mxu0 %v7168
        %7193 = vmatprep.subr.bf16.mxu0 0
        %7194 = vmatpush1.bf16.msra.mxu0 0
        %7195 = vmatprep.subr.bf16.mxu0 0
        %7196 = vmatpush1.bf16.msra.mxu0 0
        %7197 = vmatprep.subr.bf16.mxu0 0
        %7198 = vmatpush1.bf16.msra.mxu0 0
        %7199 = vmatprep.subr.bf16.mxu0 0
        %7200 = vmatpush1.bf16.msra.mxu0 0
        %7201 = vmatprep.subr.bf16.mxu0 0
        %7202 = vmatpush1.bf16.msra.mxu0 0
        %7203 = vmatprep.subr.bf16.mxu0 0
        %7204 = vmatpush1.bf16.msra.mxu0 0
        %7205 = vmatprep.subr.bf16.mxu0 0
        %7206 = vmatpush1.bf16.msra.mxu0 0
        %7207 = vmatprep.subr.bf16.mxu0 0
        %7208 = vmatpush1.bf16.msra.mxu0 0
        %7209 = vmatprep.mubr.bf16.mxu0 0
        %7210 = vmatmul.mubr.bf16.gmra.mrb[0].mxu0 %v7127
        %v7211 = vpop.f32.mrb[0].mxu0
        %v7212 = vadd.f32 0.0, %v7211
        %v7213 = vpop.f32.mrb[0].mxu0
        %v7214 = vpop.f32.mrb[0].mxu0
        %v7215 = vpop.f32.mrb[0].mxu0
        %7216 = vdwg.mxu0
        %v7217 = vadd.f32 %v7109, %v7212
        %v7218 = vmax.f32 %v7217, 0.0
        %v7219 = vpack.c.bf16 %v7218, %v7218
        %v7220 = vld [vmem:[%s8] sm:$0xf]
        %v7221 = vld [vmem:[%s8 + $0x4] sm:$0xf]
        %v7222 = vld [vmem:[%s8 + $0x8] sm:$0xf]
        %v7223 = vld [vmem:[%s8 + $0xc] sm:$0xf]
        %v7224 = vld [vmem:[%s8 + $0x10] sm:$0xf]
        %v7225 = vld [vmem:[%s8 + $0x14] sm:$0xf]
        %v7226 = vld [vmem:[%s8 + $0x18] sm:$0xf]
        %v7227 = vld [vmem:[%s8 + $0x1c] sm:$0xf]
        %v7228 = vld [vmem:[%s9] sm:$0x1]
        %v7237 = vunpack.c.l.b16 %v7220
        %v7238 = vunpack.c.l.b16 %v7221
        %v7239 = vunpack.c.l.b16 %v7222
        %v7240 = vunpack.c.l.b16 %v7223
        %v7241 = vunpack.c.l.b16 %v7224
        %v7242 = vunpack.c.l.b16 %v7225
        %v7243 = vunpack.c.l.b16 %v7226
        %v7244 = vunpack.c.l.b16 %v7227
        %v7245 = vpack.c.b16 %v7238, %v7237
        %v7246 = vpack.c.b16 %v7240, %v7239
        %v7247 = vpack.c.b16 %v7242, %v7241
        %v7248 = vpack.c.b16 %v7244, %v7243
        %v7254 = vsel %vm1577, %v7219, 0
        %7256 = vmatprep.subr.bf16.mxu0 0
        %7257 = vmatpush1.bf16.msra.mxu0 %v7245
        %7258 = vmatprep.subr.bf16.mxu0 0
        %7259 = vmatpush1.bf16.msra.mxu0 %v7246
        %7260 = vmatprep.subr.bf16.mxu0 0
        %7261 = vmatpush1.bf16.msra.mxu0 %v7247
        %7262 = vmatprep.subr.bf16.mxu0 0
        %7263 = vmatpush1.bf16.msra.mxu0 %v7248
        %7264 = vmatprep.subr.bf16.mxu0 0
        %7265 = vmatpush1.bf16.msra.mxu0 0
        %7266 = vmatprep.subr.bf16.mxu0 0
        %7267 = vmatpush1.bf16.msra.mxu0 0
        %7268 = vmatprep.subr.bf16.mxu0 0
        %7269 = vmatpush1.bf16.msra.mxu0 0
        %7270 = vmatprep.subr.bf16.mxu0 0
        %7271 = vmatpush1.bf16.msra.mxu0 0
        %7272 = vmatprep.subr.bf16.mxu0 0
        %7273 = vmatpush1.bf16.msra.mxu0 0
        %7274 = vmatprep.subr.bf16.mxu0 0
        %7275 = vmatpush1.bf16.msra.mxu0 0
        %7276 = vmatprep.subr.bf16.mxu0 0
        %7277 = vmatpush1.bf16.msra.mxu0 0
        %7278 = vmatprep.subr.bf16.mxu0 0
        %7279 = vmatpush1.bf16.msra.mxu0 0
        %7280 = vmatprep.subr.bf16.mxu0 0
        %7281 = vmatpush1.bf16.msra.mxu0 0
        %7282 = vmatprep.subr.bf16.mxu0 0
        %7283 = vmatpush1.bf16.msra.mxu0 0
        %7284 = vmatprep.subr.bf16.mxu0 0
        %7285 = vmatpush1.bf16.msra.mxu0 0
        %7286 = vmatprep.subr.bf16.mxu0 0
        %7287 = vmatpush1.bf16.msra.mxu0 0
        %7288 = vmatprep.mubr.bf16.mxu0 0
        %7289 = vmatmul.mubr.bf16.gmra.mrb[0].mxu0 %v7254
        %v7290 = vpop.f32.mrb[0].mxu0
        %v7291 = vadd.f32 %v7228, %v7290
        %v7292 = vpop.f32.mrb[0].mxu0
        %v7293 = vpop.f32.mrb[0].mxu0
        %v7294 = vpop.f32.mrb[0].mxu0
        %7295 = vdwg.mxu0
        %v7296 = vmax.f32 %v7291, 0.0
        %v7297 = vpack.c.bf16 %v7296, %v7296
        %v7298 = vld [vmem:[%s10] sm:$0xf]
        %v7299 = vld [vmem:[%s10 + $0x4] sm:$0xf]
        %v7300 = vld [vmem:[%s11] sm:$0x1]
        %v7303 = vunpack.c.l.b16 %v7298
        %v7304 = vunpack.c.l.b16 %v7299
        %v7305 = vpack.c.b16 %v7304, %v7303
        %vm7307 = vcmask 130048
        %v7309 = vsel %vm7307, %v7297, 0
        %7311 = vmatprep.subr.bf16.mxu0 0
        %7312 = vmatpush1.bf16.msra.mxu0 %v7305
        %7313 = vmatprep.subr.bf16.mxu0 0
        %7314 = vmatpush1.bf16.msra.mxu0 0
        %7315 = vmatprep.subr.bf16.mxu0 0
        %7316 = vmatpush1.bf16.msra.mxu0 0
        %7317 = vmatprep.subr.bf16.mxu0 0
        %7318 = vmatpush1.bf16.msra.mxu0 0
        %7319 = vmatprep.subr.bf16.mxu0 0
        %7320 = vmatpush1.bf16.msra.mxu0 0
        %7321 = vmatprep.subr.bf16.mxu0 0
        %7322 = vmatpush1.bf16.msra.mxu0 0
        %7323 = vmatprep.subr.bf16.mxu0 0
        %7324 = vmatpush1.bf16.msra.mxu0 0
        %7325 = vmatprep.subr.bf16.mxu0 0
        %7326 = vmatpush1.bf16.msra.mxu0 0
        %7327 = vmatprep.subr.bf16.mxu0 0
        %7328 = vmatpush1.bf16.msra.mxu0 0
        %7329 = vmatprep.subr.bf16.mxu0 0
        %7330 = vmatpush1.bf16.msra.mxu0 0
        %7331 = vmatprep.subr.bf16.mxu0 0
        %7332 = vmatpush1.bf16.msra.mxu0 0
        %7333 = vmatprep.subr.bf16.mxu0 0
        %7334 = vmatpush1.bf16.msra.mxu0 0
        %7335 = vmatprep.subr.bf16.mxu0 0
        %7336 = vmatpush1.bf16.msra.mxu0 0
        %7337 = vmatprep.subr.bf16.mxu0 0
        %7338 = vmatpush1.bf16.msra.mxu0 0
        %7339 = vmatprep.subr.bf16.mxu0 0
        %7340 = vmatpush1.bf16.msra.mxu0 0
        %7341 = vmatprep.subr.bf16.mxu0 0
        %7342 = vmatpush1.bf16.msra.mxu0 0
        %7343 = vmatprep.mubr.bf16.mxu0 0
        %7344 = vmatmul.mubr.bf16.gmra.mrb[0].mxu0 %v7309
        %v7345 = vpop.f32.mrb[0].mxu0
        %v7346 = vadd.f32 %v7300, %v7345
        %v7347 = vpop.f32.mrb[0].mxu0
        %v7348 = vpop.f32.mrb[0].mxu0
        %v7349 = vpop.f32.mrb[0].mxu0
        %7350 = vdwg.mxu0
        %vm7351 = vcmask 73728
        %7352 = vst.msk [vmem:[%s405] sm:$0x1] %vm7351, %v7346
        %s7353 = sand.u32 %s291, 1
        %s7354 = scalar_lea.sflag [#allocation3], %s7353
        %s7355 = sand.u32 %s291, 1
        %s7356 = scalar_lea.vmem [#allocation2], %s7355
        // Predicated region
        $region69: #{cnn32_forward.1} parent=67 // pred_check
          %p7357 = pneg %p301
        $region70: #{cnn32_forward.1} parent=67 // pred_check_branch
          %7359 = sbr.rel (%p7357) target = $region72
        $region71: #{cnn32_forward.1} parent=67 // pred_region
          %s7361 = ssub.s32 16, 16
          %7362 = vsyncadd %s7354, %s7361
          %s7363 = smul.addr %s26, 16
          %s7364 = scalar_lea.hbm %s12, %s7363
          %s7366 = sshll.u32 %s7356, 4
          %s7367 = int_to_ptr.vmem [resolvable:$true] %s7366
          %7369 = dma.vmem_to_hbm [thread:$0]  %s7367, 16, %s7364, %s7354
        $region72: #{cnn32_forward.1} parent=67 // pred_fallthru
          _
      $region68: #{cnn32_forward.1} parent=5 // pred_fallthru
        _
      %p7370 = scmp.le.s32.totalorder 2, %s21
      // Predicated region
      $region73: #{cnn32_forward.1} parent=5 // pred_check
        %p7371 = pneg %p7370
      $region74: #{cnn32_forward.1} parent=5 // pred_check_branch
        %7373 = sbr.rel (%p7371) target = $region76
      $region75: #{cnn32_forward.1} parent=5 // pred_region
        %s7374 = ssub.s32 %s21, 2
        // Predicated region
        $region77: #{cnn32_forward.1} parent=75 // pred_check
          %p7375 = pneg %p307
        $region78: #{cnn32_forward.1} parent=75 // pred_check_branch
          %7377 = sbr.rel (%p7375) target = $region80
        $region79: #{cnn32_forward.1} parent=75 // pred_region
          %s7378 = sand.u32 %s292, 1
          %s7379 = scalar_lea.sflag [#allocation3], %s7378
          %s7380 = sand.u32 %s292, 1
          %s7381 = scalar_lea.vmem [#allocation2], %s7380
          %7382 = dma.done %s7379, 16
        $region80: #{cnn32_forward.1} parent=75 // pred_fallthru
          _
      $region76: #{cnn32_forward.1} parent=5 // pred_fallthru
        _
    $region6: #{cnn32_forward.1} parent=1 // loop_footer
      %s25 = sadd.s32 1, %s21
    $region7: #{cnn32_forward.1} parent=1 // loop_footer_branch
      %20 = sbr.rel target = $region3
    $region8: #{cnn32_forward.1} parent=1 // loop_exit
      _
    %7383 = vsyncpa [#allocation3], 1
    %s7384 = scalar_lea.sflag [#allocation3], 1
    %7385 = vsyncpa %s7384, 1

</llo_original>
